<compile_context>
chip_gen: v5e
topology: v5e:2x2
jax: 0.10.0
libtpu: 0.0.40
codegen_flags: <defaults>
</compile_context>

<pallas_src>
from functools import partial

import jax
import jax.numpy as jnp
from jax import lax
from jax.experimental import pallas as pl
from jax.experimental.pallas import tpu as pltpu


_SQRT_HALF = 0.7071067811865476


def _gelu_exact(x):
    # torch.nn.GELU() default = exact erf formulation (not tanh approx).
    return 0.5 * x * (1.0 + lax.erf(x * _SQRT_HALF))


def _encoder_kernel(x_ref, wt_ref, b_ref, o_ref):
    # x_ref: (tb, D)   wt_ref: (D, D) = W^T ([in, out])   b_ref: (1, D) f32
    x = x_ref[...]
    wt = wt_ref[...]
    b = b_ref[...]

    # Explicit MXU precision path: f32 inputs use the full-precision
    # decomposition (matches the f32 reference); bf16 inputs are a native
    # single-pass MXU matmul.
    prec = (lax.Precision.HIGHEST if x.dtype == jnp.float32
            else lax.Precision.DEFAULT)

    # fc_image + GELU (pass 1)
    h = jnp.dot(x, wt, preferred_element_type=jnp.float32, precision=prec) + b
    h = _gelu_exact(h)
    # fc_image + GELU (pass 2, same weights/bias)
    h = jnp.dot(h.astype(wt.dtype), wt,
                preferred_element_type=jnp.float32, precision=prec) + b
    h = _gelu_exact(h)

    # F.normalize(dim=-1).  max(sqrt(s), 1e-12) == sqrt(max(s, 1e-24)), so a
    # single rsqrt per row (EUP slot) followed by cheap vmuls.
    sumsq = jnp.sum(h * h, axis=-1, keepdims=True)
    inv = lax.rsqrt(jnp.maximum(sumsq, 1e-24))
    o_ref[...] = (h * inv).astype(o_ref.dtype)


def _vmem_capacity_bytes():
    try:
        return int(pltpu.get_tpu_info().vmem_capacity_bytes)
    except Exception:
        return 64 << 20  # conservative fallback (v7x-sized VMEM)


def _pick_tile_and_vmem(B, D, in_itemsize):
    """Pick a batch tile + VMEM limit that fit the current TPU generation."""
    vmem_cap = _vmem_capacity_bytes()

    # Resident blocks: weight (D,D) + bias (1,D).  Constant index_maps mean
    # they are DMA'd once, but the default pipeline still double-buffers them,
    # so budget both buffers.  (Single-buffering via pipeline_mode would
    # reclaim D*D*itemsize; left off for portability across jax versions.)
    w_bytes = 2 * D * D * in_itemsize
    b_bytes = 2 * D * 4
    # Per batch row: x (2 bufs) + out (2 bufs) + in-kernel f32 temporaries
    # (h, h*h, matmul accumulator, casts) -- budget 8 f32-rows of slack.
    per_row = 4 * D * in_itemsize + 8 * D * 4

    budget = int(vmem_cap * 0.70)            # headroom for Mosaic scratch
    cap = (budget - w_bytes - b_bytes) // per_row
    cap = max(8, (cap // 8) * 8)
    # TODO(synk): for D >~ 2048 the weight should be column-tiled (extra grid
    # axis) or stored bf16 to fit v7x's 64 MiB VMEM; not needed at these sizes.

    max_tile = 512 if vmem_cap >= (96 << 20) else 256   # v5e/v6e vs v7x

    if B < 256:
        # Single tile when it fits: no forced 2-way split on single-TC chips.
        tb = min(B, cap)
    elif B <= 2 * max_tile:
        # Split into >=2 tiles only when each tile keeps >=128 rows
        # (feeds both v7x TensorCores without starving the MXU M-dim).
        tb = min(cap, ((B + 15) // 16) * 8)
    else:
        tb = min(cap, max_tile)

    used = w_bytes + b_bytes + per_row * tb
    vmem_limit = max(32 << 20, used + (8 << 20))
    vmem_limit = min(vmem_limit, int(vmem_cap * 0.85))  # stay below physical
    return tb, vmem_limit


@partial(jax.jit, static_argnames=("use_bf16",))
def image_encoder2(x, weight, bias, *, use_bf16=False):
    """x: [B, D]; weight: [D, D] (PyTorch [out, in] layout); bias: [D]."""
    B, D = x.shape
    assert weight.shape == (D, D), "fc_image must be square (applied twice)"
    assert bias.shape == (D,)

    # One-time prep outside the grid loop: transpose W to [in, out] so the
    # kernel runs plain NN matmuls; optionally cast to bf16 for a single-pass
    # MXU path (also halves the weight DMA).
    w_t = weight.T
    if use_bf16:
        x_in = x.astype(jnp.bfloat16)
        w_in = w_t.astype(jnp.bfloat16)
    else:
        x_in = x
        w_in = w_t
    b2d = bias.reshape(1, D).astype(jnp.float32)

    in_itemsize = jnp.dtype(w_in.dtype).itemsize
    tb, vmem_limit = _pick_tile_and_vmem(B, D, in_itemsize)
    grid = (pl.cdiv(B, tb),)

    cost = pl.CostEstimate(
        flops=4 * B * D * D,                         # two (B,D)x(D,D) matmuls
        transcendentals=2 * B * D + B,               # erf x2 + per-row rsqrt
        bytes_accessed=(B * D * (in_itemsize + 4)    # x in + out
                        + D * D * in_itemsize + D * 4),
    )

    return pl.pallas_call(
        _encoder_kernel,
        out_shape=jax.ShapeDtypeStruct((B, D), x.dtype),
        grid_spec=pltpu.PrefetchScalarGridSpec(
            num_scalar_prefetch=0,
            grid=grid,
            in_specs=[
                pl.BlockSpec((tb, D), lambda i: (i, 0)),   # batch tile of x
                pl.BlockSpec((D, D), lambda i: (0, 0)),    # W^T: VMEM-resident
                pl.BlockSpec((1, D), lambda i: (0, 0)),    # bias: resident
            ],
            out_specs=pl.BlockSpec((tb, D), lambda i: (i, 0)),
        ),
        compiler_params=pltpu.CompilerParams(
            dimension_semantics=("parallel",),             # shard batch across TCs
            vmem_limit_bytes=vmem_limit,
        ),
        cost_estimate=cost,
    )(x_in, w_in, b2d)


def _reference(x, weight, bias):
    hp = lax.Precision.HIGHEST
    h = jax.nn.gelu(jnp.dot(x, weight.T, precision=hp) + bias, approximate=False)
    h = jax.nn.gelu(jnp.dot(h, weight.T, precision=hp) + bias, approximate=False)
    n = jnp.maximum(jnp.linalg.norm(h, axis=-1, keepdims=True), 1e-12)
    return h / n


if __name__ == "__main__":
    # Module defaults: input_size = output_size = 512; small batch.
    B, D = 8, 512
    key = jax.random.PRNGKey(0)
    kx, kw, kb = jax.random.split(key, 3)

    x = jax.random.normal(kx, (B, D), dtype=jnp.float32)
    # Deterministic "Linear" parameters (PyTorch layout: [out_features, in_features]).
    bound = 1.0 / jnp.sqrt(D)
    weight = jax.random.uniform(kw, (D, D), minval=-bound, maxval=bound,
                                dtype=jnp.float32)
    bias = jax.random.uniform(kb, (D,), minval=-bound, maxval=bound,
                              dtype=jnp.float32)

    ref = _reference(x, weight, bias)

    # Default f32 path (precision=HIGHEST inside the kernel): tight tolerance.
    out = jax.block_until_ready(image_encoder2(x, weight, bias))
    assert out.shape == (B, D)
    assert jnp.allclose(out, ref, atol=1e-4, rtol=1e-4), "f32 path mismatch"

    # Fast bf16 MXU path: single-pass matmuls, loose tolerance vs f32 reference.
    out_bf16 = jax.block_until_ready(image_encoder2(x, weight, bias, use_bf16=True))
    assert out_bf16.shape == (B, D)
    assert jnp.allclose(out_bf16, ref, atol=3e-2, rtol=3e-2), "bf16 path mismatch"

    print("KERNEL_OK")
</pallas_src>

<mosaic_0001>
module attributes {stable_mosaic.version = 11 : i64} {
  func.func @_encoder_kernel(%arg0: i32, %arg1: memref<8x512xf32, #tpu.memory_space<vmem>>, %arg2: memref<512x512xf32, #tpu.memory_space<vmem>>, %arg3: memref<1x512xf32, #tpu.memory_space<vmem>>, %arg4: memref<8x512xf32, #tpu.memory_space<vmem>>) attributes {dimension_semantics = [#tpu.dimension_semantics<parallel>], iteration_bounds = array<i64: 1>, scalar_prefetch = 0 : i64, scratch_operands = 0 : i64, tpu.core_type = #tpu.core_type<tc>, window_params = [{transform_indices = @transform_0, window_bounds = array<i64: 8, 512>}, {pipeline_mode = #tpu.pipeline_mode<synchronous>, transform_indices = @transform_1, window_bounds = array<i64: 512, 512>}, {pipeline_mode = #tpu.pipeline_mode<synchronous>, transform_indices = @transform_2, window_bounds = array<i64: 1, 512>}, {transform_indices = @transform_3, window_bounds = array<i64: 8, 512>}]} {
    %c0 = arith.constant 0 : index
    %c0_0 = arith.constant 0 : index
    %0 = vector.load %arg1[%c0, %c0_0] : memref<8x512xf32, #tpu.memory_space<vmem>>, vector<8x512xf32>
    %c0_1 = arith.constant 0 : index
    %c0_2 = arith.constant 0 : index
    %1 = vector.load %arg2[%c0_1, %c0_2] : memref<512x512xf32, #tpu.memory_space<vmem>>, vector<512x512xf32>
    %c0_3 = arith.constant 0 : index
    %c0_4 = arith.constant 0 : index
    %2 = vector.load %arg3[%c0_3, %c0_4] : memref<1x512xf32, #tpu.memory_space<vmem>>, vector<1x512xf32>
    %cst = arith.constant dense<0.000000e+00> : vector<8x512xf32>
    %3 = tpu.matmul %0, %1, %cst {dimension_numbers = #tpu.dot_dimension_numbers<[1], [0], [0], [1], [0, 0, 1, 1], [], []>, precision = #tpu.contract_precision<fp32>} : vector<8x512xf32>, vector<512x512xf32>, vector<8x512xf32> -> vector<8x512xf32>
    %4 = vector.broadcast %2 : vector<1x512xf32> to vector<8x512xf32>
    %5 = arith.addf %3, %4 : vector<8x512xf32>
    %cst_5 = arith.constant 5.000000e-01 : f32
    %6 = vector.broadcast %cst_5 : f32 to vector<8x512xf32>
    %7 = arith.mulf %6, %5 : vector<8x512xf32>
    %cst_6 = arith.constant 0.707106769 : f32
    %8 = vector.broadcast %cst_6 : f32 to vector<8x512xf32>
    %9 = arith.mulf %5, %8 : vector<8x512xf32>
    %10 = math.erf %9 : vector<8x512xf32>
    %cst_7 = arith.constant 1.000000e+00 : f32
    %11 = vector.broadcast %cst_7 : f32 to vector<8x512xf32>
    %12 = arith.addf %11, %10 : vector<8x512xf32>
    %13 = arith.mulf %7, %12 : vector<8x512xf32>
    %cst_8 = arith.constant dense<0.000000e+00> : vector<8x512xf32>
    %14 = tpu.matmul %13, %1, %cst_8 {dimension_numbers = #tpu.dot_dimension_numbers<[1], [0], [0], [1], [0, 0, 1, 1], [], []>, precision = #tpu.contract_precision<fp32>} : vector<8x512xf32>, vector<512x512xf32>, vector<8x512xf32> -> vector<8x512xf32>
    %15 = vector.broadcast %2 : vector<1x512xf32> to vector<8x512xf32>
    %16 = arith.addf %14, %15 : vector<8x512xf32>
    %cst_9 = arith.constant 5.000000e-01 : f32
    %17 = vector.broadcast %cst_9 : f32 to vector<8x512xf32>
    %18 = arith.mulf %17, %16 : vector<8x512xf32>
    %cst_10 = arith.constant 0.707106769 : f32
    %19 = vector.broadcast %cst_10 : f32 to vector<8x512xf32>
    %20 = arith.mulf %16, %19 : vector<8x512xf32>
    %21 = math.erf %20 : vector<8x512xf32>
    %cst_11 = arith.constant 1.000000e+00 : f32
    %22 = vector.broadcast %cst_11 : f32 to vector<8x512xf32>
    %23 = arith.addf %22, %21 : vector<8x512xf32>
    %24 = arith.mulf %18, %23 : vector<8x512xf32>
    %25 = arith.mulf %24, %24 : vector<8x512xf32>
    %cst_12 = arith.constant dense<0.000000e+00> : vector<8xf32>
    %26 = vector.multi_reduction <add>, %25, %cst_12 [1] : vector<8x512xf32> to vector<8xf32>
    %27 = vector.shape_cast %26 : vector<8xf32> to vector<8x1xf32>
    %cst_13 = arith.constant 1.000000e-24 : f32
    %28 = vector.broadcast %cst_13 : f32 to vector<8x1xf32>
    %29 = arith.maximumf %27, %28 : vector<8x1xf32>
    %30 = math.rsqrt %29 : vector<8x1xf32>
    %31 = vector.broadcast %30 : vector<8x1xf32> to vector<8x512xf32>
    %32 = arith.mulf %24, %31 : vector<8x512xf32>
    %c0_14 = arith.constant 0 : index
    %c0_15 = arith.constant 0 : index
    %33 = vector.load %arg4[%c0_14, %c0_15] : memref<8x512xf32, #tpu.memory_space<vmem>>, vector<8x512xf32>
    tpu.vector_store %arg4[%c0_14, %c0_15], %32 {strides = array<i32>} : memref<8x512xf32, #tpu.memory_space<vmem>>, vector<8x512xf32>,
    return
  }
  func.func @transform_0(%arg0: i32) -> (i32, i32) {
    %c0_i32 = arith.constant 0 : i32
    %c0_i32_0 = arith.constant 0 : i32
    return %arg0, %c0_i32 : i32, i32
  }
  func.func @transform_1(%arg0: i32) -> (i32, i32) {
    %c0_i32 = arith.constant 0 : i32
    %c0_i32_0 = arith.constant 0 : i32
    %c0_i32_1 = arith.constant 0 : i32
    return %c0_i32, %c0_i32_0 : i32, i32
  }
  func.func @transform_2(%arg0: i32) -> (i32, i32) {
    %c0_i32 = arith.constant 0 : i32
    %c0_i32_0 = arith.constant 0 : i32
    %c0_i32_1 = arith.constant 0 : i32
    return %c0_i32, %c0_i32_0 : i32, i32
  }
  func.func @transform_3(%arg0: i32) -> (i32, i32) {
    %c0_i32 = arith.constant 0 : i32
    %c0_i32_0 = arith.constant 0 : i32
    return %arg0, %c0_i32 : i32, i32
  }
}

</mosaic_0001>

<llo_original>
// kernel: image_encoder2.1
$region0: #{image_encoder2.1}
  #allocation0 [shape = 'u32[]', space=smem, size = 0x4, offset = 0x4, fixed_abs, tag = 'smem constant byte address 0x4 - core index']
  #allocation1 [shape = 'u32[72,128]{1,0:T(1,128)}', space=vmem, size = 0x9000, scoped, tag = 'internal scratch']
  %s0 = inlined_call_operand.vmem [shape: f32[8,512], index: 0, kind: input, shape index: {}]
  %s1 = inlined_call_operand.vmem [shape: f32[512,512], index: 1, kind: input, shape index: {}]
  %s2 = inlined_call_operand.vmem [shape: f32[1,512], index: 2, kind: input, shape index: {}]
  %s3 = inlined_call_operand.hbm [shape: f32[8,512], index: 3, kind: output, shape index: {}]
  %s4 = sld [smem:[#allocation0]]
  $region22: #{image_encoder2.1} parent=0
    _
  %s6 = ssub.s32 1, %s4
  %s7 = scalar_select 0, %s6, %s4
  $region1: #{image_encoder2.1} parent=0
    #allocation2 [shape = 'u8[16384]{0}', space=vmem, size = 0x4000, scoped, tag = 'output window, operand 0, single buffered']
    #allocation3 [shape = 's32[1]{0}', space=sflag, size = 0x4, scoped, tag = 'scoped memory for image_encoder2.1']
    %8 = vsyncpa [#allocation3], 0
    // Predicated region
    $region2: #{image_encoder2.1} parent=1 // pred_check
      _
    $region3: #{image_encoder2.1} parent=1 // pred_check_branch
      %10 = sbr.rel (0) target = $region5
    $region4: #{image_encoder2.1} parent=1 // pred_region
      _
    $region5: #{image_encoder2.1} parent=1 // pred_fallthru
      _
    // Predicated region
    $region6: #{image_encoder2.1} parent=1 // pred_check
      _
    $region7: #{image_encoder2.1} parent=1 // pred_check_branch
      %12 = sbr.rel (0) target = $region9
    $region8: #{image_encoder2.1} parent=1 // pred_region
      _
    $region9: #{image_encoder2.1} parent=1 // pred_fallthru
      _
    // Predicated region
    $region10: #{image_encoder2.1} parent=1 // pred_check
      _
    $region11: #{image_encoder2.1} parent=1 // pred_check_branch
      %14 = sbr.rel (0) target = $region13
    $region12: #{image_encoder2.1} parent=1 // pred_region
      _
    $region13: #{image_encoder2.1} parent=1 // pred_fallthru
      _
    %v15 = vld [vmem:[%s0] sm:$0xff]
    %v16 = vld [vmem:[%s0 + $0x8] sm:$0xff]
    %v17 = vld [vmem:[%s0 + $0x10] sm:$0xff]
    %v18 = vld [vmem:[%s0 + $0x18] sm:$0xff]
    %v19 = vld [vmem:[%s1] sm:$0xff]
    %v20 = vld [vmem:[%s1 + $0x8] sm:$0xff]
    %v21 = vld [vmem:[%s1 + $0x10] sm:$0xff]
    %v22 = vld [vmem:[%s1 + $0x18] sm:$0xff]
    %v23 = vld [vmem:[%s1 + $0x20] sm:$0xff]
    %v24 = vld [vmem:[%s1 + $0x28] sm:$0xff]
    %v25 = vld [vmem:[%s1 + $0x30] sm:$0xff]
    %v26 = vld [vmem:[%s1 + $0x38] sm:$0xff]
    %v27 = vld [vmem:[%s1 + $0x40] sm:$0xff]
    %v28 = vld [vmem:[%s1 + $0x48] sm:$0xff]
    %v29 = vld [vmem:[%s1 + $0x50] sm:$0xff]
    %v30 = vld [vmem:[%s1 + $0x58] sm:$0xff]
    %v31 = vld [vmem:[%s1 + $0x60] sm:$0xff]
    %v32 = vld [vmem:[%s1 + $0x68] sm:$0xff]
    %v33 = vld [vmem:[%s1 + $0x70] sm:$0xff]
    %v34 = vld [vmem:[%s1 + $0x78] sm:$0xff]
    %v35 = vld [vmem:[%s1 + $0x80] sm:$0xff]
    %v36 = vld [vmem:[%s1 + $0x88] sm:$0xff]
    %v37 = vld [vmem:[%s1 + $0x90] sm:$0xff]
    %v38 = vld [vmem:[%s1 + $0x98] sm:$0xff]
    %v39 = vld [vmem:[%s1 + $0xa0] sm:$0xff]
    %v40 = vld [vmem:[%s1 + $0xa8] sm:$0xff]
    %v41 = vld [vmem:[%s1 + $0xb0] sm:$0xff]
    %v42 = vld [vmem:[%s1 + $0xb8] sm:$0xff]
    %v43 = vld [vmem:[%s1 + $0xc0] sm:$0xff]
    %v44 = vld [vmem:[%s1 + $0xc8] sm:$0xff]
    %v45 = vld [vmem:[%s1 + $0xd0] sm:$0xff]
    %v46 = vld [vmem:[%s1 + $0xd8] sm:$0xff]
    %v47 = vld [vmem:[%s1 + $0xe0] sm:$0xff]
    %v48 = vld [vmem:[%s1 + $0xe8] sm:$0xff]
    %v49 = vld [vmem:[%s1 + $0xf0] sm:$0xff]
    %v50 = vld [vmem:[%s1 + $0xf8] sm:$0xff]
    %v51 = vld [vmem:[%s1 + $0x100] sm:$0xff]
    %v52 = vld [vmem:[%s1 + $0x108] sm:$0xff]
    %v53 = vld [vmem:[%s1 + $0x110] sm:$0xff]
    %v54 = vld [vmem:[%s1 + $0x118] sm:$0xff]
    %v55 = vld [vmem:[%s1 + $0x120] sm:$0xff]
    %v56 = vld [vmem:[%s1 + $0x128] sm:$0xff]
    %v57 = vld [vmem:[%s1 + $0x130] sm:$0xff]
    %v58 = vld [vmem:[%s1 + $0x138] sm:$0xff]
    %v59 = vld [vmem:[%s1 + $0x140] sm:$0xff]
    %v60 = vld [vmem:[%s1 + $0x148] sm:$0xff]
    %v61 = vld [vmem:[%s1 + $0x150] sm:$0xff]
    %v62 = vld [vmem:[%s1 + $0x158] sm:$0xff]
    %v63 = vld [vmem:[%s1 + $0x160] sm:$0xff]
    %v64 = vld [vmem:[%s1 + $0x168] sm:$0xff]
    %v65 = vld [vmem:[%s1 + $0x170] sm:$0xff]
    %v66 = vld [vmem:[%s1 + $0x178] sm:$0xff]
    %v67 = vld [vmem:[%s1 + $0x180] sm:$0xff]
    %v68 = vld [vmem:[%s1 + $0x188] sm:$0xff]
    %v69 = vld [vmem:[%s1 + $0x190] sm:$0xff]
    %v70 = vld [vmem:[%s1 + $0x198] sm:$0xff]
    %v71 = vld [vmem:[%s1 + $0x1a0] sm:$0xff]
    %v72 = vld [vmem:[%s1 + $0x1a8] sm:$0xff]
    %v73 = vld [vmem:[%s1 + $0x1b0] sm:$0xff]
    %v74 = vld [vmem:[%s1 + $0x1b8] sm:$0xff]
    %v75 = vld [vmem:[%s1 + $0x1c0] sm:$0xff]
    %v76 = vld [vmem:[%s1 + $0x1c8] sm:$0xff]
    %v77 = vld [vmem:[%s1 + $0x1d0] sm:$0xff]
    %v78 = vld [vmem:[%s1 + $0x1d8] sm:$0xff]
    %v79 = vld [vmem:[%s1 + $0x1e0] sm:$0xff]
    %v80 = vld [vmem:[%s1 + $0x1e8] sm:$0xff]
    %v81 = vld [vmem:[%s1 + $0x1f0] sm:$0xff]
    %v82 = vld [vmem:[%s1 + $0x1f8] sm:$0xff]
    %v83 = vld [vmem:[%s1 + $0x200] sm:$0xff]
    %v84 = vld [vmem:[%s1 + $0x208] sm:$0xff]
    %v85 = vld [vmem:[%s1 + $0x210] sm:$0xff]
    %v86 = vld [vmem:[%s1 + $0x218] sm:$0xff]
    %v87 = vld [vmem:[%s1 + $0x220] sm:$0xff]
    %v88 = vld [vmem:[%s1 + $0x228] sm:$0xff]
    %v89 = vld [vmem:[%s1 + $0x230] sm:$0xff]
    %v90 = vld [vmem:[%s1 + $0x238] sm:$0xff]
    %v91 = vld [vmem:[%s1 + $0x240] sm:$0xff]
    %v92 = vld [vmem:[%s1 + $0x248] sm:$0xff]
    %v93 = vld [vmem:[%s1 + $0x250] sm:$0xff]
    %v94 = vld [vmem:[%s1 + $0x258] sm:$0xff]
    %v95 = vld [vmem:[%s1 + $0x260] sm:$0xff]
    %v96 = vld [vmem:[%s1 + $0x268] sm:$0xff]
    %v97 = vld [vmem:[%s1 + $0x270] sm:$0xff]
    %v98 = vld [vmem:[%s1 + $0x278] sm:$0xff]
    %v99 = vld [vmem:[%s1 + $0x280] sm:$0xff]
    %v100 = vld [vmem:[%s1 + $0x288] sm:$0xff]
    %v101 = vld [vmem:[%s1 + $0x290] sm:$0xff]
    %v102 = vld [vmem:[%s1 + $0x298] sm:$0xff]
    %v103 = vld [vmem:[%s1 + $0x2a0] sm:$0xff]
    %v104 = vld [vmem:[%s1 + $0x2a8] sm:$0xff]
    %v105 = vld [vmem:[%s1 + $0x2b0] sm:$0xff]
    %v106 = vld [vmem:[%s1 + $0x2b8] sm:$0xff]
    %v107 = vld [vmem:[%s1 + $0x2c0] sm:$0xff]
    %v108 = vld [vmem:[%s1 + $0x2c8] sm:$0xff]
    %v109 = vld [vmem:[%s1 + $0x2d0] sm:$0xff]
    %v110 = vld [vmem:[%s1 + $0x2d8] sm:$0xff]
    %v111 = vld [vmem:[%s1 + $0x2e0] sm:$0xff]
    %v112 = vld [vmem:[%s1 + $0x2e8] sm:$0xff]
    %v113 = vld [vmem:[%s1 + $0x2f0] sm:$0xff]
    %v114 = vld [vmem:[%s1 + $0x2f8] sm:$0xff]
    %v115 = vld [vmem:[%s1 + $0x300] sm:$0xff]
    %v116 = vld [vmem:[%s1 + $0x308] sm:$0xff]
    %v117 = vld [vmem:[%s1 + $0x310] sm:$0xff]
    %v118 = vld [vmem:[%s1 + $0x318] sm:$0xff]
    %v119 = vld [vmem:[%s1 + $0x320] sm:$0xff]
    %v120 = vld [vmem:[%s1 + $0x328] sm:$0xff]
    %v121 = vld [vmem:[%s1 + $0x330] sm:$0xff]
    %v122 = vld [vmem:[%s1 + $0x338] sm:$0xff]
    %v123 = vld [vmem:[%s1 + $0x340] sm:$0xff]
    %v124 = vld [vmem:[%s1 + $0x348] sm:$0xff]
    %v125 = vld [vmem:[%s1 + $0x350] sm:$0xff]
    %v126 = vld [vmem:[%s1 + $0x358] sm:$0xff]
    %v127 = vld [vmem:[%s1 + $0x360] sm:$0xff]
    %v128 = vld [vmem:[%s1 + $0x368] sm:$0xff]
    %v129 = vld [vmem:[%s1 + $0x370] sm:$0xff]
    %v130 = vld [vmem:[%s1 + $0x378] sm:$0xff]
    %v131 = vld [vmem:[%s1 + $0x380] sm:$0xff]
    %v132 = vld [vmem:[%s1 + $0x388] sm:$0xff]
    %v133 = vld [vmem:[%s1 + $0x390] sm:$0xff]
    %v134 = vld [vmem:[%s1 + $0x398] sm:$0xff]
    %v135 = vld [vmem:[%s1 + $0x3a0] sm:$0xff]
    %v136 = vld [vmem:[%s1 + $0x3a8] sm:$0xff]
    %v137 = vld [vmem:[%s1 + $0x3b0] sm:$0xff]
    %v138 = vld [vmem:[%s1 + $0x3b8] sm:$0xff]
    %v139 = vld [vmem:[%s1 + $0x3c0] sm:$0xff]
    %v140 = vld [vmem:[%s1 + $0x3c8] sm:$0xff]
    %v141 = vld [vmem:[%s1 + $0x3d0] sm:$0xff]
    %v142 = vld [vmem:[%s1 + $0x3d8] sm:$0xff]
    %v143 = vld [vmem:[%s1 + $0x3e0] sm:$0xff]
    %v144 = vld [vmem:[%s1 + $0x3e8] sm:$0xff]
    %v145 = vld [vmem:[%s1 + $0x3f0] sm:$0xff]
    %v146 = vld [vmem:[%s1 + $0x3f8] sm:$0xff]
    %v147 = vld [vmem:[%s1 + $0x400] sm:$0xff]
    %v148 = vld [vmem:[%s1 + $0x408] sm:$0xff]
    %v149 = vld [vmem:[%s1 + $0x410] sm:$0xff]
    %v150 = vld [vmem:[%s1 + $0x418] sm:$0xff]
    %v151 = vld [vmem:[%s1 + $0x420] sm:$0xff]
    %v152 = vld [vmem:[%s1 + $0x428] sm:$0xff]
    %v153 = vld [vmem:[%s1 + $0x430] sm:$0xff]
    %v154 = vld [vmem:[%s1 + $0x438] sm:$0xff]
    %v155 = vld [vmem:[%s1 + $0x440] sm:$0xff]
    %v156 = vld [vmem:[%s1 + $0x448] sm:$0xff]
    %v157 = vld [vmem:[%s1 + $0x450] sm:$0xff]
    %v158 = vld [vmem:[%s1 + $0x458] sm:$0xff]
    %v159 = vld [vmem:[%s1 + $0x460] sm:$0xff]
    %v160 = vld [vmem:[%s1 + $0x468] sm:$0xff]
    %v161 = vld [vmem:[%s1 + $0x470] sm:$0xff]
    %v162 = vld [vmem:[%s1 + $0x478] sm:$0xff]
    %v163 = vld [vmem:[%s1 + $0x480] sm:$0xff]
    %v164 = vld [vmem:[%s1 + $0x488] sm:$0xff]
    %v165 = vld [vmem:[%s1 + $0x490] sm:$0xff]
    %v166 = vld [vmem:[%s1 + $0x498] sm:$0xff]
    %v167 = vld [vmem:[%s1 + $0x4a0] sm:$0xff]
    %v168 = vld [vmem:[%s1 + $0x4a8] sm:$0xff]
    %v169 = vld [vmem:[%s1 + $0x4b0] sm:$0xff]
    %v170 = vld [vmem:[%s1 + $0x4b8] sm:$0xff]
    %v171 = vld [vmem:[%s1 + $0x4c0] sm:$0xff]
    %v172 = vld [vmem:[%s1 + $0x4c8] sm:$0xff]
    %v173 = vld [vmem:[%s1 + $0x4d0] sm:$0xff]
    %v174 = vld [vmem:[%s1 + $0x4d8] sm:$0xff]
    %v175 = vld [vmem:[%s1 + $0x4e0] sm:$0xff]
    %v176 = vld [vmem:[%s1 + $0x4e8] sm:$0xff]
    %v177 = vld [vmem:[%s1 + $0x4f0] sm:$0xff]
    %v178 = vld [vmem:[%s1 + $0x4f8] sm:$0xff]
    %v179 = vld [vmem:[%s1 + $0x500] sm:$0xff]
    %v180 = vld [vmem:[%s1 + $0x508] sm:$0xff]
    %v181 = vld [vmem:[%s1 + $0x510] sm:$0xff]
    %v182 = vld [vmem:[%s1 + $0x518] sm:$0xff]
    %v183 = vld [vmem:[%s1 + $0x520] sm:$0xff]
    %v184 = vld [vmem:[%s1 + $0x528] sm:$0xff]
    %v185 = vld [vmem:[%s1 + $0x530] sm:$0xff]
    %v186 = vld [vmem:[%s1 + $0x538] sm:$0xff]
    %v187 = vld [vmem:[%s1 + $0x540] sm:$0xff]
    %v188 = vld [vmem:[%s1 + $0x548] sm:$0xff]
    %v189 = vld [vmem:[%s1 + $0x550] sm:$0xff]
    %v190 = vld [vmem:[%s1 + $0x558] sm:$0xff]
    %v191 = vld [vmem:[%s1 + $0x560] sm:$0xff]
    %v192 = vld [vmem:[%s1 + $0x568] sm:$0xff]
    %v193 = vld [vmem:[%s1 + $0x570] sm:$0xff]
    %v194 = vld [vmem:[%s1 + $0x578] sm:$0xff]
    %v195 = vld [vmem:[%s1 + $0x580] sm:$0xff]
    %v196 = vld [vmem:[%s1 + $0x588] sm:$0xff]
    %v197 = vld [vmem:[%s1 + $0x590] sm:$0xff]
    %v198 = vld [vmem:[%s1 + $0x598] sm:$0xff]
    %v199 = vld [vmem:[%s1 + $0x5a0] sm:$0xff]
    %v200 = vld [vmem:[%s1 + $0x5a8] sm:$0xff]
    %v201 = vld [vmem:[%s1 + $0x5b0] sm:$0xff]
    %v202 = vld [vmem:[%s1 + $0x5b8] sm:$0xff]
    %v203 = vld [vmem:[%s1 + $0x5c0] sm:$0xff]
    %v204 = vld [vmem:[%s1 + $0x5c8] sm:$0xff]
    %v205 = vld [vmem:[%s1 + $0x5d0] sm:$0xff]
    %v206 = vld [vmem:[%s1 + $0x5d8] sm:$0xff]
    %v207 = vld [vmem:[%s1 + $0x5e0] sm:$0xff]
    %v208 = vld [vmem:[%s1 + $0x5e8] sm:$0xff]
    %v209 = vld [vmem:[%s1 + $0x5f0] sm:$0xff]
    %v210 = vld [vmem:[%s1 + $0x5f8] sm:$0xff]
    %v211 = vld [vmem:[%s1 + $0x600] sm:$0xff]
    %v212 = vld [vmem:[%s1 + $0x608] sm:$0xff]
    %v213 = vld [vmem:[%s1 + $0x610] sm:$0xff]
    %v214 = vld [vmem:[%s1 + $0x618] sm:$0xff]
    %v215 = vld [vmem:[%s1 + $0x620] sm:$0xff]
    %v216 = vld [vmem:[%s1 + $0x628] sm:$0xff]
    %v217 = vld [vmem:[%s1 + $0x630] sm:$0xff]
    %v218 = vld [vmem:[%s1 + $0x638] sm:$0xff]
    %v219 = vld [vmem:[%s1 + $0x640] sm:$0xff]
    %v220 = vld [vmem:[%s1 + $0x648] sm:$0xff]
    %v221 = vld [vmem:[%s1 + $0x650] sm:$0xff]
    %v222 = vld [vmem:[%s1 + $0x658] sm:$0xff]
    %v223 = vld [vmem:[%s1 + $0x660] sm:$0xff]
    %v224 = vld [vmem:[%s1 + $0x668] sm:$0xff]
    %v225 = vld [vmem:[%s1 + $0x670] sm:$0xff]
    %v226 = vld [vmem:[%s1 + $0x678] sm:$0xff]
    %v227 = vld [vmem:[%s1 + $0x680] sm:$0xff]
    %v228 = vld [vmem:[%s1 + $0x688] sm:$0xff]
    %v229 = vld [vmem:[%s1 + $0x690] sm:$0xff]
    %v230 = vld [vmem:[%s1 + $0x698] sm:$0xff]
    %v231 = vld [vmem:[%s1 + $0x6a0] sm:$0xff]
    %v232 = vld [vmem:[%s1 + $0x6a8] sm:$0xff]
    %v233 = vld [vmem:[%s1 + $0x6b0] sm:$0xff]
    %v234 = vld [vmem:[%s1 + $0x6b8] sm:$0xff]
    %v235 = vld [vmem:[%s1 + $0x6c0] sm:$0xff]
    %v236 = vld [vmem:[%s1 + $0x6c8] sm:$0xff]
    %v237 = vld [vmem:[%s1 + $0x6d0] sm:$0xff]
    %v238 = vld [vmem:[%s1 + $0x6d8] sm:$0xff]
    %v239 = vld [vmem:[%s1 + $0x6e0] sm:$0xff]
    %v240 = vld [vmem:[%s1 + $0x6e8] sm:$0xff]
    %v241 = vld [vmem:[%s1 + $0x6f0] sm:$0xff]
    %v242 = vld [vmem:[%s1 + $0x6f8] sm:$0xff]
    %v243 = vld [vmem:[%s1 + $0x700] sm:$0xff]
    %v244 = vld [vmem:[%s1 + $0x708] sm:$0xff]
    %v245 = vld [vmem:[%s1 + $0x710] sm:$0xff]
    %v246 = vld [vmem:[%s1 + $0x718] sm:$0xff]
    %v247 = vld [vmem:[%s1 + $0x720] sm:$0xff]
    %v248 = vld [vmem:[%s1 + $0x728] sm:$0xff]
    %v249 = vld [vmem:[%s1 + $0x730] sm:$0xff]
    %v250 = vld [vmem:[%s1 + $0x738] sm:$0xff]
    %v251 = vld [vmem:[%s1 + $0x740] sm:$0xff]
    %v252 = vld [vmem:[%s1 + $0x748] sm:$0xff]
    %v253 = vld [vmem:[%s1 + $0x750] sm:$0xff]
    %v254 = vld [vmem:[%s1 + $0x758] sm:$0xff]
    %v255 = vld [vmem:[%s1 + $0x760] sm:$0xff]
    %v256 = vld [vmem:[%s1 + $0x768] sm:$0xff]
    %v257 = vld [vmem:[%s1 + $0x770] sm:$0xff]
    %v258 = vld [vmem:[%s1 + $0x778] sm:$0xff]
    %v259 = vld [vmem:[%s1 + $0x780] sm:$0xff]
    %v260 = vld [vmem:[%s1 + $0x788] sm:$0xff]
    %v261 = vld [vmem:[%s1 + $0x790] sm:$0xff]
    %v262 = vld [vmem:[%s1 + $0x798] sm:$0xff]
    %v263 = vld [vmem:[%s1 + $0x7a0] sm:$0xff]
    %v264 = vld [vmem:[%s1 + $0x7a8] sm:$0xff]
    %v265 = vld [vmem:[%s1 + $0x7b0] sm:$0xff]
    %v266 = vld [vmem:[%s1 + $0x7b8] sm:$0xff]
    %v267 = vld [vmem:[%s1 + $0x7c0] sm:$0xff]
    %v268 = vld [vmem:[%s1 + $0x7c8] sm:$0xff]
    %v269 = vld [vmem:[%s1 + $0x7d0] sm:$0xff]
    %v270 = vld [vmem:[%s1 + $0x7d8] sm:$0xff]
    %v271 = vld [vmem:[%s1 + $0x7e0] sm:$0xff]
    %v272 = vld [vmem:[%s1 + $0x7e8] sm:$0xff]
    %v273 = vld [vmem:[%s1 + $0x7f0] sm:$0xff]
    %v274 = vld [vmem:[%s1 + $0x7f8] sm:$0xff]
    %v275 = vld [vmem:[%s2] sm:$0xf]
    %v277 = vperm.slane %v275, 0
    %v278 = vperm.slane %v275, 1
    %v279 = vperm.slane %v275, 2
    %v280 = vperm.slane %v275, 3
    %v285 = vand.u32 %v79, 4294901760
    %286 = vmatpush.msra.mxu0 %v285
    %v287 = vand.u32 %v75, 4294901760
    %288 = vmatpush.msra.mxu0 %v287
    %v289 = vand.u32 %v71, 4294901760
    %290 = vmatpush.msra.mxu0 %v289
    %v291 = vand.u32 %v67, 4294901760
    %292 = vmatpush.msra.mxu0 %v291
    %v293 = vand.u32 %v63, 4294901760
    %294 = vmatpush.msra.mxu0 %v293
    %v295 = vand.u32 %v59, 4294901760
    %296 = vmatpush.msra.mxu0 %v295
    %v297 = vand.u32 %v55, 4294901760
    %298 = vmatpush.msra.mxu0 %v297
    %v299 = vand.u32 %v51, 4294901760
    %300 = vmatpush.msra.mxu0 %v299
    %v301 = vand.u32 %v47, 4294901760
    %302 = vmatpush.msra.mxu0 %v301
    %v303 = vand.u32 %v43, 4294901760
    %304 = vmatpush.msra.mxu0 %v303
    %v305 = vand.u32 %v39, 4294901760
    %306 = vmatpush.msra.mxu0 %v305
    %v307 = vand.u32 %v35, 4294901760
    %308 = vmatpush.msra.mxu0 %v307
    %v309 = vand.u32 %v31, 4294901760
    %310 = vmatpush.msra.mxu0 %v309
    %v311 = vand.u32 %v27, 4294901760
    %312 = vmatpush.msra.mxu0 %v311
    %v313 = vand.u32 %v23, 4294901760
    %314 = vmatpush.msra.mxu0 %v313
    %v315 = vand.u32 %v19, 4294901760
    %316 = vmatpush.msra.mxu0 %v315
    %v317 = vand.u32 %v15, 4294901760
    %v318 = vsub.f32 %v15, %v317
    %v319 = vand.u32 %v318, 4294901760
    %v320 = vsub.f32 %v318, %v319
    %v321 = vand.u32 %v320, 4294901760
    %322 = vmatmul.f32.gmra.mxu0 %v321
    %v323 = vpop.f32.mrf.mxu0
    %v324 = vadd.f32 %v277, %v323
    %325 = vdwg.mxu0
    %v326 = vand.u32 %v79, 4294901760
    %v327 = vsub.f32 %v79, %v326
    %v328 = vand.u32 %v327, 4294901760
    %v329 = vsub.f32 %v327, %v328
    %v330 = vand.u32 %v329, 4294901760
    %331 = vmatpush.msra.mxu0 %v330
    %v332 = vand.u32 %v75, 4294901760
    %v333 = vsub.f32 %v75, %v332
    %v334 = vand.u32 %v333, 4294901760
    %v335 = vsub.f32 %v333, %v334
    %v336 = vand.u32 %v335, 4294901760
    %337 = vmatpush.msra.mxu0 %v336
    %v338 = vand.u32 %v71, 4294901760
    %v339 = vsub.f32 %v71, %v338
    %v340 = vand.u32 %v339, 4294901760
    %v341 = vsub.f32 %v339, %v340
    %v342 = vand.u32 %v341, 4294901760
    %343 = vmatpush.msra.mxu0 %v342
    %v344 = vand.u32 %v67, 4294901760
    %v345 = vsub.f32 %v67, %v344
    %v346 = vand.u32 %v345, 4294901760
    %v347 = vsub.f32 %v345, %v346
    %v348 = vand.u32 %v347, 4294901760
    %349 = vmatpush.msra.mxu0 %v348
    %v350 = vand.u32 %v63, 4294901760
    %v351 = vsub.f32 %v63, %v350
    %v352 = vand.u32 %v351, 4294901760
    %v353 = vsub.f32 %v351, %v352
    %v354 = vand.u32 %v353, 4294901760
    %355 = vmatpush.msra.mxu0 %v354
    %v356 = vand.u32 %v59, 4294901760
    %v357 = vsub.f32 %v59, %v356
    %v358 = vand.u32 %v357, 4294901760
    %v359 = vsub.f32 %v357, %v358
    %v360 = vand.u32 %v359, 4294901760
    %361 = vmatpush.msra.mxu0 %v360
    %v362 = vand.u32 %v55, 4294901760
    %v363 = vsub.f32 %v55, %v362
    %v364 = vand.u32 %v363, 4294901760
    %v365 = vsub.f32 %v363, %v364
    %v366 = vand.u32 %v365, 4294901760
    %367 = vmatpush.msra.mxu0 %v366
    %v368 = vand.u32 %v51, 4294901760
    %v369 = vsub.f32 %v51, %v368
    %v370 = vand.u32 %v369, 4294901760
    %v371 = vsub.f32 %v369, %v370
    %v372 = vand.u32 %v371, 4294901760
    %373 = vmatpush.msra.mxu0 %v372
    %v374 = vand.u32 %v47, 4294901760
    %v375 = vsub.f32 %v47, %v374
    %v376 = vand.u32 %v375, 4294901760
    %v377 = vsub.f32 %v375, %v376
    %v378 = vand.u32 %v377, 4294901760
    %379 = vmatpush.msra.mxu0 %v378
    %v380 = vand.u32 %v43, 4294901760
    %v381 = vsub.f32 %v43, %v380
    %v382 = vand.u32 %v381, 4294901760
    %v383 = vsub.f32 %v381, %v382
    %v384 = vand.u32 %v383, 4294901760
    %385 = vmatpush.msra.mxu0 %v384
    %v386 = vand.u32 %v39, 4294901760
    %v387 = vsub.f32 %v39, %v386
    %v388 = vand.u32 %v387, 4294901760
    %v389 = vsub.f32 %v387, %v388
    %v390 = vand.u32 %v389, 4294901760
    %391 = vmatpush.msra.mxu0 %v390
    %v392 = vand.u32 %v35, 4294901760
    %v393 = vsub.f32 %v35, %v392
    %v394 = vand.u32 %v393, 4294901760
    %v395 = vsub.f32 %v393, %v394
    %v396 = vand.u32 %v395, 4294901760
    %397 = vmatpush.msra.mxu0 %v396
    %v398 = vand.u32 %v31, 4294901760
    %v399 = vsub.f32 %v31, %v398
    %v400 = vand.u32 %v399, 4294901760
    %v401 = vsub.f32 %v399, %v400
    %v402 = vand.u32 %v401, 4294901760
    %403 = vmatpush.msra.mxu0 %v402
    %v404 = vand.u32 %v27, 4294901760
    %v405 = vsub.f32 %v27, %v404
    %v406 = vand.u32 %v405, 4294901760
    %v407 = vsub.f32 %v405, %v406
    %v408 = vand.u32 %v407, 4294901760
    %409 = vmatpush.msra.mxu0 %v408
    %v410 = vand.u32 %v23, 4294901760
    %v411 = vsub.f32 %v23, %v410
    %v412 = vand.u32 %v411, 4294901760
    %v413 = vsub.f32 %v411, %v412
    %v414 = vand.u32 %v413, 4294901760
    %415 = vmatpush.msra.mxu0 %v414
    %v416 = vand.u32 %v19, 4294901760
    %v417 = vsub.f32 %v19, %v416
    %v418 = vand.u32 %v417, 4294901760
    %v419 = vsub.f32 %v417, %v418
    %v420 = vand.u32 %v419, 4294901760
    %421 = vmatpush.msra.mxu0 %v420
    %v422 = vand.u32 %v15, 4294901760
    %423 = vmatmul.f32.gmra.mxu0 %v422
    %v424 = vpop.f32.mrf.mxu0
    %v425 = vadd.f32 %v324, %v424
    %426 = vdwg.mxu0
    %v427 = vand.u32 %v79, 4294901760
    %v428 = vsub.f32 %v79, %v427
    %429 = vmatpush.msra.mxu0 %v428
    %v430 = vand.u32 %v75, 4294901760
    %v431 = vsub.f32 %v75, %v430
    %432 = vmatpush.msra.mxu0 %v431
    %v433 = vand.u32 %v71, 4294901760
    %v434 = vsub.f32 %v71, %v433
    %435 = vmatpush.msra.mxu0 %v434
    %v436 = vand.u32 %v67, 4294901760
    %v437 = vsub.f32 %v67, %v436
    %438 = vmatpush.msra.mxu0 %v437
    %v439 = vand.u32 %v63, 4294901760
    %v440 = vsub.f32 %v63, %v439
    %441 = vmatpush.msra.mxu0 %v440
    %v442 = vand.u32 %v59, 4294901760
    %v443 = vsub.f32 %v59, %v442
    %444 = vmatpush.msra.mxu0 %v443
    %v445 = vand.u32 %v55, 4294901760
    %v446 = vsub.f32 %v55, %v445
    %447 = vmatpush.msra.mxu0 %v446
    %v448 = vand.u32 %v51, 4294901760
    %v449 = vsub.f32 %v51, %v448
    %450 = vmatpush.msra.mxu0 %v449
    %v451 = vand.u32 %v47, 4294901760
    %v452 = vsub.f32 %v47, %v451
    %453 = vmatpush.msra.mxu0 %v452
    %v454 = vand.u32 %v43, 4294901760
    %v455 = vsub.f32 %v43, %v454
    %456 = vmatpush.msra.mxu0 %v455
    %v457 = vand.u32 %v39, 4294901760
    %v458 = vsub.f32 %v39, %v457
    %459 = vmatpush.msra.mxu0 %v458
    %v460 = vand.u32 %v35, 4294901760
    %v461 = vsub.f32 %v35, %v460
    %462 = vmatpush.msra.mxu0 %v461
    %v463 = vand.u32 %v31, 4294901760
    %v464 = vsub.f32 %v31, %v463
    %465 = vmatpush.msra.mxu0 %v464
    %v466 = vand.u32 %v27, 4294901760
    %v467 = vsub.f32 %v27, %v466
    %468 = vmatpush.msra.mxu0 %v467
    %v469 = vand.u32 %v23, 4294901760
    %v470 = vsub.f32 %v23, %v469
    %471 = vmatpush.msra.mxu0 %v470
    %v472 = vand.u32 %v19, 4294901760
    %v473 = vsub.f32 %v19, %v472
    %474 = vmatpush.msra.mxu0 %v473
    %v475 = vand.u32 %v15, 4294901760
    %v476 = vsub.f32 %v15, %v475
    %477 = vmatmul.f32.gmra.mxu0 %v476
    %v478 = vpop.f32.mrf.mxu0
    %v479 = vadd.f32 %v425, %v478
    %480 = vdwg.mxu0
    %v481 = vand.u32 %v79, 4294901760
    %482 = vmatpush.msra.mxu0 %v481
    %v483 = vand.u32 %v75, 4294901760
    %484 = vmatpush.msra.mxu0 %v483
    %v485 = vand.u32 %v71, 4294901760
    %486 = vmatpush.msra.mxu0 %v485
    %v487 = vand.u32 %v67, 4294901760
    %488 = vmatpush.msra.mxu0 %v487
    %v489 = vand.u32 %v63, 4294901760
    %490 = vmatpush.msra.mxu0 %v489
    %v491 = vand.u32 %v59, 4294901760
    %492 = vmatpush.msra.mxu0 %v491
    %v493 = vand.u32 %v55, 4294901760
    %494 = vmatpush.msra.mxu0 %v493
    %v495 = vand.u32 %v51, 4294901760
    %496 = vmatpush.msra.mxu0 %v495
    %v497 = vand.u32 %v47, 4294901760
    %498 = vmatpush.msra.mxu0 %v497
    %v499 = vand.u32 %v43, 4294901760
    %500 = vmatpush.msra.mxu0 %v499
    %v501 = vand.u32 %v39, 4294901760
    %502 = vmatpush.msra.mxu0 %v501
    %v503 = vand.u32 %v35, 4294901760
    %504 = vmatpush.msra.mxu0 %v503
    %v505 = vand.u32 %v31, 4294901760
    %506 = vmatpush.msra.mxu0 %v505
    %v507 = vand.u32 %v27, 4294901760
    %508 = vmatpush.msra.mxu0 %v507
    %v509 = vand.u32 %v23, 4294901760
    %510 = vmatpush.msra.mxu0 %v509
    %v511 = vand.u32 %v19, 4294901760
    %512 = vmatpush.msra.mxu0 %v511
    %v513 = vand.u32 %v15, 4294901760
    %v514 = vsub.f32 %v15, %v513
    %v515 = vand.u32 %v514, 4294901760
    %516 = vmatmul.f32.gmra.mxu0 %v515
    %v517 = vpop.f32.mrf.mxu0
    %v518 = vadd.f32 %v479, %v517
    %519 = vdwg.mxu0
    %v520 = vand.u32 %v79, 4294901760
    %v521 = vsub.f32 %v79, %v520
    %v522 = vand.u32 %v521, 4294901760
    %523 = vmatpush.msra.mxu0 %v522
    %v524 = vand.u32 %v75, 4294901760
    %v525 = vsub.f32 %v75, %v524
    %v526 = vand.u32 %v525, 4294901760
    %527 = vmatpush.msra.mxu0 %v526
    %v528 = vand.u32 %v71, 4294901760
    %v529 = vsub.f32 %v71, %v528
    %v530 = vand.u32 %v529, 4294901760
    %531 = vmatpush.msra.mxu0 %v530
    %v532 = vand.u32 %v67, 4294901760
    %v533 = vsub.f32 %v67, %v532
    %v534 = vand.u32 %v533, 4294901760
    %535 = vmatpush.msra.mxu0 %v534
    %v536 = vand.u32 %v63, 4294901760
    %v537 = vsub.f32 %v63, %v536
    %v538 = vand.u32 %v537, 4294901760
    %539 = vmatpush.msra.mxu0 %v538
    %v540 = vand.u32 %v59, 4294901760
    %v541 = vsub.f32 %v59, %v540
    %v542 = vand.u32 %v541, 4294901760
    %543 = vmatpush.msra.mxu0 %v542
    %v544 = vand.u32 %v55, 4294901760
    %v545 = vsub.f32 %v55, %v544
    %v546 = vand.u32 %v545, 4294901760
    %547 = vmatpush.msra.mxu0 %v546
    %v548 = vand.u32 %v51, 4294901760
    %v549 = vsub.f32 %v51, %v548
    %v550 = vand.u32 %v549, 4294901760
    %551 = vmatpush.msra.mxu0 %v550
    %v552 = vand.u32 %v47, 4294901760
    %v553 = vsub.f32 %v47, %v552
    %v554 = vand.u32 %v553, 4294901760
    %555 = vmatpush.msra.mxu0 %v554
    %v556 = vand.u32 %v43, 4294901760
    %v557 = vsub.f32 %v43, %v556
    %v558 = vand.u32 %v557, 4294901760
    %559 = vmatpush.msra.mxu0 %v558
    %v560 = vand.u32 %v39, 4294901760
    %v561 = vsub.f32 %v39, %v560
    %v562 = vand.u32 %v561, 4294901760
    %563 = vmatpush.msra.mxu0 %v562
    %v564 = vand.u32 %v35, 4294901760
    %v565 = vsub.f32 %v35, %v564
    %v566 = vand.u32 %v565, 4294901760
    %567 = vmatpush.msra.mxu0 %v566
    %v568 = vand.u32 %v31, 4294901760
    %v569 = vsub.f32 %v31, %v568
    %v570 = vand.u32 %v569, 4294901760
    %571 = vmatpush.msra.mxu0 %v570
    %v572 = vand.u32 %v27, 4294901760
    %v573 = vsub.f32 %v27, %v572
    %v574 = vand.u32 %v573, 4294901760
    %575 = vmatpush.msra.mxu0 %v574
    %v576 = vand.u32 %v23, 4294901760
    %v577 = vsub.f32 %v23, %v576
    %v578 = vand.u32 %v577, 4294901760
    %579 = vmatpush.msra.mxu0 %v578
    %v580 = vand.u32 %v19, 4294901760
    %v581 = vsub.f32 %v19, %v580
    %v582 = vand.u32 %v581, 4294901760
    %583 = vmatpush.msra.mxu0 %v582
    %v584 = vand.u32 %v15, 4294901760
    %585 = vmatmul.f32.gmra.mxu0 %v584
    %v586 = vpop.f32.mrf.mxu0
    %v587 = vadd.f32 %v518, %v586
    %588 = vdwg.mxu0
    %v589 = vand.u32 %v79, 4294901760
    %590 = vmatpush.msra.mxu0 %v589
    %v591 = vand.u32 %v75, 4294901760
    %592 = vmatpush.msra.mxu0 %v591
    %v593 = vand.u32 %v71, 4294901760
    %594 = vmatpush.msra.mxu0 %v593
    %v595 = vand.u32 %v67, 4294901760
    %596 = vmatpush.msra.mxu0 %v595
    %v597 = vand.u32 %v63, 4294901760
    %598 = vmatpush.msra.mxu0 %v597
    %v599 = vand.u32 %v59, 4294901760
    %600 = vmatpush.msra.mxu0 %v599
    %v601 = vand.u32 %v55, 4294901760
    %602 = vmatpush.msra.mxu0 %v601
    %v603 = vand.u32 %v51, 4294901760
    %604 = vmatpush.msra.mxu0 %v603
    %v605 = vand.u32 %v47, 4294901760
    %606 = vmatpush.msra.mxu0 %v605
    %v607 = vand.u32 %v43, 4294901760
    %608 = vmatpush.msra.mxu0 %v607
    %v609 = vand.u32 %v39, 4294901760
    %610 = vmatpush.msra.mxu0 %v609
    %v611 = vand.u32 %v35, 4294901760
    %612 = vmatpush.msra.mxu0 %v611
    %v613 = vand.u32 %v31, 4294901760
    %614 = vmatpush.msra.mxu0 %v613
    %v615 = vand.u32 %v27, 4294901760
    %616 = vmatpush.msra.mxu0 %v615
    %v617 = vand.u32 %v23, 4294901760
    %618 = vmatpush.msra.mxu0 %v617
    %v619 = vand.u32 %v19, 4294901760
    %620 = vmatpush.msra.mxu0 %v619
    %v621 = vand.u32 %v15, 4294901760
    %622 = vmatmul.f32.gmra.mxu0 %v621
    %v623 = vpop.f32.mrf.mxu0
    %v624 = vadd.f32 %v587, %v623
    %625 = vdwg.mxu0
    %v626 = vand.u32 %v143, 4294901760
    %627 = vmatpush.msra.mxu0 %v626
    %v628 = vand.u32 %v139, 4294901760
    %629 = vmatpush.msra.mxu0 %v628
    %v630 = vand.u32 %v135, 4294901760
    %631 = vmatpush.msra.mxu0 %v630
    %v632 = vand.u32 %v131, 4294901760
    %633 = vmatpush.msra.mxu0 %v632
    %v634 = vand.u32 %v127, 4294901760
    %635 = vmatpush.msra.mxu0 %v634
    %v636 = vand.u32 %v123, 4294901760
    %637 = vmatpush.msra.mxu0 %v636
    %v638 = vand.u32 %v119, 4294901760
    %639 = vmatpush.msra.mxu0 %v638
    %v640 = vand.u32 %v115, 4294901760
    %641 = vmatpush.msra.mxu0 %v640
    %v642 = vand.u32 %v111, 4294901760
    %643 = vmatpush.msra.mxu0 %v642
    %v644 = vand.u32 %v107, 4294901760
    %645 = vmatpush.msra.mxu0 %v644
    %v646 = vand.u32 %v103, 4294901760
    %647 = vmatpush.msra.mxu0 %v646
    %v648 = vand.u32 %v99, 4294901760
    %649 = vmatpush.msra.mxu0 %v648
    %v650 = vand.u32 %v95, 4294901760
    %651 = vmatpush.msra.mxu0 %v650
    %v652 = vand.u32 %v91, 4294901760
    %653 = vmatpush.msra.mxu0 %v652
    %v654 = vand.u32 %v87, 4294901760
    %655 = vmatpush.msra.mxu0 %v654
    %v656 = vand.u32 %v83, 4294901760
    %657 = vmatpush.msra.mxu0 %v656
    %v658 = vand.u32 %v16, 4294901760
    %v659 = vsub.f32 %v16, %v658
    %v660 = vand.u32 %v659, 4294901760
    %v661 = vsub.f32 %v659, %v660
    %v662 = vand.u32 %v661, 4294901760
    %663 = vmatmul.f32.gmra.mxu0 %v662
    %v664 = vpop.f32.mrf.mxu0
    %v665 = vadd.f32 %v624, %v664
    %666 = vdwg.mxu0
    %v667 = vand.u32 %v143, 4294901760
    %v668 = vsub.f32 %v143, %v667
    %v669 = vand.u32 %v668, 4294901760
    %v670 = vsub.f32 %v668, %v669
    %v671 = vand.u32 %v670, 4294901760
    %672 = vmatpush.msra.mxu0 %v671
    %v673 = vand.u32 %v139, 4294901760
    %v674 = vsub.f32 %v139, %v673
    %v675 = vand.u32 %v674, 4294901760
    %v676 = vsub.f32 %v674, %v675
    %v677 = vand.u32 %v676, 4294901760
    %678 = vmatpush.msra.mxu0 %v677
    %v679 = vand.u32 %v135, 4294901760
    %v680 = vsub.f32 %v135, %v679
    %v681 = vand.u32 %v680, 4294901760
    %v682 = vsub.f32 %v680, %v681
    %v683 = vand.u32 %v682, 4294901760
    %684 = vmatpush.msra.mxu0 %v683
    %v685 = vand.u32 %v131, 4294901760
    %v686 = vsub.f32 %v131, %v685
    %v687 = vand.u32 %v686, 4294901760
    %v688 = vsub.f32 %v686, %v687
    %v689 = vand.u32 %v688, 4294901760
    %690 = vmatpush.msra.mxu0 %v689
    %v691 = vand.u32 %v127, 4294901760
    %v692 = vsub.f32 %v127, %v691
    %v693 = vand.u32 %v692, 4294901760
    %v694 = vsub.f32 %v692, %v693
    %v695 = vand.u32 %v694, 4294901760
    %696 = vmatpush.msra.mxu0 %v695
    %v697 = vand.u32 %v123, 4294901760
    %v698 = vsub.f32 %v123, %v697
    %v699 = vand.u32 %v698, 4294901760
    %v700 = vsub.f32 %v698, %v699
    %v701 = vand.u32 %v700, 4294901760
    %702 = vmatpush.msra.mxu0 %v701
    %v703 = vand.u32 %v119, 4294901760
    %v704 = vsub.f32 %v119, %v703
    %v705 = vand.u32 %v704, 4294901760
    %v706 = vsub.f32 %v704, %v705
    %v707 = vand.u32 %v706, 4294901760
    %708 = vmatpush.msra.mxu0 %v707
    %v709 = vand.u32 %v115, 4294901760
    %v710 = vsub.f32 %v115, %v709
    %v711 = vand.u32 %v710, 4294901760
    %v712 = vsub.f32 %v710, %v711
    %v713 = vand.u32 %v712, 4294901760
    %714 = vmatpush.msra.mxu0 %v713
    %v715 = vand.u32 %v111, 4294901760
    %v716 = vsub.f32 %v111, %v715
    %v717 = vand.u32 %v716, 4294901760
    %v718 = vsub.f32 %v716, %v717
    %v719 = vand.u32 %v718, 4294901760
    %720 = vmatpush.msra.mxu0 %v719
    %v721 = vand.u32 %v107, 4294901760
    %v722 = vsub.f32 %v107, %v721
    %v723 = vand.u32 %v722, 4294901760
    %v724 = vsub.f32 %v722, %v723
    %v725 = vand.u32 %v724, 4294901760
    %726 = vmatpush.msra.mxu0 %v725
    %v727 = vand.u32 %v103, 4294901760
    %v728 = vsub.f32 %v103, %v727
    %v729 = vand.u32 %v728, 4294901760
    %v730 = vsub.f32 %v728, %v729
    %v731 = vand.u32 %v730, 4294901760
    %732 = vmatpush.msra.mxu0 %v731
    %v733 = vand.u32 %v99, 4294901760
    %v734 = vsub.f32 %v99, %v733
    %v735 = vand.u32 %v734, 4294901760
    %v736 = vsub.f32 %v734, %v735
    %v737 = vand.u32 %v736, 4294901760
    %738 = vmatpush.msra.mxu0 %v737
    %v739 = vand.u32 %v95, 4294901760
    %v740 = vsub.f32 %v95, %v739
    %v741 = vand.u32 %v740, 4294901760
    %v742 = vsub.f32 %v740, %v741
    %v743 = vand.u32 %v742, 4294901760
    %744 = vmatpush.msra.mxu0 %v743
    %v745 = vand.u32 %v91, 4294901760
    %v746 = vsub.f32 %v91, %v745
    %v747 = vand.u32 %v746, 4294901760
    %v748 = vsub.f32 %v746, %v747
    %v749 = vand.u32 %v748, 4294901760
    %750 = vmatpush.msra.mxu0 %v749
    %v751 = vand.u32 %v87, 4294901760
    %v752 = vsub.f32 %v87, %v751
    %v753 = vand.u32 %v752, 4294901760
    %v754 = vsub.f32 %v752, %v753
    %v755 = vand.u32 %v754, 4294901760
    %756 = vmatpush.msra.mxu0 %v755
    %v757 = vand.u32 %v83, 4294901760
    %v758 = vsub.f32 %v83, %v757
    %v759 = vand.u32 %v758, 4294901760
    %v760 = vsub.f32 %v758, %v759
    %v761 = vand.u32 %v760, 4294901760
    %762 = vmatpush.msra.mxu0 %v761
    %v763 = vand.u32 %v16, 4294901760
    %764 = vmatmul.f32.gmra.mxu0 %v763
    %v765 = vpop.f32.mrf.mxu0
    %v766 = vadd.f32 %v665, %v765
    %767 = vdwg.mxu0
    %v768 = vand.u32 %v143, 4294901760
    %v769 = vsub.f32 %v143, %v768
    %770 = vmatpush.msra.mxu0 %v769
    %v771 = vand.u32 %v139, 4294901760
    %v772 = vsub.f32 %v139, %v771
    %773 = vmatpush.msra.mxu0 %v772
    %v774 = vand.u32 %v135, 4294901760
    %v775 = vsub.f32 %v135, %v774
    %776 = vmatpush.msra.mxu0 %v775
    %v777 = vand.u32 %v131, 4294901760
    %v778 = vsub.f32 %v131, %v777
    %779 = vmatpush.msra.mxu0 %v778
    %v780 = vand.u32 %v127, 4294901760
    %v781 = vsub.f32 %v127, %v780
    %782 = vmatpush.msra.mxu0 %v781
    %v783 = vand.u32 %v123, 4294901760
    %v784 = vsub.f32 %v123, %v783
    %785 = vmatpush.msra.mxu0 %v784
    %v786 = vand.u32 %v119, 4294901760
    %v787 = vsub.f32 %v119, %v786
    %788 = vmatpush.msra.mxu0 %v787
    %v789 = vand.u32 %v115, 4294901760
    %v790 = vsub.f32 %v115, %v789
    %791 = vmatpush.msra.mxu0 %v790
    %v792 = vand.u32 %v111, 4294901760
    %v793 = vsub.f32 %v111, %v792
    %794 = vmatpush.msra.mxu0 %v793
    %v795 = vand.u32 %v107, 4294901760
    %v796 = vsub.f32 %v107, %v795
    %797 = vmatpush.msra.mxu0 %v796
    %v798 = vand.u32 %v103, 4294901760
    %v799 = vsub.f32 %v103, %v798
    %800 = vmatpush.msra.mxu0 %v799
    %v801 = vand.u32 %v99, 4294901760
    %v802 = vsub.f32 %v99, %v801
    %803 = vmatpush.msra.mxu0 %v802
    %v804 = vand.u32 %v95, 4294901760
    %v805 = vsub.f32 %v95, %v804
    %806 = vmatpush.msra.mxu0 %v805
    %v807 = vand.u32 %v91, 4294901760
    %v808 = vsub.f32 %v91, %v807
    %809 = vmatpush.msra.mxu0 %v808
    %v810 = vand.u32 %v87, 4294901760
    %v811 = vsub.f32 %v87, %v810
    %812 = vmatpush.msra.mxu0 %v811
    %v813 = vand.u32 %v83, 4294901760
    %v814 = vsub.f32 %v83, %v813
    %815 = vmatpush.msra.mxu0 %v814
    %v816 = vand.u32 %v16, 4294901760
    %v817 = vsub.f32 %v16, %v816
    %818 = vmatmul.f32.gmra.mxu0 %v817
    %v819 = vpop.f32.mrf.mxu0
    %v820 = vadd.f32 %v766, %v819
    %821 = vdwg.mxu0
    %v822 = vand.u32 %v143, 4294901760
    %823 = vmatpush.msra.mxu0 %v822
    %v824 = vand.u32 %v139, 4294901760
    %825 = vmatpush.msra.mxu0 %v824
    %v826 = vand.u32 %v135, 4294901760
    %827 = vmatpush.msra.mxu0 %v826
    %v828 = vand.u32 %v131, 4294901760
    %829 = vmatpush.msra.mxu0 %v828
    %v830 = vand.u32 %v127, 4294901760
    %831 = vmatpush.msra.mxu0 %v830
    %v832 = vand.u32 %v123, 4294901760
    %833 = vmatpush.msra.mxu0 %v832
    %v834 = vand.u32 %v119, 4294901760
    %835 = vmatpush.msra.mxu0 %v834
    %v836 = vand.u32 %v115, 4294901760
    %837 = vmatpush.msra.mxu0 %v836
    %v838 = vand.u32 %v111, 4294901760
    %839 = vmatpush.msra.mxu0 %v838
    %v840 = vand.u32 %v107, 4294901760
    %841 = vmatpush.msra.mxu0 %v840
    %v842 = vand.u32 %v103, 4294901760
    %843 = vmatpush.msra.mxu0 %v842
    %v844 = vand.u32 %v99, 4294901760
    %845 = vmatpush.msra.mxu0 %v844
    %v846 = vand.u32 %v95, 4294901760
    %847 = vmatpush.msra.mxu0 %v846
    %v848 = vand.u32 %v91, 4294901760
    %849 = vmatpush.msra.mxu0 %v848
    %v850 = vand.u32 %v87, 4294901760
    %851 = vmatpush.msra.mxu0 %v850
    %v852 = vand.u32 %v83, 4294901760
    %853 = vmatpush.msra.mxu0 %v852
    %v854 = vand.u32 %v16, 4294901760
    %v855 = vsub.f32 %v16, %v854
    %v856 = vand.u32 %v855, 4294901760
    %857 = vmatmul.f32.gmra.mxu0 %v856
    %v858 = vpop.f32.mrf.mxu0
    %v859 = vadd.f32 %v820, %v858
    %860 = vdwg.mxu0
    %v861 = vand.u32 %v143, 4294901760
    %v862 = vsub.f32 %v143, %v861
    %v863 = vand.u32 %v862, 4294901760
    %864 = vmatpush.msra.mxu0 %v863
    %v865 = vand.u32 %v139, 4294901760
    %v866 = vsub.f32 %v139, %v865
    %v867 = vand.u32 %v866, 4294901760
    %868 = vmatpush.msra.mxu0 %v867
    %v869 = vand.u32 %v135, 4294901760
    %v870 = vsub.f32 %v135, %v869
    %v871 = vand.u32 %v870, 4294901760
    %872 = vmatpush.msra.mxu0 %v871
    %v873 = vand.u32 %v131, 4294901760
    %v874 = vsub.f32 %v131, %v873
    %v875 = vand.u32 %v874, 4294901760
    %876 = vmatpush.msra.mxu0 %v875
    %v877 = vand.u32 %v127, 4294901760
    %v878 = vsub.f32 %v127, %v877
    %v879 = vand.u32 %v878, 4294901760
    %880 = vmatpush.msra.mxu0 %v879
    %v881 = vand.u32 %v123, 4294901760
    %v882 = vsub.f32 %v123, %v881
    %v883 = vand.u32 %v882, 4294901760
    %884 = vmatpush.msra.mxu0 %v883
    %v885 = vand.u32 %v119, 4294901760
    %v886 = vsub.f32 %v119, %v885
    %v887 = vand.u32 %v886, 4294901760
    %888 = vmatpush.msra.mxu0 %v887
    %v889 = vand.u32 %v115, 4294901760
    %v890 = vsub.f32 %v115, %v889
    %v891 = vand.u32 %v890, 4294901760
    %892 = vmatpush.msra.mxu0 %v891
    %v893 = vand.u32 %v111, 4294901760
    %v894 = vsub.f32 %v111, %v893
    %v895 = vand.u32 %v894, 4294901760
    %896 = vmatpush.msra.mxu0 %v895
    %v897 = vand.u32 %v107, 4294901760
    %v898 = vsub.f32 %v107, %v897
    %v899 = vand.u32 %v898, 4294901760
    %900 = vmatpush.msra.mxu0 %v899
    %v901 = vand.u32 %v103, 4294901760
    %v902 = vsub.f32 %v103, %v901
    %v903 = vand.u32 %v902, 4294901760
    %904 = vmatpush.msra.mxu0 %v903
    %v905 = vand.u32 %v99, 4294901760
    %v906 = vsub.f32 %v99, %v905
    %v907 = vand.u32 %v906, 4294901760
    %908 = vmatpush.msra.mxu0 %v907
    %v909 = vand.u32 %v95, 4294901760
    %v910 = vsub.f32 %v95, %v909
    %v911 = vand.u32 %v910, 4294901760
    %912 = vmatpush.msra.mxu0 %v911
    %v913 = vand.u32 %v91, 4294901760
    %v914 = vsub.f32 %v91, %v913
    %v915 = vand.u32 %v914, 4294901760
    %916 = vmatpush.msra.mxu0 %v915
    %v917 = vand.u32 %v87, 4294901760
    %v918 = vsub.f32 %v87, %v917
    %v919 = vand.u32 %v918, 4294901760
    %920 = vmatpush.msra.mxu0 %v919
    %v921 = vand.u32 %v83, 4294901760
    %v922 = vsub.f32 %v83, %v921
    %v923 = vand.u32 %v922, 4294901760
    %924 = vmatpush.msra.mxu0 %v923
    %v925 = vand.u32 %v16, 4294901760
    %926 = vmatmul.f32.gmra.mxu0 %v925
    %v927 = vpop.f32.mrf.mxu0
    %v928 = vadd.f32 %v859, %v927
    %929 = vdwg.mxu0
    %v930 = vand.u32 %v143, 4294901760
    %931 = vmatpush.msra.mxu0 %v930
    %v932 = vand.u32 %v139, 4294901760
    %933 = vmatpush.msra.mxu0 %v932
    %v934 = vand.u32 %v135, 4294901760
    %935 = vmatpush.msra.mxu0 %v934
    %v936 = vand.u32 %v131, 4294901760
    %937 = vmatpush.msra.mxu0 %v936
    %v938 = vand.u32 %v127, 4294901760
    %939 = vmatpush.msra.mxu0 %v938
    %v940 = vand.u32 %v123, 4294901760
    %941 = vmatpush.msra.mxu0 %v940
    %v942 = vand.u32 %v119, 4294901760
    %943 = vmatpush.msra.mxu0 %v942
    %v944 = vand.u32 %v115, 4294901760
    %945 = vmatpush.msra.mxu0 %v944
    %v946 = vand.u32 %v111, 4294901760
    %947 = vmatpush.msra.mxu0 %v946
    %v948 = vand.u32 %v107, 4294901760
    %949 = vmatpush.msra.mxu0 %v948
    %v950 = vand.u32 %v103, 4294901760
    %951 = vmatpush.msra.mxu0 %v950
    %v952 = vand.u32 %v99, 4294901760
    %953 = vmatpush.msra.mxu0 %v952
    %v954 = vand.u32 %v95, 4294901760
    %955 = vmatpush.msra.mxu0 %v954
    %v956 = vand.u32 %v91, 4294901760
    %957 = vmatpush.msra.mxu0 %v956
    %v958 = vand.u32 %v87, 4294901760
    %959 = vmatpush.msra.mxu0 %v958
    %v960 = vand.u32 %v83, 4294901760
    %961 = vmatpush.msra.mxu0 %v960
    %v962 = vand.u32 %v16, 4294901760
    %963 = vmatmul.f32.gmra.mxu0 %v962
    %v964 = vpop.f32.mrf.mxu0
    %v965 = vadd.f32 %v928, %v964
    %966 = vdwg.mxu0
    %v967 = vand.u32 %v207, 4294901760
    %968 = vmatpush.msra.mxu0 %v967
    %v969 = vand.u32 %v203, 4294901760
    %970 = vmatpush.msra.mxu0 %v969
    %v971 = vand.u32 %v199, 4294901760
    %972 = vmatpush.msra.mxu0 %v971
    %v973 = vand.u32 %v195, 4294901760
    %974 = vmatpush.msra.mxu0 %v973
    %v975 = vand.u32 %v191, 4294901760
    %976 = vmatpush.msra.mxu0 %v975
    %v977 = vand.u32 %v187, 4294901760
    %978 = vmatpush.msra.mxu0 %v977
    %v979 = vand.u32 %v183, 4294901760
    %980 = vmatpush.msra.mxu0 %v979
    %v981 = vand.u32 %v179, 4294901760
    %982 = vmatpush.msra.mxu0 %v981
    %v983 = vand.u32 %v175, 4294901760
    %984 = vmatpush.msra.mxu0 %v983
    %v985 = vand.u32 %v171, 4294901760
    %986 = vmatpush.msra.mxu0 %v985
    %v987 = vand.u32 %v167, 4294901760
    %988 = vmatpush.msra.mxu0 %v987
    %v989 = vand.u32 %v163, 4294901760
    %990 = vmatpush.msra.mxu0 %v989
    %v991 = vand.u32 %v159, 4294901760
    %992 = vmatpush.msra.mxu0 %v991
    %v993 = vand.u32 %v155, 4294901760
    %994 = vmatpush.msra.mxu0 %v993
    %v995 = vand.u32 %v151, 4294901760
    %996 = vmatpush.msra.mxu0 %v995
    %v997 = vand.u32 %v147, 4294901760
    %998 = vmatpush.msra.mxu0 %v997
    %v999 = vand.u32 %v17, 4294901760
    %v1000 = vsub.f32 %v17, %v999
    %v1001 = vand.u32 %v1000, 4294901760
    %v1002 = vsub.f32 %v1000, %v1001
    %v1003 = vand.u32 %v1002, 4294901760
    %1004 = vmatmul.f32.gmra.mxu0 %v1003
    %v1005 = vpop.f32.mrf.mxu0
    %v1006 = vadd.f32 %v965, %v1005
    %1007 = vdwg.mxu0
    %v1008 = vand.u32 %v207, 4294901760
    %v1009 = vsub.f32 %v207, %v1008
    %v1010 = vand.u32 %v1009, 4294901760
    %v1011 = vsub.f32 %v1009, %v1010
    %v1012 = vand.u32 %v1011, 4294901760
    %1013 = vmatpush.msra.mxu0 %v1012
    %v1014 = vand.u32 %v203, 4294901760
    %v1015 = vsub.f32 %v203, %v1014
    %v1016 = vand.u32 %v1015, 4294901760
    %v1017 = vsub.f32 %v1015, %v1016
    %v1018 = vand.u32 %v1017, 4294901760
    %1019 = vmatpush.msra.mxu0 %v1018
    %v1020 = vand.u32 %v199, 4294901760
    %v1021 = vsub.f32 %v199, %v1020
    %v1022 = vand.u32 %v1021, 4294901760
    %v1023 = vsub.f32 %v1021, %v1022
    %v1024 = vand.u32 %v1023, 4294901760
    %1025 = vmatpush.msra.mxu0 %v1024
    %v1026 = vand.u32 %v195, 4294901760
    %v1027 = vsub.f32 %v195, %v1026
    %v1028 = vand.u32 %v1027, 4294901760
    %v1029 = vsub.f32 %v1027, %v1028
    %v1030 = vand.u32 %v1029, 4294901760
    %1031 = vmatpush.msra.mxu0 %v1030
    %v1032 = vand.u32 %v191, 4294901760
    %v1033 = vsub.f32 %v191, %v1032
    %v1034 = vand.u32 %v1033, 4294901760
    %v1035 = vsub.f32 %v1033, %v1034
    %v1036 = vand.u32 %v1035, 4294901760
    %1037 = vmatpush.msra.mxu0 %v1036
    %v1038 = vand.u32 %v187, 4294901760
    %v1039 = vsub.f32 %v187, %v1038
    %v1040 = vand.u32 %v1039, 4294901760
    %v1041 = vsub.f32 %v1039, %v1040
    %v1042 = vand.u32 %v1041, 4294901760
    %1043 = vmatpush.msra.mxu0 %v1042
    %v1044 = vand.u32 %v183, 4294901760
    %v1045 = vsub.f32 %v183, %v1044
    %v1046 = vand.u32 %v1045, 4294901760
    %v1047 = vsub.f32 %v1045, %v1046
    %v1048 = vand.u32 %v1047, 4294901760
    %1049 = vmatpush.msra.mxu0 %v1048
    %v1050 = vand.u32 %v179, 4294901760
    %v1051 = vsub.f32 %v179, %v1050
    %v1052 = vand.u32 %v1051, 4294901760
    %v1053 = vsub.f32 %v1051, %v1052
    %v1054 = vand.u32 %v1053, 4294901760
    %1055 = vmatpush.msra.mxu0 %v1054
    %v1056 = vand.u32 %v175, 4294901760
    %v1057 = vsub.f32 %v175, %v1056
    %v1058 = vand.u32 %v1057, 4294901760
    %v1059 = vsub.f32 %v1057, %v1058
    %v1060 = vand.u32 %v1059, 4294901760
    %1061 = vmatpush.msra.mxu0 %v1060
    %v1062 = vand.u32 %v171, 4294901760
    %v1063 = vsub.f32 %v171, %v1062
    %v1064 = vand.u32 %v1063, 4294901760
    %v1065 = vsub.f32 %v1063, %v1064
    %v1066 = vand.u32 %v1065, 4294901760
    %1067 = vmatpush.msra.mxu0 %v1066
    %v1068 = vand.u32 %v167, 4294901760
    %v1069 = vsub.f32 %v167, %v1068
    %v1070 = vand.u32 %v1069, 4294901760
    %v1071 = vsub.f32 %v1069, %v1070
    %v1072 = vand.u32 %v1071, 4294901760
    %1073 = vmatpush.msra.mxu0 %v1072
    %v1074 = vand.u32 %v163, 4294901760
    %v1075 = vsub.f32 %v163, %v1074
    %v1076 = vand.u32 %v1075, 4294901760
    %v1077 = vsub.f32 %v1075, %v1076
    %v1078 = vand.u32 %v1077, 4294901760
    %1079 = vmatpush.msra.mxu0 %v1078
    %v1080 = vand.u32 %v159, 4294901760
    %v1081 = vsub.f32 %v159, %v1080
    %v1082 = vand.u32 %v1081, 4294901760
    %v1083 = vsub.f32 %v1081, %v1082
    %v1084 = vand.u32 %v1083, 4294901760
    %1085 = vmatpush.msra.mxu0 %v1084
    %v1086 = vand.u32 %v155, 4294901760
    %v1087 = vsub.f32 %v155, %v1086
    %v1088 = vand.u32 %v1087, 4294901760
    %v1089 = vsub.f32 %v1087, %v1088
    %v1090 = vand.u32 %v1089, 4294901760
    %1091 = vmatpush.msra.mxu0 %v1090
    %v1092 = vand.u32 %v151, 4294901760
    %v1093 = vsub.f32 %v151, %v1092
    %v1094 = vand.u32 %v1093, 4294901760
    %v1095 = vsub.f32 %v1093, %v1094
    %v1096 = vand.u32 %v1095, 4294901760
    %1097 = vmatpush.msra.mxu0 %v1096
    %v1098 = vand.u32 %v147, 4294901760
    %v1099 = vsub.f32 %v147, %v1098
    %v1100 = vand.u32 %v1099, 4294901760
    %v1101 = vsub.f32 %v1099, %v1100
    %v1102 = vand.u32 %v1101, 4294901760
    %1103 = vmatpush.msra.mxu0 %v1102
    %v1104 = vand.u32 %v17, 4294901760
    %1105 = vmatmul.f32.gmra.mxu0 %v1104
    %v1106 = vpop.f32.mrf.mxu0
    %v1107 = vadd.f32 %v1006, %v1106
    %1108 = vdwg.mxu0
    %v1109 = vand.u32 %v207, 4294901760
    %v1110 = vsub.f32 %v207, %v1109
    %1111 = vmatpush.msra.mxu0 %v1110
    %v1112 = vand.u32 %v203, 4294901760
    %v1113 = vsub.f32 %v203, %v1112
    %1114 = vmatpush.msra.mxu0 %v1113
    %v1115 = vand.u32 %v199, 4294901760
    %v1116 = vsub.f32 %v199, %v1115
    %1117 = vmatpush.msra.mxu0 %v1116
    %v1118 = vand.u32 %v195, 4294901760
    %v1119 = vsub.f32 %v195, %v1118
    %1120 = vmatpush.msra.mxu0 %v1119
    %v1121 = vand.u32 %v191, 4294901760
    %v1122 = vsub.f32 %v191, %v1121
    %1123 = vmatpush.msra.mxu0 %v1122
    %v1124 = vand.u32 %v187, 4294901760
    %v1125 = vsub.f32 %v187, %v1124
    %1126 = vmatpush.msra.mxu0 %v1125
    %v1127 = vand.u32 %v183, 4294901760
    %v1128 = vsub.f32 %v183, %v1127
    %1129 = vmatpush.msra.mxu0 %v1128
    %v1130 = vand.u32 %v179, 4294901760
    %v1131 = vsub.f32 %v179, %v1130
    %1132 = vmatpush.msra.mxu0 %v1131
    %v1133 = vand.u32 %v175, 4294901760
    %v1134 = vsub.f32 %v175, %v1133
    %1135 = vmatpush.msra.mxu0 %v1134
    %v1136 = vand.u32 %v171, 4294901760
    %v1137 = vsub.f32 %v171, %v1136
    %1138 = vmatpush.msra.mxu0 %v1137
    %v1139 = vand.u32 %v167, 4294901760
    %v1140 = vsub.f32 %v167, %v1139
    %1141 = vmatpush.msra.mxu0 %v1140
    %v1142 = vand.u32 %v163, 4294901760
    %v1143 = vsub.f32 %v163, %v1142
    %1144 = vmatpush.msra.mxu0 %v1143
    %v1145 = vand.u32 %v159, 4294901760
    %v1146 = vsub.f32 %v159, %v1145
    %1147 = vmatpush.msra.mxu0 %v1146
    %v1148 = vand.u32 %v155, 4294901760
    %v1149 = vsub.f32 %v155, %v1148
    %1150 = vmatpush.msra.mxu0 %v1149
    %v1151 = vand.u32 %v151, 4294901760
    %v1152 = vsub.f32 %v151, %v1151
    %1153 = vmatpush.msra.mxu0 %v1152
    %v1154 = vand.u32 %v147, 4294901760
    %v1155 = vsub.f32 %v147, %v1154
    %1156 = vmatpush.msra.mxu0 %v1155
    %v1157 = vand.u32 %v17, 4294901760
    %v1158 = vsub.f32 %v17, %v1157
    %1159 = vmatmul.f32.gmra.mxu0 %v1158
    %v1160 = vpop.f32.mrf.mxu0
    %v1161 = vadd.f32 %v1107, %v1160
    %1162 = vdwg.mxu0
    %v1163 = vand.u32 %v207, 4294901760
    %1164 = vmatpush.msra.mxu0 %v1163
    %v1165 = vand.u32 %v203, 4294901760
    %1166 = vmatpush.msra.mxu0 %v1165
    %v1167 = vand.u32 %v199, 4294901760
    %1168 = vmatpush.msra.mxu0 %v1167
    %v1169 = vand.u32 %v195, 4294901760
    %1170 = vmatpush.msra.mxu0 %v1169
    %v1171 = vand.u32 %v191, 4294901760
    %1172 = vmatpush.msra.mxu0 %v1171
    %v1173 = vand.u32 %v187, 4294901760
    %1174 = vmatpush.msra.mxu0 %v1173
    %v1175 = vand.u32 %v183, 4294901760
    %1176 = vmatpush.msra.mxu0 %v1175
    %v1177 = vand.u32 %v179, 4294901760
    %1178 = vmatpush.msra.mxu0 %v1177
    %v1179 = vand.u32 %v175, 4294901760
    %1180 = vmatpush.msra.mxu0 %v1179
    %v1181 = vand.u32 %v171, 4294901760
    %1182 = vmatpush.msra.mxu0 %v1181
    %v1183 = vand.u32 %v167, 4294901760
    %1184 = vmatpush.msra.mxu0 %v1183
    %v1185 = vand.u32 %v163, 4294901760
    %1186 = vmatpush.msra.mxu0 %v1185
    %v1187 = vand.u32 %v159, 4294901760
    %1188 = vmatpush.msra.mxu0 %v1187
    %v1189 = vand.u32 %v155, 4294901760
    %1190 = vmatpush.msra.mxu0 %v1189
    %v1191 = vand.u32 %v151, 4294901760
    %1192 = vmatpush.msra.mxu0 %v1191
    %v1193 = vand.u32 %v147, 4294901760
    %1194 = vmatpush.msra.mxu0 %v1193
    %v1195 = vand.u32 %v17, 4294901760
    %v1196 = vsub.f32 %v17, %v1195
    %v1197 = vand.u32 %v1196, 4294901760
    %1198 = vmatmul.f32.gmra.mxu0 %v1197
    %v1199 = vpop.f32.mrf.mxu0
    %v1200 = vadd.f32 %v1161, %v1199
    %1201 = vdwg.mxu0
    %v1202 = vand.u32 %v207, 4294901760
    %v1203 = vsub.f32 %v207, %v1202
    %v1204 = vand.u32 %v1203, 4294901760
    %1205 = vmatpush.msra.mxu0 %v1204
    %v1206 = vand.u32 %v203, 4294901760
    %v1207 = vsub.f32 %v203, %v1206
    %v1208 = vand.u32 %v1207, 4294901760
    %1209 = vmatpush.msra.mxu0 %v1208
    %v1210 = vand.u32 %v199, 4294901760
    %v1211 = vsub.f32 %v199, %v1210
    %v1212 = vand.u32 %v1211, 4294901760
    %1213 = vmatpush.msra.mxu0 %v1212
    %v1214 = vand.u32 %v195, 4294901760
    %v1215 = vsub.f32 %v195, %v1214
    %v1216 = vand.u32 %v1215, 4294901760
    %1217 = vmatpush.msra.mxu0 %v1216
    %v1218 = vand.u32 %v191, 4294901760
    %v1219 = vsub.f32 %v191, %v1218
    %v1220 = vand.u32 %v1219, 4294901760
    %1221 = vmatpush.msra.mxu0 %v1220
    %v1222 = vand.u32 %v187, 4294901760
    %v1223 = vsub.f32 %v187, %v1222
    %v1224 = vand.u32 %v1223, 4294901760
    %1225 = vmatpush.msra.mxu0 %v1224
    %v1226 = vand.u32 %v183, 4294901760
    %v1227 = vsub.f32 %v183, %v1226
    %v1228 = vand.u32 %v1227, 4294901760
    %1229 = vmatpush.msra.mxu0 %v1228
    %v1230 = vand.u32 %v179, 4294901760
    %v1231 = vsub.f32 %v179, %v1230
    %v1232 = vand.u32 %v1231, 4294901760
    %1233 = vmatpush.msra.mxu0 %v1232
    %v1234 = vand.u32 %v175, 4294901760
    %v1235 = vsub.f32 %v175, %v1234
    %v1236 = vand.u32 %v1235, 4294901760
    %1237 = vmatpush.msra.mxu0 %v1236
    %v1238 = vand.u32 %v171, 4294901760
    %v1239 = vsub.f32 %v171, %v1238
    %v1240 = vand.u32 %v1239, 4294901760
    %1241 = vmatpush.msra.mxu0 %v1240
    %v1242 = vand.u32 %v167, 4294901760
    %v1243 = vsub.f32 %v167, %v1242
    %v1244 = vand.u32 %v1243, 4294901760
    %1245 = vmatpush.msra.mxu0 %v1244
    %v1246 = vand.u32 %v163, 4294901760
    %v1247 = vsub.f32 %v163, %v1246
    %v1248 = vand.u32 %v1247, 4294901760
    %1249 = vmatpush.msra.mxu0 %v1248
    %v1250 = vand.u32 %v159, 4294901760
    %v1251 = vsub.f32 %v159, %v1250
    %v1252 = vand.u32 %v1251, 4294901760
    %1253 = vmatpush.msra.mxu0 %v1252
    %v1254 = vand.u32 %v155, 4294901760
    %v1255 = vsub.f32 %v155, %v1254
    %v1256 = vand.u32 %v1255, 4294901760
    %1257 = vmatpush.msra.mxu0 %v1256
    %v1258 = vand.u32 %v151, 4294901760
    %v1259 = vsub.f32 %v151, %v1258
    %v1260 = vand.u32 %v1259, 4294901760
    %1261 = vmatpush.msra.mxu0 %v1260
    %v1262 = vand.u32 %v147, 4294901760
    %v1263 = vsub.f32 %v147, %v1262
    %v1264 = vand.u32 %v1263, 4294901760
    %1265 = vmatpush.msra.mxu0 %v1264
    %v1266 = vand.u32 %v17, 4294901760
    %1267 = vmatmul.f32.gmra.mxu0 %v1266
    %v1268 = vpop.f32.mrf.mxu0
    %v1269 = vadd.f32 %v1200, %v1268
    %1270 = vdwg.mxu0
    %v1271 = vand.u32 %v207, 4294901760
    %1272 = vmatpush.msra.mxu0 %v1271
    %v1273 = vand.u32 %v203, 4294901760
    %1274 = vmatpush.msra.mxu0 %v1273
    %v1275 = vand.u32 %v199, 4294901760
    %1276 = vmatpush.msra.mxu0 %v1275
    %v1277 = vand.u32 %v195, 4294901760
    %1278 = vmatpush.msra.mxu0 %v1277
    %v1279 = vand.u32 %v191, 4294901760
    %1280 = vmatpush.msra.mxu0 %v1279
    %v1281 = vand.u32 %v187, 4294901760
    %1282 = vmatpush.msra.mxu0 %v1281
    %v1283 = vand.u32 %v183, 4294901760
    %1284 = vmatpush.msra.mxu0 %v1283
    %v1285 = vand.u32 %v179, 4294901760
    %1286 = vmatpush.msra.mxu0 %v1285
    %v1287 = vand.u32 %v175, 4294901760
    %1288 = vmatpush.msra.mxu0 %v1287
    %v1289 = vand.u32 %v171, 4294901760
    %1290 = vmatpush.msra.mxu0 %v1289
    %v1291 = vand.u32 %v167, 4294901760
    %1292 = vmatpush.msra.mxu0 %v1291
    %v1293 = vand.u32 %v163, 4294901760
    %1294 = vmatpush.msra.mxu0 %v1293
    %v1295 = vand.u32 %v159, 4294901760
    %1296 = vmatpush.msra.mxu0 %v1295
    %v1297 = vand.u32 %v155, 4294901760
    %1298 = vmatpush.msra.mxu0 %v1297
    %v1299 = vand.u32 %v151, 4294901760
    %1300 = vmatpush.msra.mxu0 %v1299
    %v1301 = vand.u32 %v147, 4294901760
    %1302 = vmatpush.msra.mxu0 %v1301
    %v1303 = vand.u32 %v17, 4294901760
    %1304 = vmatmul.f32.gmra.mxu0 %v1303
    %v1305 = vpop.f32.mrf.mxu0
    %v1306 = vadd.f32 %v1269, %v1305
    %1307 = vdwg.mxu0
    %v1308 = vand.u32 %v271, 4294901760
    %1309 = vmatpush.msra.mxu0 %v1308
    %v1310 = vand.u32 %v267, 4294901760
    %1311 = vmatpush.msra.mxu0 %v1310
    %v1312 = vand.u32 %v263, 4294901760
    %1313 = vmatpush.msra.mxu0 %v1312
    %v1314 = vand.u32 %v259, 4294901760
    %1315 = vmatpush.msra.mxu0 %v1314
    %v1316 = vand.u32 %v255, 4294901760
    %1317 = vmatpush.msra.mxu0 %v1316
    %v1318 = vand.u32 %v251, 4294901760
    %1319 = vmatpush.msra.mxu0 %v1318
    %v1320 = vand.u32 %v247, 4294901760
    %1321 = vmatpush.msra.mxu0 %v1320
    %v1322 = vand.u32 %v243, 4294901760
    %1323 = vmatpush.msra.mxu0 %v1322
    %v1324 = vand.u32 %v239, 4294901760
    %1325 = vmatpush.msra.mxu0 %v1324
    %v1326 = vand.u32 %v235, 4294901760
    %1327 = vmatpush.msra.mxu0 %v1326
    %v1328 = vand.u32 %v231, 4294901760
    %1329 = vmatpush.msra.mxu0 %v1328
    %v1330 = vand.u32 %v227, 4294901760
    %1331 = vmatpush.msra.mxu0 %v1330
    %v1332 = vand.u32 %v223, 4294901760
    %1333 = vmatpush.msra.mxu0 %v1332
    %v1334 = vand.u32 %v219, 4294901760
    %1335 = vmatpush.msra.mxu0 %v1334
    %v1336 = vand.u32 %v215, 4294901760
    %1337 = vmatpush.msra.mxu0 %v1336
    %v1338 = vand.u32 %v211, 4294901760
    %1339 = vmatpush.msra.mxu0 %v1338
    %v1340 = vand.u32 %v18, 4294901760
    %v1341 = vsub.f32 %v18, %v1340
    %v1342 = vand.u32 %v1341, 4294901760
    %v1343 = vsub.f32 %v1341, %v1342
    %v1344 = vand.u32 %v1343, 4294901760
    %1345 = vmatmul.f32.gmra.mxu0 %v1344
    %v1346 = vpop.f32.mrf.mxu0
    %v1347 = vadd.f32 %v1306, %v1346
    %1348 = vdwg.mxu0
    %v1349 = vand.u32 %v271, 4294901760
    %v1350 = vsub.f32 %v271, %v1349
    %v1351 = vand.u32 %v1350, 4294901760
    %v1352 = vsub.f32 %v1350, %v1351
    %v1353 = vand.u32 %v1352, 4294901760
    %1354 = vmatpush.msra.mxu0 %v1353
    %v1355 = vand.u32 %v267, 4294901760
    %v1356 = vsub.f32 %v267, %v1355
    %v1357 = vand.u32 %v1356, 4294901760
    %v1358 = vsub.f32 %v1356, %v1357
    %v1359 = vand.u32 %v1358, 4294901760
    %1360 = vmatpush.msra.mxu0 %v1359
    %v1361 = vand.u32 %v263, 4294901760
    %v1362 = vsub.f32 %v263, %v1361
    %v1363 = vand.u32 %v1362, 4294901760
    %v1364 = vsub.f32 %v1362, %v1363
    %v1365 = vand.u32 %v1364, 4294901760
    %1366 = vmatpush.msra.mxu0 %v1365
    %v1367 = vand.u32 %v259, 4294901760
    %v1368 = vsub.f32 %v259, %v1367
    %v1369 = vand.u32 %v1368, 4294901760
    %v1370 = vsub.f32 %v1368, %v1369
    %v1371 = vand.u32 %v1370, 4294901760
    %1372 = vmatpush.msra.mxu0 %v1371
    %v1373 = vand.u32 %v255, 4294901760
    %v1374 = vsub.f32 %v255, %v1373
    %v1375 = vand.u32 %v1374, 4294901760
    %v1376 = vsub.f32 %v1374, %v1375
    %v1377 = vand.u32 %v1376, 4294901760
    %1378 = vmatpush.msra.mxu0 %v1377
    %v1379 = vand.u32 %v251, 4294901760
    %v1380 = vsub.f32 %v251, %v1379
    %v1381 = vand.u32 %v1380, 4294901760
    %v1382 = vsub.f32 %v1380, %v1381
    %v1383 = vand.u32 %v1382, 4294901760
    %1384 = vmatpush.msra.mxu0 %v1383
    %v1385 = vand.u32 %v247, 4294901760
    %v1386 = vsub.f32 %v247, %v1385
    %v1387 = vand.u32 %v1386, 4294901760
    %v1388 = vsub.f32 %v1386, %v1387
    %v1389 = vand.u32 %v1388, 4294901760
    %1390 = vmatpush.msra.mxu0 %v1389
    %v1391 = vand.u32 %v243, 4294901760
    %v1392 = vsub.f32 %v243, %v1391
    %v1393 = vand.u32 %v1392, 4294901760
    %v1394 = vsub.f32 %v1392, %v1393
    %v1395 = vand.u32 %v1394, 4294901760
    %1396 = vmatpush.msra.mxu0 %v1395
    %v1397 = vand.u32 %v239, 4294901760
    %v1398 = vsub.f32 %v239, %v1397
    %v1399 = vand.u32 %v1398, 4294901760
    %v1400 = vsub.f32 %v1398, %v1399
    %v1401 = vand.u32 %v1400, 4294901760
    %1402 = vmatpush.msra.mxu0 %v1401
    %v1403 = vand.u32 %v235, 4294901760
    %v1404 = vsub.f32 %v235, %v1403
    %v1405 = vand.u32 %v1404, 4294901760
    %v1406 = vsub.f32 %v1404, %v1405
    %v1407 = vand.u32 %v1406, 4294901760
    %1408 = vmatpush.msra.mxu0 %v1407
    %v1409 = vand.u32 %v231, 4294901760
    %v1410 = vsub.f32 %v231, %v1409
    %v1411 = vand.u32 %v1410, 4294901760
    %v1412 = vsub.f32 %v1410, %v1411
    %v1413 = vand.u32 %v1412, 4294901760
    %1414 = vmatpush.msra.mxu0 %v1413
    %v1415 = vand.u32 %v227, 4294901760
    %v1416 = vsub.f32 %v227, %v1415
    %v1417 = vand.u32 %v1416, 4294901760
    %v1418 = vsub.f32 %v1416, %v1417
    %v1419 = vand.u32 %v1418, 4294901760
    %1420 = vmatpush.msra.mxu0 %v1419
    %v1421 = vand.u32 %v223, 4294901760
    %v1422 = vsub.f32 %v223, %v1421
    %v1423 = vand.u32 %v1422, 4294901760
    %v1424 = vsub.f32 %v1422, %v1423
    %v1425 = vand.u32 %v1424, 4294901760
    %1426 = vmatpush.msra.mxu0 %v1425
    %v1427 = vand.u32 %v219, 4294901760
    %v1428 = vsub.f32 %v219, %v1427
    %v1429 = vand.u32 %v1428, 4294901760
    %v1430 = vsub.f32 %v1428, %v1429
    %v1431 = vand.u32 %v1430, 4294901760
    %1432 = vmatpush.msra.mxu0 %v1431
    %v1433 = vand.u32 %v215, 4294901760
    %v1434 = vsub.f32 %v215, %v1433
    %v1435 = vand.u32 %v1434, 4294901760
    %v1436 = vsub.f32 %v1434, %v1435
    %v1437 = vand.u32 %v1436, 4294901760
    %1438 = vmatpush.msra.mxu0 %v1437
    %v1439 = vand.u32 %v211, 4294901760
    %v1440 = vsub.f32 %v211, %v1439
    %v1441 = vand.u32 %v1440, 4294901760
    %v1442 = vsub.f32 %v1440, %v1441
    %v1443 = vand.u32 %v1442, 4294901760
    %1444 = vmatpush.msra.mxu0 %v1443
    %v1445 = vand.u32 %v18, 4294901760
    %1446 = vmatmul.f32.gmra.mxu0 %v1445
    %v1447 = vpop.f32.mrf.mxu0
    %v1448 = vadd.f32 %v1347, %v1447
    %1449 = vdwg.mxu0
    %v1450 = vand.u32 %v271, 4294901760
    %v1451 = vsub.f32 %v271, %v1450
    %1452 = vmatpush.msra.mxu0 %v1451
    %v1453 = vand.u32 %v267, 4294901760
    %v1454 = vsub.f32 %v267, %v1453
    %1455 = vmatpush.msra.mxu0 %v1454
    %v1456 = vand.u32 %v263, 4294901760
    %v1457 = vsub.f32 %v263, %v1456
    %1458 = vmatpush.msra.mxu0 %v1457
    %v1459 = vand.u32 %v259, 4294901760
    %v1460 = vsub.f32 %v259, %v1459
    %1461 = vmatpush.msra.mxu0 %v1460
    %v1462 = vand.u32 %v255, 4294901760
    %v1463 = vsub.f32 %v255, %v1462
    %1464 = vmatpush.msra.mxu0 %v1463
    %v1465 = vand.u32 %v251, 4294901760
    %v1466 = vsub.f32 %v251, %v1465
    %1467 = vmatpush.msra.mxu0 %v1466
    %v1468 = vand.u32 %v247, 4294901760
    %v1469 = vsub.f32 %v247, %v1468
    %1470 = vmatpush.msra.mxu0 %v1469
    %v1471 = vand.u32 %v243, 4294901760
    %v1472 = vsub.f32 %v243, %v1471
    %1473 = vmatpush.msra.mxu0 %v1472
    %v1474 = vand.u32 %v239, 4294901760
    %v1475 = vsub.f32 %v239, %v1474
    %1476 = vmatpush.msra.mxu0 %v1475
    %v1477 = vand.u32 %v235, 4294901760
    %v1478 = vsub.f32 %v235, %v1477
    %1479 = vmatpush.msra.mxu0 %v1478
    %v1480 = vand.u32 %v231, 4294901760
    %v1481 = vsub.f32 %v231, %v1480
    %1482 = vmatpush.msra.mxu0 %v1481
    %v1483 = vand.u32 %v227, 4294901760
    %v1484 = vsub.f32 %v227, %v1483
    %1485 = vmatpush.msra.mxu0 %v1484
    %v1486 = vand.u32 %v223, 4294901760
    %v1487 = vsub.f32 %v223, %v1486
    %1488 = vmatpush.msra.mxu0 %v1487
    %v1489 = vand.u32 %v219, 4294901760
    %v1490 = vsub.f32 %v219, %v1489
    %1491 = vmatpush.msra.mxu0 %v1490
    %v1492 = vand.u32 %v215, 4294901760
    %v1493 = vsub.f32 %v215, %v1492
    %1494 = vmatpush.msra.mxu0 %v1493
    %v1495 = vand.u32 %v211, 4294901760
    %v1496 = vsub.f32 %v211, %v1495
    %1497 = vmatpush.msra.mxu0 %v1496
    %v1498 = vand.u32 %v18, 4294901760
    %v1499 = vsub.f32 %v18, %v1498
    %1500 = vmatmul.f32.gmra.mxu0 %v1499
    %v1501 = vpop.f32.mrf.mxu0
    %v1502 = vadd.f32 %v1448, %v1501
    %1503 = vdwg.mxu0
    %v1504 = vand.u32 %v271, 4294901760
    %1505 = vmatpush.msra.mxu0 %v1504
    %v1506 = vand.u32 %v267, 4294901760
    %1507 = vmatpush.msra.mxu0 %v1506
    %v1508 = vand.u32 %v263, 4294901760
    %1509 = vmatpush.msra.mxu0 %v1508
    %v1510 = vand.u32 %v259, 4294901760
    %1511 = vmatpush.msra.mxu0 %v1510
    %v1512 = vand.u32 %v255, 4294901760
    %1513 = vmatpush.msra.mxu0 %v1512
    %v1514 = vand.u32 %v251, 4294901760
    %1515 = vmatpush.msra.mxu0 %v1514
    %v1516 = vand.u32 %v247, 4294901760
    %1517 = vmatpush.msra.mxu0 %v1516
    %v1518 = vand.u32 %v243, 4294901760
    %1519 = vmatpush.msra.mxu0 %v1518
    %v1520 = vand.u32 %v239, 4294901760
    %1521 = vmatpush.msra.mxu0 %v1520
    %v1522 = vand.u32 %v235, 4294901760
    %1523 = vmatpush.msra.mxu0 %v1522
    %v1524 = vand.u32 %v231, 4294901760
    %1525 = vmatpush.msra.mxu0 %v1524
    %v1526 = vand.u32 %v227, 4294901760
    %1527 = vmatpush.msra.mxu0 %v1526
    %v1528 = vand.u32 %v223, 4294901760
    %1529 = vmatpush.msra.mxu0 %v1528
    %v1530 = vand.u32 %v219, 4294901760
    %1531 = vmatpush.msra.mxu0 %v1530
    %v1532 = vand.u32 %v215, 4294901760
    %1533 = vmatpush.msra.mxu0 %v1532
    %v1534 = vand.u32 %v211, 4294901760
    %1535 = vmatpush.msra.mxu0 %v1534
    %v1536 = vand.u32 %v18, 4294901760
    %v1537 = vsub.f32 %v18, %v1536
    %v1538 = vand.u32 %v1537, 4294901760
    %1539 = vmatmul.f32.gmra.mxu0 %v1538
    %v1540 = vpop.f32.mrf.mxu0
    %v1541 = vadd.f32 %v1502, %v1540
    %1542 = vdwg.mxu0
    %v1543 = vand.u32 %v271, 4294901760
    %v1544 = vsub.f32 %v271, %v1543
    %v1545 = vand.u32 %v1544, 4294901760
    %1546 = vmatpush.msra.mxu0 %v1545
    %v1547 = vand.u32 %v267, 4294901760
    %v1548 = vsub.f32 %v267, %v1547
    %v1549 = vand.u32 %v1548, 4294901760
    %1550 = vmatpush.msra.mxu0 %v1549
    %v1551 = vand.u32 %v263, 4294901760
    %v1552 = vsub.f32 %v263, %v1551
    %v1553 = vand.u32 %v1552, 4294901760
    %1554 = vmatpush.msra.mxu0 %v1553
    %v1555 = vand.u32 %v259, 4294901760
    %v1556 = vsub.f32 %v259, %v1555
    %v1557 = vand.u32 %v1556, 4294901760
    %1558 = vmatpush.msra.mxu0 %v1557
    %v1559 = vand.u32 %v255, 4294901760
    %v1560 = vsub.f32 %v255, %v1559
    %v1561 = vand.u32 %v1560, 4294901760
    %1562 = vmatpush.msra.mxu0 %v1561
    %v1563 = vand.u32 %v251, 4294901760
    %v1564 = vsub.f32 %v251, %v1563
    %v1565 = vand.u32 %v1564, 4294901760
    %1566 = vmatpush.msra.mxu0 %v1565
    %v1567 = vand.u32 %v247, 4294901760
    %v1568 = vsub.f32 %v247, %v1567
    %v1569 = vand.u32 %v1568, 4294901760
    %1570 = vmatpush.msra.mxu0 %v1569
    %v1571 = vand.u32 %v243, 4294901760
    %v1572 = vsub.f32 %v243, %v1571
    %v1573 = vand.u32 %v1572, 4294901760
    %1574 = vmatpush.msra.mxu0 %v1573
    %v1575 = vand.u32 %v239, 4294901760
    %v1576 = vsub.f32 %v239, %v1575
    %v1577 = vand.u32 %v1576, 4294901760
    %1578 = vmatpush.msra.mxu0 %v1577
    %v1579 = vand.u32 %v235, 4294901760
    %v1580 = vsub.f32 %v235, %v1579
    %v1581 = vand.u32 %v1580, 4294901760
    %1582 = vmatpush.msra.mxu0 %v1581
    %v1583 = vand.u32 %v231, 4294901760
    %v1584 = vsub.f32 %v231, %v1583
    %v1585 = vand.u32 %v1584, 4294901760
    %1586 = vmatpush.msra.mxu0 %v1585
    %v1587 = vand.u32 %v227, 4294901760
    %v1588 = vsub.f32 %v227, %v1587
    %v1589 = vand.u32 %v1588, 4294901760
    %1590 = vmatpush.msra.mxu0 %v1589
    %v1591 = vand.u32 %v223, 4294901760
    %v1592 = vsub.f32 %v223, %v1591
    %v1593 = vand.u32 %v1592, 4294901760
    %1594 = vmatpush.msra.mxu0 %v1593
    %v1595 = vand.u32 %v219, 4294901760
    %v1596 = vsub.f32 %v219, %v1595
    %v1597 = vand.u32 %v1596, 4294901760
    %1598 = vmatpush.msra.mxu0 %v1597
    %v1599 = vand.u32 %v215, 4294901760
    %v1600 = vsub.f32 %v215, %v1599
    %v1601 = vand.u32 %v1600, 4294901760
    %1602 = vmatpush.msra.mxu0 %v1601
    %v1603 = vand.u32 %v211, 4294901760
    %v1604 = vsub.f32 %v211, %v1603
    %v1605 = vand.u32 %v1604, 4294901760
    %1606 = vmatpush.msra.mxu0 %v1605
    %v1607 = vand.u32 %v18, 4294901760
    %1608 = vmatmul.f32.gmra.mxu0 %v1607
    %v1609 = vpop.f32.mrf.mxu0
    %v1610 = vadd.f32 %v1541, %v1609
    %1611 = vdwg.mxu0
    %v1612 = vand.u32 %v271, 4294901760
    %1613 = vmatpush.msra.mxu0 %v1612
    %v1614 = vand.u32 %v267, 4294901760
    %1615 = vmatpush.msra.mxu0 %v1614
    %v1616 = vand.u32 %v263, 4294901760
    %1617 = vmatpush.msra.mxu0 %v1616
    %v1618 = vand.u32 %v259, 4294901760
    %1619 = vmatpush.msra.mxu0 %v1618
    %v1620 = vand.u32 %v255, 4294901760
    %1621 = vmatpush.msra.mxu0 %v1620
    %v1622 = vand.u32 %v251, 4294901760
    %1623 = vmatpush.msra.mxu0 %v1622
    %v1624 = vand.u32 %v247, 4294901760
    %1625 = vmatpush.msra.mxu0 %v1624
    %v1626 = vand.u32 %v243, 4294901760
    %1627 = vmatpush.msra.mxu0 %v1626
    %v1628 = vand.u32 %v239, 4294901760
    %1629 = vmatpush.msra.mxu0 %v1628
    %v1630 = vand.u32 %v235, 4294901760
    %1631 = vmatpush.msra.mxu0 %v1630
    %v1632 = vand.u32 %v231, 4294901760
    %1633 = vmatpush.msra.mxu0 %v1632
    %v1634 = vand.u32 %v227, 4294901760
    %1635 = vmatpush.msra.mxu0 %v1634
    %v1636 = vand.u32 %v223, 4294901760
    %1637 = vmatpush.msra.mxu0 %v1636
    %v1638 = vand.u32 %v219, 4294901760
    %1639 = vmatpush.msra.mxu0 %v1638
    %v1640 = vand.u32 %v215, 4294901760
    %1641 = vmatpush.msra.mxu0 %v1640
    %v1642 = vand.u32 %v211, 4294901760
    %1643 = vmatpush.msra.mxu0 %v1642
    %v1644 = vand.u32 %v18, 4294901760
    %1645 = vmatmul.f32.gmra.mxu0 %v1644
    %v1646 = vpop.f32.mrf.mxu0
    %v1647 = vadd.f32 %v1610, %v1646
    %1648 = vdwg.mxu0
    %v1649 = vand.u32 %v80, 4294901760
    %1650 = vmatpush.msra.mxu0 %v1649
    %v1651 = vand.u32 %v76, 4294901760
    %1652 = vmatpush.msra.mxu0 %v1651
    %v1653 = vand.u32 %v72, 4294901760
    %1654 = vmatpush.msra.mxu0 %v1653
    %v1655 = vand.u32 %v68, 4294901760
    %1656 = vmatpush.msra.mxu0 %v1655
    %v1657 = vand.u32 %v64, 4294901760
    %1658 = vmatpush.msra.mxu0 %v1657
    %v1659 = vand.u32 %v60, 4294901760
    %1660 = vmatpush.msra.mxu0 %v1659
    %v1661 = vand.u32 %v56, 4294901760
    %1662 = vmatpush.msra.mxu0 %v1661
    %v1663 = vand.u32 %v52, 4294901760
    %1664 = vmatpush.msra.mxu0 %v1663
    %v1665 = vand.u32 %v48, 4294901760
    %1666 = vmatpush.msra.mxu0 %v1665
    %v1667 = vand.u32 %v44, 4294901760
    %1668 = vmatpush.msra.mxu0 %v1667
    %v1669 = vand.u32 %v40, 4294901760
    %1670 = vmatpush.msra.mxu0 %v1669
    %v1671 = vand.u32 %v36, 4294901760
    %1672 = vmatpush.msra.mxu0 %v1671
    %v1673 = vand.u32 %v32, 4294901760
    %1674 = vmatpush.msra.mxu0 %v1673
    %v1675 = vand.u32 %v28, 4294901760
    %1676 = vmatpush.msra.mxu0 %v1675
    %v1677 = vand.u32 %v24, 4294901760
    %1678 = vmatpush.msra.mxu0 %v1677
    %v1679 = vand.u32 %v20, 4294901760
    %1680 = vmatpush.msra.mxu0 %v1679
    %v1681 = vand.u32 %v15, 4294901760
    %v1682 = vsub.f32 %v15, %v1681
    %v1683 = vand.u32 %v1682, 4294901760
    %v1684 = vsub.f32 %v1682, %v1683
    %v1685 = vand.u32 %v1684, 4294901760
    %1686 = vmatmul.f32.gmra.mxu0 %v1685
    %v1687 = vpop.f32.mrf.mxu0
    %v1688 = vadd.f32 %v278, %v1687
    %1689 = vdwg.mxu0
    %v1690 = vand.u32 %v80, 4294901760
    %v1691 = vsub.f32 %v80, %v1690
    %v1692 = vand.u32 %v1691, 4294901760
    %v1693 = vsub.f32 %v1691, %v1692
    %v1694 = vand.u32 %v1693, 4294901760
    %1695 = vmatpush.msra.mxu0 %v1694
    %v1696 = vand.u32 %v76, 4294901760
    %v1697 = vsub.f32 %v76, %v1696
    %v1698 = vand.u32 %v1697, 4294901760
    %v1699 = vsub.f32 %v1697, %v1698
    %v1700 = vand.u32 %v1699, 4294901760
    %1701 = vmatpush.msra.mxu0 %v1700
    %v1702 = vand.u32 %v72, 4294901760
    %v1703 = vsub.f32 %v72, %v1702
    %v1704 = vand.u32 %v1703, 4294901760
    %v1705 = vsub.f32 %v1703, %v1704
    %v1706 = vand.u32 %v1705, 4294901760
    %1707 = vmatpush.msra.mxu0 %v1706
    %v1708 = vand.u32 %v68, 4294901760
    %v1709 = vsub.f32 %v68, %v1708
    %v1710 = vand.u32 %v1709, 4294901760
    %v1711 = vsub.f32 %v1709, %v1710
    %v1712 = vand.u32 %v1711, 4294901760
    %1713 = vmatpush.msra.mxu0 %v1712
    %v1714 = vand.u32 %v64, 4294901760
    %v1715 = vsub.f32 %v64, %v1714
    %v1716 = vand.u32 %v1715, 4294901760
    %v1717 = vsub.f32 %v1715, %v1716
    %v1718 = vand.u32 %v1717, 4294901760
    %1719 = vmatpush.msra.mxu0 %v1718
    %v1720 = vand.u32 %v60, 4294901760
    %v1721 = vsub.f32 %v60, %v1720
    %v1722 = vand.u32 %v1721, 4294901760
    %v1723 = vsub.f32 %v1721, %v1722
    %v1724 = vand.u32 %v1723, 4294901760
    %1725 = vmatpush.msra.mxu0 %v1724
    %v1726 = vand.u32 %v56, 4294901760
    %v1727 = vsub.f32 %v56, %v1726
    %v1728 = vand.u32 %v1727, 4294901760
    %v1729 = vsub.f32 %v1727, %v1728
    %v1730 = vand.u32 %v1729, 4294901760
    %1731 = vmatpush.msra.mxu0 %v1730
    %v1732 = vand.u32 %v52, 4294901760
    %v1733 = vsub.f32 %v52, %v1732
    %v1734 = vand.u32 %v1733, 4294901760
    %v1735 = vsub.f32 %v1733, %v1734
    %v1736 = vand.u32 %v1735, 4294901760
    %1737 = vmatpush.msra.mxu0 %v1736
    %v1738 = vand.u32 %v48, 4294901760
    %v1739 = vsub.f32 %v48, %v1738
    %v1740 = vand.u32 %v1739, 4294901760
    %v1741 = vsub.f32 %v1739, %v1740
    %v1742 = vand.u32 %v1741, 4294901760
    %1743 = vmatpush.msra.mxu0 %v1742
    %v1744 = vand.u32 %v44, 4294901760
    %v1745 = vsub.f32 %v44, %v1744
    %v1746 = vand.u32 %v1745, 4294901760
    %v1747 = vsub.f32 %v1745, %v1746
    %v1748 = vand.u32 %v1747, 4294901760
    %1749 = vmatpush.msra.mxu0 %v1748
    %v1750 = vand.u32 %v40, 4294901760
    %v1751 = vsub.f32 %v40, %v1750
    %v1752 = vand.u32 %v1751, 4294901760
    %v1753 = vsub.f32 %v1751, %v1752
    %v1754 = vand.u32 %v1753, 4294901760
    %1755 = vmatpush.msra.mxu0 %v1754
    %v1756 = vand.u32 %v36, 4294901760
    %v1757 = vsub.f32 %v36, %v1756
    %v1758 = vand.u32 %v1757, 4294901760
    %v1759 = vsub.f32 %v1757, %v1758
    %v1760 = vand.u32 %v1759, 4294901760
    %1761 = vmatpush.msra.mxu0 %v1760
    %v1762 = vand.u32 %v32, 4294901760
    %v1763 = vsub.f32 %v32, %v1762
    %v1764 = vand.u32 %v1763, 4294901760
    %v1765 = vsub.f32 %v1763, %v1764
    %v1766 = vand.u32 %v1765, 4294901760
    %1767 = vmatpush.msra.mxu0 %v1766
    %v1768 = vand.u32 %v28, 4294901760
    %v1769 = vsub.f32 %v28, %v1768
    %v1770 = vand.u32 %v1769, 4294901760
    %v1771 = vsub.f32 %v1769, %v1770
    %v1772 = vand.u32 %v1771, 4294901760
    %1773 = vmatpush.msra.mxu0 %v1772
    %v1774 = vand.u32 %v24, 4294901760
    %v1775 = vsub.f32 %v24, %v1774
    %v1776 = vand.u32 %v1775, 4294901760
    %v1777 = vsub.f32 %v1775, %v1776
    %v1778 = vand.u32 %v1777, 4294901760
    %1779 = vmatpush.msra.mxu0 %v1778
    %v1780 = vand.u32 %v20, 4294901760
    %v1781 = vsub.f32 %v20, %v1780
    %v1782 = vand.u32 %v1781, 4294901760
    %v1783 = vsub.f32 %v1781, %v1782
    %v1784 = vand.u32 %v1783, 4294901760
    %1785 = vmatpush.msra.mxu0 %v1784
    %v1786 = vand.u32 %v15, 4294901760
    %1787 = vmatmul.f32.gmra.mxu0 %v1786
    %v1788 = vpop.f32.mrf.mxu0
    %v1789 = vadd.f32 %v1688, %v1788
    %1790 = vdwg.mxu0
    %v1791 = vand.u32 %v80, 4294901760
    %v1792 = vsub.f32 %v80, %v1791
    %1793 = vmatpush.msra.mxu0 %v1792
    %v1794 = vand.u32 %v76, 4294901760
    %v1795 = vsub.f32 %v76, %v1794
    %1796 = vmatpush.msra.mxu0 %v1795
    %v1797 = vand.u32 %v72, 4294901760
    %v1798 = vsub.f32 %v72, %v1797
    %1799 = vmatpush.msra.mxu0 %v1798
    %v1800 = vand.u32 %v68, 4294901760
    %v1801 = vsub.f32 %v68, %v1800
    %1802 = vmatpush.msra.mxu0 %v1801
    %v1803 = vand.u32 %v64, 4294901760
    %v1804 = vsub.f32 %v64, %v1803
    %1805 = vmatpush.msra.mxu0 %v1804
    %v1806 = vand.u32 %v60, 4294901760
    %v1807 = vsub.f32 %v60, %v1806
    %1808 = vmatpush.msra.mxu0 %v1807
    %v1809 = vand.u32 %v56, 4294901760
    %v1810 = vsub.f32 %v56, %v1809
    %1811 = vmatpush.msra.mxu0 %v1810
    %v1812 = vand.u32 %v52, 4294901760
    %v1813 = vsub.f32 %v52, %v1812
    %1814 = vmatpush.msra.mxu0 %v1813
    %v1815 = vand.u32 %v48, 4294901760
    %v1816 = vsub.f32 %v48, %v1815
    %1817 = vmatpush.msra.mxu0 %v1816
    %v1818 = vand.u32 %v44, 4294901760
    %v1819 = vsub.f32 %v44, %v1818
    %1820 = vmatpush.msra.mxu0 %v1819
    %v1821 = vand.u32 %v40, 4294901760
    %v1822 = vsub.f32 %v40, %v1821
    %1823 = vmatpush.msra.mxu0 %v1822
    %v1824 = vand.u32 %v36, 4294901760
    %v1825 = vsub.f32 %v36, %v1824
    %1826 = vmatpush.msra.mxu0 %v1825
    %v1827 = vand.u32 %v32, 4294901760
    %v1828 = vsub.f32 %v32, %v1827
    %1829 = vmatpush.msra.mxu0 %v1828
    %v1830 = vand.u32 %v28, 4294901760
    %v1831 = vsub.f32 %v28, %v1830
    %1832 = vmatpush.msra.mxu0 %v1831
    %v1833 = vand.u32 %v24, 4294901760
    %v1834 = vsub.f32 %v24, %v1833
    %1835 = vmatpush.msra.mxu0 %v1834
    %v1836 = vand.u32 %v20, 4294901760
    %v1837 = vsub.f32 %v20, %v1836
    %1838 = vmatpush.msra.mxu0 %v1837
    %v1839 = vand.u32 %v15, 4294901760
    %v1840 = vsub.f32 %v15, %v1839
    %1841 = vmatmul.f32.gmra.mxu0 %v1840
    %v1842 = vpop.f32.mrf.mxu0
    %v1843 = vadd.f32 %v1789, %v1842
    %1844 = vdwg.mxu0
    %v1845 = vand.u32 %v80, 4294901760
    %1846 = vmatpush.msra.mxu0 %v1845
    %v1847 = vand.u32 %v76, 4294901760
    %1848 = vmatpush.msra.mxu0 %v1847
    %v1849 = vand.u32 %v72, 4294901760
    %1850 = vmatpush.msra.mxu0 %v1849
    %v1851 = vand.u32 %v68, 4294901760
    %1852 = vmatpush.msra.mxu0 %v1851
    %v1853 = vand.u32 %v64, 4294901760
    %1854 = vmatpush.msra.mxu0 %v1853
    %v1855 = vand.u32 %v60, 4294901760
    %1856 = vmatpush.msra.mxu0 %v1855
    %v1857 = vand.u32 %v56, 4294901760
    %1858 = vmatpush.msra.mxu0 %v1857
    %v1859 = vand.u32 %v52, 4294901760
    %1860 = vmatpush.msra.mxu0 %v1859
    %v1861 = vand.u32 %v48, 4294901760
    %1862 = vmatpush.msra.mxu0 %v1861
    %v1863 = vand.u32 %v44, 4294901760
    %1864 = vmatpush.msra.mxu0 %v1863
    %v1865 = vand.u32 %v40, 4294901760
    %1866 = vmatpush.msra.mxu0 %v1865
    %v1867 = vand.u32 %v36, 4294901760
    %1868 = vmatpush.msra.mxu0 %v1867
    %v1869 = vand.u32 %v32, 4294901760
    %1870 = vmatpush.msra.mxu0 %v1869
    %v1871 = vand.u32 %v28, 4294901760
    %1872 = vmatpush.msra.mxu0 %v1871
    %v1873 = vand.u32 %v24, 4294901760
    %1874 = vmatpush.msra.mxu0 %v1873
    %v1875 = vand.u32 %v20, 4294901760
    %1876 = vmatpush.msra.mxu0 %v1875
    %v1877 = vand.u32 %v15, 4294901760
    %v1878 = vsub.f32 %v15, %v1877
    %v1879 = vand.u32 %v1878, 4294901760
    %1880 = vmatmul.f32.gmra.mxu0 %v1879
    %v1881 = vpop.f32.mrf.mxu0
    %v1882 = vadd.f32 %v1843, %v1881
    %1883 = vdwg.mxu0
    %v1884 = vand.u32 %v80, 4294901760
    %v1885 = vsub.f32 %v80, %v1884
    %v1886 = vand.u32 %v1885, 4294901760
    %1887 = vmatpush.msra.mxu0 %v1886
    %v1888 = vand.u32 %v76, 4294901760
    %v1889 = vsub.f32 %v76, %v1888
    %v1890 = vand.u32 %v1889, 4294901760
    %1891 = vmatpush.msra.mxu0 %v1890
    %v1892 = vand.u32 %v72, 4294901760
    %v1893 = vsub.f32 %v72, %v1892
    %v1894 = vand.u32 %v1893, 4294901760
    %1895 = vmatpush.msra.mxu0 %v1894
    %v1896 = vand.u32 %v68, 4294901760
    %v1897 = vsub.f32 %v68, %v1896
    %v1898 = vand.u32 %v1897, 4294901760
    %1899 = vmatpush.msra.mxu0 %v1898
    %v1900 = vand.u32 %v64, 4294901760
    %v1901 = vsub.f32 %v64, %v1900
    %v1902 = vand.u32 %v1901, 4294901760
    %1903 = vmatpush.msra.mxu0 %v1902
    %v1904 = vand.u32 %v60, 4294901760
    %v1905 = vsub.f32 %v60, %v1904
    %v1906 = vand.u32 %v1905, 4294901760
    %1907 = vmatpush.msra.mxu0 %v1906
    %v1908 = vand.u32 %v56, 4294901760
    %v1909 = vsub.f32 %v56, %v1908
    %v1910 = vand.u32 %v1909, 4294901760
    %1911 = vmatpush.msra.mxu0 %v1910
    %v1912 = vand.u32 %v52, 4294901760
    %v1913 = vsub.f32 %v52, %v1912
    %v1914 = vand.u32 %v1913, 4294901760
    %1915 = vmatpush.msra.mxu0 %v1914
    %v1916 = vand.u32 %v48, 4294901760
    %v1917 = vsub.f32 %v48, %v1916
    %v1918 = vand.u32 %v1917, 4294901760
    %1919 = vmatpush.msra.mxu0 %v1918
    %v1920 = vand.u32 %v44, 4294901760
    %v1921 = vsub.f32 %v44, %v1920
    %v1922 = vand.u32 %v1921, 4294901760
    %1923 = vmatpush.msra.mxu0 %v1922
    %v1924 = vand.u32 %v40, 4294901760
    %v1925 = vsub.f32 %v40, %v1924
    %v1926 = vand.u32 %v1925, 4294901760
    %1927 = vmatpush.msra.mxu0 %v1926
    %v1928 = vand.u32 %v36, 4294901760
    %v1929 = vsub.f32 %v36, %v1928
    %v1930 = vand.u32 %v1929, 4294901760
    %1931 = vmatpush.msra.mxu0 %v1930
    %v1932 = vand.u32 %v32, 4294901760
    %v1933 = vsub.f32 %v32, %v1932
    %v1934 = vand.u32 %v1933, 4294901760
    %1935 = vmatpush.msra.mxu0 %v1934
    %v1936 = vand.u32 %v28, 4294901760
    %v1937 = vsub.f32 %v28, %v1936
    %v1938 = vand.u32 %v1937, 4294901760
    %1939 = vmatpush.msra.mxu0 %v1938
    %v1940 = vand.u32 %v24, 4294901760
    %v1941 = vsub.f32 %v24, %v1940
    %v1942 = vand.u32 %v1941, 4294901760
    %1943 = vmatpush.msra.mxu0 %v1942
    %v1944 = vand.u32 %v20, 4294901760
    %v1945 = vsub.f32 %v20, %v1944
    %v1946 = vand.u32 %v1945, 4294901760
    %1947 = vmatpush.msra.mxu0 %v1946
    %v1948 = vand.u32 %v15, 4294901760
    %1949 = vmatmul.f32.gmra.mxu0 %v1948
    %v1950 = vpop.f32.mrf.mxu0
    %v1951 = vadd.f32 %v1882, %v1950
    %1952 = vdwg.mxu0
    %v1953 = vand.u32 %v80, 4294901760
    %1954 = vmatpush.msra.mxu0 %v1953
    %v1955 = vand.u32 %v76, 4294901760
    %1956 = vmatpush.msra.mxu0 %v1955
    %v1957 = vand.u32 %v72, 4294901760
    %1958 = vmatpush.msra.mxu0 %v1957
    %v1959 = vand.u32 %v68, 4294901760
    %1960 = vmatpush.msra.mxu0 %v1959
    %v1961 = vand.u32 %v64, 4294901760
    %1962 = vmatpush.msra.mxu0 %v1961
    %v1963 = vand.u32 %v60, 4294901760
    %1964 = vmatpush.msra.mxu0 %v1963
    %v1965 = vand.u32 %v56, 4294901760
    %1966 = vmatpush.msra.mxu0 %v1965
    %v1967 = vand.u32 %v52, 4294901760
    %1968 = vmatpush.msra.mxu0 %v1967
    %v1969 = vand.u32 %v48, 4294901760
    %1970 = vmatpush.msra.mxu0 %v1969
    %v1971 = vand.u32 %v44, 4294901760
    %1972 = vmatpush.msra.mxu0 %v1971
    %v1973 = vand.u32 %v40, 4294901760
    %1974 = vmatpush.msra.mxu0 %v1973
    %v1975 = vand.u32 %v36, 4294901760
    %1976 = vmatpush.msra.mxu0 %v1975
    %v1977 = vand.u32 %v32, 4294901760
    %1978 = vmatpush.msra.mxu0 %v1977
    %v1979 = vand.u32 %v28, 4294901760
    %1980 = vmatpush.msra.mxu0 %v1979
    %v1981 = vand.u32 %v24, 4294901760
    %1982 = vmatpush.msra.mxu0 %v1981
    %v1983 = vand.u32 %v20, 4294901760
    %1984 = vmatpush.msra.mxu0 %v1983
    %v1985 = vand.u32 %v15, 4294901760
    %1986 = vmatmul.f32.gmra.mxu0 %v1985
    %v1987 = vpop.f32.mrf.mxu0
    %v1988 = vadd.f32 %v1951, %v1987
    %1989 = vdwg.mxu0
    %v1990 = vand.u32 %v144, 4294901760
    %1991 = vmatpush.msra.mxu0 %v1990
    %v1992 = vand.u32 %v140, 4294901760
    %1993 = vmatpush.msra.mxu0 %v1992
    %v1994 = vand.u32 %v136, 4294901760
    %1995 = vmatpush.msra.mxu0 %v1994
    %v1996 = vand.u32 %v132, 4294901760
    %1997 = vmatpush.msra.mxu0 %v1996
    %v1998 = vand.u32 %v128, 4294901760
    %1999 = vmatpush.msra.mxu0 %v1998
    %v2000 = vand.u32 %v124, 4294901760
    %2001 = vmatpush.msra.mxu0 %v2000
    %v2002 = vand.u32 %v120, 4294901760
    %2003 = vmatpush.msra.mxu0 %v2002
    %v2004 = vand.u32 %v116, 4294901760
    %2005 = vmatpush.msra.mxu0 %v2004
    %v2006 = vand.u32 %v112, 4294901760
    %2007 = vmatpush.msra.mxu0 %v2006
    %v2008 = vand.u32 %v108, 4294901760
    %2009 = vmatpush.msra.mxu0 %v2008
    %v2010 = vand.u32 %v104, 4294901760
    %2011 = vmatpush.msra.mxu0 %v2010
    %v2012 = vand.u32 %v100, 4294901760
    %2013 = vmatpush.msra.mxu0 %v2012
    %v2014 = vand.u32 %v96, 4294901760
    %2015 = vmatpush.msra.mxu0 %v2014
    %v2016 = vand.u32 %v92, 4294901760
    %2017 = vmatpush.msra.mxu0 %v2016
    %v2018 = vand.u32 %v88, 4294901760
    %2019 = vmatpush.msra.mxu0 %v2018
    %v2020 = vand.u32 %v84, 4294901760
    %2021 = vmatpush.msra.mxu0 %v2020
    %v2022 = vand.u32 %v16, 4294901760
    %v2023 = vsub.f32 %v16, %v2022
    %v2024 = vand.u32 %v2023, 4294901760
    %v2025 = vsub.f32 %v2023, %v2024
    %v2026 = vand.u32 %v2025, 4294901760
    %2027 = vmatmul.f32.gmra.mxu0 %v2026
    %v2028 = vpop.f32.mrf.mxu0
    %v2029 = vadd.f32 %v1988, %v2028
    %2030 = vdwg.mxu0
    %v2031 = vand.u32 %v144, 4294901760
    %v2032 = vsub.f32 %v144, %v2031
    %v2033 = vand.u32 %v2032, 4294901760
    %v2034 = vsub.f32 %v2032, %v2033
    %v2035 = vand.u32 %v2034, 4294901760
    %2036 = vmatpush.msra.mxu0 %v2035
    %v2037 = vand.u32 %v140, 4294901760
    %v2038 = vsub.f32 %v140, %v2037
    %v2039 = vand.u32 %v2038, 4294901760
    %v2040 = vsub.f32 %v2038, %v2039
    %v2041 = vand.u32 %v2040, 4294901760
    %2042 = vmatpush.msra.mxu0 %v2041
    %v2043 = vand.u32 %v136, 4294901760
    %v2044 = vsub.f32 %v136, %v2043
    %v2045 = vand.u32 %v2044, 4294901760
    %v2046 = vsub.f32 %v2044, %v2045
    %v2047 = vand.u32 %v2046, 4294901760
    %2048 = vmatpush.msra.mxu0 %v2047
    %v2049 = vand.u32 %v132, 4294901760
    %v2050 = vsub.f32 %v132, %v2049
    %v2051 = vand.u32 %v2050, 4294901760
    %v2052 = vsub.f32 %v2050, %v2051
    %v2053 = vand.u32 %v2052, 4294901760
    %2054 = vmatpush.msra.mxu0 %v2053
    %v2055 = vand.u32 %v128, 4294901760
    %v2056 = vsub.f32 %v128, %v2055
    %v2057 = vand.u32 %v2056, 4294901760
    %v2058 = vsub.f32 %v2056, %v2057
    %v2059 = vand.u32 %v2058, 4294901760
    %2060 = vmatpush.msra.mxu0 %v2059
    %v2061 = vand.u32 %v124, 4294901760
    %v2062 = vsub.f32 %v124, %v2061
    %v2063 = vand.u32 %v2062, 4294901760
    %v2064 = vsub.f32 %v2062, %v2063
    %v2065 = vand.u32 %v2064, 4294901760
    %2066 = vmatpush.msra.mxu0 %v2065
    %v2067 = vand.u32 %v120, 4294901760
    %v2068 = vsub.f32 %v120, %v2067
    %v2069 = vand.u32 %v2068, 4294901760
    %v2070 = vsub.f32 %v2068, %v2069
    %v2071 = vand.u32 %v2070, 4294901760
    %2072 = vmatpush.msra.mxu0 %v2071
    %v2073 = vand.u32 %v116, 4294901760
    %v2074 = vsub.f32 %v116, %v2073
    %v2075 = vand.u32 %v2074, 4294901760
    %v2076 = vsub.f32 %v2074, %v2075
    %v2077 = vand.u32 %v2076, 4294901760
    %2078 = vmatpush.msra.mxu0 %v2077
    %v2079 = vand.u32 %v112, 4294901760
    %v2080 = vsub.f32 %v112, %v2079
    %v2081 = vand.u32 %v2080, 4294901760
    %v2082 = vsub.f32 %v2080, %v2081
    %v2083 = vand.u32 %v2082, 4294901760
    %2084 = vmatpush.msra.mxu0 %v2083
    %v2085 = vand.u32 %v108, 4294901760
    %v2086 = vsub.f32 %v108, %v2085
    %v2087 = vand.u32 %v2086, 4294901760
    %v2088 = vsub.f32 %v2086, %v2087
    %v2089 = vand.u32 %v2088, 4294901760
    %2090 = vmatpush.msra.mxu0 %v2089
    %v2091 = vand.u32 %v104, 4294901760
    %v2092 = vsub.f32 %v104, %v2091
    %v2093 = vand.u32 %v2092, 4294901760
    %v2094 = vsub.f32 %v2092, %v2093
    %v2095 = vand.u32 %v2094, 4294901760
    %2096 = vmatpush.msra.mxu0 %v2095
    %v2097 = vand.u32 %v100, 4294901760
    %v2098 = vsub.f32 %v100, %v2097
    %v2099 = vand.u32 %v2098, 4294901760
    %v2100 = vsub.f32 %v2098, %v2099
    %v2101 = vand.u32 %v2100, 4294901760
    %2102 = vmatpush.msra.mxu0 %v2101
    %v2103 = vand.u32 %v96, 4294901760
    %v2104 = vsub.f32 %v96, %v2103
    %v2105 = vand.u32 %v2104, 4294901760
    %v2106 = vsub.f32 %v2104, %v2105
    %v2107 = vand.u32 %v2106, 4294901760
    %2108 = vmatpush.msra.mxu0 %v2107
    %v2109 = vand.u32 %v92, 4294901760
    %v2110 = vsub.f32 %v92, %v2109
    %v2111 = vand.u32 %v2110, 4294901760
    %v2112 = vsub.f32 %v2110, %v2111
    %v2113 = vand.u32 %v2112, 4294901760
    %2114 = vmatpush.msra.mxu0 %v2113
    %v2115 = vand.u32 %v88, 4294901760
    %v2116 = vsub.f32 %v88, %v2115
    %v2117 = vand.u32 %v2116, 4294901760
    %v2118 = vsub.f32 %v2116, %v2117
    %v2119 = vand.u32 %v2118, 4294901760
    %2120 = vmatpush.msra.mxu0 %v2119
    %v2121 = vand.u32 %v84, 4294901760
    %v2122 = vsub.f32 %v84, %v2121
    %v2123 = vand.u32 %v2122, 4294901760
    %v2124 = vsub.f32 %v2122, %v2123
    %v2125 = vand.u32 %v2124, 4294901760
    %2126 = vmatpush.msra.mxu0 %v2125
    %v2127 = vand.u32 %v16, 4294901760
    %2128 = vmatmul.f32.gmra.mxu0 %v2127
    %v2129 = vpop.f32.mrf.mxu0
    %v2130 = vadd.f32 %v2029, %v2129
    %2131 = vdwg.mxu0
    %v2132 = vand.u32 %v144, 4294901760
    %v2133 = vsub.f32 %v144, %v2132
    %2134 = vmatpush.msra.mxu0 %v2133
    %v2135 = vand.u32 %v140, 4294901760
    %v2136 = vsub.f32 %v140, %v2135
    %2137 = vmatpush.msra.mxu0 %v2136
    %v2138 = vand.u32 %v136, 4294901760
    %v2139 = vsub.f32 %v136, %v2138
    %2140 = vmatpush.msra.mxu0 %v2139
    %v2141 = vand.u32 %v132, 4294901760
    %v2142 = vsub.f32 %v132, %v2141
    %2143 = vmatpush.msra.mxu0 %v2142
    %v2144 = vand.u32 %v128, 4294901760
    %v2145 = vsub.f32 %v128, %v2144
    %2146 = vmatpush.msra.mxu0 %v2145
    %v2147 = vand.u32 %v124, 4294901760
    %v2148 = vsub.f32 %v124, %v2147
    %2149 = vmatpush.msra.mxu0 %v2148
    %v2150 = vand.u32 %v120, 4294901760
    %v2151 = vsub.f32 %v120, %v2150
    %2152 = vmatpush.msra.mxu0 %v2151
    %v2153 = vand.u32 %v116, 4294901760
    %v2154 = vsub.f32 %v116, %v2153
    %2155 = vmatpush.msra.mxu0 %v2154
    %v2156 = vand.u32 %v112, 4294901760
    %v2157 = vsub.f32 %v112, %v2156
    %2158 = vmatpush.msra.mxu0 %v2157
    %v2159 = vand.u32 %v108, 4294901760
    %v2160 = vsub.f32 %v108, %v2159
    %2161 = vmatpush.msra.mxu0 %v2160
    %v2162 = vand.u32 %v104, 4294901760
    %v2163 = vsub.f32 %v104, %v2162
    %2164 = vmatpush.msra.mxu0 %v2163
    %v2165 = vand.u32 %v100, 4294901760
    %v2166 = vsub.f32 %v100, %v2165
    %2167 = vmatpush.msra.mxu0 %v2166
    %v2168 = vand.u32 %v96, 4294901760
    %v2169 = vsub.f32 %v96, %v2168
    %2170 = vmatpush.msra.mxu0 %v2169
    %v2171 = vand.u32 %v92, 4294901760
    %v2172 = vsub.f32 %v92, %v2171
    %2173 = vmatpush.msra.mxu0 %v2172
    %v2174 = vand.u32 %v88, 4294901760
    %v2175 = vsub.f32 %v88, %v2174
    %2176 = vmatpush.msra.mxu0 %v2175
    %v2177 = vand.u32 %v84, 4294901760
    %v2178 = vsub.f32 %v84, %v2177
    %2179 = vmatpush.msra.mxu0 %v2178
    %v2180 = vand.u32 %v16, 4294901760
    %v2181 = vsub.f32 %v16, %v2180
    %2182 = vmatmul.f32.gmra.mxu0 %v2181
    %v2183 = vpop.f32.mrf.mxu0
    %v2184 = vadd.f32 %v2130, %v2183
    %2185 = vdwg.mxu0
    %v2186 = vand.u32 %v144, 4294901760
    %2187 = vmatpush.msra.mxu0 %v2186
    %v2188 = vand.u32 %v140, 4294901760
    %2189 = vmatpush.msra.mxu0 %v2188
    %v2190 = vand.u32 %v136, 4294901760
    %2191 = vmatpush.msra.mxu0 %v2190
    %v2192 = vand.u32 %v132, 4294901760
    %2193 = vmatpush.msra.mxu0 %v2192
    %v2194 = vand.u32 %v128, 4294901760
    %2195 = vmatpush.msra.mxu0 %v2194
    %v2196 = vand.u32 %v124, 4294901760
    %2197 = vmatpush.msra.mxu0 %v2196
    %v2198 = vand.u32 %v120, 4294901760
    %2199 = vmatpush.msra.mxu0 %v2198
    %v2200 = vand.u32 %v116, 4294901760
    %2201 = vmatpush.msra.mxu0 %v2200
    %v2202 = vand.u32 %v112, 4294901760
    %2203 = vmatpush.msra.mxu0 %v2202
    %v2204 = vand.u32 %v108, 4294901760
    %2205 = vmatpush.msra.mxu0 %v2204
    %v2206 = vand.u32 %v104, 4294901760
    %2207 = vmatpush.msra.mxu0 %v2206
    %v2208 = vand.u32 %v100, 4294901760
    %2209 = vmatpush.msra.mxu0 %v2208
    %v2210 = vand.u32 %v96, 4294901760
    %2211 = vmatpush.msra.mxu0 %v2210
    %v2212 = vand.u32 %v92, 4294901760
    %2213 = vmatpush.msra.mxu0 %v2212
    %v2214 = vand.u32 %v88, 4294901760
    %2215 = vmatpush.msra.mxu0 %v2214
    %v2216 = vand.u32 %v84, 4294901760
    %2217 = vmatpush.msra.mxu0 %v2216
    %v2218 = vand.u32 %v16, 4294901760
    %v2219 = vsub.f32 %v16, %v2218
    %v2220 = vand.u32 %v2219, 4294901760
    %2221 = vmatmul.f32.gmra.mxu0 %v2220
    %v2222 = vpop.f32.mrf.mxu0
    %v2223 = vadd.f32 %v2184, %v2222
    %2224 = vdwg.mxu0
    %v2225 = vand.u32 %v144, 4294901760
    %v2226 = vsub.f32 %v144, %v2225
    %v2227 = vand.u32 %v2226, 4294901760
    %2228 = vmatpush.msra.mxu0 %v2227
    %v2229 = vand.u32 %v140, 4294901760
    %v2230 = vsub.f32 %v140, %v2229
    %v2231 = vand.u32 %v2230, 4294901760
    %2232 = vmatpush.msra.mxu0 %v2231
    %v2233 = vand.u32 %v136, 4294901760
    %v2234 = vsub.f32 %v136, %v2233
    %v2235 = vand.u32 %v2234, 4294901760
    %2236 = vmatpush.msra.mxu0 %v2235
    %v2237 = vand.u32 %v132, 4294901760
    %v2238 = vsub.f32 %v132, %v2237
    %v2239 = vand.u32 %v2238, 4294901760
    %2240 = vmatpush.msra.mxu0 %v2239
    %v2241 = vand.u32 %v128, 4294901760
    %v2242 = vsub.f32 %v128, %v2241
    %v2243 = vand.u32 %v2242, 4294901760
    %2244 = vmatpush.msra.mxu0 %v2243
    %v2245 = vand.u32 %v124, 4294901760
    %v2246 = vsub.f32 %v124, %v2245
    %v2247 = vand.u32 %v2246, 4294901760
    %2248 = vmatpush.msra.mxu0 %v2247
    %v2249 = vand.u32 %v120, 4294901760
    %v2250 = vsub.f32 %v120, %v2249
    %v2251 = vand.u32 %v2250, 4294901760
    %2252 = vmatpush.msra.mxu0 %v2251
    %v2253 = vand.u32 %v116, 4294901760
    %v2254 = vsub.f32 %v116, %v2253
    %v2255 = vand.u32 %v2254, 4294901760
    %2256 = vmatpush.msra.mxu0 %v2255
    %v2257 = vand.u32 %v112, 4294901760
    %v2258 = vsub.f32 %v112, %v2257
    %v2259 = vand.u32 %v2258, 4294901760
    %2260 = vmatpush.msra.mxu0 %v2259
    %v2261 = vand.u32 %v108, 4294901760
    %v2262 = vsub.f32 %v108, %v2261
    %v2263 = vand.u32 %v2262, 4294901760
    %2264 = vmatpush.msra.mxu0 %v2263
    %v2265 = vand.u32 %v104, 4294901760
    %v2266 = vsub.f32 %v104, %v2265
    %v2267 = vand.u32 %v2266, 4294901760
    %2268 = vmatpush.msra.mxu0 %v2267
    %v2269 = vand.u32 %v100, 4294901760
    %v2270 = vsub.f32 %v100, %v2269
    %v2271 = vand.u32 %v2270, 4294901760
    %2272 = vmatpush.msra.mxu0 %v2271
    %v2273 = vand.u32 %v96, 4294901760
    %v2274 = vsub.f32 %v96, %v2273
    %v2275 = vand.u32 %v2274, 4294901760
    %2276 = vmatpush.msra.mxu0 %v2275
    %v2277 = vand.u32 %v92, 4294901760
    %v2278 = vsub.f32 %v92, %v2277
    %v2279 = vand.u32 %v2278, 4294901760
    %2280 = vmatpush.msra.mxu0 %v2279
    %v2281 = vand.u32 %v88, 4294901760
    %v2282 = vsub.f32 %v88, %v2281
    %v2283 = vand.u32 %v2282, 4294901760
    %2284 = vmatpush.msra.mxu0 %v2283
    %v2285 = vand.u32 %v84, 4294901760
    %v2286 = vsub.f32 %v84, %v2285
    %v2287 = vand.u32 %v2286, 4294901760
    %2288 = vmatpush.msra.mxu0 %v2287
    %v2289 = vand.u32 %v16, 4294901760
    %2290 = vmatmul.f32.gmra.mxu0 %v2289
    %v2291 = vpop.f32.mrf.mxu0
    %v2292 = vadd.f32 %v2223, %v2291
    %2293 = vdwg.mxu0
    %v2294 = vand.u32 %v144, 4294901760
    %2295 = vmatpush.msra.mxu0 %v2294
    %v2296 = vand.u32 %v140, 4294901760
    %2297 = vmatpush.msra.mxu0 %v2296
    %v2298 = vand.u32 %v136, 4294901760
    %2299 = vmatpush.msra.mxu0 %v2298
    %v2300 = vand.u32 %v132, 4294901760
    %2301 = vmatpush.msra.mxu0 %v2300
    %v2302 = vand.u32 %v128, 4294901760
    %2303 = vmatpush.msra.mxu0 %v2302
    %v2304 = vand.u32 %v124, 4294901760
    %2305 = vmatpush.msra.mxu0 %v2304
    %v2306 = vand.u32 %v120, 4294901760
    %2307 = vmatpush.msra.mxu0 %v2306
    %v2308 = vand.u32 %v116, 4294901760
    %2309 = vmatpush.msra.mxu0 %v2308
    %v2310 = vand.u32 %v112, 4294901760
    %2311 = vmatpush.msra.mxu0 %v2310
    %v2312 = vand.u32 %v108, 4294901760
    %2313 = vmatpush.msra.mxu0 %v2312
    %v2314 = vand.u32 %v104, 4294901760
    %2315 = vmatpush.msra.mxu0 %v2314
    %v2316 = vand.u32 %v100, 4294901760
    %2317 = vmatpush.msra.mxu0 %v2316
    %v2318 = vand.u32 %v96, 4294901760
    %2319 = vmatpush.msra.mxu0 %v2318
    %v2320 = vand.u32 %v92, 4294901760
    %2321 = vmatpush.msra.mxu0 %v2320
    %v2322 = vand.u32 %v88, 4294901760
    %2323 = vmatpush.msra.mxu0 %v2322
    %v2324 = vand.u32 %v84, 4294901760
    %2325 = vmatpush.msra.mxu0 %v2324
    %v2326 = vand.u32 %v16, 4294901760
    %2327 = vmatmul.f32.gmra.mxu0 %v2326
    %v2328 = vpop.f32.mrf.mxu0
    %v2329 = vadd.f32 %v2292, %v2328
    %2330 = vdwg.mxu0
    %v2331 = vand.u32 %v208, 4294901760
    %2332 = vmatpush.msra.mxu0 %v2331
    %v2333 = vand.u32 %v204, 4294901760
    %2334 = vmatpush.msra.mxu0 %v2333
    %v2335 = vand.u32 %v200, 4294901760
    %2336 = vmatpush.msra.mxu0 %v2335
    %v2337 = vand.u32 %v196, 4294901760
    %2338 = vmatpush.msra.mxu0 %v2337
    %v2339 = vand.u32 %v192, 4294901760
    %2340 = vmatpush.msra.mxu0 %v2339
    %v2341 = vand.u32 %v188, 4294901760
    %2342 = vmatpush.msra.mxu0 %v2341
    %v2343 = vand.u32 %v184, 4294901760
    %2344 = vmatpush.msra.mxu0 %v2343
    %v2345 = vand.u32 %v180, 4294901760
    %2346 = vmatpush.msra.mxu0 %v2345
    %v2347 = vand.u32 %v176, 4294901760
    %2348 = vmatpush.msra.mxu0 %v2347
    %v2349 = vand.u32 %v172, 4294901760
    %2350 = vmatpush.msra.mxu0 %v2349
    %v2351 = vand.u32 %v168, 4294901760
    %2352 = vmatpush.msra.mxu0 %v2351
    %v2353 = vand.u32 %v164, 4294901760
    %2354 = vmatpush.msra.mxu0 %v2353
    %v2355 = vand.u32 %v160, 4294901760
    %2356 = vmatpush.msra.mxu0 %v2355
    %v2357 = vand.u32 %v156, 4294901760
    %2358 = vmatpush.msra.mxu0 %v2357
    %v2359 = vand.u32 %v152, 4294901760
    %2360 = vmatpush.msra.mxu0 %v2359
    %v2361 = vand.u32 %v148, 4294901760
    %2362 = vmatpush.msra.mxu0 %v2361
    %v2363 = vand.u32 %v17, 4294901760
    %v2364 = vsub.f32 %v17, %v2363
    %v2365 = vand.u32 %v2364, 4294901760
    %v2366 = vsub.f32 %v2364, %v2365
    %v2367 = vand.u32 %v2366, 4294901760
    %2368 = vmatmul.f32.gmra.mxu0 %v2367
    %v2369 = vpop.f32.mrf.mxu0
    %v2370 = vadd.f32 %v2329, %v2369
    %2371 = vdwg.mxu0
    %v2372 = vand.u32 %v208, 4294901760
    %v2373 = vsub.f32 %v208, %v2372
    %v2374 = vand.u32 %v2373, 4294901760
    %v2375 = vsub.f32 %v2373, %v2374
    %v2376 = vand.u32 %v2375, 4294901760
    %2377 = vmatpush.msra.mxu0 %v2376
    %v2378 = vand.u32 %v204, 4294901760
    %v2379 = vsub.f32 %v204, %v2378
    %v2380 = vand.u32 %v2379, 4294901760
    %v2381 = vsub.f32 %v2379, %v2380
    %v2382 = vand.u32 %v2381, 4294901760
    %2383 = vmatpush.msra.mxu0 %v2382
    %v2384 = vand.u32 %v200, 4294901760
    %v2385 = vsub.f32 %v200, %v2384
    %v2386 = vand.u32 %v2385, 4294901760
    %v2387 = vsub.f32 %v2385, %v2386
    %v2388 = vand.u32 %v2387, 4294901760
    %2389 = vmatpush.msra.mxu0 %v2388
    %v2390 = vand.u32 %v196, 4294901760
    %v2391 = vsub.f32 %v196, %v2390
    %v2392 = vand.u32 %v2391, 4294901760
    %v2393 = vsub.f32 %v2391, %v2392
    %v2394 = vand.u32 %v2393, 4294901760
    %2395 = vmatpush.msra.mxu0 %v2394
    %v2396 = vand.u32 %v192, 4294901760
    %v2397 = vsub.f32 %v192, %v2396
    %v2398 = vand.u32 %v2397, 4294901760
    %v2399 = vsub.f32 %v2397, %v2398
    %v2400 = vand.u32 %v2399, 4294901760
    %2401 = vmatpush.msra.mxu0 %v2400
    %v2402 = vand.u32 %v188, 4294901760
    %v2403 = vsub.f32 %v188, %v2402
    %v2404 = vand.u32 %v2403, 4294901760
    %v2405 = vsub.f32 %v2403, %v2404
    %v2406 = vand.u32 %v2405, 4294901760
    %2407 = vmatpush.msra.mxu0 %v2406
    %v2408 = vand.u32 %v184, 4294901760
    %v2409 = vsub.f32 %v184, %v2408
    %v2410 = vand.u32 %v2409, 4294901760
    %v2411 = vsub.f32 %v2409, %v2410
    %v2412 = vand.u32 %v2411, 4294901760
    %2413 = vmatpush.msra.mxu0 %v2412
    %v2414 = vand.u32 %v180, 4294901760
    %v2415 = vsub.f32 %v180, %v2414
    %v2416 = vand.u32 %v2415, 4294901760
    %v2417 = vsub.f32 %v2415, %v2416
    %v2418 = vand.u32 %v2417, 4294901760
    %2419 = vmatpush.msra.mxu0 %v2418
    %v2420 = vand.u32 %v176, 4294901760
    %v2421 = vsub.f32 %v176, %v2420
    %v2422 = vand.u32 %v2421, 4294901760
    %v2423 = vsub.f32 %v2421, %v2422
    %v2424 = vand.u32 %v2423, 4294901760
    %2425 = vmatpush.msra.mxu0 %v2424
    %v2426 = vand.u32 %v172, 4294901760
    %v2427 = vsub.f32 %v172, %v2426
    %v2428 = vand.u32 %v2427, 4294901760
    %v2429 = vsub.f32 %v2427, %v2428
    %v2430 = vand.u32 %v2429, 4294901760
    %2431 = vmatpush.msra.mxu0 %v2430
    %v2432 = vand.u32 %v168, 4294901760
    %v2433 = vsub.f32 %v168, %v2432
    %v2434 = vand.u32 %v2433, 4294901760
    %v2435 = vsub.f32 %v2433, %v2434
    %v2436 = vand.u32 %v2435, 4294901760
    %2437 = vmatpush.msra.mxu0 %v2436
    %v2438 = vand.u32 %v164, 4294901760
    %v2439 = vsub.f32 %v164, %v2438
    %v2440 = vand.u32 %v2439, 4294901760
    %v2441 = vsub.f32 %v2439, %v2440
    %v2442 = vand.u32 %v2441, 4294901760
    %2443 = vmatpush.msra.mxu0 %v2442
    %v2444 = vand.u32 %v160, 4294901760
    %v2445 = vsub.f32 %v160, %v2444
    %v2446 = vand.u32 %v2445, 4294901760
    %v2447 = vsub.f32 %v2445, %v2446
    %v2448 = vand.u32 %v2447, 4294901760
    %2449 = vmatpush.msra.mxu0 %v2448
    %v2450 = vand.u32 %v156, 4294901760
    %v2451 = vsub.f32 %v156, %v2450
    %v2452 = vand.u32 %v2451, 4294901760
    %v2453 = vsub.f32 %v2451, %v2452
    %v2454 = vand.u32 %v2453, 4294901760
    %2455 = vmatpush.msra.mxu0 %v2454
    %v2456 = vand.u32 %v152, 4294901760
    %v2457 = vsub.f32 %v152, %v2456
    %v2458 = vand.u32 %v2457, 4294901760
    %v2459 = vsub.f32 %v2457, %v2458
    %v2460 = vand.u32 %v2459, 4294901760
    %2461 = vmatpush.msra.mxu0 %v2460
    %v2462 = vand.u32 %v148, 4294901760
    %v2463 = vsub.f32 %v148, %v2462
    %v2464 = vand.u32 %v2463, 4294901760
    %v2465 = vsub.f32 %v2463, %v2464
    %v2466 = vand.u32 %v2465, 4294901760
    %2467 = vmatpush.msra.mxu0 %v2466
    %v2468 = vand.u32 %v17, 4294901760
    %2469 = vmatmul.f32.gmra.mxu0 %v2468
    %v2470 = vpop.f32.mrf.mxu0
    %v2471 = vadd.f32 %v2370, %v2470
    %2472 = vdwg.mxu0
    %v2473 = vand.u32 %v208, 4294901760
    %v2474 = vsub.f32 %v208, %v2473
    %2475 = vmatpush.msra.mxu0 %v2474
    %v2476 = vand.u32 %v204, 4294901760
    %v2477 = vsub.f32 %v204, %v2476
    %2478 = vmatpush.msra.mxu0 %v2477
    %v2479 = vand.u32 %v200, 4294901760
    %v2480 = vsub.f32 %v200, %v2479
    %2481 = vmatpush.msra.mxu0 %v2480
    %v2482 = vand.u32 %v196, 4294901760
    %v2483 = vsub.f32 %v196, %v2482
    %2484 = vmatpush.msra.mxu0 %v2483
    %v2485 = vand.u32 %v192, 4294901760
    %v2486 = vsub.f32 %v192, %v2485
    %2487 = vmatpush.msra.mxu0 %v2486
    %v2488 = vand.u32 %v188, 4294901760
    %v2489 = vsub.f32 %v188, %v2488
    %2490 = vmatpush.msra.mxu0 %v2489
    %v2491 = vand.u32 %v184, 4294901760
    %v2492 = vsub.f32 %v184, %v2491
    %2493 = vmatpush.msra.mxu0 %v2492
    %v2494 = vand.u32 %v180, 4294901760
    %v2495 = vsub.f32 %v180, %v2494
    %2496 = vmatpush.msra.mxu0 %v2495
    %v2497 = vand.u32 %v176, 4294901760
    %v2498 = vsub.f32 %v176, %v2497
    %2499 = vmatpush.msra.mxu0 %v2498
    %v2500 = vand.u32 %v172, 4294901760
    %v2501 = vsub.f32 %v172, %v2500
    %2502 = vmatpush.msra.mxu0 %v2501
    %v2503 = vand.u32 %v168, 4294901760
    %v2504 = vsub.f32 %v168, %v2503
    %2505 = vmatpush.msra.mxu0 %v2504
    %v2506 = vand.u32 %v164, 4294901760
    %v2507 = vsub.f32 %v164, %v2506
    %2508 = vmatpush.msra.mxu0 %v2507
    %v2509 = vand.u32 %v160, 4294901760
    %v2510 = vsub.f32 %v160, %v2509
    %2511 = vmatpush.msra.mxu0 %v2510
    %v2512 = vand.u32 %v156, 4294901760
    %v2513 = vsub.f32 %v156, %v2512
    %2514 = vmatpush.msra.mxu0 %v2513
    %v2515 = vand.u32 %v152, 4294901760
    %v2516 = vsub.f32 %v152, %v2515
    %2517 = vmatpush.msra.mxu0 %v2516
    %v2518 = vand.u32 %v148, 4294901760
    %v2519 = vsub.f32 %v148, %v2518
    %2520 = vmatpush.msra.mxu0 %v2519
    %v2521 = vand.u32 %v17, 4294901760
    %v2522 = vsub.f32 %v17, %v2521
    %2523 = vmatmul.f32.gmra.mxu0 %v2522
    %v2524 = vpop.f32.mrf.mxu0
    %v2525 = vadd.f32 %v2471, %v2524
    %2526 = vdwg.mxu0
    %v2527 = vand.u32 %v208, 4294901760
    %2528 = vmatpush.msra.mxu0 %v2527
    %v2529 = vand.u32 %v204, 4294901760
    %2530 = vmatpush.msra.mxu0 %v2529
    %v2531 = vand.u32 %v200, 4294901760
    %2532 = vmatpush.msra.mxu0 %v2531
    %v2533 = vand.u32 %v196, 4294901760
    %2534 = vmatpush.msra.mxu0 %v2533
    %v2535 = vand.u32 %v192, 4294901760
    %2536 = vmatpush.msra.mxu0 %v2535
    %v2537 = vand.u32 %v188, 4294901760
    %2538 = vmatpush.msra.mxu0 %v2537
    %v2539 = vand.u32 %v184, 4294901760
    %2540 = vmatpush.msra.mxu0 %v2539
    %v2541 = vand.u32 %v180, 4294901760
    %2542 = vmatpush.msra.mxu0 %v2541
    %v2543 = vand.u32 %v176, 4294901760
    %2544 = vmatpush.msra.mxu0 %v2543
    %v2545 = vand.u32 %v172, 4294901760
    %2546 = vmatpush.msra.mxu0 %v2545
    %v2547 = vand.u32 %v168, 4294901760
    %2548 = vmatpush.msra.mxu0 %v2547
    %v2549 = vand.u32 %v164, 4294901760
    %2550 = vmatpush.msra.mxu0 %v2549
    %v2551 = vand.u32 %v160, 4294901760
    %2552 = vmatpush.msra.mxu0 %v2551
    %v2553 = vand.u32 %v156, 4294901760
    %2554 = vmatpush.msra.mxu0 %v2553
    %v2555 = vand.u32 %v152, 4294901760
    %2556 = vmatpush.msra.mxu0 %v2555
    %v2557 = vand.u32 %v148, 4294901760
    %2558 = vmatpush.msra.mxu0 %v2557
    %v2559 = vand.u32 %v17, 4294901760
    %v2560 = vsub.f32 %v17, %v2559
    %v2561 = vand.u32 %v2560, 4294901760
    %2562 = vmatmul.f32.gmra.mxu0 %v2561
    %v2563 = vpop.f32.mrf.mxu0
    %v2564 = vadd.f32 %v2525, %v2563
    %2565 = vdwg.mxu0
    %v2566 = vand.u32 %v208, 4294901760
    %v2567 = vsub.f32 %v208, %v2566
    %v2568 = vand.u32 %v2567, 4294901760
    %2569 = vmatpush.msra.mxu0 %v2568
    %v2570 = vand.u32 %v204, 4294901760
    %v2571 = vsub.f32 %v204, %v2570
    %v2572 = vand.u32 %v2571, 4294901760
    %2573 = vmatpush.msra.mxu0 %v2572
    %v2574 = vand.u32 %v200, 4294901760
    %v2575 = vsub.f32 %v200, %v2574
    %v2576 = vand.u32 %v2575, 4294901760
    %2577 = vmatpush.msra.mxu0 %v2576
    %v2578 = vand.u32 %v196, 4294901760
    %v2579 = vsub.f32 %v196, %v2578
    %v2580 = vand.u32 %v2579, 4294901760
    %2581 = vmatpush.msra.mxu0 %v2580
    %v2582 = vand.u32 %v192, 4294901760
    %v2583 = vsub.f32 %v192, %v2582
    %v2584 = vand.u32 %v2583, 4294901760
    %2585 = vmatpush.msra.mxu0 %v2584
    %v2586 = vand.u32 %v188, 4294901760
    %v2587 = vsub.f32 %v188, %v2586
    %v2588 = vand.u32 %v2587, 4294901760
    %2589 = vmatpush.msra.mxu0 %v2588
    %v2590 = vand.u32 %v184, 4294901760
    %v2591 = vsub.f32 %v184, %v2590
    %v2592 = vand.u32 %v2591, 4294901760
    %2593 = vmatpush.msra.mxu0 %v2592
    %v2594 = vand.u32 %v180, 4294901760
    %v2595 = vsub.f32 %v180, %v2594
    %v2596 = vand.u32 %v2595, 4294901760
    %2597 = vmatpush.msra.mxu0 %v2596
    %v2598 = vand.u32 %v176, 4294901760
    %v2599 = vsub.f32 %v176, %v2598
    %v2600 = vand.u32 %v2599, 4294901760
    %2601 = vmatpush.msra.mxu0 %v2600
    %v2602 = vand.u32 %v172, 4294901760
    %v2603 = vsub.f32 %v172, %v2602
    %v2604 = vand.u32 %v2603, 4294901760
    %2605 = vmatpush.msra.mxu0 %v2604
    %v2606 = vand.u32 %v168, 4294901760
    %v2607 = vsub.f32 %v168, %v2606
    %v2608 = vand.u32 %v2607, 4294901760
    %2609 = vmatpush.msra.mxu0 %v2608
    %v2610 = vand.u32 %v164, 4294901760
    %v2611 = vsub.f32 %v164, %v2610
    %v2612 = vand.u32 %v2611, 4294901760
    %2613 = vmatpush.msra.mxu0 %v2612
    %v2614 = vand.u32 %v160, 4294901760
    %v2615 = vsub.f32 %v160, %v2614
    %v2616 = vand.u32 %v2615, 4294901760
    %2617 = vmatpush.msra.mxu0 %v2616
    %v2618 = vand.u32 %v156, 4294901760
    %v2619 = vsub.f32 %v156, %v2618
    %v2620 = vand.u32 %v2619, 4294901760
    %2621 = vmatpush.msra.mxu0 %v2620
    %v2622 = vand.u32 %v152, 4294901760
    %v2623 = vsub.f32 %v152, %v2622
    %v2624 = vand.u32 %v2623, 4294901760
    %2625 = vmatpush.msra.mxu0 %v2624
    %v2626 = vand.u32 %v148, 4294901760
    %v2627 = vsub.f32 %v148, %v2626
    %v2628 = vand.u32 %v2627, 4294901760
    %2629 = vmatpush.msra.mxu0 %v2628
    %v2630 = vand.u32 %v17, 4294901760
    %2631 = vmatmul.f32.gmra.mxu0 %v2630
    %v2632 = vpop.f32.mrf.mxu0
    %v2633 = vadd.f32 %v2564, %v2632
    %2634 = vdwg.mxu0
    %v2635 = vand.u32 %v208, 4294901760
    %2636 = vmatpush.msra.mxu0 %v2635
    %v2637 = vand.u32 %v204, 4294901760
    %2638 = vmatpush.msra.mxu0 %v2637
    %v2639 = vand.u32 %v200, 4294901760
    %2640 = vmatpush.msra.mxu0 %v2639
    %v2641 = vand.u32 %v196, 4294901760
    %2642 = vmatpush.msra.mxu0 %v2641
    %v2643 = vand.u32 %v192, 4294901760
    %2644 = vmatpush.msra.mxu0 %v2643
    %v2645 = vand.u32 %v188, 4294901760
    %2646 = vmatpush.msra.mxu0 %v2645
    %v2647 = vand.u32 %v184, 4294901760
    %2648 = vmatpush.msra.mxu0 %v2647
    %v2649 = vand.u32 %v180, 4294901760
    %2650 = vmatpush.msra.mxu0 %v2649
    %v2651 = vand.u32 %v176, 4294901760
    %2652 = vmatpush.msra.mxu0 %v2651
    %v2653 = vand.u32 %v172, 4294901760
    %2654 = vmatpush.msra.mxu0 %v2653
    %v2655 = vand.u32 %v168, 4294901760
    %2656 = vmatpush.msra.mxu0 %v2655
    %v2657 = vand.u32 %v164, 4294901760
    %2658 = vmatpush.msra.mxu0 %v2657
    %v2659 = vand.u32 %v160, 4294901760
    %2660 = vmatpush.msra.mxu0 %v2659
    %v2661 = vand.u32 %v156, 4294901760
    %2662 = vmatpush.msra.mxu0 %v2661
    %v2663 = vand.u32 %v152, 4294901760
    %2664 = vmatpush.msra.mxu0 %v2663
    %v2665 = vand.u32 %v148, 4294901760
    %2666 = vmatpush.msra.mxu0 %v2665
    %v2667 = vand.u32 %v17, 4294901760
    %2668 = vmatmul.f32.gmra.mxu0 %v2667
    %v2669 = vpop.f32.mrf.mxu0
    %v2670 = vadd.f32 %v2633, %v2669
    %2671 = vdwg.mxu0
    %v2672 = vand.u32 %v272, 4294901760
    %2673 = vmatpush.msra.mxu0 %v2672
    %v2674 = vand.u32 %v268, 4294901760
    %2675 = vmatpush.msra.mxu0 %v2674
    %v2676 = vand.u32 %v264, 4294901760
    %2677 = vmatpush.msra.mxu0 %v2676
    %v2678 = vand.u32 %v260, 4294901760
    %2679 = vmatpush.msra.mxu0 %v2678
    %v2680 = vand.u32 %v256, 4294901760
    %2681 = vmatpush.msra.mxu0 %v2680
    %v2682 = vand.u32 %v252, 4294901760
    %2683 = vmatpush.msra.mxu0 %v2682
    %v2684 = vand.u32 %v248, 4294901760
    %2685 = vmatpush.msra.mxu0 %v2684
    %v2686 = vand.u32 %v244, 4294901760
    %2687 = vmatpush.msra.mxu0 %v2686
    %v2688 = vand.u32 %v240, 4294901760
    %2689 = vmatpush.msra.mxu0 %v2688
    %v2690 = vand.u32 %v236, 4294901760
    %2691 = vmatpush.msra.mxu0 %v2690
    %v2692 = vand.u32 %v232, 4294901760
    %2693 = vmatpush.msra.mxu0 %v2692
    %v2694 = vand.u32 %v228, 4294901760
    %2695 = vmatpush.msra.mxu0 %v2694
    %v2696 = vand.u32 %v224, 4294901760
    %2697 = vmatpush.msra.mxu0 %v2696
    %v2698 = vand.u32 %v220, 4294901760
    %2699 = vmatpush.msra.mxu0 %v2698
    %v2700 = vand.u32 %v216, 4294901760
    %2701 = vmatpush.msra.mxu0 %v2700
    %v2702 = vand.u32 %v212, 4294901760
    %2703 = vmatpush.msra.mxu0 %v2702
    %v2704 = vand.u32 %v18, 4294901760
    %v2705 = vsub.f32 %v18, %v2704
    %v2706 = vand.u32 %v2705, 4294901760
    %v2707 = vsub.f32 %v2705, %v2706
    %v2708 = vand.u32 %v2707, 4294901760
    %2709 = vmatmul.f32.gmra.mxu0 %v2708
    %v2710 = vpop.f32.mrf.mxu0
    %v2711 = vadd.f32 %v2670, %v2710
    %2712 = vdwg.mxu0
    %v2713 = vand.u32 %v272, 4294901760
    %v2714 = vsub.f32 %v272, %v2713
    %v2715 = vand.u32 %v2714, 4294901760
    %v2716 = vsub.f32 %v2714, %v2715
    %v2717 = vand.u32 %v2716, 4294901760
    %2718 = vmatpush.msra.mxu0 %v2717
    %v2719 = vand.u32 %v268, 4294901760
    %v2720 = vsub.f32 %v268, %v2719
    %v2721 = vand.u32 %v2720, 4294901760
    %v2722 = vsub.f32 %v2720, %v2721
    %v2723 = vand.u32 %v2722, 4294901760
    %2724 = vmatpush.msra.mxu0 %v2723
    %v2725 = vand.u32 %v264, 4294901760
    %v2726 = vsub.f32 %v264, %v2725
    %v2727 = vand.u32 %v2726, 4294901760
    %v2728 = vsub.f32 %v2726, %v2727
    %v2729 = vand.u32 %v2728, 4294901760
    %2730 = vmatpush.msra.mxu0 %v2729
    %v2731 = vand.u32 %v260, 4294901760
    %v2732 = vsub.f32 %v260, %v2731
    %v2733 = vand.u32 %v2732, 4294901760
    %v2734 = vsub.f32 %v2732, %v2733
    %v2735 = vand.u32 %v2734, 4294901760
    %2736 = vmatpush.msra.mxu0 %v2735
    %v2737 = vand.u32 %v256, 4294901760
    %v2738 = vsub.f32 %v256, %v2737
    %v2739 = vand.u32 %v2738, 4294901760
    %v2740 = vsub.f32 %v2738, %v2739
    %v2741 = vand.u32 %v2740, 4294901760
    %2742 = vmatpush.msra.mxu0 %v2741
    %v2743 = vand.u32 %v252, 4294901760
    %v2744 = vsub.f32 %v252, %v2743
    %v2745 = vand.u32 %v2744, 4294901760
    %v2746 = vsub.f32 %v2744, %v2745
    %v2747 = vand.u32 %v2746, 4294901760
    %2748 = vmatpush.msra.mxu0 %v2747
    %v2749 = vand.u32 %v248, 4294901760
    %v2750 = vsub.f32 %v248, %v2749
    %v2751 = vand.u32 %v2750, 4294901760
    %v2752 = vsub.f32 %v2750, %v2751
    %v2753 = vand.u32 %v2752, 4294901760
    %2754 = vmatpush.msra.mxu0 %v2753
    %v2755 = vand.u32 %v244, 4294901760
    %v2756 = vsub.f32 %v244, %v2755
    %v2757 = vand.u32 %v2756, 4294901760
    %v2758 = vsub.f32 %v2756, %v2757
    %v2759 = vand.u32 %v2758, 4294901760
    %2760 = vmatpush.msra.mxu0 %v2759
    %v2761 = vand.u32 %v240, 4294901760
    %v2762 = vsub.f32 %v240, %v2761
    %v2763 = vand.u32 %v2762, 4294901760
    %v2764 = vsub.f32 %v2762, %v2763
    %v2765 = vand.u32 %v2764, 4294901760
    %2766 = vmatpush.msra.mxu0 %v2765
    %v2767 = vand.u32 %v236, 4294901760
    %v2768 = vsub.f32 %v236, %v2767
    %v2769 = vand.u32 %v2768, 4294901760
    %v2770 = vsub.f32 %v2768, %v2769
    %v2771 = vand.u32 %v2770, 4294901760
    %2772 = vmatpush.msra.mxu0 %v2771
    %v2773 = vand.u32 %v232, 4294901760
    %v2774 = vsub.f32 %v232, %v2773
    %v2775 = vand.u32 %v2774, 4294901760
    %v2776 = vsub.f32 %v2774, %v2775
    %v2777 = vand.u32 %v2776, 4294901760
    %2778 = vmatpush.msra.mxu0 %v2777
    %v2779 = vand.u32 %v228, 4294901760
    %v2780 = vsub.f32 %v228, %v2779
    %v2781 = vand.u32 %v2780, 4294901760
    %v2782 = vsub.f32 %v2780, %v2781
    %v2783 = vand.u32 %v2782, 4294901760
    %2784 = vmatpush.msra.mxu0 %v2783
    %v2785 = vand.u32 %v224, 4294901760
    %v2786 = vsub.f32 %v224, %v2785
    %v2787 = vand.u32 %v2786, 4294901760
    %v2788 = vsub.f32 %v2786, %v2787
    %v2789 = vand.u32 %v2788, 4294901760
    %2790 = vmatpush.msra.mxu0 %v2789
    %v2791 = vand.u32 %v220, 4294901760
    %v2792 = vsub.f32 %v220, %v2791
    %v2793 = vand.u32 %v2792, 4294901760
    %v2794 = vsub.f32 %v2792, %v2793
    %v2795 = vand.u32 %v2794, 4294901760
    %2796 = vmatpush.msra.mxu0 %v2795
    %v2797 = vand.u32 %v216, 4294901760
    %v2798 = vsub.f32 %v216, %v2797
    %v2799 = vand.u32 %v2798, 4294901760
    %v2800 = vsub.f32 %v2798, %v2799
    %v2801 = vand.u32 %v2800, 4294901760
    %2802 = vmatpush.msra.mxu0 %v2801
    %v2803 = vand.u32 %v212, 4294901760
    %v2804 = vsub.f32 %v212, %v2803
    %v2805 = vand.u32 %v2804, 4294901760
    %v2806 = vsub.f32 %v2804, %v2805
    %v2807 = vand.u32 %v2806, 4294901760
    %2808 = vmatpush.msra.mxu0 %v2807
    %v2809 = vand.u32 %v18, 4294901760
    %2810 = vmatmul.f32.gmra.mxu0 %v2809
    %v2811 = vpop.f32.mrf.mxu0
    %v2812 = vadd.f32 %v2711, %v2811
    %2813 = vdwg.mxu0
    %v2814 = vand.u32 %v272, 4294901760
    %v2815 = vsub.f32 %v272, %v2814
    %2816 = vmatpush.msra.mxu0 %v2815
    %v2817 = vand.u32 %v268, 4294901760
    %v2818 = vsub.f32 %v268, %v2817
    %2819 = vmatpush.msra.mxu0 %v2818
    %v2820 = vand.u32 %v264, 4294901760
    %v2821 = vsub.f32 %v264, %v2820
    %2822 = vmatpush.msra.mxu0 %v2821
    %v2823 = vand.u32 %v260, 4294901760
    %v2824 = vsub.f32 %v260, %v2823
    %2825 = vmatpush.msra.mxu0 %v2824
    %v2826 = vand.u32 %v256, 4294901760
    %v2827 = vsub.f32 %v256, %v2826
    %2828 = vmatpush.msra.mxu0 %v2827
    %v2829 = vand.u32 %v252, 4294901760
    %v2830 = vsub.f32 %v252, %v2829
    %2831 = vmatpush.msra.mxu0 %v2830
    %v2832 = vand.u32 %v248, 4294901760
    %v2833 = vsub.f32 %v248, %v2832
    %2834 = vmatpush.msra.mxu0 %v2833
    %v2835 = vand.u32 %v244, 4294901760
    %v2836 = vsub.f32 %v244, %v2835
    %2837 = vmatpush.msra.mxu0 %v2836
    %v2838 = vand.u32 %v240, 4294901760
    %v2839 = vsub.f32 %v240, %v2838
    %2840 = vmatpush.msra.mxu0 %v2839
    %v2841 = vand.u32 %v236, 4294901760
    %v2842 = vsub.f32 %v236, %v2841
    %2843 = vmatpush.msra.mxu0 %v2842
    %v2844 = vand.u32 %v232, 4294901760
    %v2845 = vsub.f32 %v232, %v2844
    %2846 = vmatpush.msra.mxu0 %v2845
    %v2847 = vand.u32 %v228, 4294901760
    %v2848 = vsub.f32 %v228, %v2847
    %2849 = vmatpush.msra.mxu0 %v2848
    %v2850 = vand.u32 %v224, 4294901760
    %v2851 = vsub.f32 %v224, %v2850
    %2852 = vmatpush.msra.mxu0 %v2851
    %v2853 = vand.u32 %v220, 4294901760
    %v2854 = vsub.f32 %v220, %v2853
    %2855 = vmatpush.msra.mxu0 %v2854
    %v2856 = vand.u32 %v216, 4294901760
    %v2857 = vsub.f32 %v216, %v2856
    %2858 = vmatpush.msra.mxu0 %v2857
    %v2859 = vand.u32 %v212, 4294901760
    %v2860 = vsub.f32 %v212, %v2859
    %2861 = vmatpush.msra.mxu0 %v2860
    %v2862 = vand.u32 %v18, 4294901760
    %v2863 = vsub.f32 %v18, %v2862
    %2864 = vmatmul.f32.gmra.mxu0 %v2863
    %v2865 = vpop.f32.mrf.mxu0
    %v2866 = vadd.f32 %v2812, %v2865
    %2867 = vdwg.mxu0
    %v2868 = vand.u32 %v272, 4294901760
    %2869 = vmatpush.msra.mxu0 %v2868
    %v2870 = vand.u32 %v268, 4294901760
    %2871 = vmatpush.msra.mxu0 %v2870
    %v2872 = vand.u32 %v264, 4294901760
    %2873 = vmatpush.msra.mxu0 %v2872
    %v2874 = vand.u32 %v260, 4294901760
    %2875 = vmatpush.msra.mxu0 %v2874
    %v2876 = vand.u32 %v256, 4294901760
    %2877 = vmatpush.msra.mxu0 %v2876
    %v2878 = vand.u32 %v252, 4294901760
    %2879 = vmatpush.msra.mxu0 %v2878
    %v2880 = vand.u32 %v248, 4294901760
    %2881 = vmatpush.msra.mxu0 %v2880
    %v2882 = vand.u32 %v244, 4294901760
    %2883 = vmatpush.msra.mxu0 %v2882
    %v2884 = vand.u32 %v240, 4294901760
    %2885 = vmatpush.msra.mxu0 %v2884
    %v2886 = vand.u32 %v236, 4294901760
    %2887 = vmatpush.msra.mxu0 %v2886
    %v2888 = vand.u32 %v232, 4294901760
    %2889 = vmatpush.msra.mxu0 %v2888
    %v2890 = vand.u32 %v228, 4294901760
    %2891 = vmatpush.msra.mxu0 %v2890
    %v2892 = vand.u32 %v224, 4294901760
    %2893 = vmatpush.msra.mxu0 %v2892
    %v2894 = vand.u32 %v220, 4294901760
    %2895 = vmatpush.msra.mxu0 %v2894
    %v2896 = vand.u32 %v216, 4294901760
    %2897 = vmatpush.msra.mxu0 %v2896
    %v2898 = vand.u32 %v212, 4294901760
    %2899 = vmatpush.msra.mxu0 %v2898
    %v2900 = vand.u32 %v18, 4294901760
    %v2901 = vsub.f32 %v18, %v2900
    %v2902 = vand.u32 %v2901, 4294901760
    %2903 = vmatmul.f32.gmra.mxu0 %v2902
    %v2904 = vpop.f32.mrf.mxu0
    %v2905 = vadd.f32 %v2866, %v2904
    %2906 = vdwg.mxu0
    %v2907 = vand.u32 %v272, 4294901760
    %v2908 = vsub.f32 %v272, %v2907
    %v2909 = vand.u32 %v2908, 4294901760
    %2910 = vmatpush.msra.mxu0 %v2909
    %v2911 = vand.u32 %v268, 4294901760
    %v2912 = vsub.f32 %v268, %v2911
    %v2913 = vand.u32 %v2912, 4294901760
    %2914 = vmatpush.msra.mxu0 %v2913
    %v2915 = vand.u32 %v264, 4294901760
    %v2916 = vsub.f32 %v264, %v2915
    %v2917 = vand.u32 %v2916, 4294901760
    %2918 = vmatpush.msra.mxu0 %v2917
    %v2919 = vand.u32 %v260, 4294901760
    %v2920 = vsub.f32 %v260, %v2919
    %v2921 = vand.u32 %v2920, 4294901760
    %2922 = vmatpush.msra.mxu0 %v2921
    %v2923 = vand.u32 %v256, 4294901760
    %v2924 = vsub.f32 %v256, %v2923
    %v2925 = vand.u32 %v2924, 4294901760
    %2926 = vmatpush.msra.mxu0 %v2925
    %v2927 = vand.u32 %v252, 4294901760
    %v2928 = vsub.f32 %v252, %v2927
    %v2929 = vand.u32 %v2928, 4294901760
    %2930 = vmatpush.msra.mxu0 %v2929
    %v2931 = vand.u32 %v248, 4294901760
    %v2932 = vsub.f32 %v248, %v2931
    %v2933 = vand.u32 %v2932, 4294901760
    %2934 = vmatpush.msra.mxu0 %v2933
    %v2935 = vand.u32 %v244, 4294901760
    %v2936 = vsub.f32 %v244, %v2935
    %v2937 = vand.u32 %v2936, 4294901760
    %2938 = vmatpush.msra.mxu0 %v2937
    %v2939 = vand.u32 %v240, 4294901760
    %v2940 = vsub.f32 %v240, %v2939
    %v2941 = vand.u32 %v2940, 4294901760
    %2942 = vmatpush.msra.mxu0 %v2941
    %v2943 = vand.u32 %v236, 4294901760
    %v2944 = vsub.f32 %v236, %v2943
    %v2945 = vand.u32 %v2944, 4294901760
    %2946 = vmatpush.msra.mxu0 %v2945
    %v2947 = vand.u32 %v232, 4294901760
    %v2948 = vsub.f32 %v232, %v2947
    %v2949 = vand.u32 %v2948, 4294901760
    %2950 = vmatpush.msra.mxu0 %v2949
    %v2951 = vand.u32 %v228, 4294901760
    %v2952 = vsub.f32 %v228, %v2951
    %v2953 = vand.u32 %v2952, 4294901760
    %2954 = vmatpush.msra.mxu0 %v2953
    %v2955 = vand.u32 %v224, 4294901760
    %v2956 = vsub.f32 %v224, %v2955
    %v2957 = vand.u32 %v2956, 4294901760
    %2958 = vmatpush.msra.mxu0 %v2957
    %v2959 = vand.u32 %v220, 4294901760
    %v2960 = vsub.f32 %v220, %v2959
    %v2961 = vand.u32 %v2960, 4294901760
    %2962 = vmatpush.msra.mxu0 %v2961
    %v2963 = vand.u32 %v216, 4294901760
    %v2964 = vsub.f32 %v216, %v2963
    %v2965 = vand.u32 %v2964, 4294901760
    %2966 = vmatpush.msra.mxu0 %v2965
    %v2967 = vand.u32 %v212, 4294901760
    %v2968 = vsub.f32 %v212, %v2967
    %v2969 = vand.u32 %v2968, 4294901760
    %2970 = vmatpush.msra.mxu0 %v2969
    %v2971 = vand.u32 %v18, 4294901760
    %2972 = vmatmul.f32.gmra.mxu0 %v2971
    %v2973 = vpop.f32.mrf.mxu0
    %v2974 = vadd.f32 %v2905, %v2973
    %2975 = vdwg.mxu0
    %v2976 = vand.u32 %v272, 4294901760
    %2977 = vmatpush.msra.mxu0 %v2976
    %v2978 = vand.u32 %v268, 4294901760
    %2979 = vmatpush.msra.mxu0 %v2978
    %v2980 = vand.u32 %v264, 4294901760
    %2981 = vmatpush.msra.mxu0 %v2980
    %v2982 = vand.u32 %v260, 4294901760
    %2983 = vmatpush.msra.mxu0 %v2982
    %v2984 = vand.u32 %v256, 4294901760
    %2985 = vmatpush.msra.mxu0 %v2984
    %v2986 = vand.u32 %v252, 4294901760
    %2987 = vmatpush.msra.mxu0 %v2986
    %v2988 = vand.u32 %v248, 4294901760
    %2989 = vmatpush.msra.mxu0 %v2988
    %v2990 = vand.u32 %v244, 4294901760
    %2991 = vmatpush.msra.mxu0 %v2990
    %v2992 = vand.u32 %v240, 4294901760
    %2993 = vmatpush.msra.mxu0 %v2992
    %v2994 = vand.u32 %v236, 4294901760
    %2995 = vmatpush.msra.mxu0 %v2994
    %v2996 = vand.u32 %v232, 4294901760
    %2997 = vmatpush.msra.mxu0 %v2996
    %v2998 = vand.u32 %v228, 4294901760
    %2999 = vmatpush.msra.mxu0 %v2998
    %v3000 = vand.u32 %v224, 4294901760
    %3001 = vmatpush.msra.mxu0 %v3000
    %v3002 = vand.u32 %v220, 4294901760
    %3003 = vmatpush.msra.mxu0 %v3002
    %v3004 = vand.u32 %v216, 4294901760
    %3005 = vmatpush.msra.mxu0 %v3004
    %v3006 = vand.u32 %v212, 4294901760
    %3007 = vmatpush.msra.mxu0 %v3006
    %v3008 = vand.u32 %v18, 4294901760
    %3009 = vmatmul.f32.gmra.mxu0 %v3008
    %v3010 = vpop.f32.mrf.mxu0
    %v3011 = vadd.f32 %v2974, %v3010
    %3012 = vdwg.mxu0
    %v3013 = vand.u32 %v81, 4294901760
    %3014 = vmatpush.msra.mxu0 %v3013
    %v3015 = vand.u32 %v77, 4294901760
    %3016 = vmatpush.msra.mxu0 %v3015
    %v3017 = vand.u32 %v73, 4294901760
    %3018 = vmatpush.msra.mxu0 %v3017
    %v3019 = vand.u32 %v69, 4294901760
    %3020 = vmatpush.msra.mxu0 %v3019
    %v3021 = vand.u32 %v65, 4294901760
    %3022 = vmatpush.msra.mxu0 %v3021
    %v3023 = vand.u32 %v61, 4294901760
    %3024 = vmatpush.msra.mxu0 %v3023
    %v3025 = vand.u32 %v57, 4294901760
    %3026 = vmatpush.msra.mxu0 %v3025
    %v3027 = vand.u32 %v53, 4294901760
    %3028 = vmatpush.msra.mxu0 %v3027
    %v3029 = vand.u32 %v49, 4294901760
    %3030 = vmatpush.msra.mxu0 %v3029
    %v3031 = vand.u32 %v45, 4294901760
    %3032 = vmatpush.msra.mxu0 %v3031
    %v3033 = vand.u32 %v41, 4294901760
    %3034 = vmatpush.msra.mxu0 %v3033
    %v3035 = vand.u32 %v37, 4294901760
    %3036 = vmatpush.msra.mxu0 %v3035
    %v3037 = vand.u32 %v33, 4294901760
    %3038 = vmatpush.msra.mxu0 %v3037
    %v3039 = vand.u32 %v29, 4294901760
    %3040 = vmatpush.msra.mxu0 %v3039
    %v3041 = vand.u32 %v25, 4294901760
    %3042 = vmatpush.msra.mxu0 %v3041
    %v3043 = vand.u32 %v21, 4294901760
    %3044 = vmatpush.msra.mxu0 %v3043
    %v3045 = vand.u32 %v15, 4294901760
    %v3046 = vsub.f32 %v15, %v3045
    %v3047 = vand.u32 %v3046, 4294901760
    %v3048 = vsub.f32 %v3046, %v3047
    %v3049 = vand.u32 %v3048, 4294901760
    %3050 = vmatmul.f32.gmra.mxu0 %v3049
    %v3051 = vpop.f32.mrf.mxu0
    %v3052 = vadd.f32 %v279, %v3051
    %3053 = vdwg.mxu0
    %v3054 = vand.u32 %v81, 4294901760
    %v3055 = vsub.f32 %v81, %v3054
    %v3056 = vand.u32 %v3055, 4294901760
    %v3057 = vsub.f32 %v3055, %v3056
    %v3058 = vand.u32 %v3057, 4294901760
    %3059 = vmatpush.msra.mxu0 %v3058
    %v3060 = vand.u32 %v77, 4294901760
    %v3061 = vsub.f32 %v77, %v3060
    %v3062 = vand.u32 %v3061, 4294901760
    %v3063 = vsub.f32 %v3061, %v3062
    %v3064 = vand.u32 %v3063, 4294901760
    %3065 = vmatpush.msra.mxu0 %v3064
    %v3066 = vand.u32 %v73, 4294901760
    %v3067 = vsub.f32 %v73, %v3066
    %v3068 = vand.u32 %v3067, 4294901760
    %v3069 = vsub.f32 %v3067, %v3068
    %v3070 = vand.u32 %v3069, 4294901760
    %3071 = vmatpush.msra.mxu0 %v3070
    %v3072 = vand.u32 %v69, 4294901760
    %v3073 = vsub.f32 %v69, %v3072
    %v3074 = vand.u32 %v3073, 4294901760
    %v3075 = vsub.f32 %v3073, %v3074
    %v3076 = vand.u32 %v3075, 4294901760
    %3077 = vmatpush.msra.mxu0 %v3076
    %v3078 = vand.u32 %v65, 4294901760
    %v3079 = vsub.f32 %v65, %v3078
    %v3080 = vand.u32 %v3079, 4294901760
    %v3081 = vsub.f32 %v3079, %v3080
    %v3082 = vand.u32 %v3081, 4294901760
    %3083 = vmatpush.msra.mxu0 %v3082
    %v3084 = vand.u32 %v61, 4294901760
    %v3085 = vsub.f32 %v61, %v3084
    %v3086 = vand.u32 %v3085, 4294901760
    %v3087 = vsub.f32 %v3085, %v3086
    %v3088 = vand.u32 %v3087, 4294901760
    %3089 = vmatpush.msra.mxu0 %v3088
    %v3090 = vand.u32 %v57, 4294901760
    %v3091 = vsub.f32 %v57, %v3090
    %v3092 = vand.u32 %v3091, 4294901760
    %v3093 = vsub.f32 %v3091, %v3092
    %v3094 = vand.u32 %v3093, 4294901760
    %3095 = vmatpush.msra.mxu0 %v3094
    %v3096 = vand.u32 %v53, 4294901760
    %v3097 = vsub.f32 %v53, %v3096
    %v3098 = vand.u32 %v3097, 4294901760
    %v3099 = vsub.f32 %v3097, %v3098
    %v3100 = vand.u32 %v3099, 4294901760
    %3101 = vmatpush.msra.mxu0 %v3100
    %v3102 = vand.u32 %v49, 4294901760
    %v3103 = vsub.f32 %v49, %v3102
    %v3104 = vand.u32 %v3103, 4294901760
    %v3105 = vsub.f32 %v3103, %v3104
    %v3106 = vand.u32 %v3105, 4294901760
    %3107 = vmatpush.msra.mxu0 %v3106
    %v3108 = vand.u32 %v45, 4294901760
    %v3109 = vsub.f32 %v45, %v3108
    %v3110 = vand.u32 %v3109, 4294901760
    %v3111 = vsub.f32 %v3109, %v3110
    %v3112 = vand.u32 %v3111, 4294901760
    %3113 = vmatpush.msra.mxu0 %v3112
    %v3114 = vand.u32 %v41, 4294901760
    %v3115 = vsub.f32 %v41, %v3114
    %v3116 = vand.u32 %v3115, 4294901760
    %v3117 = vsub.f32 %v3115, %v3116
    %v3118 = vand.u32 %v3117, 4294901760
    %3119 = vmatpush.msra.mxu0 %v3118
    %v3120 = vand.u32 %v37, 4294901760
    %v3121 = vsub.f32 %v37, %v3120
    %v3122 = vand.u32 %v3121, 4294901760
    %v3123 = vsub.f32 %v3121, %v3122
    %v3124 = vand.u32 %v3123, 4294901760
    %3125 = vmatpush.msra.mxu0 %v3124
    %v3126 = vand.u32 %v33, 4294901760
    %v3127 = vsub.f32 %v33, %v3126
    %v3128 = vand.u32 %v3127, 4294901760
    %v3129 = vsub.f32 %v3127, %v3128
    %v3130 = vand.u32 %v3129, 4294901760
    %3131 = vmatpush.msra.mxu0 %v3130
    %v3132 = vand.u32 %v29, 4294901760
    %v3133 = vsub.f32 %v29, %v3132
    %v3134 = vand.u32 %v3133, 4294901760
    %v3135 = vsub.f32 %v3133, %v3134
    %v3136 = vand.u32 %v3135, 4294901760
    %3137 = vmatpush.msra.mxu0 %v3136
    %v3138 = vand.u32 %v25, 4294901760
    %v3139 = vsub.f32 %v25, %v3138
    %v3140 = vand.u32 %v3139, 4294901760
    %v3141 = vsub.f32 %v3139, %v3140
    %v3142 = vand.u32 %v3141, 4294901760
    %3143 = vmatpush.msra.mxu0 %v3142
    %v3144 = vand.u32 %v21, 4294901760
    %v3145 = vsub.f32 %v21, %v3144
    %v3146 = vand.u32 %v3145, 4294901760
    %v3147 = vsub.f32 %v3145, %v3146
    %v3148 = vand.u32 %v3147, 4294901760
    %3149 = vmatpush.msra.mxu0 %v3148
    %v3150 = vand.u32 %v15, 4294901760
    %3151 = vmatmul.f32.gmra.mxu0 %v3150
    %v3152 = vpop.f32.mrf.mxu0
    %v3153 = vadd.f32 %v3052, %v3152
    %3154 = vdwg.mxu0
    %v3155 = vand.u32 %v81, 4294901760
    %v3156 = vsub.f32 %v81, %v3155
    %3157 = vmatpush.msra.mxu0 %v3156
    %v3158 = vand.u32 %v77, 4294901760
    %v3159 = vsub.f32 %v77, %v3158
    %3160 = vmatpush.msra.mxu0 %v3159
    %v3161 = vand.u32 %v73, 4294901760
    %v3162 = vsub.f32 %v73, %v3161
    %3163 = vmatpush.msra.mxu0 %v3162
    %v3164 = vand.u32 %v69, 4294901760
    %v3165 = vsub.f32 %v69, %v3164
    %3166 = vmatpush.msra.mxu0 %v3165
    %v3167 = vand.u32 %v65, 4294901760
    %v3168 = vsub.f32 %v65, %v3167
    %3169 = vmatpush.msra.mxu0 %v3168
    %v3170 = vand.u32 %v61, 4294901760
    %v3171 = vsub.f32 %v61, %v3170
    %3172 = vmatpush.msra.mxu0 %v3171
    %v3173 = vand.u32 %v57, 4294901760
    %v3174 = vsub.f32 %v57, %v3173
    %3175 = vmatpush.msra.mxu0 %v3174
    %v3176 = vand.u32 %v53, 4294901760
    %v3177 = vsub.f32 %v53, %v3176
    %3178 = vmatpush.msra.mxu0 %v3177
    %v3179 = vand.u32 %v49, 4294901760
    %v3180 = vsub.f32 %v49, %v3179
    %3181 = vmatpush.msra.mxu0 %v3180
    %v3182 = vand.u32 %v45, 4294901760
    %v3183 = vsub.f32 %v45, %v3182
    %3184 = vmatpush.msra.mxu0 %v3183
    %v3185 = vand.u32 %v41, 4294901760
    %v3186 = vsub.f32 %v41, %v3185
    %3187 = vmatpush.msra.mxu0 %v3186
    %v3188 = vand.u32 %v37, 4294901760
    %v3189 = vsub.f32 %v37, %v3188
    %3190 = vmatpush.msra.mxu0 %v3189
    %v3191 = vand.u32 %v33, 4294901760
    %v3192 = vsub.f32 %v33, %v3191
    %3193 = vmatpush.msra.mxu0 %v3192
    %v3194 = vand.u32 %v29, 4294901760
    %v3195 = vsub.f32 %v29, %v3194
    %3196 = vmatpush.msra.mxu0 %v3195
    %v3197 = vand.u32 %v25, 4294901760
    %v3198 = vsub.f32 %v25, %v3197
    %3199 = vmatpush.msra.mxu0 %v3198
    %v3200 = vand.u32 %v21, 4294901760
    %v3201 = vsub.f32 %v21, %v3200
    %3202 = vmatpush.msra.mxu0 %v3201
    %v3203 = vand.u32 %v15, 4294901760
    %v3204 = vsub.f32 %v15, %v3203
    %3205 = vmatmul.f32.gmra.mxu0 %v3204
    %v3206 = vpop.f32.mrf.mxu0
    %v3207 = vadd.f32 %v3153, %v3206
    %3208 = vdwg.mxu0
    %v3209 = vand.u32 %v81, 4294901760
    %3210 = vmatpush.msra.mxu0 %v3209
    %v3211 = vand.u32 %v77, 4294901760
    %3212 = vmatpush.msra.mxu0 %v3211
    %v3213 = vand.u32 %v73, 4294901760
    %3214 = vmatpush.msra.mxu0 %v3213
    %v3215 = vand.u32 %v69, 4294901760
    %3216 = vmatpush.msra.mxu0 %v3215
    %v3217 = vand.u32 %v65, 4294901760
    %3218 = vmatpush.msra.mxu0 %v3217
    %v3219 = vand.u32 %v61, 4294901760
    %3220 = vmatpush.msra.mxu0 %v3219
    %v3221 = vand.u32 %v57, 4294901760
    %3222 = vmatpush.msra.mxu0 %v3221
    %v3223 = vand.u32 %v53, 4294901760
    %3224 = vmatpush.msra.mxu0 %v3223
    %v3225 = vand.u32 %v49, 4294901760
    %3226 = vmatpush.msra.mxu0 %v3225
    %v3227 = vand.u32 %v45, 4294901760
    %3228 = vmatpush.msra.mxu0 %v3227
    %v3229 = vand.u32 %v41, 4294901760
    %3230 = vmatpush.msra.mxu0 %v3229
    %v3231 = vand.u32 %v37, 4294901760
    %3232 = vmatpush.msra.mxu0 %v3231
    %v3233 = vand.u32 %v33, 4294901760
    %3234 = vmatpush.msra.mxu0 %v3233
    %v3235 = vand.u32 %v29, 4294901760
    %3236 = vmatpush.msra.mxu0 %v3235
    %v3237 = vand.u32 %v25, 4294901760
    %3238 = vmatpush.msra.mxu0 %v3237
    %v3239 = vand.u32 %v21, 4294901760
    %3240 = vmatpush.msra.mxu0 %v3239
    %v3241 = vand.u32 %v15, 4294901760
    %v3242 = vsub.f32 %v15, %v3241
    %v3243 = vand.u32 %v3242, 4294901760
    %3244 = vmatmul.f32.gmra.mxu0 %v3243
    %v3245 = vpop.f32.mrf.mxu0
    %v3246 = vadd.f32 %v3207, %v3245
    %3247 = vdwg.mxu0
    %v3248 = vand.u32 %v81, 4294901760
    %v3249 = vsub.f32 %v81, %v3248
    %v3250 = vand.u32 %v3249, 4294901760
    %3251 = vmatpush.msra.mxu0 %v3250
    %v3252 = vand.u32 %v77, 4294901760
    %v3253 = vsub.f32 %v77, %v3252
    %v3254 = vand.u32 %v3253, 4294901760
    %3255 = vmatpush.msra.mxu0 %v3254
    %v3256 = vand.u32 %v73, 4294901760
    %v3257 = vsub.f32 %v73, %v3256
    %v3258 = vand.u32 %v3257, 4294901760
    %3259 = vmatpush.msra.mxu0 %v3258
    %v3260 = vand.u32 %v69, 4294901760
    %v3261 = vsub.f32 %v69, %v3260
    %v3262 = vand.u32 %v3261, 4294901760
    %3263 = vmatpush.msra.mxu0 %v3262
    %v3264 = vand.u32 %v65, 4294901760
    %v3265 = vsub.f32 %v65, %v3264
    %v3266 = vand.u32 %v3265, 4294901760
    %3267 = vmatpush.msra.mxu0 %v3266
    %v3268 = vand.u32 %v61, 4294901760
    %v3269 = vsub.f32 %v61, %v3268
    %v3270 = vand.u32 %v3269, 4294901760
    %3271 = vmatpush.msra.mxu0 %v3270
    %v3272 = vand.u32 %v57, 4294901760
    %v3273 = vsub.f32 %v57, %v3272
    %v3274 = vand.u32 %v3273, 4294901760
    %3275 = vmatpush.msra.mxu0 %v3274
    %v3276 = vand.u32 %v53, 4294901760
    %v3277 = vsub.f32 %v53, %v3276
    %v3278 = vand.u32 %v3277, 4294901760
    %3279 = vmatpush.msra.mxu0 %v3278
    %v3280 = vand.u32 %v49, 4294901760
    %v3281 = vsub.f32 %v49, %v3280
    %v3282 = vand.u32 %v3281, 4294901760
    %3283 = vmatpush.msra.mxu0 %v3282
    %v3284 = vand.u32 %v45, 4294901760
    %v3285 = vsub.f32 %v45, %v3284
    %v3286 = vand.u32 %v3285, 4294901760
    %3287 = vmatpush.msra.mxu0 %v3286
    %v3288 = vand.u32 %v41, 4294901760
    %v3289 = vsub.f32 %v41, %v3288
    %v3290 = vand.u32 %v3289, 4294901760
    %3291 = vmatpush.msra.mxu0 %v3290
    %v3292 = vand.u32 %v37, 4294901760
    %v3293 = vsub.f32 %v37, %v3292
    %v3294 = vand.u32 %v3293, 4294901760
    %3295 = vmatpush.msra.mxu0 %v3294
    %v3296 = vand.u32 %v33, 4294901760
    %v3297 = vsub.f32 %v33, %v3296
    %v3298 = vand.u32 %v3297, 4294901760
    %3299 = vmatpush.msra.mxu0 %v3298
    %v3300 = vand.u32 %v29, 4294901760
    %v3301 = vsub.f32 %v29, %v3300
    %v3302 = vand.u32 %v3301, 4294901760
    %3303 = vmatpush.msra.mxu0 %v3302
    %v3304 = vand.u32 %v25, 4294901760
    %v3305 = vsub.f32 %v25, %v3304
    %v3306 = vand.u32 %v3305, 4294901760
    %3307 = vmatpush.msra.mxu0 %v3306
    %v3308 = vand.u32 %v21, 4294901760
    %v3309 = vsub.f32 %v21, %v3308
    %v3310 = vand.u32 %v3309, 4294901760
    %3311 = vmatpush.msra.mxu0 %v3310
    %v3312 = vand.u32 %v15, 4294901760
    %3313 = vmatmul.f32.gmra.mxu0 %v3312
    %v3314 = vpop.f32.mrf.mxu0
    %v3315 = vadd.f32 %v3246, %v3314
    %3316 = vdwg.mxu0
    %v3317 = vand.u32 %v81, 4294901760
    %3318 = vmatpush.msra.mxu0 %v3317
    %v3319 = vand.u32 %v77, 4294901760
    %3320 = vmatpush.msra.mxu0 %v3319
    %v3321 = vand.u32 %v73, 4294901760
    %3322 = vmatpush.msra.mxu0 %v3321
    %v3323 = vand.u32 %v69, 4294901760
    %3324 = vmatpush.msra.mxu0 %v3323
    %v3325 = vand.u32 %v65, 4294901760
    %3326 = vmatpush.msra.mxu0 %v3325
    %v3327 = vand.u32 %v61, 4294901760
    %3328 = vmatpush.msra.mxu0 %v3327
    %v3329 = vand.u32 %v57, 4294901760
    %3330 = vmatpush.msra.mxu0 %v3329
    %v3331 = vand.u32 %v53, 4294901760
    %3332 = vmatpush.msra.mxu0 %v3331
    %v3333 = vand.u32 %v49, 4294901760
    %3334 = vmatpush.msra.mxu0 %v3333
    %v3335 = vand.u32 %v45, 4294901760
    %3336 = vmatpush.msra.mxu0 %v3335
    %v3337 = vand.u32 %v41, 4294901760
    %3338 = vmatpush.msra.mxu0 %v3337
    %v3339 = vand.u32 %v37, 4294901760
    %3340 = vmatpush.msra.mxu0 %v3339
    %v3341 = vand.u32 %v33, 4294901760
    %3342 = vmatpush.msra.mxu0 %v3341
    %v3343 = vand.u32 %v29, 4294901760
    %3344 = vmatpush.msra.mxu0 %v3343
    %v3345 = vand.u32 %v25, 4294901760
    %3346 = vmatpush.msra.mxu0 %v3345
    %v3347 = vand.u32 %v21, 4294901760
    %3348 = vmatpush.msra.mxu0 %v3347
    %v3349 = vand.u32 %v15, 4294901760
    %3350 = vmatmul.f32.gmra.mxu0 %v3349
    %v3351 = vpop.f32.mrf.mxu0
    %v3352 = vadd.f32 %v3315, %v3351
    %3353 = vdwg.mxu0
    %v3354 = vand.u32 %v145, 4294901760
    %3355 = vmatpush.msra.mxu0 %v3354
    %v3356 = vand.u32 %v141, 4294901760
    %3357 = vmatpush.msra.mxu0 %v3356
    %v3358 = vand.u32 %v137, 4294901760
    %3359 = vmatpush.msra.mxu0 %v3358
    %v3360 = vand.u32 %v133, 4294901760
    %3361 = vmatpush.msra.mxu0 %v3360
    %v3362 = vand.u32 %v129, 4294901760
    %3363 = vmatpush.msra.mxu0 %v3362
    %v3364 = vand.u32 %v125, 4294901760
    %3365 = vmatpush.msra.mxu0 %v3364
    %v3366 = vand.u32 %v121, 4294901760
    %3367 = vmatpush.msra.mxu0 %v3366
    %v3368 = vand.u32 %v117, 4294901760
    %3369 = vmatpush.msra.mxu0 %v3368
    %v3370 = vand.u32 %v113, 4294901760
    %3371 = vmatpush.msra.mxu0 %v3370
    %v3372 = vand.u32 %v109, 4294901760
    %3373 = vmatpush.msra.mxu0 %v3372
    %v3374 = vand.u32 %v105, 4294901760
    %3375 = vmatpush.msra.mxu0 %v3374
    %v3376 = vand.u32 %v101, 4294901760
    %3377 = vmatpush.msra.mxu0 %v3376
    %v3378 = vand.u32 %v97, 4294901760
    %3379 = vmatpush.msra.mxu0 %v3378
    %v3380 = vand.u32 %v93, 4294901760
    %3381 = vmatpush.msra.mxu0 %v3380
    %v3382 = vand.u32 %v89, 4294901760
    %3383 = vmatpush.msra.mxu0 %v3382
    %v3384 = vand.u32 %v85, 4294901760
    %3385 = vmatpush.msra.mxu0 %v3384
    %v3386 = vand.u32 %v16, 4294901760
    %v3387 = vsub.f32 %v16, %v3386
    %v3388 = vand.u32 %v3387, 4294901760
    %v3389 = vsub.f32 %v3387, %v3388
    %v3390 = vand.u32 %v3389, 4294901760
    %3391 = vmatmul.f32.gmra.mxu0 %v3390
    %v3392 = vpop.f32.mrf.mxu0
    %v3393 = vadd.f32 %v3352, %v3392
    %3394 = vdwg.mxu0
    %v3395 = vand.u32 %v145, 4294901760
    %v3396 = vsub.f32 %v145, %v3395
    %v3397 = vand.u32 %v3396, 4294901760
    %v3398 = vsub.f32 %v3396, %v3397
    %v3399 = vand.u32 %v3398, 4294901760
    %3400 = vmatpush.msra.mxu0 %v3399
    %v3401 = vand.u32 %v141, 4294901760
    %v3402 = vsub.f32 %v141, %v3401
    %v3403 = vand.u32 %v3402, 4294901760
    %v3404 = vsub.f32 %v3402, %v3403
    %v3405 = vand.u32 %v3404, 4294901760
    %3406 = vmatpush.msra.mxu0 %v3405
    %v3407 = vand.u32 %v137, 4294901760
    %v3408 = vsub.f32 %v137, %v3407
    %v3409 = vand.u32 %v3408, 4294901760
    %v3410 = vsub.f32 %v3408, %v3409
    %v3411 = vand.u32 %v3410, 4294901760
    %3412 = vmatpush.msra.mxu0 %v3411
    %v3413 = vand.u32 %v133, 4294901760
    %v3414 = vsub.f32 %v133, %v3413
    %v3415 = vand.u32 %v3414, 4294901760
    %v3416 = vsub.f32 %v3414, %v3415
    %v3417 = vand.u32 %v3416, 4294901760
    %3418 = vmatpush.msra.mxu0 %v3417
    %v3419 = vand.u32 %v129, 4294901760
    %v3420 = vsub.f32 %v129, %v3419
    %v3421 = vand.u32 %v3420, 4294901760
    %v3422 = vsub.f32 %v3420, %v3421
    %v3423 = vand.u32 %v3422, 4294901760
    %3424 = vmatpush.msra.mxu0 %v3423
    %v3425 = vand.u32 %v125, 4294901760
    %v3426 = vsub.f32 %v125, %v3425
    %v3427 = vand.u32 %v3426, 4294901760
    %v3428 = vsub.f32 %v3426, %v3427
    %v3429 = vand.u32 %v3428, 4294901760
    %3430 = vmatpush.msra.mxu0 %v3429
    %v3431 = vand.u32 %v121, 4294901760
    %v3432 = vsub.f32 %v121, %v3431
    %v3433 = vand.u32 %v3432, 4294901760
    %v3434 = vsub.f32 %v3432, %v3433
    %v3435 = vand.u32 %v3434, 4294901760
    %3436 = vmatpush.msra.mxu0 %v3435
    %v3437 = vand.u32 %v117, 4294901760
    %v3438 = vsub.f32 %v117, %v3437
    %v3439 = vand.u32 %v3438, 4294901760
    %v3440 = vsub.f32 %v3438, %v3439
    %v3441 = vand.u32 %v3440, 4294901760
    %3442 = vmatpush.msra.mxu0 %v3441
    %v3443 = vand.u32 %v113, 4294901760
    %v3444 = vsub.f32 %v113, %v3443
    %v3445 = vand.u32 %v3444, 4294901760
    %v3446 = vsub.f32 %v3444, %v3445
    %v3447 = vand.u32 %v3446, 4294901760
    %3448 = vmatpush.msra.mxu0 %v3447
    %v3449 = vand.u32 %v109, 4294901760
    %v3450 = vsub.f32 %v109, %v3449
    %v3451 = vand.u32 %v3450, 4294901760
    %v3452 = vsub.f32 %v3450, %v3451
    %v3453 = vand.u32 %v3452, 4294901760
    %3454 = vmatpush.msra.mxu0 %v3453
    %v3455 = vand.u32 %v105, 4294901760
    %v3456 = vsub.f32 %v105, %v3455
    %v3457 = vand.u32 %v3456, 4294901760
    %v3458 = vsub.f32 %v3456, %v3457
    %v3459 = vand.u32 %v3458, 4294901760
    %3460 = vmatpush.msra.mxu0 %v3459
    %v3461 = vand.u32 %v101, 4294901760
    %v3462 = vsub.f32 %v101, %v3461
    %v3463 = vand.u32 %v3462, 4294901760
    %v3464 = vsub.f32 %v3462, %v3463
    %v3465 = vand.u32 %v3464, 4294901760
    %3466 = vmatpush.msra.mxu0 %v3465
    %v3467 = vand.u32 %v97, 4294901760
    %v3468 = vsub.f32 %v97, %v3467
    %v3469 = vand.u32 %v3468, 4294901760
    %v3470 = vsub.f32 %v3468, %v3469
    %v3471 = vand.u32 %v3470, 4294901760
    %3472 = vmatpush.msra.mxu0 %v3471
    %v3473 = vand.u32 %v93, 4294901760
    %v3474 = vsub.f32 %v93, %v3473
    %v3475 = vand.u32 %v3474, 4294901760
    %v3476 = vsub.f32 %v3474, %v3475
    %v3477 = vand.u32 %v3476, 4294901760
    %3478 = vmatpush.msra.mxu0 %v3477
    %v3479 = vand.u32 %v89, 4294901760
    %v3480 = vsub.f32 %v89, %v3479
    %v3481 = vand.u32 %v3480, 4294901760
    %v3482 = vsub.f32 %v3480, %v3481
    %v3483 = vand.u32 %v3482, 4294901760
    %3484 = vmatpush.msra.mxu0 %v3483
    %v3485 = vand.u32 %v85, 4294901760
    %v3486 = vsub.f32 %v85, %v3485
    %v3487 = vand.u32 %v3486, 4294901760
    %v3488 = vsub.f32 %v3486, %v3487
    %v3489 = vand.u32 %v3488, 4294901760
    %3490 = vmatpush.msra.mxu0 %v3489
    %v3491 = vand.u32 %v16, 4294901760
    %3492 = vmatmul.f32.gmra.mxu0 %v3491
    %v3493 = vpop.f32.mrf.mxu0
    %v3494 = vadd.f32 %v3393, %v3493
    %3495 = vdwg.mxu0
    %v3496 = vand.u32 %v145, 4294901760
    %v3497 = vsub.f32 %v145, %v3496
    %3498 = vmatpush.msra.mxu0 %v3497
    %v3499 = vand.u32 %v141, 4294901760
    %v3500 = vsub.f32 %v141, %v3499
    %3501 = vmatpush.msra.mxu0 %v3500
    %v3502 = vand.u32 %v137, 4294901760
    %v3503 = vsub.f32 %v137, %v3502
    %3504 = vmatpush.msra.mxu0 %v3503
    %v3505 = vand.u32 %v133, 4294901760
    %v3506 = vsub.f32 %v133, %v3505
    %3507 = vmatpush.msra.mxu0 %v3506
    %v3508 = vand.u32 %v129, 4294901760
    %v3509 = vsub.f32 %v129, %v3508
    %3510 = vmatpush.msra.mxu0 %v3509
    %v3511 = vand.u32 %v125, 4294901760
    %v3512 = vsub.f32 %v125, %v3511
    %3513 = vmatpush.msra.mxu0 %v3512
    %v3514 = vand.u32 %v121, 4294901760
    %v3515 = vsub.f32 %v121, %v3514
    %3516 = vmatpush.msra.mxu0 %v3515
    %v3517 = vand.u32 %v117, 4294901760
    %v3518 = vsub.f32 %v117, %v3517
    %3519 = vmatpush.msra.mxu0 %v3518
    %v3520 = vand.u32 %v113, 4294901760
    %v3521 = vsub.f32 %v113, %v3520
    %3522 = vmatpush.msra.mxu0 %v3521
    %v3523 = vand.u32 %v109, 4294901760
    %v3524 = vsub.f32 %v109, %v3523
    %3525 = vmatpush.msra.mxu0 %v3524
    %v3526 = vand.u32 %v105, 4294901760
    %v3527 = vsub.f32 %v105, %v3526
    %3528 = vmatpush.msra.mxu0 %v3527
    %v3529 = vand.u32 %v101, 4294901760
    %v3530 = vsub.f32 %v101, %v3529
    %3531 = vmatpush.msra.mxu0 %v3530
    %v3532 = vand.u32 %v97, 4294901760
    %v3533 = vsub.f32 %v97, %v3532
    %3534 = vmatpush.msra.mxu0 %v3533
    %v3535 = vand.u32 %v93, 4294901760
    %v3536 = vsub.f32 %v93, %v3535
    %3537 = vmatpush.msra.mxu0 %v3536
    %v3538 = vand.u32 %v89, 4294901760
    %v3539 = vsub.f32 %v89, %v3538
    %3540 = vmatpush.msra.mxu0 %v3539
    %v3541 = vand.u32 %v85, 4294901760
    %v3542 = vsub.f32 %v85, %v3541
    %3543 = vmatpush.msra.mxu0 %v3542
    %v3544 = vand.u32 %v16, 4294901760
    %v3545 = vsub.f32 %v16, %v3544
    %3546 = vmatmul.f32.gmra.mxu0 %v3545
    %v3547 = vpop.f32.mrf.mxu0
    %v3548 = vadd.f32 %v3494, %v3547
    %3549 = vdwg.mxu0
    %v3550 = vand.u32 %v145, 4294901760
    %3551 = vmatpush.msra.mxu0 %v3550
    %v3552 = vand.u32 %v141, 4294901760
    %3553 = vmatpush.msra.mxu0 %v3552
    %v3554 = vand.u32 %v137, 4294901760
    %3555 = vmatpush.msra.mxu0 %v3554
    %v3556 = vand.u32 %v133, 4294901760
    %3557 = vmatpush.msra.mxu0 %v3556
    %v3558 = vand.u32 %v129, 4294901760
    %3559 = vmatpush.msra.mxu0 %v3558
    %v3560 = vand.u32 %v125, 4294901760
    %3561 = vmatpush.msra.mxu0 %v3560
    %v3562 = vand.u32 %v121, 4294901760
    %3563 = vmatpush.msra.mxu0 %v3562
    %v3564 = vand.u32 %v117, 4294901760
    %3565 = vmatpush.msra.mxu0 %v3564
    %v3566 = vand.u32 %v113, 4294901760
    %3567 = vmatpush.msra.mxu0 %v3566
    %v3568 = vand.u32 %v109, 4294901760
    %3569 = vmatpush.msra.mxu0 %v3568
    %v3570 = vand.u32 %v105, 4294901760
    %3571 = vmatpush.msra.mxu0 %v3570
    %v3572 = vand.u32 %v101, 4294901760
    %3573 = vmatpush.msra.mxu0 %v3572
    %v3574 = vand.u32 %v97, 4294901760
    %3575 = vmatpush.msra.mxu0 %v3574
    %v3576 = vand.u32 %v93, 4294901760
    %3577 = vmatpush.msra.mxu0 %v3576
    %v3578 = vand.u32 %v89, 4294901760
    %3579 = vmatpush.msra.mxu0 %v3578
    %v3580 = vand.u32 %v85, 4294901760
    %3581 = vmatpush.msra.mxu0 %v3580
    %v3582 = vand.u32 %v16, 4294901760
    %v3583 = vsub.f32 %v16, %v3582
    %v3584 = vand.u32 %v3583, 4294901760
    %3585 = vmatmul.f32.gmra.mxu0 %v3584
    %v3586 = vpop.f32.mrf.mxu0
    %v3587 = vadd.f32 %v3548, %v3586
    %3588 = vdwg.mxu0
    %v3589 = vand.u32 %v145, 4294901760
    %v3590 = vsub.f32 %v145, %v3589
    %v3591 = vand.u32 %v3590, 4294901760
    %3592 = vmatpush.msra.mxu0 %v3591
    %v3593 = vand.u32 %v141, 4294901760
    %v3594 = vsub.f32 %v141, %v3593
    %v3595 = vand.u32 %v3594, 4294901760
    %3596 = vmatpush.msra.mxu0 %v3595
    %v3597 = vand.u32 %v137, 4294901760
    %v3598 = vsub.f32 %v137, %v3597
    %v3599 = vand.u32 %v3598, 4294901760
    %3600 = vmatpush.msra.mxu0 %v3599
    %v3601 = vand.u32 %v133, 4294901760
    %v3602 = vsub.f32 %v133, %v3601
    %v3603 = vand.u32 %v3602, 4294901760
    %3604 = vmatpush.msra.mxu0 %v3603
    %v3605 = vand.u32 %v129, 4294901760
    %v3606 = vsub.f32 %v129, %v3605
    %v3607 = vand.u32 %v3606, 4294901760
    %3608 = vmatpush.msra.mxu0 %v3607
    %v3609 = vand.u32 %v125, 4294901760
    %v3610 = vsub.f32 %v125, %v3609
    %v3611 = vand.u32 %v3610, 4294901760
    %3612 = vmatpush.msra.mxu0 %v3611
    %v3613 = vand.u32 %v121, 4294901760
    %v3614 = vsub.f32 %v121, %v3613
    %v3615 = vand.u32 %v3614, 4294901760
    %3616 = vmatpush.msra.mxu0 %v3615
    %v3617 = vand.u32 %v117, 4294901760
    %v3618 = vsub.f32 %v117, %v3617
    %v3619 = vand.u32 %v3618, 4294901760
    %3620 = vmatpush.msra.mxu0 %v3619
    %v3621 = vand.u32 %v113, 4294901760
    %v3622 = vsub.f32 %v113, %v3621
    %v3623 = vand.u32 %v3622, 4294901760
    %3624 = vmatpush.msra.mxu0 %v3623
    %v3625 = vand.u32 %v109, 4294901760
    %v3626 = vsub.f32 %v109, %v3625
    %v3627 = vand.u32 %v3626, 4294901760
    %3628 = vmatpush.msra.mxu0 %v3627
    %v3629 = vand.u32 %v105, 4294901760
    %v3630 = vsub.f32 %v105, %v3629
    %v3631 = vand.u32 %v3630, 4294901760
    %3632 = vmatpush.msra.mxu0 %v3631
    %v3633 = vand.u32 %v101, 4294901760
    %v3634 = vsub.f32 %v101, %v3633
    %v3635 = vand.u32 %v3634, 4294901760
    %3636 = vmatpush.msra.mxu0 %v3635
    %v3637 = vand.u32 %v97, 4294901760
    %v3638 = vsub.f32 %v97, %v3637
    %v3639 = vand.u32 %v3638, 4294901760
    %3640 = vmatpush.msra.mxu0 %v3639
    %v3641 = vand.u32 %v93, 4294901760
    %v3642 = vsub.f32 %v93, %v3641
    %v3643 = vand.u32 %v3642, 4294901760
    %3644 = vmatpush.msra.mxu0 %v3643
    %v3645 = vand.u32 %v89, 4294901760
    %v3646 = vsub.f32 %v89, %v3645
    %v3647 = vand.u32 %v3646, 4294901760
    %3648 = vmatpush.msra.mxu0 %v3647
    %v3649 = vand.u32 %v85, 4294901760
    %v3650 = vsub.f32 %v85, %v3649
    %v3651 = vand.u32 %v3650, 4294901760
    %3652 = vmatpush.msra.mxu0 %v3651
    %v3653 = vand.u32 %v16, 4294901760
    %3654 = vmatmul.f32.gmra.mxu0 %v3653
    %v3655 = vpop.f32.mrf.mxu0
    %v3656 = vadd.f32 %v3587, %v3655
    %3657 = vdwg.mxu0
    %v3658 = vand.u32 %v145, 4294901760
    %3659 = vmatpush.msra.mxu0 %v3658
    %v3660 = vand.u32 %v141, 4294901760
    %3661 = vmatpush.msra.mxu0 %v3660
    %v3662 = vand.u32 %v137, 4294901760
    %3663 = vmatpush.msra.mxu0 %v3662
    %v3664 = vand.u32 %v133, 4294901760
    %3665 = vmatpush.msra.mxu0 %v3664
    %v3666 = vand.u32 %v129, 4294901760
    %3667 = vmatpush.msra.mxu0 %v3666
    %v3668 = vand.u32 %v125, 4294901760
    %3669 = vmatpush.msra.mxu0 %v3668
    %v3670 = vand.u32 %v121, 4294901760
    %3671 = vmatpush.msra.mxu0 %v3670
    %v3672 = vand.u32 %v117, 4294901760
    %3673 = vmatpush.msra.mxu0 %v3672
    %v3674 = vand.u32 %v113, 4294901760
    %3675 = vmatpush.msra.mxu0 %v3674
    %v3676 = vand.u32 %v109, 4294901760
    %3677 = vmatpush.msra.mxu0 %v3676
    %v3678 = vand.u32 %v105, 4294901760
    %3679 = vmatpush.msra.mxu0 %v3678
    %v3680 = vand.u32 %v101, 4294901760
    %3681 = vmatpush.msra.mxu0 %v3680
    %v3682 = vand.u32 %v97, 4294901760
    %3683 = vmatpush.msra.mxu0 %v3682
    %v3684 = vand.u32 %v93, 4294901760
    %3685 = vmatpush.msra.mxu0 %v3684
    %v3686 = vand.u32 %v89, 4294901760
    %3687 = vmatpush.msra.mxu0 %v3686
    %v3688 = vand.u32 %v85, 4294901760
    %3689 = vmatpush.msra.mxu0 %v3688
    %v3690 = vand.u32 %v16, 4294901760
    %3691 = vmatmul.f32.gmra.mxu0 %v3690
    %v3692 = vpop.f32.mrf.mxu0
    %v3693 = vadd.f32 %v3656, %v3692
    %3694 = vdwg.mxu0
    %v3695 = vand.u32 %v209, 4294901760
    %3696 = vmatpush.msra.mxu0 %v3695
    %v3697 = vand.u32 %v205, 4294901760
    %3698 = vmatpush.msra.mxu0 %v3697
    %v3699 = vand.u32 %v201, 4294901760
    %3700 = vmatpush.msra.mxu0 %v3699
    %v3701 = vand.u32 %v197, 4294901760
    %3702 = vmatpush.msra.mxu0 %v3701
    %v3703 = vand.u32 %v193, 4294901760
    %3704 = vmatpush.msra.mxu0 %v3703
    %v3705 = vand.u32 %v189, 4294901760
    %3706 = vmatpush.msra.mxu0 %v3705
    %v3707 = vand.u32 %v185, 4294901760
    %3708 = vmatpush.msra.mxu0 %v3707
    %v3709 = vand.u32 %v181, 4294901760
    %3710 = vmatpush.msra.mxu0 %v3709
    %v3711 = vand.u32 %v177, 4294901760
    %3712 = vmatpush.msra.mxu0 %v3711
    %v3713 = vand.u32 %v173, 4294901760
    %3714 = vmatpush.msra.mxu0 %v3713
    %v3715 = vand.u32 %v169, 4294901760
    %3716 = vmatpush.msra.mxu0 %v3715
    %v3717 = vand.u32 %v165, 4294901760
    %3718 = vmatpush.msra.mxu0 %v3717
    %v3719 = vand.u32 %v161, 4294901760
    %3720 = vmatpush.msra.mxu0 %v3719
    %v3721 = vand.u32 %v157, 4294901760
    %3722 = vmatpush.msra.mxu0 %v3721
    %v3723 = vand.u32 %v153, 4294901760
    %3724 = vmatpush.msra.mxu0 %v3723
    %v3725 = vand.u32 %v149, 4294901760
    %3726 = vmatpush.msra.mxu0 %v3725
    %v3727 = vand.u32 %v17, 4294901760
    %v3728 = vsub.f32 %v17, %v3727
    %v3729 = vand.u32 %v3728, 4294901760
    %v3730 = vsub.f32 %v3728, %v3729
    %v3731 = vand.u32 %v3730, 4294901760
    %3732 = vmatmul.f32.gmra.mxu0 %v3731
    %v3733 = vpop.f32.mrf.mxu0
    %v3734 = vadd.f32 %v3693, %v3733
    %3735 = vdwg.mxu0
    %v3736 = vand.u32 %v209, 4294901760
    %v3737 = vsub.f32 %v209, %v3736
    %v3738 = vand.u32 %v3737, 4294901760
    %v3739 = vsub.f32 %v3737, %v3738
    %v3740 = vand.u32 %v3739, 4294901760
    %3741 = vmatpush.msra.mxu0 %v3740
    %v3742 = vand.u32 %v205, 4294901760
    %v3743 = vsub.f32 %v205, %v3742
    %v3744 = vand.u32 %v3743, 4294901760
    %v3745 = vsub.f32 %v3743, %v3744
    %v3746 = vand.u32 %v3745, 4294901760
    %3747 = vmatpush.msra.mxu0 %v3746
    %v3748 = vand.u32 %v201, 4294901760
    %v3749 = vsub.f32 %v201, %v3748
    %v3750 = vand.u32 %v3749, 4294901760
    %v3751 = vsub.f32 %v3749, %v3750
    %v3752 = vand.u32 %v3751, 4294901760
    %3753 = vmatpush.msra.mxu0 %v3752
    %v3754 = vand.u32 %v197, 4294901760
    %v3755 = vsub.f32 %v197, %v3754
    %v3756 = vand.u32 %v3755, 4294901760
    %v3757 = vsub.f32 %v3755, %v3756
    %v3758 = vand.u32 %v3757, 4294901760
    %3759 = vmatpush.msra.mxu0 %v3758
    %v3760 = vand.u32 %v193, 4294901760
    %v3761 = vsub.f32 %v193, %v3760
    %v3762 = vand.u32 %v3761, 4294901760
    %v3763 = vsub.f32 %v3761, %v3762
    %v3764 = vand.u32 %v3763, 4294901760
    %3765 = vmatpush.msra.mxu0 %v3764
    %v3766 = vand.u32 %v189, 4294901760
    %v3767 = vsub.f32 %v189, %v3766
    %v3768 = vand.u32 %v3767, 4294901760
    %v3769 = vsub.f32 %v3767, %v3768
    %v3770 = vand.u32 %v3769, 4294901760
    %3771 = vmatpush.msra.mxu0 %v3770
    %v3772 = vand.u32 %v185, 4294901760
    %v3773 = vsub.f32 %v185, %v3772
    %v3774 = vand.u32 %v3773, 4294901760
    %v3775 = vsub.f32 %v3773, %v3774
    %v3776 = vand.u32 %v3775, 4294901760
    %3777 = vmatpush.msra.mxu0 %v3776
    %v3778 = vand.u32 %v181, 4294901760
    %v3779 = vsub.f32 %v181, %v3778
    %v3780 = vand.u32 %v3779, 4294901760
    %v3781 = vsub.f32 %v3779, %v3780
    %v3782 = vand.u32 %v3781, 4294901760
    %3783 = vmatpush.msra.mxu0 %v3782
    %v3784 = vand.u32 %v177, 4294901760
    %v3785 = vsub.f32 %v177, %v3784
    %v3786 = vand.u32 %v3785, 4294901760
    %v3787 = vsub.f32 %v3785, %v3786
    %v3788 = vand.u32 %v3787, 4294901760
    %3789 = vmatpush.msra.mxu0 %v3788
    %v3790 = vand.u32 %v173, 4294901760
    %v3791 = vsub.f32 %v173, %v3790
    %v3792 = vand.u32 %v3791, 4294901760
    %v3793 = vsub.f32 %v3791, %v3792
    %v3794 = vand.u32 %v3793, 4294901760
    %3795 = vmatpush.msra.mxu0 %v3794
    %v3796 = vand.u32 %v169, 4294901760
    %v3797 = vsub.f32 %v169, %v3796
    %v3798 = vand.u32 %v3797, 4294901760
    %v3799 = vsub.f32 %v3797, %v3798
    %v3800 = vand.u32 %v3799, 4294901760
    %3801 = vmatpush.msra.mxu0 %v3800
    %v3802 = vand.u32 %v165, 4294901760
    %v3803 = vsub.f32 %v165, %v3802
    %v3804 = vand.u32 %v3803, 4294901760
    %v3805 = vsub.f32 %v3803, %v3804
    %v3806 = vand.u32 %v3805, 4294901760
    %3807 = vmatpush.msra.mxu0 %v3806
    %v3808 = vand.u32 %v161, 4294901760
    %v3809 = vsub.f32 %v161, %v3808
    %v3810 = vand.u32 %v3809, 4294901760
    %v3811 = vsub.f32 %v3809, %v3810
    %v3812 = vand.u32 %v3811, 4294901760
    %3813 = vmatpush.msra.mxu0 %v3812
    %v3814 = vand.u32 %v157, 4294901760
    %v3815 = vsub.f32 %v157, %v3814
    %v3816 = vand.u32 %v3815, 4294901760
    %v3817 = vsub.f32 %v3815, %v3816
    %v3818 = vand.u32 %v3817, 4294901760
    %3819 = vmatpush.msra.mxu0 %v3818
    %v3820 = vand.u32 %v153, 4294901760
    %v3821 = vsub.f32 %v153, %v3820
    %v3822 = vand.u32 %v3821, 4294901760
    %v3823 = vsub.f32 %v3821, %v3822
    %v3824 = vand.u32 %v3823, 4294901760
    %3825 = vmatpush.msra.mxu0 %v3824
    %v3826 = vand.u32 %v149, 4294901760
    %v3827 = vsub.f32 %v149, %v3826
    %v3828 = vand.u32 %v3827, 4294901760
    %v3829 = vsub.f32 %v3827, %v3828
    %v3830 = vand.u32 %v3829, 4294901760
    %3831 = vmatpush.msra.mxu0 %v3830
    %v3832 = vand.u32 %v17, 4294901760
    %3833 = vmatmul.f32.gmra.mxu0 %v3832
    %v3834 = vpop.f32.mrf.mxu0
    %v3835 = vadd.f32 %v3734, %v3834
    %3836 = vdwg.mxu0
    %v3837 = vand.u32 %v209, 4294901760
    %v3838 = vsub.f32 %v209, %v3837
    %3839 = vmatpush.msra.mxu0 %v3838
    %v3840 = vand.u32 %v205, 4294901760
    %v3841 = vsub.f32 %v205, %v3840
    %3842 = vmatpush.msra.mxu0 %v3841
    %v3843 = vand.u32 %v201, 4294901760
    %v3844 = vsub.f32 %v201, %v3843
    %3845 = vmatpush.msra.mxu0 %v3844
    %v3846 = vand.u32 %v197, 4294901760
    %v3847 = vsub.f32 %v197, %v3846
    %3848 = vmatpush.msra.mxu0 %v3847
    %v3849 = vand.u32 %v193, 4294901760
    %v3850 = vsub.f32 %v193, %v3849
    %3851 = vmatpush.msra.mxu0 %v3850
    %v3852 = vand.u32 %v189, 4294901760
    %v3853 = vsub.f32 %v189, %v3852
    %3854 = vmatpush.msra.mxu0 %v3853
    %v3855 = vand.u32 %v185, 4294901760
    %v3856 = vsub.f32 %v185, %v3855
    %3857 = vmatpush.msra.mxu0 %v3856
    %v3858 = vand.u32 %v181, 4294901760
    %v3859 = vsub.f32 %v181, %v3858
    %3860 = vmatpush.msra.mxu0 %v3859
    %v3861 = vand.u32 %v177, 4294901760
    %v3862 = vsub.f32 %v177, %v3861
    %3863 = vmatpush.msra.mxu0 %v3862
    %v3864 = vand.u32 %v173, 4294901760
    %v3865 = vsub.f32 %v173, %v3864
    %3866 = vmatpush.msra.mxu0 %v3865
    %v3867 = vand.u32 %v169, 4294901760
    %v3868 = vsub.f32 %v169, %v3867
    %3869 = vmatpush.msra.mxu0 %v3868
    %v3870 = vand.u32 %v165, 4294901760
    %v3871 = vsub.f32 %v165, %v3870
    %3872 = vmatpush.msra.mxu0 %v3871
    %v3873 = vand.u32 %v161, 4294901760
    %v3874 = vsub.f32 %v161, %v3873
    %3875 = vmatpush.msra.mxu0 %v3874
    %v3876 = vand.u32 %v157, 4294901760
    %v3877 = vsub.f32 %v157, %v3876
    %3878 = vmatpush.msra.mxu0 %v3877
    %v3879 = vand.u32 %v153, 4294901760
    %v3880 = vsub.f32 %v153, %v3879
    %3881 = vmatpush.msra.mxu0 %v3880
    %v3882 = vand.u32 %v149, 4294901760
    %v3883 = vsub.f32 %v149, %v3882
    %3884 = vmatpush.msra.mxu0 %v3883
    %v3885 = vand.u32 %v17, 4294901760
    %v3886 = vsub.f32 %v17, %v3885
    %3887 = vmatmul.f32.gmra.mxu0 %v3886
    %v3888 = vpop.f32.mrf.mxu0
    %v3889 = vadd.f32 %v3835, %v3888
    %3890 = vdwg.mxu0
    %v3891 = vand.u32 %v209, 4294901760
    %3892 = vmatpush.msra.mxu0 %v3891
    %v3893 = vand.u32 %v205, 4294901760
    %3894 = vmatpush.msra.mxu0 %v3893
    %v3895 = vand.u32 %v201, 4294901760
    %3896 = vmatpush.msra.mxu0 %v3895
    %v3897 = vand.u32 %v197, 4294901760
    %3898 = vmatpush.msra.mxu0 %v3897
    %v3899 = vand.u32 %v193, 4294901760
    %3900 = vmatpush.msra.mxu0 %v3899
    %v3901 = vand.u32 %v189, 4294901760
    %3902 = vmatpush.msra.mxu0 %v3901
    %v3903 = vand.u32 %v185, 4294901760
    %3904 = vmatpush.msra.mxu0 %v3903
    %v3905 = vand.u32 %v181, 4294901760
    %3906 = vmatpush.msra.mxu0 %v3905
    %v3907 = vand.u32 %v177, 4294901760
    %3908 = vmatpush.msra.mxu0 %v3907
    %v3909 = vand.u32 %v173, 4294901760
    %3910 = vmatpush.msra.mxu0 %v3909
    %v3911 = vand.u32 %v169, 4294901760
    %3912 = vmatpush.msra.mxu0 %v3911
    %v3913 = vand.u32 %v165, 4294901760
    %3914 = vmatpush.msra.mxu0 %v3913
    %v3915 = vand.u32 %v161, 4294901760
    %3916 = vmatpush.msra.mxu0 %v3915
    %v3917 = vand.u32 %v157, 4294901760
    %3918 = vmatpush.msra.mxu0 %v3917
    %v3919 = vand.u32 %v153, 4294901760
    %3920 = vmatpush.msra.mxu0 %v3919
    %v3921 = vand.u32 %v149, 4294901760
    %3922 = vmatpush.msra.mxu0 %v3921
    %v3923 = vand.u32 %v17, 4294901760
    %v3924 = vsub.f32 %v17, %v3923
    %v3925 = vand.u32 %v3924, 4294901760
    %3926 = vmatmul.f32.gmra.mxu0 %v3925
    %v3927 = vpop.f32.mrf.mxu0
    %v3928 = vadd.f32 %v3889, %v3927
    %3929 = vdwg.mxu0
    %v3930 = vand.u32 %v209, 4294901760
    %v3931 = vsub.f32 %v209, %v3930
    %v3932 = vand.u32 %v3931, 4294901760
    %3933 = vmatpush.msra.mxu0 %v3932
    %v3934 = vand.u32 %v205, 4294901760
    %v3935 = vsub.f32 %v205, %v3934
    %v3936 = vand.u32 %v3935, 4294901760
    %3937 = vmatpush.msra.mxu0 %v3936
    %v3938 = vand.u32 %v201, 4294901760
    %v3939 = vsub.f32 %v201, %v3938
    %v3940 = vand.u32 %v3939, 4294901760
    %3941 = vmatpush.msra.mxu0 %v3940
    %v3942 = vand.u32 %v197, 4294901760
    %v3943 = vsub.f32 %v197, %v3942
    %v3944 = vand.u32 %v3943, 4294901760
    %3945 = vmatpush.msra.mxu0 %v3944
    %v3946 = vand.u32 %v193, 4294901760
    %v3947 = vsub.f32 %v193, %v3946
    %v3948 = vand.u32 %v3947, 4294901760
    %3949 = vmatpush.msra.mxu0 %v3948
    %v3950 = vand.u32 %v189, 4294901760
    %v3951 = vsub.f32 %v189, %v3950
    %v3952 = vand.u32 %v3951, 4294901760
    %3953 = vmatpush.msra.mxu0 %v3952
    %v3954 = vand.u32 %v185, 4294901760
    %v3955 = vsub.f32 %v185, %v3954
    %v3956 = vand.u32 %v3955, 4294901760
    %3957 = vmatpush.msra.mxu0 %v3956
    %v3958 = vand.u32 %v181, 4294901760
    %v3959 = vsub.f32 %v181, %v3958
    %v3960 = vand.u32 %v3959, 4294901760
    %3961 = vmatpush.msra.mxu0 %v3960
    %v3962 = vand.u32 %v177, 4294901760
    %v3963 = vsub.f32 %v177, %v3962
    %v3964 = vand.u32 %v3963, 4294901760
    %3965 = vmatpush.msra.mxu0 %v3964
    %v3966 = vand.u32 %v173, 4294901760
    %v3967 = vsub.f32 %v173, %v3966
    %v3968 = vand.u32 %v3967, 4294901760
    %3969 = vmatpush.msra.mxu0 %v3968
    %v3970 = vand.u32 %v169, 4294901760
    %v3971 = vsub.f32 %v169, %v3970
    %v3972 = vand.u32 %v3971, 4294901760
    %3973 = vmatpush.msra.mxu0 %v3972
    %v3974 = vand.u32 %v165, 4294901760
    %v3975 = vsub.f32 %v165, %v3974
    %v3976 = vand.u32 %v3975, 4294901760
    %3977 = vmatpush.msra.mxu0 %v3976
    %v3978 = vand.u32 %v161, 4294901760
    %v3979 = vsub.f32 %v161, %v3978
    %v3980 = vand.u32 %v3979, 4294901760
    %3981 = vmatpush.msra.mxu0 %v3980
    %v3982 = vand.u32 %v157, 4294901760
    %v3983 = vsub.f32 %v157, %v3982
    %v3984 = vand.u32 %v3983, 4294901760
    %3985 = vmatpush.msra.mxu0 %v3984
    %v3986 = vand.u32 %v153, 4294901760
    %v3987 = vsub.f32 %v153, %v3986
    %v3988 = vand.u32 %v3987, 4294901760
    %3989 = vmatpush.msra.mxu0 %v3988
    %v3990 = vand.u32 %v149, 4294901760
    %v3991 = vsub.f32 %v149, %v3990
    %v3992 = vand.u32 %v3991, 4294901760
    %3993 = vmatpush.msra.mxu0 %v3992
    %v3994 = vand.u32 %v17, 4294901760
    %3995 = vmatmul.f32.gmra.mxu0 %v3994
    %v3996 = vpop.f32.mrf.mxu0
    %v3997 = vadd.f32 %v3928, %v3996
    %3998 = vdwg.mxu0
    %v3999 = vand.u32 %v209, 4294901760
    %4000 = vmatpush.msra.mxu0 %v3999
    %v4001 = vand.u32 %v205, 4294901760
    %4002 = vmatpush.msra.mxu0 %v4001
    %v4003 = vand.u32 %v201, 4294901760
    %4004 = vmatpush.msra.mxu0 %v4003
    %v4005 = vand.u32 %v197, 4294901760
    %4006 = vmatpush.msra.mxu0 %v4005
    %v4007 = vand.u32 %v193, 4294901760
    %4008 = vmatpush.msra.mxu0 %v4007
    %v4009 = vand.u32 %v189, 4294901760
    %4010 = vmatpush.msra.mxu0 %v4009
    %v4011 = vand.u32 %v185, 4294901760
    %4012 = vmatpush.msra.mxu0 %v4011
    %v4013 = vand.u32 %v181, 4294901760
    %4014 = vmatpush.msra.mxu0 %v4013
    %v4015 = vand.u32 %v177, 4294901760
    %4016 = vmatpush.msra.mxu0 %v4015
    %v4017 = vand.u32 %v173, 4294901760
    %4018 = vmatpush.msra.mxu0 %v4017
    %v4019 = vand.u32 %v169, 4294901760
    %4020 = vmatpush.msra.mxu0 %v4019
    %v4021 = vand.u32 %v165, 4294901760
    %4022 = vmatpush.msra.mxu0 %v4021
    %v4023 = vand.u32 %v161, 4294901760
    %4024 = vmatpush.msra.mxu0 %v4023
    %v4025 = vand.u32 %v157, 4294901760
    %4026 = vmatpush.msra.mxu0 %v4025
    %v4027 = vand.u32 %v153, 4294901760
    %4028 = vmatpush.msra.mxu0 %v4027
    %v4029 = vand.u32 %v149, 4294901760
    %4030 = vmatpush.msra.mxu0 %v4029
    %v4031 = vand.u32 %v17, 4294901760
    %4032 = vmatmul.f32.gmra.mxu0 %v4031
    %v4033 = vpop.f32.mrf.mxu0
    %v4034 = vadd.f32 %v3997, %v4033
    %4035 = vdwg.mxu0
    %v4036 = vand.u32 %v273, 4294901760
    %4037 = vmatpush.msra.mxu0 %v4036
    %v4038 = vand.u32 %v269, 4294901760
    %4039 = vmatpush.msra.mxu0 %v4038
    %v4040 = vand.u32 %v265, 4294901760
    %4041 = vmatpush.msra.mxu0 %v4040
    %v4042 = vand.u32 %v261, 4294901760
    %4043 = vmatpush.msra.mxu0 %v4042
    %v4044 = vand.u32 %v257, 4294901760
    %4045 = vmatpush.msra.mxu0 %v4044
    %v4046 = vand.u32 %v253, 4294901760
    %4047 = vmatpush.msra.mxu0 %v4046
    %v4048 = vand.u32 %v249, 4294901760
    %4049 = vmatpush.msra.mxu0 %v4048
    %v4050 = vand.u32 %v245, 4294901760
    %4051 = vmatpush.msra.mxu0 %v4050
    %v4052 = vand.u32 %v241, 4294901760
    %4053 = vmatpush.msra.mxu0 %v4052
    %v4054 = vand.u32 %v237, 4294901760
    %4055 = vmatpush.msra.mxu0 %v4054
    %v4056 = vand.u32 %v233, 4294901760
    %4057 = vmatpush.msra.mxu0 %v4056
    %v4058 = vand.u32 %v229, 4294901760
    %4059 = vmatpush.msra.mxu0 %v4058
    %v4060 = vand.u32 %v225, 4294901760
    %4061 = vmatpush.msra.mxu0 %v4060
    %v4062 = vand.u32 %v221, 4294901760
    %4063 = vmatpush.msra.mxu0 %v4062
    %v4064 = vand.u32 %v217, 4294901760
    %4065 = vmatpush.msra.mxu0 %v4064
    %v4066 = vand.u32 %v213, 4294901760
    %4067 = vmatpush.msra.mxu0 %v4066
    %v4068 = vand.u32 %v18, 4294901760
    %v4069 = vsub.f32 %v18, %v4068
    %v4070 = vand.u32 %v4069, 4294901760
    %v4071 = vsub.f32 %v4069, %v4070
    %v4072 = vand.u32 %v4071, 4294901760
    %4073 = vmatmul.f32.gmra.mxu0 %v4072
    %v4074 = vpop.f32.mrf.mxu0
    %v4075 = vadd.f32 %v4034, %v4074
    %4076 = vdwg.mxu0
    %v4077 = vand.u32 %v273, 4294901760
    %v4078 = vsub.f32 %v273, %v4077
    %v4079 = vand.u32 %v4078, 4294901760
    %v4080 = vsub.f32 %v4078, %v4079
    %v4081 = vand.u32 %v4080, 4294901760
    %4082 = vmatpush.msra.mxu0 %v4081
    %v4083 = vand.u32 %v269, 4294901760
    %v4084 = vsub.f32 %v269, %v4083
    %v4085 = vand.u32 %v4084, 4294901760
    %v4086 = vsub.f32 %v4084, %v4085
    %v4087 = vand.u32 %v4086, 4294901760
    %4088 = vmatpush.msra.mxu0 %v4087
    %v4089 = vand.u32 %v265, 4294901760
    %v4090 = vsub.f32 %v265, %v4089
    %v4091 = vand.u32 %v4090, 4294901760
    %v4092 = vsub.f32 %v4090, %v4091
    %v4093 = vand.u32 %v4092, 4294901760
    %4094 = vmatpush.msra.mxu0 %v4093
    %v4095 = vand.u32 %v261, 4294901760
    %v4096 = vsub.f32 %v261, %v4095
    %v4097 = vand.u32 %v4096, 4294901760
    %v4098 = vsub.f32 %v4096, %v4097
    %v4099 = vand.u32 %v4098, 4294901760
    %4100 = vmatpush.msra.mxu0 %v4099
    %v4101 = vand.u32 %v257, 4294901760
    %v4102 = vsub.f32 %v257, %v4101
    %v4103 = vand.u32 %v4102, 4294901760
    %v4104 = vsub.f32 %v4102, %v4103
    %v4105 = vand.u32 %v4104, 4294901760
    %4106 = vmatpush.msra.mxu0 %v4105
    %v4107 = vand.u32 %v253, 4294901760
    %v4108 = vsub.f32 %v253, %v4107
    %v4109 = vand.u32 %v4108, 4294901760
    %v4110 = vsub.f32 %v4108, %v4109
    %v4111 = vand.u32 %v4110, 4294901760
    %4112 = vmatpush.msra.mxu0 %v4111
    %v4113 = vand.u32 %v249, 4294901760
    %v4114 = vsub.f32 %v249, %v4113
    %v4115 = vand.u32 %v4114, 4294901760
    %v4116 = vsub.f32 %v4114, %v4115
    %v4117 = vand.u32 %v4116, 4294901760
    %4118 = vmatpush.msra.mxu0 %v4117
    %v4119 = vand.u32 %v245, 4294901760
    %v4120 = vsub.f32 %v245, %v4119
    %v4121 = vand.u32 %v4120, 4294901760
    %v4122 = vsub.f32 %v4120, %v4121
    %v4123 = vand.u32 %v4122, 4294901760
    %4124 = vmatpush.msra.mxu0 %v4123
    %v4125 = vand.u32 %v241, 4294901760
    %v4126 = vsub.f32 %v241, %v4125
    %v4127 = vand.u32 %v4126, 4294901760
    %v4128 = vsub.f32 %v4126, %v4127
    %v4129 = vand.u32 %v4128, 4294901760
    %4130 = vmatpush.msra.mxu0 %v4129
    %v4131 = vand.u32 %v237, 4294901760
    %v4132 = vsub.f32 %v237, %v4131
    %v4133 = vand.u32 %v4132, 4294901760
    %v4134 = vsub.f32 %v4132, %v4133
    %v4135 = vand.u32 %v4134, 4294901760
    %4136 = vmatpush.msra.mxu0 %v4135
    %v4137 = vand.u32 %v233, 4294901760
    %v4138 = vsub.f32 %v233, %v4137
    %v4139 = vand.u32 %v4138, 4294901760
    %v4140 = vsub.f32 %v4138, %v4139
    %v4141 = vand.u32 %v4140, 4294901760
    %4142 = vmatpush.msra.mxu0 %v4141
    %v4143 = vand.u32 %v229, 4294901760
    %v4144 = vsub.f32 %v229, %v4143
    %v4145 = vand.u32 %v4144, 4294901760
    %v4146 = vsub.f32 %v4144, %v4145
    %v4147 = vand.u32 %v4146, 4294901760
    %4148 = vmatpush.msra.mxu0 %v4147
    %v4149 = vand.u32 %v225, 4294901760
    %v4150 = vsub.f32 %v225, %v4149
    %v4151 = vand.u32 %v4150, 4294901760
    %v4152 = vsub.f32 %v4150, %v4151
    %v4153 = vand.u32 %v4152, 4294901760
    %4154 = vmatpush.msra.mxu0 %v4153
    %v4155 = vand.u32 %v221, 4294901760
    %v4156 = vsub.f32 %v221, %v4155
    %v4157 = vand.u32 %v4156, 4294901760
    %v4158 = vsub.f32 %v4156, %v4157
    %v4159 = vand.u32 %v4158, 4294901760
    %4160 = vmatpush.msra.mxu0 %v4159
    %v4161 = vand.u32 %v217, 4294901760
    %v4162 = vsub.f32 %v217, %v4161
    %v4163 = vand.u32 %v4162, 4294901760
    %v4164 = vsub.f32 %v4162, %v4163
    %v4165 = vand.u32 %v4164, 4294901760
    %4166 = vmatpush.msra.mxu0 %v4165
    %v4167 = vand.u32 %v213, 4294901760
    %v4168 = vsub.f32 %v213, %v4167
    %v4169 = vand.u32 %v4168, 4294901760
    %v4170 = vsub.f32 %v4168, %v4169
    %v4171 = vand.u32 %v4170, 4294901760
    %4172 = vmatpush.msra.mxu0 %v4171
    %v4173 = vand.u32 %v18, 4294901760
    %4174 = vmatmul.f32.gmra.mxu0 %v4173
    %v4175 = vpop.f32.mrf.mxu0
    %v4176 = vadd.f32 %v4075, %v4175
    %4177 = vdwg.mxu0
    %v4178 = vand.u32 %v273, 4294901760
    %v4179 = vsub.f32 %v273, %v4178
    %4180 = vmatpush.msra.mxu0 %v4179
    %v4181 = vand.u32 %v269, 4294901760
    %v4182 = vsub.f32 %v269, %v4181
    %4183 = vmatpush.msra.mxu0 %v4182
    %v4184 = vand.u32 %v265, 4294901760
    %v4185 = vsub.f32 %v265, %v4184
    %4186 = vmatpush.msra.mxu0 %v4185
    %v4187 = vand.u32 %v261, 4294901760
    %v4188 = vsub.f32 %v261, %v4187
    %4189 = vmatpush.msra.mxu0 %v4188
    %v4190 = vand.u32 %v257, 4294901760
    %v4191 = vsub.f32 %v257, %v4190
    %4192 = vmatpush.msra.mxu0 %v4191
    %v4193 = vand.u32 %v253, 4294901760
    %v4194 = vsub.f32 %v253, %v4193
    %4195 = vmatpush.msra.mxu0 %v4194
    %v4196 = vand.u32 %v249, 4294901760
    %v4197 = vsub.f32 %v249, %v4196
    %4198 = vmatpush.msra.mxu0 %v4197
    %v4199 = vand.u32 %v245, 4294901760
    %v4200 = vsub.f32 %v245, %v4199
    %4201 = vmatpush.msra.mxu0 %v4200
    %v4202 = vand.u32 %v241, 4294901760
    %v4203 = vsub.f32 %v241, %v4202
    %4204 = vmatpush.msra.mxu0 %v4203
    %v4205 = vand.u32 %v237, 4294901760
    %v4206 = vsub.f32 %v237, %v4205
    %4207 = vmatpush.msra.mxu0 %v4206
    %v4208 = vand.u32 %v233, 4294901760
    %v4209 = vsub.f32 %v233, %v4208
    %4210 = vmatpush.msra.mxu0 %v4209
    %v4211 = vand.u32 %v229, 4294901760
    %v4212 = vsub.f32 %v229, %v4211
    %4213 = vmatpush.msra.mxu0 %v4212
    %v4214 = vand.u32 %v225, 4294901760
    %v4215 = vsub.f32 %v225, %v4214
    %4216 = vmatpush.msra.mxu0 %v4215
    %v4217 = vand.u32 %v221, 4294901760
    %v4218 = vsub.f32 %v221, %v4217
    %4219 = vmatpush.msra.mxu0 %v4218
    %v4220 = vand.u32 %v217, 4294901760
    %v4221 = vsub.f32 %v217, %v4220
    %4222 = vmatpush.msra.mxu0 %v4221
    %v4223 = vand.u32 %v213, 4294901760
    %v4224 = vsub.f32 %v213, %v4223
    %4225 = vmatpush.msra.mxu0 %v4224
    %v4226 = vand.u32 %v18, 4294901760
    %v4227 = vsub.f32 %v18, %v4226
    %4228 = vmatmul.f32.gmra.mxu0 %v4227
    %v4229 = vpop.f32.mrf.mxu0
    %v4230 = vadd.f32 %v4176, %v4229
    %4231 = vdwg.mxu0
    %v4232 = vand.u32 %v273, 4294901760
    %4233 = vmatpush.msra.mxu0 %v4232
    %v4234 = vand.u32 %v269, 4294901760
    %4235 = vmatpush.msra.mxu0 %v4234
    %v4236 = vand.u32 %v265, 4294901760
    %4237 = vmatpush.msra.mxu0 %v4236
    %v4238 = vand.u32 %v261, 4294901760
    %4239 = vmatpush.msra.mxu0 %v4238
    %v4240 = vand.u32 %v257, 4294901760
    %4241 = vmatpush.msra.mxu0 %v4240
    %v4242 = vand.u32 %v253, 4294901760
    %4243 = vmatpush.msra.mxu0 %v4242
    %v4244 = vand.u32 %v249, 4294901760
    %4245 = vmatpush.msra.mxu0 %v4244
    %v4246 = vand.u32 %v245, 4294901760
    %4247 = vmatpush.msra.mxu0 %v4246
    %v4248 = vand.u32 %v241, 4294901760
    %4249 = vmatpush.msra.mxu0 %v4248
    %v4250 = vand.u32 %v237, 4294901760
    %4251 = vmatpush.msra.mxu0 %v4250
    %v4252 = vand.u32 %v233, 4294901760
    %4253 = vmatpush.msra.mxu0 %v4252
    %v4254 = vand.u32 %v229, 4294901760
    %4255 = vmatpush.msra.mxu0 %v4254
    %v4256 = vand.u32 %v225, 4294901760
    %4257 = vmatpush.msra.mxu0 %v4256
    %v4258 = vand.u32 %v221, 4294901760
    %4259 = vmatpush.msra.mxu0 %v4258
    %v4260 = vand.u32 %v217, 4294901760
    %4261 = vmatpush.msra.mxu0 %v4260
    %v4262 = vand.u32 %v213, 4294901760
    %4263 = vmatpush.msra.mxu0 %v4262
    %v4264 = vand.u32 %v18, 4294901760
    %v4265 = vsub.f32 %v18, %v4264
    %v4266 = vand.u32 %v4265, 4294901760
    %4267 = vmatmul.f32.gmra.mxu0 %v4266
    %v4268 = vpop.f32.mrf.mxu0
    %v4269 = vadd.f32 %v4230, %v4268
    %4270 = vdwg.mxu0
    %v4271 = vand.u32 %v273, 4294901760
    %v4272 = vsub.f32 %v273, %v4271
    %v4273 = vand.u32 %v4272, 4294901760
    %4274 = vmatpush.msra.mxu0 %v4273
    %v4275 = vand.u32 %v269, 4294901760
    %v4276 = vsub.f32 %v269, %v4275
    %v4277 = vand.u32 %v4276, 4294901760
    %4278 = vmatpush.msra.mxu0 %v4277
    %v4279 = vand.u32 %v265, 4294901760
    %v4280 = vsub.f32 %v265, %v4279
    %v4281 = vand.u32 %v4280, 4294901760
    %4282 = vmatpush.msra.mxu0 %v4281
    %v4283 = vand.u32 %v261, 4294901760
    %v4284 = vsub.f32 %v261, %v4283
    %v4285 = vand.u32 %v4284, 4294901760
    %4286 = vmatpush.msra.mxu0 %v4285
    %v4287 = vand.u32 %v257, 4294901760
    %v4288 = vsub.f32 %v257, %v4287
    %v4289 = vand.u32 %v4288, 4294901760
    %4290 = vmatpush.msra.mxu0 %v4289
    %v4291 = vand.u32 %v253, 4294901760
    %v4292 = vsub.f32 %v253, %v4291
    %v4293 = vand.u32 %v4292, 4294901760
    %4294 = vmatpush.msra.mxu0 %v4293
    %v4295 = vand.u32 %v249, 4294901760
    %v4296 = vsub.f32 %v249, %v4295
    %v4297 = vand.u32 %v4296, 4294901760
    %4298 = vmatpush.msra.mxu0 %v4297
    %v4299 = vand.u32 %v245, 4294901760
    %v4300 = vsub.f32 %v245, %v4299
    %v4301 = vand.u32 %v4300, 4294901760
    %4302 = vmatpush.msra.mxu0 %v4301
    %v4303 = vand.u32 %v241, 4294901760
    %v4304 = vsub.f32 %v241, %v4303
    %v4305 = vand.u32 %v4304, 4294901760
    %4306 = vmatpush.msra.mxu0 %v4305
    %v4307 = vand.u32 %v237, 4294901760
    %v4308 = vsub.f32 %v237, %v4307
    %v4309 = vand.u32 %v4308, 4294901760
    %4310 = vmatpush.msra.mxu0 %v4309
    %v4311 = vand.u32 %v233, 4294901760
    %v4312 = vsub.f32 %v233, %v4311
    %v4313 = vand.u32 %v4312, 4294901760
    %4314 = vmatpush.msra.mxu0 %v4313
    %v4315 = vand.u32 %v229, 4294901760
    %v4316 = vsub.f32 %v229, %v4315
    %v4317 = vand.u32 %v4316, 4294901760
    %4318 = vmatpush.msra.mxu0 %v4317
    %v4319 = vand.u32 %v225, 4294901760
    %v4320 = vsub.f32 %v225, %v4319
    %v4321 = vand.u32 %v4320, 4294901760
    %4322 = vmatpush.msra.mxu0 %v4321
    %v4323 = vand.u32 %v221, 4294901760
    %v4324 = vsub.f32 %v221, %v4323
    %v4325 = vand.u32 %v4324, 4294901760
    %4326 = vmatpush.msra.mxu0 %v4325
    %v4327 = vand.u32 %v217, 4294901760
    %v4328 = vsub.f32 %v217, %v4327
    %v4329 = vand.u32 %v4328, 4294901760
    %4330 = vmatpush.msra.mxu0 %v4329
    %v4331 = vand.u32 %v213, 4294901760
    %v4332 = vsub.f32 %v213, %v4331
    %v4333 = vand.u32 %v4332, 4294901760
    %4334 = vmatpush.msra.mxu0 %v4333
    %v4335 = vand.u32 %v18, 4294901760
    %4336 = vmatmul.f32.gmra.mxu0 %v4335
    %v4337 = vpop.f32.mrf.mxu0
    %v4338 = vadd.f32 %v4269, %v4337
    %4339 = vdwg.mxu0
    %v4340 = vand.u32 %v273, 4294901760
    %4341 = vmatpush.msra.mxu0 %v4340
    %v4342 = vand.u32 %v269, 4294901760
    %4343 = vmatpush.msra.mxu0 %v4342
    %v4344 = vand.u32 %v265, 4294901760
    %4345 = vmatpush.msra.mxu0 %v4344
    %v4346 = vand.u32 %v261, 4294901760
    %4347 = vmatpush.msra.mxu0 %v4346
    %v4348 = vand.u32 %v257, 4294901760
    %4349 = vmatpush.msra.mxu0 %v4348
    %v4350 = vand.u32 %v253, 4294901760
    %4351 = vmatpush.msra.mxu0 %v4350
    %v4352 = vand.u32 %v249, 4294901760
    %4353 = vmatpush.msra.mxu0 %v4352
    %v4354 = vand.u32 %v245, 4294901760
    %4355 = vmatpush.msra.mxu0 %v4354
    %v4356 = vand.u32 %v241, 4294901760
    %4357 = vmatpush.msra.mxu0 %v4356
    %v4358 = vand.u32 %v237, 4294901760
    %4359 = vmatpush.msra.mxu0 %v4358
    %v4360 = vand.u32 %v233, 4294901760
    %4361 = vmatpush.msra.mxu0 %v4360
    %v4362 = vand.u32 %v229, 4294901760
    %4363 = vmatpush.msra.mxu0 %v4362
    %v4364 = vand.u32 %v225, 4294901760
    %4365 = vmatpush.msra.mxu0 %v4364
    %v4366 = vand.u32 %v221, 4294901760
    %4367 = vmatpush.msra.mxu0 %v4366
    %v4368 = vand.u32 %v217, 4294901760
    %4369 = vmatpush.msra.mxu0 %v4368
    %v4370 = vand.u32 %v213, 4294901760
    %4371 = vmatpush.msra.mxu0 %v4370
    %v4372 = vand.u32 %v18, 4294901760
    %4373 = vmatmul.f32.gmra.mxu0 %v4372
    %v4374 = vpop.f32.mrf.mxu0
    %v4375 = vadd.f32 %v4338, %v4374
    %4376 = vdwg.mxu0
    %v4377 = vand.u32 %v82, 4294901760
    %4378 = vmatpush.msra.mxu0 %v4377
    %v4379 = vand.u32 %v78, 4294901760
    %4380 = vmatpush.msra.mxu0 %v4379
    %v4381 = vand.u32 %v74, 4294901760
    %4382 = vmatpush.msra.mxu0 %v4381
    %v4383 = vand.u32 %v70, 4294901760
    %4384 = vmatpush.msra.mxu0 %v4383
    %v4385 = vand.u32 %v66, 4294901760
    %4386 = vmatpush.msra.mxu0 %v4385
    %v4387 = vand.u32 %v62, 4294901760
    %4388 = vmatpush.msra.mxu0 %v4387
    %v4389 = vand.u32 %v58, 4294901760
    %4390 = vmatpush.msra.mxu0 %v4389
    %v4391 = vand.u32 %v54, 4294901760
    %4392 = vmatpush.msra.mxu0 %v4391
    %v4393 = vand.u32 %v50, 4294901760
    %4394 = vmatpush.msra.mxu0 %v4393
    %v4395 = vand.u32 %v46, 4294901760
    %4396 = vmatpush.msra.mxu0 %v4395
    %v4397 = vand.u32 %v42, 4294901760
    %4398 = vmatpush.msra.mxu0 %v4397
    %v4399 = vand.u32 %v38, 4294901760
    %4400 = vmatpush.msra.mxu0 %v4399
    %v4401 = vand.u32 %v34, 4294901760
    %4402 = vmatpush.msra.mxu0 %v4401
    %v4403 = vand.u32 %v30, 4294901760
    %4404 = vmatpush.msra.mxu0 %v4403
    %v4405 = vand.u32 %v26, 4294901760
    %4406 = vmatpush.msra.mxu0 %v4405
    %v4407 = vand.u32 %v22, 4294901760
    %4408 = vmatpush.msra.mxu0 %v4407
    %v4409 = vand.u32 %v15, 4294901760
    %v4410 = vsub.f32 %v15, %v4409
    %v4411 = vand.u32 %v4410, 4294901760
    %v4412 = vsub.f32 %v4410, %v4411
    %v4413 = vand.u32 %v4412, 4294901760
    %4414 = vmatmul.f32.gmra.mxu0 %v4413
    %v4415 = vpop.f32.mrf.mxu0
    %v4416 = vadd.f32 %v280, %v4415
    %4417 = vdwg.mxu0
    %v4418 = vand.u32 %v82, 4294901760
    %v4419 = vsub.f32 %v82, %v4418
    %v4420 = vand.u32 %v4419, 4294901760
    %v4421 = vsub.f32 %v4419, %v4420
    %v4422 = vand.u32 %v4421, 4294901760
    %4423 = vmatpush.msra.mxu0 %v4422
    %v4424 = vand.u32 %v78, 4294901760
    %v4425 = vsub.f32 %v78, %v4424
    %v4426 = vand.u32 %v4425, 4294901760
    %v4427 = vsub.f32 %v4425, %v4426
    %v4428 = vand.u32 %v4427, 4294901760
    %4429 = vmatpush.msra.mxu0 %v4428
    %v4430 = vand.u32 %v74, 4294901760
    %v4431 = vsub.f32 %v74, %v4430
    %v4432 = vand.u32 %v4431, 4294901760
    %v4433 = vsub.f32 %v4431, %v4432
    %v4434 = vand.u32 %v4433, 4294901760
    %4435 = vmatpush.msra.mxu0 %v4434
    %v4436 = vand.u32 %v70, 4294901760
    %v4437 = vsub.f32 %v70, %v4436
    %v4438 = vand.u32 %v4437, 4294901760
    %v4439 = vsub.f32 %v4437, %v4438
    %v4440 = vand.u32 %v4439, 4294901760
    %4441 = vmatpush.msra.mxu0 %v4440
    %v4442 = vand.u32 %v66, 4294901760
    %v4443 = vsub.f32 %v66, %v4442
    %v4444 = vand.u32 %v4443, 4294901760
    %v4445 = vsub.f32 %v4443, %v4444
    %v4446 = vand.u32 %v4445, 4294901760
    %4447 = vmatpush.msra.mxu0 %v4446
    %v4448 = vand.u32 %v62, 4294901760
    %v4449 = vsub.f32 %v62, %v4448
    %v4450 = vand.u32 %v4449, 4294901760
    %v4451 = vsub.f32 %v4449, %v4450
    %v4452 = vand.u32 %v4451, 4294901760
    %4453 = vmatpush.msra.mxu0 %v4452
    %v4454 = vand.u32 %v58, 4294901760
    %v4455 = vsub.f32 %v58, %v4454
    %v4456 = vand.u32 %v4455, 4294901760
    %v4457 = vsub.f32 %v4455, %v4456
    %v4458 = vand.u32 %v4457, 4294901760
    %4459 = vmatpush.msra.mxu0 %v4458
    %v4460 = vand.u32 %v54, 4294901760
    %v4461 = vsub.f32 %v54, %v4460
    %v4462 = vand.u32 %v4461, 4294901760
    %v4463 = vsub.f32 %v4461, %v4462
    %v4464 = vand.u32 %v4463, 4294901760
    %4465 = vmatpush.msra.mxu0 %v4464
    %v4466 = vand.u32 %v50, 4294901760
    %v4467 = vsub.f32 %v50, %v4466
    %v4468 = vand.u32 %v4467, 4294901760
    %v4469 = vsub.f32 %v4467, %v4468
    %v4470 = vand.u32 %v4469, 4294901760
    %4471 = vmatpush.msra.mxu0 %v4470
    %v4472 = vand.u32 %v46, 4294901760
    %v4473 = vsub.f32 %v46, %v4472
    %v4474 = vand.u32 %v4473, 4294901760
    %v4475 = vsub.f32 %v4473, %v4474
    %v4476 = vand.u32 %v4475, 4294901760
    %4477 = vmatpush.msra.mxu0 %v4476
    %v4478 = vand.u32 %v42, 4294901760
    %v4479 = vsub.f32 %v42, %v4478
    %v4480 = vand.u32 %v4479, 4294901760
    %v4481 = vsub.f32 %v4479, %v4480
    %v4482 = vand.u32 %v4481, 4294901760
    %4483 = vmatpush.msra.mxu0 %v4482
    %v4484 = vand.u32 %v38, 4294901760
    %v4485 = vsub.f32 %v38, %v4484
    %v4486 = vand.u32 %v4485, 4294901760
    %v4487 = vsub.f32 %v4485, %v4486
    %v4488 = vand.u32 %v4487, 4294901760
    %4489 = vmatpush.msra.mxu0 %v4488
    %v4490 = vand.u32 %v34, 4294901760
    %v4491 = vsub.f32 %v34, %v4490
    %v4492 = vand.u32 %v4491, 4294901760
    %v4493 = vsub.f32 %v4491, %v4492
    %v4494 = vand.u32 %v4493, 4294901760
    %4495 = vmatpush.msra.mxu0 %v4494
    %v4496 = vand.u32 %v30, 4294901760
    %v4497 = vsub.f32 %v30, %v4496
    %v4498 = vand.u32 %v4497, 4294901760
    %v4499 = vsub.f32 %v4497, %v4498
    %v4500 = vand.u32 %v4499, 4294901760
    %4501 = vmatpush.msra.mxu0 %v4500
    %v4502 = vand.u32 %v26, 4294901760
    %v4503 = vsub.f32 %v26, %v4502
    %v4504 = vand.u32 %v4503, 4294901760
    %v4505 = vsub.f32 %v4503, %v4504
    %v4506 = vand.u32 %v4505, 4294901760
    %4507 = vmatpush.msra.mxu0 %v4506
    %v4508 = vand.u32 %v22, 4294901760
    %v4509 = vsub.f32 %v22, %v4508
    %v4510 = vand.u32 %v4509, 4294901760
    %v4511 = vsub.f32 %v4509, %v4510
    %v4512 = vand.u32 %v4511, 4294901760
    %4513 = vmatpush.msra.mxu0 %v4512
    %v4514 = vand.u32 %v15, 4294901760
    %4515 = vmatmul.f32.gmra.mxu0 %v4514
    %v4516 = vpop.f32.mrf.mxu0
    %v4517 = vadd.f32 %v4416, %v4516
    %4518 = vdwg.mxu0
    %v4519 = vand.u32 %v82, 4294901760
    %v4520 = vsub.f32 %v82, %v4519
    %4521 = vmatpush.msra.mxu0 %v4520
    %v4522 = vand.u32 %v78, 4294901760
    %v4523 = vsub.f32 %v78, %v4522
    %4524 = vmatpush.msra.mxu0 %v4523
    %v4525 = vand.u32 %v74, 4294901760
    %v4526 = vsub.f32 %v74, %v4525
    %4527 = vmatpush.msra.mxu0 %v4526
    %v4528 = vand.u32 %v70, 4294901760
    %v4529 = vsub.f32 %v70, %v4528
    %4530 = vmatpush.msra.mxu0 %v4529
    %v4531 = vand.u32 %v66, 4294901760
    %v4532 = vsub.f32 %v66, %v4531
    %4533 = vmatpush.msra.mxu0 %v4532
    %v4534 = vand.u32 %v62, 4294901760
    %v4535 = vsub.f32 %v62, %v4534
    %4536 = vmatpush.msra.mxu0 %v4535
    %v4537 = vand.u32 %v58, 4294901760
    %v4538 = vsub.f32 %v58, %v4537
    %4539 = vmatpush.msra.mxu0 %v4538
    %v4540 = vand.u32 %v54, 4294901760
    %v4541 = vsub.f32 %v54, %v4540
    %4542 = vmatpush.msra.mxu0 %v4541
    %v4543 = vand.u32 %v50, 4294901760
    %v4544 = vsub.f32 %v50, %v4543
    %4545 = vmatpush.msra.mxu0 %v4544
    %v4546 = vand.u32 %v46, 4294901760
    %v4547 = vsub.f32 %v46, %v4546
    %4548 = vmatpush.msra.mxu0 %v4547
    %v4549 = vand.u32 %v42, 4294901760
    %v4550 = vsub.f32 %v42, %v4549
    %4551 = vmatpush.msra.mxu0 %v4550
    %v4552 = vand.u32 %v38, 4294901760
    %v4553 = vsub.f32 %v38, %v4552
    %4554 = vmatpush.msra.mxu0 %v4553
    %v4555 = vand.u32 %v34, 4294901760
    %v4556 = vsub.f32 %v34, %v4555
    %4557 = vmatpush.msra.mxu0 %v4556
    %v4558 = vand.u32 %v30, 4294901760
    %v4559 = vsub.f32 %v30, %v4558
    %4560 = vmatpush.msra.mxu0 %v4559
    %v4561 = vand.u32 %v26, 4294901760
    %v4562 = vsub.f32 %v26, %v4561
    %4563 = vmatpush.msra.mxu0 %v4562
    %v4564 = vand.u32 %v22, 4294901760
    %v4565 = vsub.f32 %v22, %v4564
    %4566 = vmatpush.msra.mxu0 %v4565
    %v4567 = vand.u32 %v15, 4294901760
    %v4568 = vsub.f32 %v15, %v4567
    %4569 = vmatmul.f32.gmra.mxu0 %v4568
    %v4570 = vpop.f32.mrf.mxu0
    %v4571 = vadd.f32 %v4517, %v4570
    %4572 = vdwg.mxu0
    %v4573 = vand.u32 %v82, 4294901760
    %4574 = vmatpush.msra.mxu0 %v4573
    %v4575 = vand.u32 %v78, 4294901760
    %4576 = vmatpush.msra.mxu0 %v4575
    %v4577 = vand.u32 %v74, 4294901760
    %4578 = vmatpush.msra.mxu0 %v4577
    %v4579 = vand.u32 %v70, 4294901760
    %4580 = vmatpush.msra.mxu0 %v4579
    %v4581 = vand.u32 %v66, 4294901760
    %4582 = vmatpush.msra.mxu0 %v4581
    %v4583 = vand.u32 %v62, 4294901760
    %4584 = vmatpush.msra.mxu0 %v4583
    %v4585 = vand.u32 %v58, 4294901760
    %4586 = vmatpush.msra.mxu0 %v4585
    %v4587 = vand.u32 %v54, 4294901760
    %4588 = vmatpush.msra.mxu0 %v4587
    %v4589 = vand.u32 %v50, 4294901760
    %4590 = vmatpush.msra.mxu0 %v4589
    %v4591 = vand.u32 %v46, 4294901760
    %4592 = vmatpush.msra.mxu0 %v4591
    %v4593 = vand.u32 %v42, 4294901760
    %4594 = vmatpush.msra.mxu0 %v4593
    %v4595 = vand.u32 %v38, 4294901760
    %4596 = vmatpush.msra.mxu0 %v4595
    %v4597 = vand.u32 %v34, 4294901760
    %4598 = vmatpush.msra.mxu0 %v4597
    %v4599 = vand.u32 %v30, 4294901760
    %4600 = vmatpush.msra.mxu0 %v4599
    %v4601 = vand.u32 %v26, 4294901760
    %4602 = vmatpush.msra.mxu0 %v4601
    %v4603 = vand.u32 %v22, 4294901760
    %4604 = vmatpush.msra.mxu0 %v4603
    %v4605 = vand.u32 %v15, 4294901760
    %v4606 = vsub.f32 %v15, %v4605
    %v4607 = vand.u32 %v4606, 4294901760
    %4608 = vmatmul.f32.gmra.mxu0 %v4607
    %v4609 = vpop.f32.mrf.mxu0
    %v4610 = vadd.f32 %v4571, %v4609
    %4611 = vdwg.mxu0
    %v4612 = vand.u32 %v82, 4294901760
    %v4613 = vsub.f32 %v82, %v4612
    %v4614 = vand.u32 %v4613, 4294901760
    %4615 = vmatpush.msra.mxu0 %v4614
    %v4616 = vand.u32 %v78, 4294901760
    %v4617 = vsub.f32 %v78, %v4616
    %v4618 = vand.u32 %v4617, 4294901760
    %4619 = vmatpush.msra.mxu0 %v4618
    %v4620 = vand.u32 %v74, 4294901760
    %v4621 = vsub.f32 %v74, %v4620
    %v4622 = vand.u32 %v4621, 4294901760
    %4623 = vmatpush.msra.mxu0 %v4622
    %v4624 = vand.u32 %v70, 4294901760
    %v4625 = vsub.f32 %v70, %v4624
    %v4626 = vand.u32 %v4625, 4294901760
    %4627 = vmatpush.msra.mxu0 %v4626
    %v4628 = vand.u32 %v66, 4294901760
    %v4629 = vsub.f32 %v66, %v4628
    %v4630 = vand.u32 %v4629, 4294901760
    %4631 = vmatpush.msra.mxu0 %v4630
    %v4632 = vand.u32 %v62, 4294901760
    %v4633 = vsub.f32 %v62, %v4632
    %v4634 = vand.u32 %v4633, 4294901760
    %4635 = vmatpush.msra.mxu0 %v4634
    %v4636 = vand.u32 %v58, 4294901760
    %v4637 = vsub.f32 %v58, %v4636
    %v4638 = vand.u32 %v4637, 4294901760
    %4639 = vmatpush.msra.mxu0 %v4638
    %v4640 = vand.u32 %v54, 4294901760
    %v4641 = vsub.f32 %v54, %v4640
    %v4642 = vand.u32 %v4641, 4294901760
    %4643 = vmatpush.msra.mxu0 %v4642
    %v4644 = vand.u32 %v50, 4294901760
    %v4645 = vsub.f32 %v50, %v4644
    %v4646 = vand.u32 %v4645, 4294901760
    %4647 = vmatpush.msra.mxu0 %v4646
    %v4648 = vand.u32 %v46, 4294901760
    %v4649 = vsub.f32 %v46, %v4648
    %v4650 = vand.u32 %v4649, 4294901760
    %4651 = vmatpush.msra.mxu0 %v4650
    %v4652 = vand.u32 %v42, 4294901760
    %v4653 = vsub.f32 %v42, %v4652
    %v4654 = vand.u32 %v4653, 4294901760
    %4655 = vmatpush.msra.mxu0 %v4654
    %v4656 = vand.u32 %v38, 4294901760
    %v4657 = vsub.f32 %v38, %v4656
    %v4658 = vand.u32 %v4657, 4294901760
    %4659 = vmatpush.msra.mxu0 %v4658
    %v4660 = vand.u32 %v34, 4294901760
    %v4661 = vsub.f32 %v34, %v4660
    %v4662 = vand.u32 %v4661, 4294901760
    %4663 = vmatpush.msra.mxu0 %v4662
    %v4664 = vand.u32 %v30, 4294901760
    %v4665 = vsub.f32 %v30, %v4664
    %v4666 = vand.u32 %v4665, 4294901760
    %4667 = vmatpush.msra.mxu0 %v4666
    %v4668 = vand.u32 %v26, 4294901760
    %v4669 = vsub.f32 %v26, %v4668
    %v4670 = vand.u32 %v4669, 4294901760
    %4671 = vmatpush.msra.mxu0 %v4670
    %v4672 = vand.u32 %v22, 4294901760
    %v4673 = vsub.f32 %v22, %v4672
    %v4674 = vand.u32 %v4673, 4294901760
    %4675 = vmatpush.msra.mxu0 %v4674
    %v4676 = vand.u32 %v15, 4294901760
    %4677 = vmatmul.f32.gmra.mxu0 %v4676
    %v4678 = vpop.f32.mrf.mxu0
    %v4679 = vadd.f32 %v4610, %v4678
    %4680 = vdwg.mxu0
    %v4681 = vand.u32 %v82, 4294901760
    %4682 = vmatpush.msra.mxu0 %v4681
    %v4683 = vand.u32 %v78, 4294901760
    %4684 = vmatpush.msra.mxu0 %v4683
    %v4685 = vand.u32 %v74, 4294901760
    %4686 = vmatpush.msra.mxu0 %v4685
    %v4687 = vand.u32 %v70, 4294901760
    %4688 = vmatpush.msra.mxu0 %v4687
    %v4689 = vand.u32 %v66, 4294901760
    %4690 = vmatpush.msra.mxu0 %v4689
    %v4691 = vand.u32 %v62, 4294901760
    %4692 = vmatpush.msra.mxu0 %v4691
    %v4693 = vand.u32 %v58, 4294901760
    %4694 = vmatpush.msra.mxu0 %v4693
    %v4695 = vand.u32 %v54, 4294901760
    %4696 = vmatpush.msra.mxu0 %v4695
    %v4697 = vand.u32 %v50, 4294901760
    %4698 = vmatpush.msra.mxu0 %v4697
    %v4699 = vand.u32 %v46, 4294901760
    %4700 = vmatpush.msra.mxu0 %v4699
    %v4701 = vand.u32 %v42, 4294901760
    %4702 = vmatpush.msra.mxu0 %v4701
    %v4703 = vand.u32 %v38, 4294901760
    %4704 = vmatpush.msra.mxu0 %v4703
    %v4705 = vand.u32 %v34, 4294901760
    %4706 = vmatpush.msra.mxu0 %v4705
    %v4707 = vand.u32 %v30, 4294901760
    %4708 = vmatpush.msra.mxu0 %v4707
    %v4709 = vand.u32 %v26, 4294901760
    %4710 = vmatpush.msra.mxu0 %v4709
    %v4711 = vand.u32 %v22, 4294901760
    %4712 = vmatpush.msra.mxu0 %v4711
    %v4713 = vand.u32 %v15, 4294901760
    %4714 = vmatmul.f32.gmra.mxu0 %v4713
    %v4715 = vpop.f32.mrf.mxu0
    %v4716 = vadd.f32 %v4679, %v4715
    %4717 = vdwg.mxu0
    %v4718 = vand.u32 %v146, 4294901760
    %4719 = vmatpush.msra.mxu0 %v4718
    %v4720 = vand.u32 %v142, 4294901760
    %4721 = vmatpush.msra.mxu0 %v4720
    %v4722 = vand.u32 %v138, 4294901760
    %4723 = vmatpush.msra.mxu0 %v4722
    %v4724 = vand.u32 %v134, 4294901760
    %4725 = vmatpush.msra.mxu0 %v4724
    %v4726 = vand.u32 %v130, 4294901760
    %4727 = vmatpush.msra.mxu0 %v4726
    %v4728 = vand.u32 %v126, 4294901760
    %4729 = vmatpush.msra.mxu0 %v4728
    %v4730 = vand.u32 %v122, 4294901760
    %4731 = vmatpush.msra.mxu0 %v4730
    %v4732 = vand.u32 %v118, 4294901760
    %4733 = vmatpush.msra.mxu0 %v4732
    %v4734 = vand.u32 %v114, 4294901760
    %4735 = vmatpush.msra.mxu0 %v4734
    %v4736 = vand.u32 %v110, 4294901760
    %4737 = vmatpush.msra.mxu0 %v4736
    %v4738 = vand.u32 %v106, 4294901760
    %4739 = vmatpush.msra.mxu0 %v4738
    %v4740 = vand.u32 %v102, 4294901760
    %4741 = vmatpush.msra.mxu0 %v4740
    %v4742 = vand.u32 %v98, 4294901760
    %4743 = vmatpush.msra.mxu0 %v4742
    %v4744 = vand.u32 %v94, 4294901760
    %4745 = vmatpush.msra.mxu0 %v4744
    %v4746 = vand.u32 %v90, 4294901760
    %4747 = vmatpush.msra.mxu0 %v4746
    %v4748 = vand.u32 %v86, 4294901760
    %4749 = vmatpush.msra.mxu0 %v4748
    %v4750 = vand.u32 %v16, 4294901760
    %v4751 = vsub.f32 %v16, %v4750
    %v4752 = vand.u32 %v4751, 4294901760
    %v4753 = vsub.f32 %v4751, %v4752
    %v4754 = vand.u32 %v4753, 4294901760
    %4755 = vmatmul.f32.gmra.mxu0 %v4754
    %v4756 = vpop.f32.mrf.mxu0
    %v4757 = vadd.f32 %v4716, %v4756
    %4758 = vdwg.mxu0
    %v4759 = vand.u32 %v146, 4294901760
    %v4760 = vsub.f32 %v146, %v4759
    %v4761 = vand.u32 %v4760, 4294901760
    %v4762 = vsub.f32 %v4760, %v4761
    %v4763 = vand.u32 %v4762, 4294901760
    %4764 = vmatpush.msra.mxu0 %v4763
    %v4765 = vand.u32 %v142, 4294901760
    %v4766 = vsub.f32 %v142, %v4765
    %v4767 = vand.u32 %v4766, 4294901760
    %v4768 = vsub.f32 %v4766, %v4767
    %v4769 = vand.u32 %v4768, 4294901760
    %4770 = vmatpush.msra.mxu0 %v4769
    %v4771 = vand.u32 %v138, 4294901760
    %v4772 = vsub.f32 %v138, %v4771
    %v4773 = vand.u32 %v4772, 4294901760
    %v4774 = vsub.f32 %v4772, %v4773
    %v4775 = vand.u32 %v4774, 4294901760
    %4776 = vmatpush.msra.mxu0 %v4775
    %v4777 = vand.u32 %v134, 4294901760
    %v4778 = vsub.f32 %v134, %v4777
    %v4779 = vand.u32 %v4778, 4294901760
    %v4780 = vsub.f32 %v4778, %v4779
    %v4781 = vand.u32 %v4780, 4294901760
    %4782 = vmatpush.msra.mxu0 %v4781
    %v4783 = vand.u32 %v130, 4294901760
    %v4784 = vsub.f32 %v130, %v4783
    %v4785 = vand.u32 %v4784, 4294901760
    %v4786 = vsub.f32 %v4784, %v4785
    %v4787 = vand.u32 %v4786, 4294901760
    %4788 = vmatpush.msra.mxu0 %v4787
    %v4789 = vand.u32 %v126, 4294901760
    %v4790 = vsub.f32 %v126, %v4789
    %v4791 = vand.u32 %v4790, 4294901760
    %v4792 = vsub.f32 %v4790, %v4791
    %v4793 = vand.u32 %v4792, 4294901760
    %4794 = vmatpush.msra.mxu0 %v4793
    %v4795 = vand.u32 %v122, 4294901760
    %v4796 = vsub.f32 %v122, %v4795
    %v4797 = vand.u32 %v4796, 4294901760
    %v4798 = vsub.f32 %v4796, %v4797
    %v4799 = vand.u32 %v4798, 4294901760
    %4800 = vmatpush.msra.mxu0 %v4799
    %v4801 = vand.u32 %v118, 4294901760
    %v4802 = vsub.f32 %v118, %v4801
    %v4803 = vand.u32 %v4802, 4294901760
    %v4804 = vsub.f32 %v4802, %v4803
    %v4805 = vand.u32 %v4804, 4294901760
    %4806 = vmatpush.msra.mxu0 %v4805
    %v4807 = vand.u32 %v114, 4294901760
    %v4808 = vsub.f32 %v114, %v4807
    %v4809 = vand.u32 %v4808, 4294901760
    %v4810 = vsub.f32 %v4808, %v4809
    %v4811 = vand.u32 %v4810, 4294901760
    %4812 = vmatpush.msra.mxu0 %v4811
    %v4813 = vand.u32 %v110, 4294901760
    %v4814 = vsub.f32 %v110, %v4813
    %v4815 = vand.u32 %v4814, 4294901760
    %v4816 = vsub.f32 %v4814, %v4815
    %v4817 = vand.u32 %v4816, 4294901760
    %4818 = vmatpush.msra.mxu0 %v4817
    %v4819 = vand.u32 %v106, 4294901760
    %v4820 = vsub.f32 %v106, %v4819
    %v4821 = vand.u32 %v4820, 4294901760
    %v4822 = vsub.f32 %v4820, %v4821
    %v4823 = vand.u32 %v4822, 4294901760
    %4824 = vmatpush.msra.mxu0 %v4823
    %v4825 = vand.u32 %v102, 4294901760
    %v4826 = vsub.f32 %v102, %v4825
    %v4827 = vand.u32 %v4826, 4294901760
    %v4828 = vsub.f32 %v4826, %v4827
    %v4829 = vand.u32 %v4828, 4294901760
    %4830 = vmatpush.msra.mxu0 %v4829
    %v4831 = vand.u32 %v98, 4294901760
    %v4832 = vsub.f32 %v98, %v4831
    %v4833 = vand.u32 %v4832, 4294901760
    %v4834 = vsub.f32 %v4832, %v4833
    %v4835 = vand.u32 %v4834, 4294901760
    %4836 = vmatpush.msra.mxu0 %v4835
    %v4837 = vand.u32 %v94, 4294901760
    %v4838 = vsub.f32 %v94, %v4837
    %v4839 = vand.u32 %v4838, 4294901760
    %v4840 = vsub.f32 %v4838, %v4839
    %v4841 = vand.u32 %v4840, 4294901760
    %4842 = vmatpush.msra.mxu0 %v4841
    %v4843 = vand.u32 %v90, 4294901760
    %v4844 = vsub.f32 %v90, %v4843
    %v4845 = vand.u32 %v4844, 4294901760
    %v4846 = vsub.f32 %v4844, %v4845
    %v4847 = vand.u32 %v4846, 4294901760
    %4848 = vmatpush.msra.mxu0 %v4847
    %v4849 = vand.u32 %v86, 4294901760
    %v4850 = vsub.f32 %v86, %v4849
    %v4851 = vand.u32 %v4850, 4294901760
    %v4852 = vsub.f32 %v4850, %v4851
    %v4853 = vand.u32 %v4852, 4294901760
    %4854 = vmatpush.msra.mxu0 %v4853
    %v4855 = vand.u32 %v16, 4294901760
    %4856 = vmatmul.f32.gmra.mxu0 %v4855
    %v4857 = vpop.f32.mrf.mxu0
    %v4858 = vadd.f32 %v4757, %v4857
    %4859 = vdwg.mxu0
    %v4860 = vand.u32 %v146, 4294901760
    %v4861 = vsub.f32 %v146, %v4860
    %4862 = vmatpush.msra.mxu0 %v4861
    %v4863 = vand.u32 %v142, 4294901760
    %v4864 = vsub.f32 %v142, %v4863
    %4865 = vmatpush.msra.mxu0 %v4864
    %v4866 = vand.u32 %v138, 4294901760
    %v4867 = vsub.f32 %v138, %v4866
    %4868 = vmatpush.msra.mxu0 %v4867
    %v4869 = vand.u32 %v134, 4294901760
    %v4870 = vsub.f32 %v134, %v4869
    %4871 = vmatpush.msra.mxu0 %v4870
    %v4872 = vand.u32 %v130, 4294901760
    %v4873 = vsub.f32 %v130, %v4872
    %4874 = vmatpush.msra.mxu0 %v4873
    %v4875 = vand.u32 %v126, 4294901760
    %v4876 = vsub.f32 %v126, %v4875
    %4877 = vmatpush.msra.mxu0 %v4876
    %v4878 = vand.u32 %v122, 4294901760
    %v4879 = vsub.f32 %v122, %v4878
    %4880 = vmatpush.msra.mxu0 %v4879
    %v4881 = vand.u32 %v118, 4294901760
    %v4882 = vsub.f32 %v118, %v4881
    %4883 = vmatpush.msra.mxu0 %v4882
    %v4884 = vand.u32 %v114, 4294901760
    %v4885 = vsub.f32 %v114, %v4884
    %4886 = vmatpush.msra.mxu0 %v4885
    %v4887 = vand.u32 %v110, 4294901760
    %v4888 = vsub.f32 %v110, %v4887
    %4889 = vmatpush.msra.mxu0 %v4888
    %v4890 = vand.u32 %v106, 4294901760
    %v4891 = vsub.f32 %v106, %v4890
    %4892 = vmatpush.msra.mxu0 %v4891
    %v4893 = vand.u32 %v102, 4294901760
    %v4894 = vsub.f32 %v102, %v4893
    %4895 = vmatpush.msra.mxu0 %v4894
    %v4896 = vand.u32 %v98, 4294901760
    %v4897 = vsub.f32 %v98, %v4896
    %4898 = vmatpush.msra.mxu0 %v4897
    %v4899 = vand.u32 %v94, 4294901760
    %v4900 = vsub.f32 %v94, %v4899
    %4901 = vmatpush.msra.mxu0 %v4900
    %v4902 = vand.u32 %v90, 4294901760
    %v4903 = vsub.f32 %v90, %v4902
    %4904 = vmatpush.msra.mxu0 %v4903
    %v4905 = vand.u32 %v86, 4294901760
    %v4906 = vsub.f32 %v86, %v4905
    %4907 = vmatpush.msra.mxu0 %v4906
    %v4908 = vand.u32 %v16, 4294901760
    %v4909 = vsub.f32 %v16, %v4908
    %4910 = vmatmul.f32.gmra.mxu0 %v4909
    %v4911 = vpop.f32.mrf.mxu0
    %v4912 = vadd.f32 %v4858, %v4911
    %4913 = vdwg.mxu0
    %v4914 = vand.u32 %v146, 4294901760
    %4915 = vmatpush.msra.mxu0 %v4914
    %v4916 = vand.u32 %v142, 4294901760
    %4917 = vmatpush.msra.mxu0 %v4916
    %v4918 = vand.u32 %v138, 4294901760
    %4919 = vmatpush.msra.mxu0 %v4918
    %v4920 = vand.u32 %v134, 4294901760
    %4921 = vmatpush.msra.mxu0 %v4920
    %v4922 = vand.u32 %v130, 4294901760
    %4923 = vmatpush.msra.mxu0 %v4922
    %v4924 = vand.u32 %v126, 4294901760
    %4925 = vmatpush.msra.mxu0 %v4924
    %v4926 = vand.u32 %v122, 4294901760
    %4927 = vmatpush.msra.mxu0 %v4926
    %v4928 = vand.u32 %v118, 4294901760
    %4929 = vmatpush.msra.mxu0 %v4928
    %v4930 = vand.u32 %v114, 4294901760
    %4931 = vmatpush.msra.mxu0 %v4930
    %v4932 = vand.u32 %v110, 4294901760
    %4933 = vmatpush.msra.mxu0 %v4932
    %v4934 = vand.u32 %v106, 4294901760
    %4935 = vmatpush.msra.mxu0 %v4934
    %v4936 = vand.u32 %v102, 4294901760
    %4937 = vmatpush.msra.mxu0 %v4936
    %v4938 = vand.u32 %v98, 4294901760
    %4939 = vmatpush.msra.mxu0 %v4938
    %v4940 = vand.u32 %v94, 4294901760
    %4941 = vmatpush.msra.mxu0 %v4940
    %v4942 = vand.u32 %v90, 4294901760
    %4943 = vmatpush.msra.mxu0 %v4942
    %v4944 = vand.u32 %v86, 4294901760
    %4945 = vmatpush.msra.mxu0 %v4944
    %v4946 = vand.u32 %v16, 4294901760
    %v4947 = vsub.f32 %v16, %v4946
    %v4948 = vand.u32 %v4947, 4294901760
    %4949 = vmatmul.f32.gmra.mxu0 %v4948
    %v4950 = vpop.f32.mrf.mxu0
    %v4951 = vadd.f32 %v4912, %v4950
    %4952 = vdwg.mxu0
    %v4953 = vand.u32 %v146, 4294901760
    %v4954 = vsub.f32 %v146, %v4953
    %v4955 = vand.u32 %v4954, 4294901760
    %4956 = vmatpush.msra.mxu0 %v4955
    %v4957 = vand.u32 %v142, 4294901760
    %v4958 = vsub.f32 %v142, %v4957
    %v4959 = vand.u32 %v4958, 4294901760
    %4960 = vmatpush.msra.mxu0 %v4959
    %v4961 = vand.u32 %v138, 4294901760
    %v4962 = vsub.f32 %v138, %v4961
    %v4963 = vand.u32 %v4962, 4294901760
    %4964 = vmatpush.msra.mxu0 %v4963
    %v4965 = vand.u32 %v134, 4294901760
    %v4966 = vsub.f32 %v134, %v4965
    %v4967 = vand.u32 %v4966, 4294901760
    %4968 = vmatpush.msra.mxu0 %v4967
    %v4969 = vand.u32 %v130, 4294901760
    %v4970 = vsub.f32 %v130, %v4969
    %v4971 = vand.u32 %v4970, 4294901760
    %4972 = vmatpush.msra.mxu0 %v4971
    %v4973 = vand.u32 %v126, 4294901760
    %v4974 = vsub.f32 %v126, %v4973
    %v4975 = vand.u32 %v4974, 4294901760
    %4976 = vmatpush.msra.mxu0 %v4975
    %v4977 = vand.u32 %v122, 4294901760
    %v4978 = vsub.f32 %v122, %v4977
    %v4979 = vand.u32 %v4978, 4294901760
    %4980 = vmatpush.msra.mxu0 %v4979
    %v4981 = vand.u32 %v118, 4294901760
    %v4982 = vsub.f32 %v118, %v4981
    %v4983 = vand.u32 %v4982, 4294901760
    %4984 = vmatpush.msra.mxu0 %v4983
    %v4985 = vand.u32 %v114, 4294901760
    %v4986 = vsub.f32 %v114, %v4985
    %v4987 = vand.u32 %v4986, 4294901760
    %4988 = vmatpush.msra.mxu0 %v4987
    %v4989 = vand.u32 %v110, 4294901760
    %v4990 = vsub.f32 %v110, %v4989
    %v4991 = vand.u32 %v4990, 4294901760
    %4992 = vmatpush.msra.mxu0 %v4991
    %v4993 = vand.u32 %v106, 4294901760
    %v4994 = vsub.f32 %v106, %v4993
    %v4995 = vand.u32 %v4994, 4294901760
    %4996 = vmatpush.msra.mxu0 %v4995
    %v4997 = vand.u32 %v102, 4294901760
    %v4998 = vsub.f32 %v102, %v4997
    %v4999 = vand.u32 %v4998, 4294901760
    %5000 = vmatpush.msra.mxu0 %v4999
    %v5001 = vand.u32 %v98, 4294901760
    %v5002 = vsub.f32 %v98, %v5001
    %v5003 = vand.u32 %v5002, 4294901760
    %5004 = vmatpush.msra.mxu0 %v5003
    %v5005 = vand.u32 %v94, 4294901760
    %v5006 = vsub.f32 %v94, %v5005
    %v5007 = vand.u32 %v5006, 4294901760
    %5008 = vmatpush.msra.mxu0 %v5007
    %v5009 = vand.u32 %v90, 4294901760
    %v5010 = vsub.f32 %v90, %v5009
    %v5011 = vand.u32 %v5010, 4294901760
    %5012 = vmatpush.msra.mxu0 %v5011
    %v5013 = vand.u32 %v86, 4294901760
    %v5014 = vsub.f32 %v86, %v5013
    %v5015 = vand.u32 %v5014, 4294901760
    %5016 = vmatpush.msra.mxu0 %v5015
    %v5017 = vand.u32 %v16, 4294901760
    %5018 = vmatmul.f32.gmra.mxu0 %v5017
    %v5019 = vpop.f32.mrf.mxu0
    %v5020 = vadd.f32 %v4951, %v5019
    %5021 = vdwg.mxu0
    %v5022 = vand.u32 %v146, 4294901760
    %5023 = vmatpush.msra.mxu0 %v5022
    %v5024 = vand.u32 %v142, 4294901760
    %5025 = vmatpush.msra.mxu0 %v5024
    %v5026 = vand.u32 %v138, 4294901760
    %5027 = vmatpush.msra.mxu0 %v5026
    %v5028 = vand.u32 %v134, 4294901760
    %5029 = vmatpush.msra.mxu0 %v5028
    %v5030 = vand.u32 %v130, 4294901760
    %5031 = vmatpush.msra.mxu0 %v5030
    %v5032 = vand.u32 %v126, 4294901760
    %5033 = vmatpush.msra.mxu0 %v5032
    %v5034 = vand.u32 %v122, 4294901760
    %5035 = vmatpush.msra.mxu0 %v5034
    %v5036 = vand.u32 %v118, 4294901760
    %5037 = vmatpush.msra.mxu0 %v5036
    %v5038 = vand.u32 %v114, 4294901760
    %5039 = vmatpush.msra.mxu0 %v5038
    %v5040 = vand.u32 %v110, 4294901760
    %5041 = vmatpush.msra.mxu0 %v5040
    %v5042 = vand.u32 %v106, 4294901760
    %5043 = vmatpush.msra.mxu0 %v5042
    %v5044 = vand.u32 %v102, 4294901760
    %5045 = vmatpush.msra.mxu0 %v5044
    %v5046 = vand.u32 %v98, 4294901760
    %5047 = vmatpush.msra.mxu0 %v5046
    %v5048 = vand.u32 %v94, 4294901760
    %5049 = vmatpush.msra.mxu0 %v5048
    %v5050 = vand.u32 %v90, 4294901760
    %5051 = vmatpush.msra.mxu0 %v5050
    %v5052 = vand.u32 %v86, 4294901760
    %5053 = vmatpush.msra.mxu0 %v5052
    %v5054 = vand.u32 %v16, 4294901760
    %5055 = vmatmul.f32.gmra.mxu0 %v5054
    %v5056 = vpop.f32.mrf.mxu0
    %v5057 = vadd.f32 %v5020, %v5056
    %5058 = vdwg.mxu0
    %v5059 = vand.u32 %v210, 4294901760
    %5060 = vmatpush.msra.mxu0 %v5059
    %v5061 = vand.u32 %v206, 4294901760
    %5062 = vmatpush.msra.mxu0 %v5061
    %v5063 = vand.u32 %v202, 4294901760
    %5064 = vmatpush.msra.mxu0 %v5063
    %v5065 = vand.u32 %v198, 4294901760
    %5066 = vmatpush.msra.mxu0 %v5065
    %v5067 = vand.u32 %v194, 4294901760
    %5068 = vmatpush.msra.mxu0 %v5067
    %v5069 = vand.u32 %v190, 4294901760
    %5070 = vmatpush.msra.mxu0 %v5069
    %v5071 = vand.u32 %v186, 4294901760
    %5072 = vmatpush.msra.mxu0 %v5071
    %v5073 = vand.u32 %v182, 4294901760
    %5074 = vmatpush.msra.mxu0 %v5073
    %v5075 = vand.u32 %v178, 4294901760
    %5076 = vmatpush.msra.mxu0 %v5075
    %v5077 = vand.u32 %v174, 4294901760
    %5078 = vmatpush.msra.mxu0 %v5077
    %v5079 = vand.u32 %v170, 4294901760
    %5080 = vmatpush.msra.mxu0 %v5079
    %v5081 = vand.u32 %v166, 4294901760
    %5082 = vmatpush.msra.mxu0 %v5081
    %v5083 = vand.u32 %v162, 4294901760
    %5084 = vmatpush.msra.mxu0 %v5083
    %v5085 = vand.u32 %v158, 4294901760
    %5086 = vmatpush.msra.mxu0 %v5085
    %v5087 = vand.u32 %v154, 4294901760
    %5088 = vmatpush.msra.mxu0 %v5087
    %v5089 = vand.u32 %v150, 4294901760
    %5090 = vmatpush.msra.mxu0 %v5089
    %v5091 = vand.u32 %v17, 4294901760
    %v5092 = vsub.f32 %v17, %v5091
    %v5093 = vand.u32 %v5092, 4294901760
    %v5094 = vsub.f32 %v5092, %v5093
    %v5095 = vand.u32 %v5094, 4294901760
    %5096 = vmatmul.f32.gmra.mxu0 %v5095
    %v5097 = vpop.f32.mrf.mxu0
    %v5098 = vadd.f32 %v5057, %v5097
    %5099 = vdwg.mxu0
    %v5100 = vand.u32 %v210, 4294901760
    %v5101 = vsub.f32 %v210, %v5100
    %v5102 = vand.u32 %v5101, 4294901760
    %v5103 = vsub.f32 %v5101, %v5102
    %v5104 = vand.u32 %v5103, 4294901760
    %5105 = vmatpush.msra.mxu0 %v5104
    %v5106 = vand.u32 %v206, 4294901760
    %v5107 = vsub.f32 %v206, %v5106
    %v5108 = vand.u32 %v5107, 4294901760
    %v5109 = vsub.f32 %v5107, %v5108
    %v5110 = vand.u32 %v5109, 4294901760
    %5111 = vmatpush.msra.mxu0 %v5110
    %v5112 = vand.u32 %v202, 4294901760
    %v5113 = vsub.f32 %v202, %v5112
    %v5114 = vand.u32 %v5113, 4294901760
    %v5115 = vsub.f32 %v5113, %v5114
    %v5116 = vand.u32 %v5115, 4294901760
    %5117 = vmatpush.msra.mxu0 %v5116
    %v5118 = vand.u32 %v198, 4294901760
    %v5119 = vsub.f32 %v198, %v5118
    %v5120 = vand.u32 %v5119, 4294901760
    %v5121 = vsub.f32 %v5119, %v5120
    %v5122 = vand.u32 %v5121, 4294901760
    %5123 = vmatpush.msra.mxu0 %v5122
    %v5124 = vand.u32 %v194, 4294901760
    %v5125 = vsub.f32 %v194, %v5124
    %v5126 = vand.u32 %v5125, 4294901760
    %v5127 = vsub.f32 %v5125, %v5126
    %v5128 = vand.u32 %v5127, 4294901760
    %5129 = vmatpush.msra.mxu0 %v5128
    %v5130 = vand.u32 %v190, 4294901760
    %v5131 = vsub.f32 %v190, %v5130
    %v5132 = vand.u32 %v5131, 4294901760
    %v5133 = vsub.f32 %v5131, %v5132
    %v5134 = vand.u32 %v5133, 4294901760
    %5135 = vmatpush.msra.mxu0 %v5134
    %v5136 = vand.u32 %v186, 4294901760
    %v5137 = vsub.f32 %v186, %v5136
    %v5138 = vand.u32 %v5137, 4294901760
    %v5139 = vsub.f32 %v5137, %v5138
    %v5140 = vand.u32 %v5139, 4294901760
    %5141 = vmatpush.msra.mxu0 %v5140
    %v5142 = vand.u32 %v182, 4294901760
    %v5143 = vsub.f32 %v182, %v5142
    %v5144 = vand.u32 %v5143, 4294901760
    %v5145 = vsub.f32 %v5143, %v5144
    %v5146 = vand.u32 %v5145, 4294901760
    %5147 = vmatpush.msra.mxu0 %v5146
    %v5148 = vand.u32 %v178, 4294901760
    %v5149 = vsub.f32 %v178, %v5148
    %v5150 = vand.u32 %v5149, 4294901760
    %v5151 = vsub.f32 %v5149, %v5150
    %v5152 = vand.u32 %v5151, 4294901760
    %5153 = vmatpush.msra.mxu0 %v5152
    %v5154 = vand.u32 %v174, 4294901760
    %v5155 = vsub.f32 %v174, %v5154
    %v5156 = vand.u32 %v5155, 4294901760
    %v5157 = vsub.f32 %v5155, %v5156
    %v5158 = vand.u32 %v5157, 4294901760
    %5159 = vmatpush.msra.mxu0 %v5158
    %v5160 = vand.u32 %v170, 4294901760
    %v5161 = vsub.f32 %v170, %v5160
    %v5162 = vand.u32 %v5161, 4294901760
    %v5163 = vsub.f32 %v5161, %v5162
    %v5164 = vand.u32 %v5163, 4294901760
    %5165 = vmatpush.msra.mxu0 %v5164
    %v5166 = vand.u32 %v166, 4294901760
    %v5167 = vsub.f32 %v166, %v5166
    %v5168 = vand.u32 %v5167, 4294901760
    %v5169 = vsub.f32 %v5167, %v5168
    %v5170 = vand.u32 %v5169, 4294901760
    %5171 = vmatpush.msra.mxu0 %v5170
    %v5172 = vand.u32 %v162, 4294901760
    %v5173 = vsub.f32 %v162, %v5172
    %v5174 = vand.u32 %v5173, 4294901760
    %v5175 = vsub.f32 %v5173, %v5174
    %v5176 = vand.u32 %v5175, 4294901760
    %5177 = vmatpush.msra.mxu0 %v5176
    %v5178 = vand.u32 %v158, 4294901760
    %v5179 = vsub.f32 %v158, %v5178
    %v5180 = vand.u32 %v5179, 4294901760
    %v5181 = vsub.f32 %v5179, %v5180
    %v5182 = vand.u32 %v5181, 4294901760
    %5183 = vmatpush.msra.mxu0 %v5182
    %v5184 = vand.u32 %v154, 4294901760
    %v5185 = vsub.f32 %v154, %v5184
    %v5186 = vand.u32 %v5185, 4294901760
    %v5187 = vsub.f32 %v5185, %v5186
    %v5188 = vand.u32 %v5187, 4294901760
    %5189 = vmatpush.msra.mxu0 %v5188
    %v5190 = vand.u32 %v150, 4294901760
    %v5191 = vsub.f32 %v150, %v5190
    %v5192 = vand.u32 %v5191, 4294901760
    %v5193 = vsub.f32 %v5191, %v5192
    %v5194 = vand.u32 %v5193, 4294901760
    %5195 = vmatpush.msra.mxu0 %v5194
    %v5196 = vand.u32 %v17, 4294901760
    %5197 = vmatmul.f32.gmra.mxu0 %v5196
    %v5198 = vpop.f32.mrf.mxu0
    %v5199 = vadd.f32 %v5098, %v5198
    %5200 = vdwg.mxu0
    %v5201 = vand.u32 %v210, 4294901760
    %v5202 = vsub.f32 %v210, %v5201
    %5203 = vmatpush.msra.mxu0 %v5202
    %v5204 = vand.u32 %v206, 4294901760
    %v5205 = vsub.f32 %v206, %v5204
    %5206 = vmatpush.msra.mxu0 %v5205
    %v5207 = vand.u32 %v202, 4294901760
    %v5208 = vsub.f32 %v202, %v5207
    %5209 = vmatpush.msra.mxu0 %v5208
    %v5210 = vand.u32 %v198, 4294901760
    %v5211 = vsub.f32 %v198, %v5210
    %5212 = vmatpush.msra.mxu0 %v5211
    %v5213 = vand.u32 %v194, 4294901760
    %v5214 = vsub.f32 %v194, %v5213
    %5215 = vmatpush.msra.mxu0 %v5214
    %v5216 = vand.u32 %v190, 4294901760
    %v5217 = vsub.f32 %v190, %v5216
    %5218 = vmatpush.msra.mxu0 %v5217
    %v5219 = vand.u32 %v186, 4294901760
    %v5220 = vsub.f32 %v186, %v5219
    %5221 = vmatpush.msra.mxu0 %v5220
    %v5222 = vand.u32 %v182, 4294901760
    %v5223 = vsub.f32 %v182, %v5222
    %5224 = vmatpush.msra.mxu0 %v5223
    %v5225 = vand.u32 %v178, 4294901760
    %v5226 = vsub.f32 %v178, %v5225
    %5227 = vmatpush.msra.mxu0 %v5226
    %v5228 = vand.u32 %v174, 4294901760
    %v5229 = vsub.f32 %v174, %v5228
    %5230 = vmatpush.msra.mxu0 %v5229
    %v5231 = vand.u32 %v170, 4294901760
    %v5232 = vsub.f32 %v170, %v5231
    %5233 = vmatpush.msra.mxu0 %v5232
    %v5234 = vand.u32 %v166, 4294901760
    %v5235 = vsub.f32 %v166, %v5234
    %5236 = vmatpush.msra.mxu0 %v5235
    %v5237 = vand.u32 %v162, 4294901760
    %v5238 = vsub.f32 %v162, %v5237
    %5239 = vmatpush.msra.mxu0 %v5238
    %v5240 = vand.u32 %v158, 4294901760
    %v5241 = vsub.f32 %v158, %v5240
    %5242 = vmatpush.msra.mxu0 %v5241
    %v5243 = vand.u32 %v154, 4294901760
    %v5244 = vsub.f32 %v154, %v5243
    %5245 = vmatpush.msra.mxu0 %v5244
    %v5246 = vand.u32 %v150, 4294901760
    %v5247 = vsub.f32 %v150, %v5246
    %5248 = vmatpush.msra.mxu0 %v5247
    %v5249 = vand.u32 %v17, 4294901760
    %v5250 = vsub.f32 %v17, %v5249
    %5251 = vmatmul.f32.gmra.mxu0 %v5250
    %v5252 = vpop.f32.mrf.mxu0
    %v5253 = vadd.f32 %v5199, %v5252
    %5254 = vdwg.mxu0
    %v5255 = vand.u32 %v210, 4294901760
    %5256 = vmatpush.msra.mxu0 %v5255
    %v5257 = vand.u32 %v206, 4294901760
    %5258 = vmatpush.msra.mxu0 %v5257
    %v5259 = vand.u32 %v202, 4294901760
    %5260 = vmatpush.msra.mxu0 %v5259
    %v5261 = vand.u32 %v198, 4294901760
    %5262 = vmatpush.msra.mxu0 %v5261
    %v5263 = vand.u32 %v194, 4294901760
    %5264 = vmatpush.msra.mxu0 %v5263
    %v5265 = vand.u32 %v190, 4294901760
    %5266 = vmatpush.msra.mxu0 %v5265
    %v5267 = vand.u32 %v186, 4294901760
    %5268 = vmatpush.msra.mxu0 %v5267
    %v5269 = vand.u32 %v182, 4294901760
    %5270 = vmatpush.msra.mxu0 %v5269
    %v5271 = vand.u32 %v178, 4294901760
    %5272 = vmatpush.msra.mxu0 %v5271
    %v5273 = vand.u32 %v174, 4294901760
    %5274 = vmatpush.msra.mxu0 %v5273
    %v5275 = vand.u32 %v170, 4294901760
    %5276 = vmatpush.msra.mxu0 %v5275
    %v5277 = vand.u32 %v166, 4294901760
    %5278 = vmatpush.msra.mxu0 %v5277
    %v5279 = vand.u32 %v162, 4294901760
    %5280 = vmatpush.msra.mxu0 %v5279
    %v5281 = vand.u32 %v158, 4294901760
    %5282 = vmatpush.msra.mxu0 %v5281
    %v5283 = vand.u32 %v154, 4294901760
    %5284 = vmatpush.msra.mxu0 %v5283
    %v5285 = vand.u32 %v150, 4294901760
    %5286 = vmatpush.msra.mxu0 %v5285
    %v5287 = vand.u32 %v17, 4294901760
    %v5288 = vsub.f32 %v17, %v5287
    %v5289 = vand.u32 %v5288, 4294901760
    %5290 = vmatmul.f32.gmra.mxu0 %v5289
    %v5291 = vpop.f32.mrf.mxu0
    %v5292 = vadd.f32 %v5253, %v5291
    %5293 = vdwg.mxu0
    %v5294 = vand.u32 %v210, 4294901760
    %v5295 = vsub.f32 %v210, %v5294
    %v5296 = vand.u32 %v5295, 4294901760
    %5297 = vmatpush.msra.mxu0 %v5296
    %v5298 = vand.u32 %v206, 4294901760
    %v5299 = vsub.f32 %v206, %v5298
    %v5300 = vand.u32 %v5299, 4294901760
    %5301 = vmatpush.msra.mxu0 %v5300
    %v5302 = vand.u32 %v202, 4294901760
    %v5303 = vsub.f32 %v202, %v5302
    %v5304 = vand.u32 %v5303, 4294901760
    %5305 = vmatpush.msra.mxu0 %v5304
    %v5306 = vand.u32 %v198, 4294901760
    %v5307 = vsub.f32 %v198, %v5306
    %v5308 = vand.u32 %v5307, 4294901760
    %5309 = vmatpush.msra.mxu0 %v5308
    %v5310 = vand.u32 %v194, 4294901760
    %v5311 = vsub.f32 %v194, %v5310
    %v5312 = vand.u32 %v5311, 4294901760
    %5313 = vmatpush.msra.mxu0 %v5312
    %v5314 = vand.u32 %v190, 4294901760
    %v5315 = vsub.f32 %v190, %v5314
    %v5316 = vand.u32 %v5315, 4294901760
    %5317 = vmatpush.msra.mxu0 %v5316
    %v5318 = vand.u32 %v186, 4294901760
    %v5319 = vsub.f32 %v186, %v5318
    %v5320 = vand.u32 %v5319, 4294901760
    %5321 = vmatpush.msra.mxu0 %v5320
    %v5322 = vand.u32 %v182, 4294901760
    %v5323 = vsub.f32 %v182, %v5322
    %v5324 = vand.u32 %v5323, 4294901760
    %5325 = vmatpush.msra.mxu0 %v5324
    %v5326 = vand.u32 %v178, 4294901760
    %v5327 = vsub.f32 %v178, %v5326
    %v5328 = vand.u32 %v5327, 4294901760
    %5329 = vmatpush.msra.mxu0 %v5328
    %v5330 = vand.u32 %v174, 4294901760
    %v5331 = vsub.f32 %v174, %v5330
    %v5332 = vand.u32 %v5331, 4294901760
    %5333 = vmatpush.msra.mxu0 %v5332
    %v5334 = vand.u32 %v170, 4294901760
    %v5335 = vsub.f32 %v170, %v5334
    %v5336 = vand.u32 %v5335, 4294901760
    %5337 = vmatpush.msra.mxu0 %v5336
    %v5338 = vand.u32 %v166, 4294901760
    %v5339 = vsub.f32 %v166, %v5338
    %v5340 = vand.u32 %v5339, 4294901760
    %5341 = vmatpush.msra.mxu0 %v5340
    %v5342 = vand.u32 %v162, 4294901760
    %v5343 = vsub.f32 %v162, %v5342
    %v5344 = vand.u32 %v5343, 4294901760
    %5345 = vmatpush.msra.mxu0 %v5344
    %v5346 = vand.u32 %v158, 4294901760
    %v5347 = vsub.f32 %v158, %v5346
    %v5348 = vand.u32 %v5347, 4294901760
    %5349 = vmatpush.msra.mxu0 %v5348
    %v5350 = vand.u32 %v154, 4294901760
    %v5351 = vsub.f32 %v154, %v5350
    %v5352 = vand.u32 %v5351, 4294901760
    %5353 = vmatpush.msra.mxu0 %v5352
    %v5354 = vand.u32 %v150, 4294901760
    %v5355 = vsub.f32 %v150, %v5354
    %v5356 = vand.u32 %v5355, 4294901760
    %5357 = vmatpush.msra.mxu0 %v5356
    %v5358 = vand.u32 %v17, 4294901760
    %5359 = vmatmul.f32.gmra.mxu0 %v5358
    %v5360 = vpop.f32.mrf.mxu0
    %v5361 = vadd.f32 %v5292, %v5360
    %5362 = vdwg.mxu0
    %v5363 = vand.u32 %v210, 4294901760
    %5364 = vmatpush.msra.mxu0 %v5363
    %v5365 = vand.u32 %v206, 4294901760
    %5366 = vmatpush.msra.mxu0 %v5365
    %v5367 = vand.u32 %v202, 4294901760
    %5368 = vmatpush.msra.mxu0 %v5367
    %v5369 = vand.u32 %v198, 4294901760
    %5370 = vmatpush.msra.mxu0 %v5369
    %v5371 = vand.u32 %v194, 4294901760
    %5372 = vmatpush.msra.mxu0 %v5371
    %v5373 = vand.u32 %v190, 4294901760
    %5374 = vmatpush.msra.mxu0 %v5373
    %v5375 = vand.u32 %v186, 4294901760
    %5376 = vmatpush.msra.mxu0 %v5375
    %v5377 = vand.u32 %v182, 4294901760
    %5378 = vmatpush.msra.mxu0 %v5377
    %v5379 = vand.u32 %v178, 4294901760
    %5380 = vmatpush.msra.mxu0 %v5379
    %v5381 = vand.u32 %v174, 4294901760
    %5382 = vmatpush.msra.mxu0 %v5381
    %v5383 = vand.u32 %v170, 4294901760
    %5384 = vmatpush.msra.mxu0 %v5383
    %v5385 = vand.u32 %v166, 4294901760
    %5386 = vmatpush.msra.mxu0 %v5385
    %v5387 = vand.u32 %v162, 4294901760
    %5388 = vmatpush.msra.mxu0 %v5387
    %v5389 = vand.u32 %v158, 4294901760
    %5390 = vmatpush.msra.mxu0 %v5389
    %v5391 = vand.u32 %v154, 4294901760
    %5392 = vmatpush.msra.mxu0 %v5391
    %v5393 = vand.u32 %v150, 4294901760
    %5394 = vmatpush.msra.mxu0 %v5393
    %v5395 = vand.u32 %v17, 4294901760
    %5396 = vmatmul.f32.gmra.mxu0 %v5395
    %v5397 = vpop.f32.mrf.mxu0
    %v5398 = vadd.f32 %v5361, %v5397
    %5399 = vdwg.mxu0
    %v5400 = vand.u32 %v274, 4294901760
    %5401 = vmatpush.msra.mxu0 %v5400
    %v5402 = vand.u32 %v270, 4294901760
    %5403 = vmatpush.msra.mxu0 %v5402
    %v5404 = vand.u32 %v266, 4294901760
    %5405 = vmatpush.msra.mxu0 %v5404
    %v5406 = vand.u32 %v262, 4294901760
    %5407 = vmatpush.msra.mxu0 %v5406
    %v5408 = vand.u32 %v258, 4294901760
    %5409 = vmatpush.msra.mxu0 %v5408
    %v5410 = vand.u32 %v254, 4294901760
    %5411 = vmatpush.msra.mxu0 %v5410
    %v5412 = vand.u32 %v250, 4294901760
    %5413 = vmatpush.msra.mxu0 %v5412
    %v5414 = vand.u32 %v246, 4294901760
    %5415 = vmatpush.msra.mxu0 %v5414
    %v5416 = vand.u32 %v242, 4294901760
    %5417 = vmatpush.msra.mxu0 %v5416
    %v5418 = vand.u32 %v238, 4294901760
    %5419 = vmatpush.msra.mxu0 %v5418
    %v5420 = vand.u32 %v234, 4294901760
    %5421 = vmatpush.msra.mxu0 %v5420
    %v5422 = vand.u32 %v230, 4294901760
    %5423 = vmatpush.msra.mxu0 %v5422
    %v5424 = vand.u32 %v226, 4294901760
    %5425 = vmatpush.msra.mxu0 %v5424
    %v5426 = vand.u32 %v222, 4294901760
    %5427 = vmatpush.msra.mxu0 %v5426
    %v5428 = vand.u32 %v218, 4294901760
    %5429 = vmatpush.msra.mxu0 %v5428
    %v5430 = vand.u32 %v214, 4294901760
    %5431 = vmatpush.msra.mxu0 %v5430
    %v5432 = vand.u32 %v18, 4294901760
    %v5433 = vsub.f32 %v18, %v5432
    %v5434 = vand.u32 %v5433, 4294901760
    %v5435 = vsub.f32 %v5433, %v5434
    %v5436 = vand.u32 %v5435, 4294901760
    %5437 = vmatmul.f32.gmra.mxu0 %v5436
    %v5438 = vpop.f32.mrf.mxu0
    %v5439 = vadd.f32 %v5398, %v5438
    %5440 = vdwg.mxu0
    %v5441 = vand.u32 %v274, 4294901760
    %v5442 = vsub.f32 %v274, %v5441
    %v5443 = vand.u32 %v5442, 4294901760
    %v5444 = vsub.f32 %v5442, %v5443
    %v5445 = vand.u32 %v5444, 4294901760
    %5446 = vmatpush.msra.mxu0 %v5445
    %v5447 = vand.u32 %v270, 4294901760
    %v5448 = vsub.f32 %v270, %v5447
    %v5449 = vand.u32 %v5448, 4294901760
    %v5450 = vsub.f32 %v5448, %v5449
    %v5451 = vand.u32 %v5450, 4294901760
    %5452 = vmatpush.msra.mxu0 %v5451
    %v5453 = vand.u32 %v266, 4294901760
    %v5454 = vsub.f32 %v266, %v5453
    %v5455 = vand.u32 %v5454, 4294901760
    %v5456 = vsub.f32 %v5454, %v5455
    %v5457 = vand.u32 %v5456, 4294901760
    %5458 = vmatpush.msra.mxu0 %v5457
    %v5459 = vand.u32 %v262, 4294901760
    %v5460 = vsub.f32 %v262, %v5459
    %v5461 = vand.u32 %v5460, 4294901760
    %v5462 = vsub.f32 %v5460, %v5461
    %v5463 = vand.u32 %v5462, 4294901760
    %5464 = vmatpush.msra.mxu0 %v5463
    %v5465 = vand.u32 %v258, 4294901760
    %v5466 = vsub.f32 %v258, %v5465
    %v5467 = vand.u32 %v5466, 4294901760
    %v5468 = vsub.f32 %v5466, %v5467
    %v5469 = vand.u32 %v5468, 4294901760
    %5470 = vmatpush.msra.mxu0 %v5469
    %v5471 = vand.u32 %v254, 4294901760
    %v5472 = vsub.f32 %v254, %v5471
    %v5473 = vand.u32 %v5472, 4294901760
    %v5474 = vsub.f32 %v5472, %v5473
    %v5475 = vand.u32 %v5474, 4294901760
    %5476 = vmatpush.msra.mxu0 %v5475
    %v5477 = vand.u32 %v250, 4294901760
    %v5478 = vsub.f32 %v250, %v5477
    %v5479 = vand.u32 %v5478, 4294901760
    %v5480 = vsub.f32 %v5478, %v5479
    %v5481 = vand.u32 %v5480, 4294901760
    %5482 = vmatpush.msra.mxu0 %v5481
    %v5483 = vand.u32 %v246, 4294901760
    %v5484 = vsub.f32 %v246, %v5483
    %v5485 = vand.u32 %v5484, 4294901760
    %v5486 = vsub.f32 %v5484, %v5485
    %v5487 = vand.u32 %v5486, 4294901760
    %5488 = vmatpush.msra.mxu0 %v5487
    %v5489 = vand.u32 %v242, 4294901760
    %v5490 = vsub.f32 %v242, %v5489
    %v5491 = vand.u32 %v5490, 4294901760
    %v5492 = vsub.f32 %v5490, %v5491
    %v5493 = vand.u32 %v5492, 4294901760
    %5494 = vmatpush.msra.mxu0 %v5493
    %v5495 = vand.u32 %v238, 4294901760
    %v5496 = vsub.f32 %v238, %v5495
    %v5497 = vand.u32 %v5496, 4294901760
    %v5498 = vsub.f32 %v5496, %v5497
    %v5499 = vand.u32 %v5498, 4294901760
    %5500 = vmatpush.msra.mxu0 %v5499
    %v5501 = vand.u32 %v234, 4294901760
    %v5502 = vsub.f32 %v234, %v5501
    %v5503 = vand.u32 %v5502, 4294901760
    %v5504 = vsub.f32 %v5502, %v5503
    %v5505 = vand.u32 %v5504, 4294901760
    %5506 = vmatpush.msra.mxu0 %v5505
    %v5507 = vand.u32 %v230, 4294901760
    %v5508 = vsub.f32 %v230, %v5507
    %v5509 = vand.u32 %v5508, 4294901760
    %v5510 = vsub.f32 %v5508, %v5509
    %v5511 = vand.u32 %v5510, 4294901760
    %5512 = vmatpush.msra.mxu0 %v5511
    %v5513 = vand.u32 %v226, 4294901760
    %v5514 = vsub.f32 %v226, %v5513
    %v5515 = vand.u32 %v5514, 4294901760
    %v5516 = vsub.f32 %v5514, %v5515
    %v5517 = vand.u32 %v5516, 4294901760
    %5518 = vmatpush.msra.mxu0 %v5517
    %v5519 = vand.u32 %v222, 4294901760
    %v5520 = vsub.f32 %v222, %v5519
    %v5521 = vand.u32 %v5520, 4294901760
    %v5522 = vsub.f32 %v5520, %v5521
    %v5523 = vand.u32 %v5522, 4294901760
    %5524 = vmatpush.msra.mxu0 %v5523
    %v5525 = vand.u32 %v218, 4294901760
    %v5526 = vsub.f32 %v218, %v5525
    %v5527 = vand.u32 %v5526, 4294901760
    %v5528 = vsub.f32 %v5526, %v5527
    %v5529 = vand.u32 %v5528, 4294901760
    %5530 = vmatpush.msra.mxu0 %v5529
    %v5531 = vand.u32 %v214, 4294901760
    %v5532 = vsub.f32 %v214, %v5531
    %v5533 = vand.u32 %v5532, 4294901760
    %v5534 = vsub.f32 %v5532, %v5533
    %v5535 = vand.u32 %v5534, 4294901760
    %5536 = vmatpush.msra.mxu0 %v5535
    %v5537 = vand.u32 %v18, 4294901760
    %5538 = vmatmul.f32.gmra.mxu0 %v5537
    %v5539 = vpop.f32.mrf.mxu0
    %v5540 = vadd.f32 %v5439, %v5539
    %5541 = vdwg.mxu0
    %v5542 = vand.u32 %v274, 4294901760
    %v5543 = vsub.f32 %v274, %v5542
    %5544 = vmatpush.msra.mxu0 %v5543
    %v5545 = vand.u32 %v270, 4294901760
    %v5546 = vsub.f32 %v270, %v5545
    %5547 = vmatpush.msra.mxu0 %v5546
    %v5548 = vand.u32 %v266, 4294901760
    %v5549 = vsub.f32 %v266, %v5548
    %5550 = vmatpush.msra.mxu0 %v5549
    %v5551 = vand.u32 %v262, 4294901760
    %v5552 = vsub.f32 %v262, %v5551
    %5553 = vmatpush.msra.mxu0 %v5552
    %v5554 = vand.u32 %v258, 4294901760
    %v5555 = vsub.f32 %v258, %v5554
    %5556 = vmatpush.msra.mxu0 %v5555
    %v5557 = vand.u32 %v254, 4294901760
    %v5558 = vsub.f32 %v254, %v5557
    %5559 = vmatpush.msra.mxu0 %v5558
    %v5560 = vand.u32 %v250, 4294901760
    %v5561 = vsub.f32 %v250, %v5560
    %5562 = vmatpush.msra.mxu0 %v5561
    %v5563 = vand.u32 %v246, 4294901760
    %v5564 = vsub.f32 %v246, %v5563
    %5565 = vmatpush.msra.mxu0 %v5564
    %v5566 = vand.u32 %v242, 4294901760
    %v5567 = vsub.f32 %v242, %v5566
    %5568 = vmatpush.msra.mxu0 %v5567
    %v5569 = vand.u32 %v238, 4294901760
    %v5570 = vsub.f32 %v238, %v5569
    %5571 = vmatpush.msra.mxu0 %v5570
    %v5572 = vand.u32 %v234, 4294901760
    %v5573 = vsub.f32 %v234, %v5572
    %5574 = vmatpush.msra.mxu0 %v5573
    %v5575 = vand.u32 %v230, 4294901760
    %v5576 = vsub.f32 %v230, %v5575
    %5577 = vmatpush.msra.mxu0 %v5576
    %v5578 = vand.u32 %v226, 4294901760
    %v5579 = vsub.f32 %v226, %v5578
    %5580 = vmatpush.msra.mxu0 %v5579
    %v5581 = vand.u32 %v222, 4294901760
    %v5582 = vsub.f32 %v222, %v5581
    %5583 = vmatpush.msra.mxu0 %v5582
    %v5584 = vand.u32 %v218, 4294901760
    %v5585 = vsub.f32 %v218, %v5584
    %5586 = vmatpush.msra.mxu0 %v5585
    %v5587 = vand.u32 %v214, 4294901760
    %v5588 = vsub.f32 %v214, %v5587
    %5589 = vmatpush.msra.mxu0 %v5588
    %v5590 = vand.u32 %v18, 4294901760
    %v5591 = vsub.f32 %v18, %v5590
    %5592 = vmatmul.f32.gmra.mxu0 %v5591
    %v5593 = vpop.f32.mrf.mxu0
    %v5594 = vadd.f32 %v5540, %v5593
    %5595 = vdwg.mxu0
    %v5596 = vand.u32 %v274, 4294901760
    %5597 = vmatpush.msra.mxu0 %v5596
    %v5598 = vand.u32 %v270, 4294901760
    %5599 = vmatpush.msra.mxu0 %v5598
    %v5600 = vand.u32 %v266, 4294901760
    %5601 = vmatpush.msra.mxu0 %v5600
    %v5602 = vand.u32 %v262, 4294901760
    %5603 = vmatpush.msra.mxu0 %v5602
    %v5604 = vand.u32 %v258, 4294901760
    %5605 = vmatpush.msra.mxu0 %v5604
    %v5606 = vand.u32 %v254, 4294901760
    %5607 = vmatpush.msra.mxu0 %v5606
    %v5608 = vand.u32 %v250, 4294901760
    %5609 = vmatpush.msra.mxu0 %v5608
    %v5610 = vand.u32 %v246, 4294901760
    %5611 = vmatpush.msra.mxu0 %v5610
    %v5612 = vand.u32 %v242, 4294901760
    %5613 = vmatpush.msra.mxu0 %v5612
    %v5614 = vand.u32 %v238, 4294901760
    %5615 = vmatpush.msra.mxu0 %v5614
    %v5616 = vand.u32 %v234, 4294901760
    %5617 = vmatpush.msra.mxu0 %v5616
    %v5618 = vand.u32 %v230, 4294901760
    %5619 = vmatpush.msra.mxu0 %v5618
    %v5620 = vand.u32 %v226, 4294901760
    %5621 = vmatpush.msra.mxu0 %v5620
    %v5622 = vand.u32 %v222, 4294901760
    %5623 = vmatpush.msra.mxu0 %v5622
    %v5624 = vand.u32 %v218, 4294901760
    %5625 = vmatpush.msra.mxu0 %v5624
    %v5626 = vand.u32 %v214, 4294901760
    %5627 = vmatpush.msra.mxu0 %v5626
    %v5628 = vand.u32 %v18, 4294901760
    %v5629 = vsub.f32 %v18, %v5628
    %v5630 = vand.u32 %v5629, 4294901760
    %5631 = vmatmul.f32.gmra.mxu0 %v5630
    %v5632 = vpop.f32.mrf.mxu0
    %v5633 = vadd.f32 %v5594, %v5632
    %5634 = vdwg.mxu0
    %v5635 = vand.u32 %v274, 4294901760
    %v5636 = vsub.f32 %v274, %v5635
    %v5637 = vand.u32 %v5636, 4294901760
    %5638 = vmatpush.msra.mxu0 %v5637
    %v5639 = vand.u32 %v270, 4294901760
    %v5640 = vsub.f32 %v270, %v5639
    %v5641 = vand.u32 %v5640, 4294901760
    %5642 = vmatpush.msra.mxu0 %v5641
    %v5643 = vand.u32 %v266, 4294901760
    %v5644 = vsub.f32 %v266, %v5643
    %v5645 = vand.u32 %v5644, 4294901760
    %5646 = vmatpush.msra.mxu0 %v5645
    %v5647 = vand.u32 %v262, 4294901760
    %v5648 = vsub.f32 %v262, %v5647
    %v5649 = vand.u32 %v5648, 4294901760
    %5650 = vmatpush.msra.mxu0 %v5649
    %v5651 = vand.u32 %v258, 4294901760
    %v5652 = vsub.f32 %v258, %v5651
    %v5653 = vand.u32 %v5652, 4294901760
    %5654 = vmatpush.msra.mxu0 %v5653
    %v5655 = vand.u32 %v254, 4294901760
    %v5656 = vsub.f32 %v254, %v5655
    %v5657 = vand.u32 %v5656, 4294901760
    %5658 = vmatpush.msra.mxu0 %v5657
    %v5659 = vand.u32 %v250, 4294901760
    %v5660 = vsub.f32 %v250, %v5659
    %v5661 = vand.u32 %v5660, 4294901760
    %5662 = vmatpush.msra.mxu0 %v5661
    %v5663 = vand.u32 %v246, 4294901760
    %v5664 = vsub.f32 %v246, %v5663
    %v5665 = vand.u32 %v5664, 4294901760
    %5666 = vmatpush.msra.mxu0 %v5665
    %v5667 = vand.u32 %v242, 4294901760
    %v5668 = vsub.f32 %v242, %v5667
    %v5669 = vand.u32 %v5668, 4294901760
    %5670 = vmatpush.msra.mxu0 %v5669
    %v5671 = vand.u32 %v238, 4294901760
    %v5672 = vsub.f32 %v238, %v5671
    %v5673 = vand.u32 %v5672, 4294901760
    %5674 = vmatpush.msra.mxu0 %v5673
    %v5675 = vand.u32 %v234, 4294901760
    %v5676 = vsub.f32 %v234, %v5675
    %v5677 = vand.u32 %v5676, 4294901760
    %5678 = vmatpush.msra.mxu0 %v5677
    %v5679 = vand.u32 %v230, 4294901760
    %v5680 = vsub.f32 %v230, %v5679
    %v5681 = vand.u32 %v5680, 4294901760
    %5682 = vmatpush.msra.mxu0 %v5681
    %v5683 = vand.u32 %v226, 4294901760
    %v5684 = vsub.f32 %v226, %v5683
    %v5685 = vand.u32 %v5684, 4294901760
    %5686 = vmatpush.msra.mxu0 %v5685
    %v5687 = vand.u32 %v222, 4294901760
    %v5688 = vsub.f32 %v222, %v5687
    %v5689 = vand.u32 %v5688, 4294901760
    %5690 = vmatpush.msra.mxu0 %v5689
    %v5691 = vand.u32 %v218, 4294901760
    %v5692 = vsub.f32 %v218, %v5691
    %v5693 = vand.u32 %v5692, 4294901760
    %5694 = vmatpush.msra.mxu0 %v5693
    %v5695 = vand.u32 %v214, 4294901760
    %v5696 = vsub.f32 %v214, %v5695
    %v5697 = vand.u32 %v5696, 4294901760
    %5698 = vmatpush.msra.mxu0 %v5697
    %v5699 = vand.u32 %v18, 4294901760
    %5700 = vmatmul.f32.gmra.mxu0 %v5699
    %v5701 = vpop.f32.mrf.mxu0
    %v5702 = vadd.f32 %v5633, %v5701
    %5703 = vdwg.mxu0
    %v5704 = vand.u32 %v274, 4294901760
    %5705 = vmatpush.msra.mxu0 %v5704
    %v5706 = vand.u32 %v270, 4294901760
    %5707 = vmatpush.msra.mxu0 %v5706
    %v5708 = vand.u32 %v266, 4294901760
    %5709 = vmatpush.msra.mxu0 %v5708
    %v5710 = vand.u32 %v262, 4294901760
    %5711 = vmatpush.msra.mxu0 %v5710
    %v5712 = vand.u32 %v258, 4294901760
    %5713 = vmatpush.msra.mxu0 %v5712
    %v5714 = vand.u32 %v254, 4294901760
    %5715 = vmatpush.msra.mxu0 %v5714
    %v5716 = vand.u32 %v250, 4294901760
    %5717 = vmatpush.msra.mxu0 %v5716
    %v5718 = vand.u32 %v246, 4294901760
    %5719 = vmatpush.msra.mxu0 %v5718
    %v5720 = vand.u32 %v242, 4294901760
    %5721 = vmatpush.msra.mxu0 %v5720
    %v5722 = vand.u32 %v238, 4294901760
    %5723 = vmatpush.msra.mxu0 %v5722
    %v5724 = vand.u32 %v234, 4294901760
    %5725 = vmatpush.msra.mxu0 %v5724
    %v5726 = vand.u32 %v230, 4294901760
    %5727 = vmatpush.msra.mxu0 %v5726
    %v5728 = vand.u32 %v226, 4294901760
    %5729 = vmatpush.msra.mxu0 %v5728
    %v5730 = vand.u32 %v222, 4294901760
    %5731 = vmatpush.msra.mxu0 %v5730
    %v5732 = vand.u32 %v218, 4294901760
    %5733 = vmatpush.msra.mxu0 %v5732
    %v5734 = vand.u32 %v214, 4294901760
    %5735 = vmatpush.msra.mxu0 %v5734
    %v5736 = vand.u32 %v18, 4294901760
    %5737 = vmatmul.f32.gmra.mxu0 %v5736
    %v5738 = vpop.f32.mrf.mxu0
    %v5739 = vadd.f32 %v5702, %v5738
    %5740 = vdwg.mxu0
    %v5741 = vmul.f32 %v1647, 0.5
    %v5742 = vmul.f32 %v3011, 0.5
    %v5743 = vmul.f32 %v4375, 0.5
    %v5744 = vmul.f32 %v5739, 0.5
    %v5745 = vmul.f32 %v1647, 0.70710677
    %v5746 = vmul.f32 %v3011, 0.70710677
    %v5747 = vmul.f32 %v4375, 0.70710677
    %v5748 = vmul.f32 %v5739, 0.70710677
    %v5749 = vmul.f32 %v5745, %v5745
    %v5750 = vmin.f32 16.0, %v5749
    %v5751 = vmul.f32 %v5750, 2.1237322e-06
    %v5752 = vadd.f32 %v5751, 0.00028619796
    %v5753 = vmul.f32 %v5750, %v5752
    %v5754 = vadd.f32 %v5753, 0.0036580483
    %v5755 = vmul.f32 %v5750, %v5754
    %v5756 = vadd.f32 %v5755, 0.05243302
    %v5757 = vmul.f32 %v5750, %v5756
    %v5758 = vadd.f32 %v5757, 0.18741608
    %v5759 = vmul.f32 %v5750, %v5758
    %v5760 = vadd.f32 %v5759, 1.1283791
    %v5761 = vmul.f32 %v5745, %v5760
    %v5762 = vmul.f32 %v5750, 3.8918573e-05
    %v5763 = vadd.f32 %v5762, 0.001143296
    %v5764 = vmul.f32 %v5750, %v5763
    %v5765 = vadd.f32 %v5764, 0.014752088
    %v5766 = vmul.f32 %v5750, %v5765
    %v5767 = vadd.f32 %v5766, 0.112945676
    %v5768 = vmul.f32 %v5750, %v5767
    %v5769 = vadd.f32 %v5768, 0.4994258
    %v5770 = vmul.f32 %v5750, %v5769
    %v5771 = vadd.f32 %v5770, 1.0
    %v5772 = vrcp.pop %v5771
    %v5773 = vmul.f32 %v5771, %v5772
    %v5774 = vsub.f32 1.0, %v5773
    %v5775 = vmul.f32 %v5772, %v5774
    %v5776 = vadd.f32 %v5772, %v5775
    %vm5777 = vweird.f32 %v5771
    %vm5778 = vweird.f32 %v5772
    %vm5779 = vmor %vm5777, %vm5778
    %v5780 = vsel %vm5779, %v5772, %v5776
    %v5781 = vand.u32 2147483647, %v5771
    %vm5782 = vcmp.eq.f32.partialorder %v5781, 8.507059e+37
    %v5783 = vand.u32 %v5771, 2147483648
    %v5784 = vor.u32 1.1754944e-38, %v5783
    %v5785 = vsel %vm5782, %v5784, %v5780
    %v5786 = vmul.f32 %v5761, %v5785
    %v5787 = vmin.f32 %v5786, 1.0
    %v5788 = vmax.f32 %v5787, -1.0
    %v5789 = vmul.f32 %v5746, %v5746
    %v5790 = vmin.f32 16.0, %v5789
    %v5791 = vmul.f32 %v5790, 2.1237322e-06
    %v5792 = vadd.f32 %v5791, 0.00028619796
    %v5793 = vmul.f32 %v5790, %v5792
    %v5794 = vadd.f32 %v5793, 0.0036580483
    %v5795 = vmul.f32 %v5790, %v5794
    %v5796 = vadd.f32 %v5795, 0.05243302
    %v5797 = vmul.f32 %v5790, %v5796
    %v5798 = vadd.f32 %v5797, 0.18741608
    %v5799 = vmul.f32 %v5790, %v5798
    %v5800 = vadd.f32 %v5799, 1.1283791
    %v5801 = vmul.f32 %v5746, %v5800
    %v5802 = vmul.f32 %v5790, 3.8918573e-05
    %v5803 = vadd.f32 %v5802, 0.001143296
    %v5804 = vmul.f32 %v5790, %v5803
    %v5805 = vadd.f32 %v5804, 0.014752088
    %v5806 = vmul.f32 %v5790, %v5805
    %v5807 = vadd.f32 %v5806, 0.112945676
    %v5808 = vmul.f32 %v5790, %v5807
    %v5809 = vadd.f32 %v5808, 0.4994258
    %v5810 = vmul.f32 %v5790, %v5809
    %v5811 = vadd.f32 %v5810, 1.0
    %v5812 = vrcp.pop %v5811
    %v5813 = vmul.f32 %v5811, %v5812
    %v5814 = vsub.f32 1.0, %v5813
    %v5815 = vmul.f32 %v5812, %v5814
    %v5816 = vadd.f32 %v5812, %v5815
    %vm5817 = vweird.f32 %v5811
    %vm5818 = vweird.f32 %v5812
    %vm5819 = vmor %vm5817, %vm5818
    %v5820 = vsel %vm5819, %v5812, %v5816
    %v5821 = vand.u32 2147483647, %v5811
    %vm5822 = vcmp.eq.f32.partialorder %v5821, 8.507059e+37
    %v5823 = vand.u32 %v5811, 2147483648
    %v5824 = vor.u32 1.1754944e-38, %v5823
    %v5825 = vsel %vm5822, %v5824, %v5820
    %v5826 = vmul.f32 %v5801, %v5825
    %v5827 = vmin.f32 %v5826, 1.0
    %v5828 = vmax.f32 %v5827, -1.0
    %v5829 = vmul.f32 %v5747, %v5747
    %v5830 = vmin.f32 16.0, %v5829
    %v5831 = vmul.f32 %v5830, 2.1237322e-06
    %v5832 = vadd.f32 %v5831, 0.00028619796
    %v5833 = vmul.f32 %v5830, %v5832
    %v5834 = vadd.f32 %v5833, 0.0036580483
    %v5835 = vmul.f32 %v5830, %v5834
    %v5836 = vadd.f32 %v5835, 0.05243302
    %v5837 = vmul.f32 %v5830, %v5836
    %v5838 = vadd.f32 %v5837, 0.18741608
    %v5839 = vmul.f32 %v5830, %v5838
    %v5840 = vadd.f32 %v5839, 1.1283791
    %v5841 = vmul.f32 %v5747, %v5840
    %v5842 = vmul.f32 %v5830, 3.8918573e-05
    %v5843 = vadd.f32 %v5842, 0.001143296
    %v5844 = vmul.f32 %v5830, %v5843
    %v5845 = vadd.f32 %v5844, 0.014752088
    %v5846 = vmul.f32 %v5830, %v5845
    %v5847 = vadd.f32 %v5846, 0.112945676
    %v5848 = vmul.f32 %v5830, %v5847
    %v5849 = vadd.f32 %v5848, 0.4994258
    %v5850 = vmul.f32 %v5830, %v5849
    %v5851 = vadd.f32 %v5850, 1.0
    %v5852 = vrcp.pop %v5851
    %v5853 = vmul.f32 %v5851, %v5852
    %v5854 = vsub.f32 1.0, %v5853
    %v5855 = vmul.f32 %v5852, %v5854
    %v5856 = vadd.f32 %v5852, %v5855
    %vm5857 = vweird.f32 %v5851
    %vm5858 = vweird.f32 %v5852
    %vm5859 = vmor %vm5857, %vm5858
    %v5860 = vsel %vm5859, %v5852, %v5856
    %v5861 = vand.u32 2147483647, %v5851
    %vm5862 = vcmp.eq.f32.partialorder %v5861, 8.507059e+37
    %v5863 = vand.u32 %v5851, 2147483648
    %v5864 = vor.u32 1.1754944e-38, %v5863
    %v5865 = vsel %vm5862, %v5864, %v5860
    %v5866 = vmul.f32 %v5841, %v5865
    %v5867 = vmin.f32 %v5866, 1.0
    %v5868 = vmax.f32 %v5867, -1.0
    %v5869 = vmul.f32 %v5748, %v5748
    %v5870 = vmin.f32 16.0, %v5869
    %v5871 = vmul.f32 %v5870, 2.1237322e-06
    %v5872 = vadd.f32 %v5871, 0.00028619796
    %v5873 = vmul.f32 %v5870, %v5872
    %v5874 = vadd.f32 %v5873, 0.0036580483
    %v5875 = vmul.f32 %v5870, %v5874
    %v5876 = vadd.f32 %v5875, 0.05243302
    %v5877 = vmul.f32 %v5870, %v5876
    %v5878 = vadd.f32 %v5877, 0.18741608
    %v5879 = vmul.f32 %v5870, %v5878
    %v5880 = vadd.f32 %v5879, 1.1283791
    %v5881 = vmul.f32 %v5748, %v5880
    %v5882 = vmul.f32 %v5870, 3.8918573e-05
    %v5883 = vadd.f32 %v5882, 0.001143296
    %v5884 = vmul.f32 %v5870, %v5883
    %v5885 = vadd.f32 %v5884, 0.014752088
    %v5886 = vmul.f32 %v5870, %v5885
    %v5887 = vadd.f32 %v5886, 0.112945676
    %v5888 = vmul.f32 %v5870, %v5887
    %v5889 = vadd.f32 %v5888, 0.4994258
    %v5890 = vmul.f32 %v5870, %v5889
    %v5891 = vadd.f32 %v5890, 1.0
    %v5892 = vrcp.pop %v5891
    %v5893 = vmul.f32 %v5891, %v5892
    %v5894 = vsub.f32 1.0, %v5893
    %v5895 = vmul.f32 %v5892, %v5894
    %v5896 = vadd.f32 %v5892, %v5895
    %vm5897 = vweird.f32 %v5891
    %vm5898 = vweird.f32 %v5892
    %vm5899 = vmor %vm5897, %vm5898
    %v5900 = vsel %vm5899, %v5892, %v5896
    %v5901 = vand.u32 2147483647, %v5891
    %vm5902 = vcmp.eq.f32.partialorder %v5901, 8.507059e+37
    %v5903 = vand.u32 %v5891, 2147483648
    %v5904 = vor.u32 1.1754944e-38, %v5903
    %v5905 = vsel %vm5902, %v5904, %v5900
    %v5906 = vmul.f32 %v5881, %v5905
    %v5907 = vmin.f32 %v5906, 1.0
    %v5908 = vmax.f32 %v5907, -1.0
    %v5909 = vadd.f32 %v5788, 1.0
    %v5910 = vadd.f32 %v5828, 1.0
    %v5911 = vadd.f32 %v5868, 1.0
    %v5912 = vadd.f32 %v5908, 1.0
    %v5913 = vmul.f32 %v5741, %v5909
    %v5914 = vmul.f32 %v5742, %v5910
    %v5915 = vmul.f32 %v5743, %v5911
    %v5916 = vmul.f32 %v5744, %v5912
    %v5917 = vand.u32 %v79, 4294901760
    %5918 = vmatpush.msra.mxu0 %v5917
    %v5919 = vand.u32 %v75, 4294901760
    %5920 = vmatpush.msra.mxu0 %v5919
    %v5921 = vand.u32 %v71, 4294901760
    %5922 = vmatpush.msra.mxu0 %v5921
    %v5923 = vand.u32 %v67, 4294901760
    %5924 = vmatpush.msra.mxu0 %v5923
    %v5925 = vand.u32 %v63, 4294901760
    %5926 = vmatpush.msra.mxu0 %v5925
    %v5927 = vand.u32 %v59, 4294901760
    %5928 = vmatpush.msra.mxu0 %v5927
    %v5929 = vand.u32 %v55, 4294901760
    %5930 = vmatpush.msra.mxu0 %v5929
    %v5931 = vand.u32 %v51, 4294901760
    %5932 = vmatpush.msra.mxu0 %v5931
    %v5933 = vand.u32 %v47, 4294901760
    %5934 = vmatpush.msra.mxu0 %v5933
    %v5935 = vand.u32 %v43, 4294901760
    %5936 = vmatpush.msra.mxu0 %v5935
    %v5937 = vand.u32 %v39, 4294901760
    %5938 = vmatpush.msra.mxu0 %v5937
    %v5939 = vand.u32 %v35, 4294901760
    %5940 = vmatpush.msra.mxu0 %v5939
    %v5941 = vand.u32 %v31, 4294901760
    %5942 = vmatpush.msra.mxu0 %v5941
    %v5943 = vand.u32 %v27, 4294901760
    %5944 = vmatpush.msra.mxu0 %v5943
    %v5945 = vand.u32 %v23, 4294901760
    %5946 = vmatpush.msra.mxu0 %v5945
    %v5947 = vand.u32 %v19, 4294901760
    %5948 = vmatpush.msra.mxu0 %v5947
    %v5949 = vand.u32 %v5913, 4294901760
    %v5950 = vsub.f32 %v5913, %v5949
    %v5951 = vand.u32 %v5950, 4294901760
    %v5952 = vsub.f32 %v5950, %v5951
    %v5953 = vand.u32 %v5952, 4294901760
    %5954 = vmatmul.f32.gmra.mxu0 %v5953
    %v5955 = vpop.f32.mrf.mxu0
    %v5956 = vadd.f32 %v277, %v5955
    %5957 = vdwg.mxu0
    %v5958 = vand.u32 %v79, 4294901760
    %v5959 = vsub.f32 %v79, %v5958
    %v5960 = vand.u32 %v5959, 4294901760
    %v5961 = vsub.f32 %v5959, %v5960
    %v5962 = vand.u32 %v5961, 4294901760
    %5963 = vmatpush.msra.mxu0 %v5962
    %v5964 = vand.u32 %v75, 4294901760
    %v5965 = vsub.f32 %v75, %v5964
    %v5966 = vand.u32 %v5965, 4294901760
    %v5967 = vsub.f32 %v5965, %v5966
    %v5968 = vand.u32 %v5967, 4294901760
    %5969 = vmatpush.msra.mxu0 %v5968
    %v5970 = vand.u32 %v71, 4294901760
    %v5971 = vsub.f32 %v71, %v5970
    %v5972 = vand.u32 %v5971, 4294901760
    %v5973 = vsub.f32 %v5971, %v5972
    %v5974 = vand.u32 %v5973, 4294901760
    %5975 = vmatpush.msra.mxu0 %v5974
    %v5976 = vand.u32 %v67, 4294901760
    %v5977 = vsub.f32 %v67, %v5976
    %v5978 = vand.u32 %v5977, 4294901760
    %v5979 = vsub.f32 %v5977, %v5978
    %v5980 = vand.u32 %v5979, 4294901760
    %5981 = vmatpush.msra.mxu0 %v5980
    %v5982 = vand.u32 %v63, 4294901760
    %v5983 = vsub.f32 %v63, %v5982
    %v5984 = vand.u32 %v5983, 4294901760
    %v5985 = vsub.f32 %v5983, %v5984
    %v5986 = vand.u32 %v5985, 4294901760
    %5987 = vmatpush.msra.mxu0 %v5986
    %v5988 = vand.u32 %v59, 4294901760
    %v5989 = vsub.f32 %v59, %v5988
    %v5990 = vand.u32 %v5989, 4294901760
    %v5991 = vsub.f32 %v5989, %v5990
    %v5992 = vand.u32 %v5991, 4294901760
    %5993 = vmatpush.msra.mxu0 %v5992
    %v5994 = vand.u32 %v55, 4294901760
    %v5995 = vsub.f32 %v55, %v5994
    %v5996 = vand.u32 %v5995, 4294901760
    %v5997 = vsub.f32 %v5995, %v5996
    %v5998 = vand.u32 %v5997, 4294901760
    %5999 = vmatpush.msra.mxu0 %v5998
    %v6000 = vand.u32 %v51, 4294901760
    %v6001 = vsub.f32 %v51, %v6000
    %v6002 = vand.u32 %v6001, 4294901760
    %v6003 = vsub.f32 %v6001, %v6002
    %v6004 = vand.u32 %v6003, 4294901760
    %6005 = vmatpush.msra.mxu0 %v6004
    %v6006 = vand.u32 %v47, 4294901760
    %v6007 = vsub.f32 %v47, %v6006
    %v6008 = vand.u32 %v6007, 4294901760
    %v6009 = vsub.f32 %v6007, %v6008
    %v6010 = vand.u32 %v6009, 4294901760
    %6011 = vmatpush.msra.mxu0 %v6010
    %v6012 = vand.u32 %v43, 4294901760
    %v6013 = vsub.f32 %v43, %v6012
    %v6014 = vand.u32 %v6013, 4294901760
    %v6015 = vsub.f32 %v6013, %v6014
    %v6016 = vand.u32 %v6015, 4294901760
    %6017 = vmatpush.msra.mxu0 %v6016
    %v6018 = vand.u32 %v39, 4294901760
    %v6019 = vsub.f32 %v39, %v6018
    %v6020 = vand.u32 %v6019, 4294901760
    %v6021 = vsub.f32 %v6019, %v6020
    %v6022 = vand.u32 %v6021, 4294901760
    %6023 = vmatpush.msra.mxu0 %v6022
    %v6024 = vand.u32 %v35, 4294901760
    %v6025 = vsub.f32 %v35, %v6024
    %v6026 = vand.u32 %v6025, 4294901760
    %v6027 = vsub.f32 %v6025, %v6026
    %v6028 = vand.u32 %v6027, 4294901760
    %6029 = vmatpush.msra.mxu0 %v6028
    %v6030 = vand.u32 %v31, 4294901760
    %v6031 = vsub.f32 %v31, %v6030
    %v6032 = vand.u32 %v6031, 4294901760
    %v6033 = vsub.f32 %v6031, %v6032
    %v6034 = vand.u32 %v6033, 4294901760
    %6035 = vmatpush.msra.mxu0 %v6034
    %v6036 = vand.u32 %v27, 4294901760
    %v6037 = vsub.f32 %v27, %v6036
    %v6038 = vand.u32 %v6037, 4294901760
    %v6039 = vsub.f32 %v6037, %v6038
    %v6040 = vand.u32 %v6039, 4294901760
    %6041 = vmatpush.msra.mxu0 %v6040
    %v6042 = vand.u32 %v23, 4294901760
    %v6043 = vsub.f32 %v23, %v6042
    %v6044 = vand.u32 %v6043, 4294901760
    %v6045 = vsub.f32 %v6043, %v6044
    %v6046 = vand.u32 %v6045, 4294901760
    %6047 = vmatpush.msra.mxu0 %v6046
    %v6048 = vand.u32 %v19, 4294901760
    %v6049 = vsub.f32 %v19, %v6048
    %v6050 = vand.u32 %v6049, 4294901760
    %v6051 = vsub.f32 %v6049, %v6050
    %v6052 = vand.u32 %v6051, 4294901760
    %6053 = vmatpush.msra.mxu0 %v6052
    %v6054 = vand.u32 %v5913, 4294901760
    %6055 = vmatmul.f32.gmra.mxu0 %v6054
    %v6056 = vpop.f32.mrf.mxu0
    %v6057 = vadd.f32 %v5956, %v6056
    %6058 = vdwg.mxu0
    %v6059 = vand.u32 %v79, 4294901760
    %v6060 = vsub.f32 %v79, %v6059
    %6061 = vmatpush.msra.mxu0 %v6060
    %v6062 = vand.u32 %v75, 4294901760
    %v6063 = vsub.f32 %v75, %v6062
    %6064 = vmatpush.msra.mxu0 %v6063
    %v6065 = vand.u32 %v71, 4294901760
    %v6066 = vsub.f32 %v71, %v6065
    %6067 = vmatpush.msra.mxu0 %v6066
    %v6068 = vand.u32 %v67, 4294901760
    %v6069 = vsub.f32 %v67, %v6068
    %6070 = vmatpush.msra.mxu0 %v6069
    %v6071 = vand.u32 %v63, 4294901760
    %v6072 = vsub.f32 %v63, %v6071
    %6073 = vmatpush.msra.mxu0 %v6072
    %v6074 = vand.u32 %v59, 4294901760
    %v6075 = vsub.f32 %v59, %v6074
    %6076 = vmatpush.msra.mxu0 %v6075
    %v6077 = vand.u32 %v55, 4294901760
    %v6078 = vsub.f32 %v55, %v6077
    %6079 = vmatpush.msra.mxu0 %v6078
    %v6080 = vand.u32 %v51, 4294901760
    %v6081 = vsub.f32 %v51, %v6080
    %6082 = vmatpush.msra.mxu0 %v6081
    %v6083 = vand.u32 %v47, 4294901760
    %v6084 = vsub.f32 %v47, %v6083
    %6085 = vmatpush.msra.mxu0 %v6084
    %v6086 = vand.u32 %v43, 4294901760
    %v6087 = vsub.f32 %v43, %v6086
    %6088 = vmatpush.msra.mxu0 %v6087
    %v6089 = vand.u32 %v39, 4294901760
    %v6090 = vsub.f32 %v39, %v6089
    %6091 = vmatpush.msra.mxu0 %v6090
    %v6092 = vand.u32 %v35, 4294901760
    %v6093 = vsub.f32 %v35, %v6092
    %6094 = vmatpush.msra.mxu0 %v6093
    %v6095 = vand.u32 %v31, 4294901760
    %v6096 = vsub.f32 %v31, %v6095
    %6097 = vmatpush.msra.mxu0 %v6096
    %v6098 = vand.u32 %v27, 4294901760
    %v6099 = vsub.f32 %v27, %v6098
    %6100 = vmatpush.msra.mxu0 %v6099
    %v6101 = vand.u32 %v23, 4294901760
    %v6102 = vsub.f32 %v23, %v6101
    %6103 = vmatpush.msra.mxu0 %v6102
    %v6104 = vand.u32 %v19, 4294901760
    %v6105 = vsub.f32 %v19, %v6104
    %6106 = vmatpush.msra.mxu0 %v6105
    %v6107 = vand.u32 %v5913, 4294901760
    %v6108 = vsub.f32 %v5913, %v6107
    %6109 = vmatmul.f32.gmra.mxu0 %v6108
    %v6110 = vpop.f32.mrf.mxu0
    %v6111 = vadd.f32 %v6057, %v6110
    %6112 = vdwg.mxu0
    %v6113 = vand.u32 %v79, 4294901760
    %6114 = vmatpush.msra.mxu0 %v6113
    %v6115 = vand.u32 %v75, 4294901760
    %6116 = vmatpush.msra.mxu0 %v6115
    %v6117 = vand.u32 %v71, 4294901760
    %6118 = vmatpush.msra.mxu0 %v6117
    %v6119 = vand.u32 %v67, 4294901760
    %6120 = vmatpush.msra.mxu0 %v6119
    %v6121 = vand.u32 %v63, 4294901760
    %6122 = vmatpush.msra.mxu0 %v6121
    %v6123 = vand.u32 %v59, 4294901760
    %6124 = vmatpush.msra.mxu0 %v6123
    %v6125 = vand.u32 %v55, 4294901760
    %6126 = vmatpush.msra.mxu0 %v6125
    %v6127 = vand.u32 %v51, 4294901760
    %6128 = vmatpush.msra.mxu0 %v6127
    %v6129 = vand.u32 %v47, 4294901760
    %6130 = vmatpush.msra.mxu0 %v6129
    %v6131 = vand.u32 %v43, 4294901760
    %6132 = vmatpush.msra.mxu0 %v6131
    %v6133 = vand.u32 %v39, 4294901760
    %6134 = vmatpush.msra.mxu0 %v6133
    %v6135 = vand.u32 %v35, 4294901760
    %6136 = vmatpush.msra.mxu0 %v6135
    %v6137 = vand.u32 %v31, 4294901760
    %6138 = vmatpush.msra.mxu0 %v6137
    %v6139 = vand.u32 %v27, 4294901760
    %6140 = vmatpush.msra.mxu0 %v6139
    %v6141 = vand.u32 %v23, 4294901760
    %6142 = vmatpush.msra.mxu0 %v6141
    %v6143 = vand.u32 %v19, 4294901760
    %6144 = vmatpush.msra.mxu0 %v6143
    %v6145 = vand.u32 %v5913, 4294901760
    %v6146 = vsub.f32 %v5913, %v6145
    %v6147 = vand.u32 %v6146, 4294901760
    %6148 = vmatmul.f32.gmra.mxu0 %v6147
    %v6149 = vpop.f32.mrf.mxu0
    %v6150 = vadd.f32 %v6111, %v6149
    %6151 = vdwg.mxu0
    %v6152 = vand.u32 %v79, 4294901760
    %v6153 = vsub.f32 %v79, %v6152
    %v6154 = vand.u32 %v6153, 4294901760
    %6155 = vmatpush.msra.mxu0 %v6154
    %v6156 = vand.u32 %v75, 4294901760
    %v6157 = vsub.f32 %v75, %v6156
    %v6158 = vand.u32 %v6157, 4294901760
    %6159 = vmatpush.msra.mxu0 %v6158
    %v6160 = vand.u32 %v71, 4294901760
    %v6161 = vsub.f32 %v71, %v6160
    %v6162 = vand.u32 %v6161, 4294901760
    %6163 = vmatpush.msra.mxu0 %v6162
    %v6164 = vand.u32 %v67, 4294901760
    %v6165 = vsub.f32 %v67, %v6164
    %v6166 = vand.u32 %v6165, 4294901760
    %6167 = vmatpush.msra.mxu0 %v6166
    %v6168 = vand.u32 %v63, 4294901760
    %v6169 = vsub.f32 %v63, %v6168
    %v6170 = vand.u32 %v6169, 4294901760
    %6171 = vmatpush.msra.mxu0 %v6170
    %v6172 = vand.u32 %v59, 4294901760
    %v6173 = vsub.f32 %v59, %v6172
    %v6174 = vand.u32 %v6173, 4294901760
    %6175 = vmatpush.msra.mxu0 %v6174
    %v6176 = vand.u32 %v55, 4294901760
    %v6177 = vsub.f32 %v55, %v6176
    %v6178 = vand.u32 %v6177, 4294901760
    %6179 = vmatpush.msra.mxu0 %v6178
    %v6180 = vand.u32 %v51, 4294901760
    %v6181 = vsub.f32 %v51, %v6180
    %v6182 = vand.u32 %v6181, 4294901760
    %6183 = vmatpush.msra.mxu0 %v6182
    %v6184 = vand.u32 %v47, 4294901760
    %v6185 = vsub.f32 %v47, %v6184
    %v6186 = vand.u32 %v6185, 4294901760
    %6187 = vmatpush.msra.mxu0 %v6186
    %v6188 = vand.u32 %v43, 4294901760
    %v6189 = vsub.f32 %v43, %v6188
    %v6190 = vand.u32 %v6189, 4294901760
    %6191 = vmatpush.msra.mxu0 %v6190
    %v6192 = vand.u32 %v39, 4294901760
    %v6193 = vsub.f32 %v39, %v6192
    %v6194 = vand.u32 %v6193, 4294901760
    %6195 = vmatpush.msra.mxu0 %v6194
    %v6196 = vand.u32 %v35, 4294901760
    %v6197 = vsub.f32 %v35, %v6196
    %v6198 = vand.u32 %v6197, 4294901760
    %6199 = vmatpush.msra.mxu0 %v6198
    %v6200 = vand.u32 %v31, 4294901760
    %v6201 = vsub.f32 %v31, %v6200
    %v6202 = vand.u32 %v6201, 4294901760
    %6203 = vmatpush.msra.mxu0 %v6202
    %v6204 = vand.u32 %v27, 4294901760
    %v6205 = vsub.f32 %v27, %v6204
    %v6206 = vand.u32 %v6205, 4294901760
    %6207 = vmatpush.msra.mxu0 %v6206
    %v6208 = vand.u32 %v23, 4294901760
    %v6209 = vsub.f32 %v23, %v6208
    %v6210 = vand.u32 %v6209, 4294901760
    %6211 = vmatpush.msra.mxu0 %v6210
    %v6212 = vand.u32 %v19, 4294901760
    %v6213 = vsub.f32 %v19, %v6212
    %v6214 = vand.u32 %v6213, 4294901760
    %6215 = vmatpush.msra.mxu0 %v6214
    %v6216 = vand.u32 %v5913, 4294901760
    %6217 = vmatmul.f32.gmra.mxu0 %v6216
    %v6218 = vpop.f32.mrf.mxu0
    %v6219 = vadd.f32 %v6150, %v6218
    %6220 = vdwg.mxu0
    %v6221 = vand.u32 %v79, 4294901760
    %6222 = vmatpush.msra.mxu0 %v6221
    %v6223 = vand.u32 %v75, 4294901760
    %6224 = vmatpush.msra.mxu0 %v6223
    %v6225 = vand.u32 %v71, 4294901760
    %6226 = vmatpush.msra.mxu0 %v6225
    %v6227 = vand.u32 %v67, 4294901760
    %6228 = vmatpush.msra.mxu0 %v6227
    %v6229 = vand.u32 %v63, 4294901760
    %6230 = vmatpush.msra.mxu0 %v6229
    %v6231 = vand.u32 %v59, 4294901760
    %6232 = vmatpush.msra.mxu0 %v6231
    %v6233 = vand.u32 %v55, 4294901760
    %6234 = vmatpush.msra.mxu0 %v6233
    %v6235 = vand.u32 %v51, 4294901760
    %6236 = vmatpush.msra.mxu0 %v6235
    %v6237 = vand.u32 %v47, 4294901760
    %6238 = vmatpush.msra.mxu0 %v6237
    %v6239 = vand.u32 %v43, 4294901760
    %6240 = vmatpush.msra.mxu0 %v6239
    %v6241 = vand.u32 %v39, 4294901760
    %6242 = vmatpush.msra.mxu0 %v6241
    %v6243 = vand.u32 %v35, 4294901760
    %6244 = vmatpush.msra.mxu0 %v6243
    %v6245 = vand.u32 %v31, 4294901760
    %6246 = vmatpush.msra.mxu0 %v6245
    %v6247 = vand.u32 %v27, 4294901760
    %6248 = vmatpush.msra.mxu0 %v6247
    %v6249 = vand.u32 %v23, 4294901760
    %6250 = vmatpush.msra.mxu0 %v6249
    %v6251 = vand.u32 %v19, 4294901760
    %6252 = vmatpush.msra.mxu0 %v6251
    %v6253 = vand.u32 %v5913, 4294901760
    %6254 = vmatmul.f32.gmra.mxu0 %v6253
    %v6255 = vpop.f32.mrf.mxu0
    %v6256 = vadd.f32 %v6219, %v6255
    %6257 = vdwg.mxu0
    %v6258 = vand.u32 %v143, 4294901760
    %6259 = vmatpush.msra.mxu0 %v6258
    %v6260 = vand.u32 %v139, 4294901760
    %6261 = vmatpush.msra.mxu0 %v6260
    %v6262 = vand.u32 %v135, 4294901760
    %6263 = vmatpush.msra.mxu0 %v6262
    %v6264 = vand.u32 %v131, 4294901760
    %6265 = vmatpush.msra.mxu0 %v6264
    %v6266 = vand.u32 %v127, 4294901760
    %6267 = vmatpush.msra.mxu0 %v6266
    %v6268 = vand.u32 %v123, 4294901760
    %6269 = vmatpush.msra.mxu0 %v6268
    %v6270 = vand.u32 %v119, 4294901760
    %6271 = vmatpush.msra.mxu0 %v6270
    %v6272 = vand.u32 %v115, 4294901760
    %6273 = vmatpush.msra.mxu0 %v6272
    %v6274 = vand.u32 %v111, 4294901760
    %6275 = vmatpush.msra.mxu0 %v6274
    %v6276 = vand.u32 %v107, 4294901760
    %6277 = vmatpush.msra.mxu0 %v6276
    %v6278 = vand.u32 %v103, 4294901760
    %6279 = vmatpush.msra.mxu0 %v6278
    %v6280 = vand.u32 %v99, 4294901760
    %6281 = vmatpush.msra.mxu0 %v6280
    %v6282 = vand.u32 %v95, 4294901760
    %6283 = vmatpush.msra.mxu0 %v6282
    %v6284 = vand.u32 %v91, 4294901760
    %6285 = vmatpush.msra.mxu0 %v6284
    %v6286 = vand.u32 %v87, 4294901760
    %6287 = vmatpush.msra.mxu0 %v6286
    %v6288 = vand.u32 %v83, 4294901760
    %6289 = vmatpush.msra.mxu0 %v6288
    %v6290 = vand.u32 %v5914, 4294901760
    %v6291 = vsub.f32 %v5914, %v6290
    %v6292 = vand.u32 %v6291, 4294901760
    %v6293 = vsub.f32 %v6291, %v6292
    %v6294 = vand.u32 %v6293, 4294901760
    %6295 = vmatmul.f32.gmra.mxu0 %v6294
    %v6296 = vpop.f32.mrf.mxu0
    %v6297 = vadd.f32 %v6256, %v6296
    %6298 = vdwg.mxu0
    %v6299 = vand.u32 %v143, 4294901760
    %v6300 = vsub.f32 %v143, %v6299
    %v6301 = vand.u32 %v6300, 4294901760
    %v6302 = vsub.f32 %v6300, %v6301
    %v6303 = vand.u32 %v6302, 4294901760
    %6304 = vmatpush.msra.mxu0 %v6303
    %v6305 = vand.u32 %v139, 4294901760
    %v6306 = vsub.f32 %v139, %v6305
    %v6307 = vand.u32 %v6306, 4294901760
    %v6308 = vsub.f32 %v6306, %v6307
    %v6309 = vand.u32 %v6308, 4294901760
    %6310 = vmatpush.msra.mxu0 %v6309
    %v6311 = vand.u32 %v135, 4294901760
    %v6312 = vsub.f32 %v135, %v6311
    %v6313 = vand.u32 %v6312, 4294901760
    %v6314 = vsub.f32 %v6312, %v6313
    %v6315 = vand.u32 %v6314, 4294901760
    %6316 = vmatpush.msra.mxu0 %v6315
    %v6317 = vand.u32 %v131, 4294901760
    %v6318 = vsub.f32 %v131, %v6317
    %v6319 = vand.u32 %v6318, 4294901760
    %v6320 = vsub.f32 %v6318, %v6319
    %v6321 = vand.u32 %v6320, 4294901760
    %6322 = vmatpush.msra.mxu0 %v6321
    %v6323 = vand.u32 %v127, 4294901760
    %v6324 = vsub.f32 %v127, %v6323
    %v6325 = vand.u32 %v6324, 4294901760
    %v6326 = vsub.f32 %v6324, %v6325
    %v6327 = vand.u32 %v6326, 4294901760
    %6328 = vmatpush.msra.mxu0 %v6327
    %v6329 = vand.u32 %v123, 4294901760
    %v6330 = vsub.f32 %v123, %v6329
    %v6331 = vand.u32 %v6330, 4294901760
    %v6332 = vsub.f32 %v6330, %v6331
    %v6333 = vand.u32 %v6332, 4294901760
    %6334 = vmatpush.msra.mxu0 %v6333
    %v6335 = vand.u32 %v119, 4294901760
    %v6336 = vsub.f32 %v119, %v6335
    %v6337 = vand.u32 %v6336, 4294901760
    %v6338 = vsub.f32 %v6336, %v6337
    %v6339 = vand.u32 %v6338, 4294901760
    %6340 = vmatpush.msra.mxu0 %v6339
    %v6341 = vand.u32 %v115, 4294901760
    %v6342 = vsub.f32 %v115, %v6341
    %v6343 = vand.u32 %v6342, 4294901760
    %v6344 = vsub.f32 %v6342, %v6343
    %v6345 = vand.u32 %v6344, 4294901760
    %6346 = vmatpush.msra.mxu0 %v6345
    %v6347 = vand.u32 %v111, 4294901760
    %v6348 = vsub.f32 %v111, %v6347
    %v6349 = vand.u32 %v6348, 4294901760
    %v6350 = vsub.f32 %v6348, %v6349
    %v6351 = vand.u32 %v6350, 4294901760
    %6352 = vmatpush.msra.mxu0 %v6351
    %v6353 = vand.u32 %v107, 4294901760
    %v6354 = vsub.f32 %v107, %v6353
    %v6355 = vand.u32 %v6354, 4294901760
    %v6356 = vsub.f32 %v6354, %v6355
    %v6357 = vand.u32 %v6356, 4294901760
    %6358 = vmatpush.msra.mxu0 %v6357
    %v6359 = vand.u32 %v103, 4294901760
    %v6360 = vsub.f32 %v103, %v6359
    %v6361 = vand.u32 %v6360, 4294901760
    %v6362 = vsub.f32 %v6360, %v6361
    %v6363 = vand.u32 %v6362, 4294901760
    %6364 = vmatpush.msra.mxu0 %v6363
    %v6365 = vand.u32 %v99, 4294901760
    %v6366 = vsub.f32 %v99, %v6365
    %v6367 = vand.u32 %v6366, 4294901760
    %v6368 = vsub.f32 %v6366, %v6367
    %v6369 = vand.u32 %v6368, 4294901760
    %6370 = vmatpush.msra.mxu0 %v6369
    %v6371 = vand.u32 %v95, 4294901760
    %v6372 = vsub.f32 %v95, %v6371
    %v6373 = vand.u32 %v6372, 4294901760
    %v6374 = vsub.f32 %v6372, %v6373
    %v6375 = vand.u32 %v6374, 4294901760
    %6376 = vmatpush.msra.mxu0 %v6375
    %v6377 = vand.u32 %v91, 4294901760
    %v6378 = vsub.f32 %v91, %v6377
    %v6379 = vand.u32 %v6378, 4294901760
    %v6380 = vsub.f32 %v6378, %v6379
    %v6381 = vand.u32 %v6380, 4294901760
    %6382 = vmatpush.msra.mxu0 %v6381
    %v6383 = vand.u32 %v87, 4294901760
    %v6384 = vsub.f32 %v87, %v6383
    %v6385 = vand.u32 %v6384, 4294901760
    %v6386 = vsub.f32 %v6384, %v6385
    %v6387 = vand.u32 %v6386, 4294901760
    %6388 = vmatpush.msra.mxu0 %v6387
    %v6389 = vand.u32 %v83, 4294901760
    %v6390 = vsub.f32 %v83, %v6389
    %v6391 = vand.u32 %v6390, 4294901760
    %v6392 = vsub.f32 %v6390, %v6391
    %v6393 = vand.u32 %v6392, 4294901760
    %6394 = vmatpush.msra.mxu0 %v6393
    %v6395 = vand.u32 %v5914, 4294901760
    %6396 = vmatmul.f32.gmra.mxu0 %v6395
    %v6397 = vpop.f32.mrf.mxu0
    %v6398 = vadd.f32 %v6297, %v6397
    %6399 = vdwg.mxu0
    %v6400 = vand.u32 %v143, 4294901760
    %v6401 = vsub.f32 %v143, %v6400
    %6402 = vmatpush.msra.mxu0 %v6401
    %v6403 = vand.u32 %v139, 4294901760
    %v6404 = vsub.f32 %v139, %v6403
    %6405 = vmatpush.msra.mxu0 %v6404
    %v6406 = vand.u32 %v135, 4294901760
    %v6407 = vsub.f32 %v135, %v6406
    %6408 = vmatpush.msra.mxu0 %v6407
    %v6409 = vand.u32 %v131, 4294901760
    %v6410 = vsub.f32 %v131, %v6409
    %6411 = vmatpush.msra.mxu0 %v6410
    %v6412 = vand.u32 %v127, 4294901760
    %v6413 = vsub.f32 %v127, %v6412
    %6414 = vmatpush.msra.mxu0 %v6413
    %v6415 = vand.u32 %v123, 4294901760
    %v6416 = vsub.f32 %v123, %v6415
    %6417 = vmatpush.msra.mxu0 %v6416
    %v6418 = vand.u32 %v119, 4294901760
    %v6419 = vsub.f32 %v119, %v6418
    %6420 = vmatpush.msra.mxu0 %v6419
    %v6421 = vand.u32 %v115, 4294901760
    %v6422 = vsub.f32 %v115, %v6421
    %6423 = vmatpush.msra.mxu0 %v6422
    %v6424 = vand.u32 %v111, 4294901760
    %v6425 = vsub.f32 %v111, %v6424
    %6426 = vmatpush.msra.mxu0 %v6425
    %v6427 = vand.u32 %v107, 4294901760
    %v6428 = vsub.f32 %v107, %v6427
    %6429 = vmatpush.msra.mxu0 %v6428
    %v6430 = vand.u32 %v103, 4294901760
    %v6431 = vsub.f32 %v103, %v6430
    %6432 = vmatpush.msra.mxu0 %v6431
    %v6433 = vand.u32 %v99, 4294901760
    %v6434 = vsub.f32 %v99, %v6433
    %6435 = vmatpush.msra.mxu0 %v6434
    %v6436 = vand.u32 %v95, 4294901760
    %v6437 = vsub.f32 %v95, %v6436
    %6438 = vmatpush.msra.mxu0 %v6437
    %v6439 = vand.u32 %v91, 4294901760
    %v6440 = vsub.f32 %v91, %v6439
    %6441 = vmatpush.msra.mxu0 %v6440
    %v6442 = vand.u32 %v87, 4294901760
    %v6443 = vsub.f32 %v87, %v6442
    %6444 = vmatpush.msra.mxu0 %v6443
    %v6445 = vand.u32 %v83, 4294901760
    %v6446 = vsub.f32 %v83, %v6445
    %6447 = vmatpush.msra.mxu0 %v6446
    %v6448 = vand.u32 %v5914, 4294901760
    %v6449 = vsub.f32 %v5914, %v6448
    %6450 = vmatmul.f32.gmra.mxu0 %v6449
    %v6451 = vpop.f32.mrf.mxu0
    %v6452 = vadd.f32 %v6398, %v6451
    %6453 = vdwg.mxu0
    %v6454 = vand.u32 %v143, 4294901760
    %6455 = vmatpush.msra.mxu0 %v6454
    %v6456 = vand.u32 %v139, 4294901760
    %6457 = vmatpush.msra.mxu0 %v6456
    %v6458 = vand.u32 %v135, 4294901760
    %6459 = vmatpush.msra.mxu0 %v6458
    %v6460 = vand.u32 %v131, 4294901760
    %6461 = vmatpush.msra.mxu0 %v6460
    %v6462 = vand.u32 %v127, 4294901760
    %6463 = vmatpush.msra.mxu0 %v6462
    %v6464 = vand.u32 %v123, 4294901760
    %6465 = vmatpush.msra.mxu0 %v6464
    %v6466 = vand.u32 %v119, 4294901760
    %6467 = vmatpush.msra.mxu0 %v6466
    %v6468 = vand.u32 %v115, 4294901760
    %6469 = vmatpush.msra.mxu0 %v6468
    %v6470 = vand.u32 %v111, 4294901760
    %6471 = vmatpush.msra.mxu0 %v6470
    %v6472 = vand.u32 %v107, 4294901760
    %6473 = vmatpush.msra.mxu0 %v6472
    %v6474 = vand.u32 %v103, 4294901760
    %6475 = vmatpush.msra.mxu0 %v6474
    %v6476 = vand.u32 %v99, 4294901760
    %6477 = vmatpush.msra.mxu0 %v6476
    %v6478 = vand.u32 %v95, 4294901760
    %6479 = vmatpush.msra.mxu0 %v6478
    %v6480 = vand.u32 %v91, 4294901760
    %6481 = vmatpush.msra.mxu0 %v6480
    %v6482 = vand.u32 %v87, 4294901760
    %6483 = vmatpush.msra.mxu0 %v6482
    %v6484 = vand.u32 %v83, 4294901760
    %6485 = vmatpush.msra.mxu0 %v6484
    %v6486 = vand.u32 %v5914, 4294901760
    %v6487 = vsub.f32 %v5914, %v6486
    %v6488 = vand.u32 %v6487, 4294901760
    %6489 = vmatmul.f32.gmra.mxu0 %v6488
    %v6490 = vpop.f32.mrf.mxu0
    %v6491 = vadd.f32 %v6452, %v6490
    %6492 = vdwg.mxu0
    %v6493 = vand.u32 %v143, 4294901760
    %v6494 = vsub.f32 %v143, %v6493
    %v6495 = vand.u32 %v6494, 4294901760
    %6496 = vmatpush.msra.mxu0 %v6495
    %v6497 = vand.u32 %v139, 4294901760
    %v6498 = vsub.f32 %v139, %v6497
    %v6499 = vand.u32 %v6498, 4294901760
    %6500 = vmatpush.msra.mxu0 %v6499
    %v6501 = vand.u32 %v135, 4294901760
    %v6502 = vsub.f32 %v135, %v6501
    %v6503 = vand.u32 %v6502, 4294901760
    %6504 = vmatpush.msra.mxu0 %v6503
    %v6505 = vand.u32 %v131, 4294901760
    %v6506 = vsub.f32 %v131, %v6505
    %v6507 = vand.u32 %v6506, 4294901760
    %6508 = vmatpush.msra.mxu0 %v6507
    %v6509 = vand.u32 %v127, 4294901760
    %v6510 = vsub.f32 %v127, %v6509
    %v6511 = vand.u32 %v6510, 4294901760
    %6512 = vmatpush.msra.mxu0 %v6511
    %v6513 = vand.u32 %v123, 4294901760
    %v6514 = vsub.f32 %v123, %v6513
    %v6515 = vand.u32 %v6514, 4294901760
    %6516 = vmatpush.msra.mxu0 %v6515
    %v6517 = vand.u32 %v119, 4294901760
    %v6518 = vsub.f32 %v119, %v6517
    %v6519 = vand.u32 %v6518, 4294901760
    %6520 = vmatpush.msra.mxu0 %v6519
    %v6521 = vand.u32 %v115, 4294901760
    %v6522 = vsub.f32 %v115, %v6521
    %v6523 = vand.u32 %v6522, 4294901760
    %6524 = vmatpush.msra.mxu0 %v6523
    %v6525 = vand.u32 %v111, 4294901760
    %v6526 = vsub.f32 %v111, %v6525
    %v6527 = vand.u32 %v6526, 4294901760
    %6528 = vmatpush.msra.mxu0 %v6527
    %v6529 = vand.u32 %v107, 4294901760
    %v6530 = vsub.f32 %v107, %v6529
    %v6531 = vand.u32 %v6530, 4294901760
    %6532 = vmatpush.msra.mxu0 %v6531
    %v6533 = vand.u32 %v103, 4294901760
    %v6534 = vsub.f32 %v103, %v6533
    %v6535 = vand.u32 %v6534, 4294901760
    %6536 = vmatpush.msra.mxu0 %v6535
    %v6537 = vand.u32 %v99, 4294901760
    %v6538 = vsub.f32 %v99, %v6537
    %v6539 = vand.u32 %v6538, 4294901760
    %6540 = vmatpush.msra.mxu0 %v6539
    %v6541 = vand.u32 %v95, 4294901760
    %v6542 = vsub.f32 %v95, %v6541
    %v6543 = vand.u32 %v6542, 4294901760
    %6544 = vmatpush.msra.mxu0 %v6543
    %v6545 = vand.u32 %v91, 4294901760
    %v6546 = vsub.f32 %v91, %v6545
    %v6547 = vand.u32 %v6546, 4294901760
    %6548 = vmatpush.msra.mxu0 %v6547
    %v6549 = vand.u32 %v87, 4294901760
    %v6550 = vsub.f32 %v87, %v6549
    %v6551 = vand.u32 %v6550, 4294901760
    %6552 = vmatpush.msra.mxu0 %v6551
    %v6553 = vand.u32 %v83, 4294901760
    %v6554 = vsub.f32 %v83, %v6553
    %v6555 = vand.u32 %v6554, 4294901760
    %6556 = vmatpush.msra.mxu0 %v6555
    %v6557 = vand.u32 %v5914, 4294901760
    %6558 = vmatmul.f32.gmra.mxu0 %v6557
    %v6559 = vpop.f32.mrf.mxu0
    %v6560 = vadd.f32 %v6491, %v6559
    %6561 = vdwg.mxu0
    %v6562 = vand.u32 %v143, 4294901760
    %6563 = vmatpush.msra.mxu0 %v6562
    %v6564 = vand.u32 %v139, 4294901760
    %6565 = vmatpush.msra.mxu0 %v6564
    %v6566 = vand.u32 %v135, 4294901760
    %6567 = vmatpush.msra.mxu0 %v6566
    %v6568 = vand.u32 %v131, 4294901760
    %6569 = vmatpush.msra.mxu0 %v6568
    %v6570 = vand.u32 %v127, 4294901760
    %6571 = vmatpush.msra.mxu0 %v6570
    %v6572 = vand.u32 %v123, 4294901760
    %6573 = vmatpush.msra.mxu0 %v6572
    %v6574 = vand.u32 %v119, 4294901760
    %6575 = vmatpush.msra.mxu0 %v6574
    %v6576 = vand.u32 %v115, 4294901760
    %6577 = vmatpush.msra.mxu0 %v6576
    %v6578 = vand.u32 %v111, 4294901760
    %6579 = vmatpush.msra.mxu0 %v6578
    %v6580 = vand.u32 %v107, 4294901760
    %6581 = vmatpush.msra.mxu0 %v6580
    %v6582 = vand.u32 %v103, 4294901760
    %6583 = vmatpush.msra.mxu0 %v6582
    %v6584 = vand.u32 %v99, 4294901760
    %6585 = vmatpush.msra.mxu0 %v6584
    %v6586 = vand.u32 %v95, 4294901760
    %6587 = vmatpush.msra.mxu0 %v6586
    %v6588 = vand.u32 %v91, 4294901760
    %6589 = vmatpush.msra.mxu0 %v6588
    %v6590 = vand.u32 %v87, 4294901760
    %6591 = vmatpush.msra.mxu0 %v6590
    %v6592 = vand.u32 %v83, 4294901760
    %6593 = vmatpush.msra.mxu0 %v6592
    %v6594 = vand.u32 %v5914, 4294901760
    %6595 = vmatmul.f32.gmra.mxu0 %v6594
    %v6596 = vpop.f32.mrf.mxu0
    %v6597 = vadd.f32 %v6560, %v6596
    %6598 = vdwg.mxu0
    %v6599 = vand.u32 %v207, 4294901760
    %6600 = vmatpush.msra.mxu0 %v6599
    %v6601 = vand.u32 %v203, 4294901760
    %6602 = vmatpush.msra.mxu0 %v6601
    %v6603 = vand.u32 %v199, 4294901760
    %6604 = vmatpush.msra.mxu0 %v6603
    %v6605 = vand.u32 %v195, 4294901760
    %6606 = vmatpush.msra.mxu0 %v6605
    %v6607 = vand.u32 %v191, 4294901760
    %6608 = vmatpush.msra.mxu0 %v6607
    %v6609 = vand.u32 %v187, 4294901760
    %6610 = vmatpush.msra.mxu0 %v6609
    %v6611 = vand.u32 %v183, 4294901760
    %6612 = vmatpush.msra.mxu0 %v6611
    %v6613 = vand.u32 %v179, 4294901760
    %6614 = vmatpush.msra.mxu0 %v6613
    %v6615 = vand.u32 %v175, 4294901760
    %6616 = vmatpush.msra.mxu0 %v6615
    %v6617 = vand.u32 %v171, 4294901760
    %6618 = vmatpush.msra.mxu0 %v6617
    %v6619 = vand.u32 %v167, 4294901760
    %6620 = vmatpush.msra.mxu0 %v6619
    %v6621 = vand.u32 %v163, 4294901760
    %6622 = vmatpush.msra.mxu0 %v6621
    %v6623 = vand.u32 %v159, 4294901760
    %6624 = vmatpush.msra.mxu0 %v6623
    %v6625 = vand.u32 %v155, 4294901760
    %6626 = vmatpush.msra.mxu0 %v6625
    %v6627 = vand.u32 %v151, 4294901760
    %6628 = vmatpush.msra.mxu0 %v6627
    %v6629 = vand.u32 %v147, 4294901760
    %6630 = vmatpush.msra.mxu0 %v6629
    %v6631 = vand.u32 %v5915, 4294901760
    %v6632 = vsub.f32 %v5915, %v6631
    %v6633 = vand.u32 %v6632, 4294901760
    %v6634 = vsub.f32 %v6632, %v6633
    %v6635 = vand.u32 %v6634, 4294901760
    %6636 = vmatmul.f32.gmra.mxu0 %v6635
    %v6637 = vpop.f32.mrf.mxu0
    %v6638 = vadd.f32 %v6597, %v6637
    %6639 = vdwg.mxu0
    %v6640 = vand.u32 %v207, 4294901760
    %v6641 = vsub.f32 %v207, %v6640
    %v6642 = vand.u32 %v6641, 4294901760
    %v6643 = vsub.f32 %v6641, %v6642
    %v6644 = vand.u32 %v6643, 4294901760
    %6645 = vmatpush.msra.mxu0 %v6644
    %v6646 = vand.u32 %v203, 4294901760
    %v6647 = vsub.f32 %v203, %v6646
    %v6648 = vand.u32 %v6647, 4294901760
    %v6649 = vsub.f32 %v6647, %v6648
    %v6650 = vand.u32 %v6649, 4294901760
    %6651 = vmatpush.msra.mxu0 %v6650
    %v6652 = vand.u32 %v199, 4294901760
    %v6653 = vsub.f32 %v199, %v6652
    %v6654 = vand.u32 %v6653, 4294901760
    %v6655 = vsub.f32 %v6653, %v6654
    %v6656 = vand.u32 %v6655, 4294901760
    %6657 = vmatpush.msra.mxu0 %v6656
    %v6658 = vand.u32 %v195, 4294901760
    %v6659 = vsub.f32 %v195, %v6658
    %v6660 = vand.u32 %v6659, 4294901760
    %v6661 = vsub.f32 %v6659, %v6660
    %v6662 = vand.u32 %v6661, 4294901760
    %6663 = vmatpush.msra.mxu0 %v6662
    %v6664 = vand.u32 %v191, 4294901760
    %v6665 = vsub.f32 %v191, %v6664
    %v6666 = vand.u32 %v6665, 4294901760
    %v6667 = vsub.f32 %v6665, %v6666
    %v6668 = vand.u32 %v6667, 4294901760
    %6669 = vmatpush.msra.mxu0 %v6668
    %v6670 = vand.u32 %v187, 4294901760
    %v6671 = vsub.f32 %v187, %v6670
    %v6672 = vand.u32 %v6671, 4294901760
    %v6673 = vsub.f32 %v6671, %v6672
    %v6674 = vand.u32 %v6673, 4294901760
    %6675 = vmatpush.msra.mxu0 %v6674
    %v6676 = vand.u32 %v183, 4294901760
    %v6677 = vsub.f32 %v183, %v6676
    %v6678 = vand.u32 %v6677, 4294901760
    %v6679 = vsub.f32 %v6677, %v6678
    %v6680 = vand.u32 %v6679, 4294901760
    %6681 = vmatpush.msra.mxu0 %v6680
    %v6682 = vand.u32 %v179, 4294901760
    %v6683 = vsub.f32 %v179, %v6682
    %v6684 = vand.u32 %v6683, 4294901760
    %v6685 = vsub.f32 %v6683, %v6684
    %v6686 = vand.u32 %v6685, 4294901760
    %6687 = vmatpush.msra.mxu0 %v6686
    %v6688 = vand.u32 %v175, 4294901760
    %v6689 = vsub.f32 %v175, %v6688
    %v6690 = vand.u32 %v6689, 4294901760
    %v6691 = vsub.f32 %v6689, %v6690
    %v6692 = vand.u32 %v6691, 4294901760
    %6693 = vmatpush.msra.mxu0 %v6692
    %v6694 = vand.u32 %v171, 4294901760
    %v6695 = vsub.f32 %v171, %v6694
    %v6696 = vand.u32 %v6695, 4294901760
    %v6697 = vsub.f32 %v6695, %v6696
    %v6698 = vand.u32 %v6697, 4294901760
    %6699 = vmatpush.msra.mxu0 %v6698
    %v6700 = vand.u32 %v167, 4294901760
    %v6701 = vsub.f32 %v167, %v6700
    %v6702 = vand.u32 %v6701, 4294901760
    %v6703 = vsub.f32 %v6701, %v6702
    %v6704 = vand.u32 %v6703, 4294901760
    %6705 = vmatpush.msra.mxu0 %v6704
    %v6706 = vand.u32 %v163, 4294901760
    %v6707 = vsub.f32 %v163, %v6706
    %v6708 = vand.u32 %v6707, 4294901760
    %v6709 = vsub.f32 %v6707, %v6708
    %v6710 = vand.u32 %v6709, 4294901760
    %6711 = vmatpush.msra.mxu0 %v6710
    %v6712 = vand.u32 %v159, 4294901760
    %v6713 = vsub.f32 %v159, %v6712
    %v6714 = vand.u32 %v6713, 4294901760
    %v6715 = vsub.f32 %v6713, %v6714
    %v6716 = vand.u32 %v6715, 4294901760
    %6717 = vmatpush.msra.mxu0 %v6716
    %v6718 = vand.u32 %v155, 4294901760
    %v6719 = vsub.f32 %v155, %v6718
    %v6720 = vand.u32 %v6719, 4294901760
    %v6721 = vsub.f32 %v6719, %v6720
    %v6722 = vand.u32 %v6721, 4294901760
    %6723 = vmatpush.msra.mxu0 %v6722
    %v6724 = vand.u32 %v151, 4294901760
    %v6725 = vsub.f32 %v151, %v6724
    %v6726 = vand.u32 %v6725, 4294901760
    %v6727 = vsub.f32 %v6725, %v6726
    %v6728 = vand.u32 %v6727, 4294901760
    %6729 = vmatpush.msra.mxu0 %v6728
    %v6730 = vand.u32 %v147, 4294901760
    %v6731 = vsub.f32 %v147, %v6730
    %v6732 = vand.u32 %v6731, 4294901760
    %v6733 = vsub.f32 %v6731, %v6732
    %v6734 = vand.u32 %v6733, 4294901760
    %6735 = vmatpush.msra.mxu0 %v6734
    %v6736 = vand.u32 %v5915, 4294901760
    %6737 = vmatmul.f32.gmra.mxu0 %v6736
    %v6738 = vpop.f32.mrf.mxu0
    %v6739 = vadd.f32 %v6638, %v6738
    %6740 = vdwg.mxu0
    %v6741 = vand.u32 %v207, 4294901760
    %v6742 = vsub.f32 %v207, %v6741
    %6743 = vmatpush.msra.mxu0 %v6742
    %v6744 = vand.u32 %v203, 4294901760
    %v6745 = vsub.f32 %v203, %v6744
    %6746 = vmatpush.msra.mxu0 %v6745
    %v6747 = vand.u32 %v199, 4294901760
    %v6748 = vsub.f32 %v199, %v6747
    %6749 = vmatpush.msra.mxu0 %v6748
    %v6750 = vand.u32 %v195, 4294901760
    %v6751 = vsub.f32 %v195, %v6750
    %6752 = vmatpush.msra.mxu0 %v6751
    %v6753 = vand.u32 %v191, 4294901760
    %v6754 = vsub.f32 %v191, %v6753
    %6755 = vmatpush.msra.mxu0 %v6754
    %v6756 = vand.u32 %v187, 4294901760
    %v6757 = vsub.f32 %v187, %v6756
    %6758 = vmatpush.msra.mxu0 %v6757
    %v6759 = vand.u32 %v183, 4294901760
    %v6760 = vsub.f32 %v183, %v6759
    %6761 = vmatpush.msra.mxu0 %v6760
    %v6762 = vand.u32 %v179, 4294901760
    %v6763 = vsub.f32 %v179, %v6762
    %6764 = vmatpush.msra.mxu0 %v6763
    %v6765 = vand.u32 %v175, 4294901760
    %v6766 = vsub.f32 %v175, %v6765
    %6767 = vmatpush.msra.mxu0 %v6766
    %v6768 = vand.u32 %v171, 4294901760
    %v6769 = vsub.f32 %v171, %v6768
    %6770 = vmatpush.msra.mxu0 %v6769
    %v6771 = vand.u32 %v167, 4294901760
    %v6772 = vsub.f32 %v167, %v6771
    %6773 = vmatpush.msra.mxu0 %v6772
    %v6774 = vand.u32 %v163, 4294901760
    %v6775 = vsub.f32 %v163, %v6774
    %6776 = vmatpush.msra.mxu0 %v6775
    %v6777 = vand.u32 %v159, 4294901760
    %v6778 = vsub.f32 %v159, %v6777
    %6779 = vmatpush.msra.mxu0 %v6778
    %v6780 = vand.u32 %v155, 4294901760
    %v6781 = vsub.f32 %v155, %v6780
    %6782 = vmatpush.msra.mxu0 %v6781
    %v6783 = vand.u32 %v151, 4294901760
    %v6784 = vsub.f32 %v151, %v6783
    %6785 = vmatpush.msra.mxu0 %v6784
    %v6786 = vand.u32 %v147, 4294901760
    %v6787 = vsub.f32 %v147, %v6786
    %6788 = vmatpush.msra.mxu0 %v6787
    %v6789 = vand.u32 %v5915, 4294901760
    %v6790 = vsub.f32 %v5915, %v6789
    %6791 = vmatmul.f32.gmra.mxu0 %v6790
    %v6792 = vpop.f32.mrf.mxu0
    %v6793 = vadd.f32 %v6739, %v6792
    %6794 = vdwg.mxu0
    %v6795 = vand.u32 %v207, 4294901760
    %6796 = vmatpush.msra.mxu0 %v6795
    %v6797 = vand.u32 %v203, 4294901760
    %6798 = vmatpush.msra.mxu0 %v6797
    %v6799 = vand.u32 %v199, 4294901760
    %6800 = vmatpush.msra.mxu0 %v6799
    %v6801 = vand.u32 %v195, 4294901760
    %6802 = vmatpush.msra.mxu0 %v6801
    %v6803 = vand.u32 %v191, 4294901760
    %6804 = vmatpush.msra.mxu0 %v6803
    %v6805 = vand.u32 %v187, 4294901760
    %6806 = vmatpush.msra.mxu0 %v6805
    %v6807 = vand.u32 %v183, 4294901760
    %6808 = vmatpush.msra.mxu0 %v6807
    %v6809 = vand.u32 %v179, 4294901760
    %6810 = vmatpush.msra.mxu0 %v6809
    %v6811 = vand.u32 %v175, 4294901760
    %6812 = vmatpush.msra.mxu0 %v6811
    %v6813 = vand.u32 %v171, 4294901760
    %6814 = vmatpush.msra.mxu0 %v6813
    %v6815 = vand.u32 %v167, 4294901760
    %6816 = vmatpush.msra.mxu0 %v6815
    %v6817 = vand.u32 %v163, 4294901760
    %6818 = vmatpush.msra.mxu0 %v6817
    %v6819 = vand.u32 %v159, 4294901760
    %6820 = vmatpush.msra.mxu0 %v6819
    %v6821 = vand.u32 %v155, 4294901760
    %6822 = vmatpush.msra.mxu0 %v6821
    %v6823 = vand.u32 %v151, 4294901760
    %6824 = vmatpush.msra.mxu0 %v6823
    %v6825 = vand.u32 %v147, 4294901760
    %6826 = vmatpush.msra.mxu0 %v6825
    %v6827 = vand.u32 %v5915, 4294901760
    %v6828 = vsub.f32 %v5915, %v6827
    %v6829 = vand.u32 %v6828, 4294901760
    %6830 = vmatmul.f32.gmra.mxu0 %v6829
    %v6831 = vpop.f32.mrf.mxu0
    %v6832 = vadd.f32 %v6793, %v6831
    %6833 = vdwg.mxu0
    %v6834 = vand.u32 %v207, 4294901760
    %v6835 = vsub.f32 %v207, %v6834
    %v6836 = vand.u32 %v6835, 4294901760
    %6837 = vmatpush.msra.mxu0 %v6836
    %v6838 = vand.u32 %v203, 4294901760
    %v6839 = vsub.f32 %v203, %v6838
    %v6840 = vand.u32 %v6839, 4294901760
    %6841 = vmatpush.msra.mxu0 %v6840
    %v6842 = vand.u32 %v199, 4294901760
    %v6843 = vsub.f32 %v199, %v6842
    %v6844 = vand.u32 %v6843, 4294901760
    %6845 = vmatpush.msra.mxu0 %v6844
    %v6846 = vand.u32 %v195, 4294901760
    %v6847 = vsub.f32 %v195, %v6846
    %v6848 = vand.u32 %v6847, 4294901760
    %6849 = vmatpush.msra.mxu0 %v6848
    %v6850 = vand.u32 %v191, 4294901760
    %v6851 = vsub.f32 %v191, %v6850
    %v6852 = vand.u32 %v6851, 4294901760
    %6853 = vmatpush.msra.mxu0 %v6852
    %v6854 = vand.u32 %v187, 4294901760
    %v6855 = vsub.f32 %v187, %v6854
    %v6856 = vand.u32 %v6855, 4294901760
    %6857 = vmatpush.msra.mxu0 %v6856
    %v6858 = vand.u32 %v183, 4294901760
    %v6859 = vsub.f32 %v183, %v6858
    %v6860 = vand.u32 %v6859, 4294901760
    %6861 = vmatpush.msra.mxu0 %v6860
    %v6862 = vand.u32 %v179, 4294901760
    %v6863 = vsub.f32 %v179, %v6862
    %v6864 = vand.u32 %v6863, 4294901760
    %6865 = vmatpush.msra.mxu0 %v6864
    %v6866 = vand.u32 %v175, 4294901760
    %v6867 = vsub.f32 %v175, %v6866
    %v6868 = vand.u32 %v6867, 4294901760
    %6869 = vmatpush.msra.mxu0 %v6868
    %v6870 = vand.u32 %v171, 4294901760
    %v6871 = vsub.f32 %v171, %v6870
    %v6872 = vand.u32 %v6871, 4294901760
    %6873 = vmatpush.msra.mxu0 %v6872
    %v6874 = vand.u32 %v167, 4294901760
    %v6875 = vsub.f32 %v167, %v6874
    %v6876 = vand.u32 %v6875, 4294901760
    %6877 = vmatpush.msra.mxu0 %v6876
    %v6878 = vand.u32 %v163, 4294901760
    %v6879 = vsub.f32 %v163, %v6878
    %v6880 = vand.u32 %v6879, 4294901760
    %6881 = vmatpush.msra.mxu0 %v6880
    %v6882 = vand.u32 %v159, 4294901760
    %v6883 = vsub.f32 %v159, %v6882
    %v6884 = vand.u32 %v6883, 4294901760
    %6885 = vmatpush.msra.mxu0 %v6884
    %v6886 = vand.u32 %v155, 4294901760
    %v6887 = vsub.f32 %v155, %v6886
    %v6888 = vand.u32 %v6887, 4294901760
    %6889 = vmatpush.msra.mxu0 %v6888
    %v6890 = vand.u32 %v151, 4294901760
    %v6891 = vsub.f32 %v151, %v6890
    %v6892 = vand.u32 %v6891, 4294901760
    %6893 = vmatpush.msra.mxu0 %v6892
    %v6894 = vand.u32 %v147, 4294901760
    %v6895 = vsub.f32 %v147, %v6894
    %v6896 = vand.u32 %v6895, 4294901760
    %6897 = vmatpush.msra.mxu0 %v6896
    %v6898 = vand.u32 %v5915, 4294901760
    %6899 = vmatmul.f32.gmra.mxu0 %v6898
    %v6900 = vpop.f32.mrf.mxu0
    %v6901 = vadd.f32 %v6832, %v6900
    %6902 = vdwg.mxu0
    %v6903 = vand.u32 %v207, 4294901760
    %6904 = vmatpush.msra.mxu0 %v6903
    %v6905 = vand.u32 %v203, 4294901760
    %6906 = vmatpush.msra.mxu0 %v6905
    %v6907 = vand.u32 %v199, 4294901760
    %6908 = vmatpush.msra.mxu0 %v6907
    %v6909 = vand.u32 %v195, 4294901760
    %6910 = vmatpush.msra.mxu0 %v6909
    %v6911 = vand.u32 %v191, 4294901760
    %6912 = vmatpush.msra.mxu0 %v6911
    %v6913 = vand.u32 %v187, 4294901760
    %6914 = vmatpush.msra.mxu0 %v6913
    %v6915 = vand.u32 %v183, 4294901760
    %6916 = vmatpush.msra.mxu0 %v6915
    %v6917 = vand.u32 %v179, 4294901760
    %6918 = vmatpush.msra.mxu0 %v6917
    %v6919 = vand.u32 %v175, 4294901760
    %6920 = vmatpush.msra.mxu0 %v6919
    %v6921 = vand.u32 %v171, 4294901760
    %6922 = vmatpush.msra.mxu0 %v6921
    %v6923 = vand.u32 %v167, 4294901760
    %6924 = vmatpush.msra.mxu0 %v6923
    %v6925 = vand.u32 %v163, 4294901760
    %6926 = vmatpush.msra.mxu0 %v6925
    %v6927 = vand.u32 %v159, 4294901760
    %6928 = vmatpush.msra.mxu0 %v6927
    %v6929 = vand.u32 %v155, 4294901760
    %6930 = vmatpush.msra.mxu0 %v6929
    %v6931 = vand.u32 %v151, 4294901760
    %6932 = vmatpush.msra.mxu0 %v6931
    %v6933 = vand.u32 %v147, 4294901760
    %6934 = vmatpush.msra.mxu0 %v6933
    %v6935 = vand.u32 %v5915, 4294901760
    %6936 = vmatmul.f32.gmra.mxu0 %v6935
    %v6937 = vpop.f32.mrf.mxu0
    %v6938 = vadd.f32 %v6901, %v6937
    %6939 = vdwg.mxu0
    %v6940 = vand.u32 %v271, 4294901760
    %6941 = vmatpush.msra.mxu0 %v6940
    %v6942 = vand.u32 %v267, 4294901760
    %6943 = vmatpush.msra.mxu0 %v6942
    %v6944 = vand.u32 %v263, 4294901760
    %6945 = vmatpush.msra.mxu0 %v6944
    %v6946 = vand.u32 %v259, 4294901760
    %6947 = vmatpush.msra.mxu0 %v6946
    %v6948 = vand.u32 %v255, 4294901760
    %6949 = vmatpush.msra.mxu0 %v6948
    %v6950 = vand.u32 %v251, 4294901760
    %6951 = vmatpush.msra.mxu0 %v6950
    %v6952 = vand.u32 %v247, 4294901760
    %6953 = vmatpush.msra.mxu0 %v6952
    %v6954 = vand.u32 %v243, 4294901760
    %6955 = vmatpush.msra.mxu0 %v6954
    %v6956 = vand.u32 %v239, 4294901760
    %6957 = vmatpush.msra.mxu0 %v6956
    %v6958 = vand.u32 %v235, 4294901760
    %6959 = vmatpush.msra.mxu0 %v6958
    %v6960 = vand.u32 %v231, 4294901760
    %6961 = vmatpush.msra.mxu0 %v6960
    %v6962 = vand.u32 %v227, 4294901760
    %6963 = vmatpush.msra.mxu0 %v6962
    %v6964 = vand.u32 %v223, 4294901760
    %6965 = vmatpush.msra.mxu0 %v6964
    %v6966 = vand.u32 %v219, 4294901760
    %6967 = vmatpush.msra.mxu0 %v6966
    %v6968 = vand.u32 %v215, 4294901760
    %6969 = vmatpush.msra.mxu0 %v6968
    %v6970 = vand.u32 %v211, 4294901760
    %6971 = vmatpush.msra.mxu0 %v6970
    %v6972 = vand.u32 %v5916, 4294901760
    %v6973 = vsub.f32 %v5916, %v6972
    %v6974 = vand.u32 %v6973, 4294901760
    %v6975 = vsub.f32 %v6973, %v6974
    %v6976 = vand.u32 %v6975, 4294901760
    %6977 = vmatmul.f32.gmra.mxu0 %v6976
    %v6978 = vpop.f32.mrf.mxu0
    %v6979 = vadd.f32 %v6938, %v6978
    %6980 = vdwg.mxu0
    %v6981 = vand.u32 %v271, 4294901760
    %v6982 = vsub.f32 %v271, %v6981
    %v6983 = vand.u32 %v6982, 4294901760
    %v6984 = vsub.f32 %v6982, %v6983
    %v6985 = vand.u32 %v6984, 4294901760
    %6986 = vmatpush.msra.mxu0 %v6985
    %v6987 = vand.u32 %v267, 4294901760
    %v6988 = vsub.f32 %v267, %v6987
    %v6989 = vand.u32 %v6988, 4294901760
    %v6990 = vsub.f32 %v6988, %v6989
    %v6991 = vand.u32 %v6990, 4294901760
    %6992 = vmatpush.msra.mxu0 %v6991
    %v6993 = vand.u32 %v263, 4294901760
    %v6994 = vsub.f32 %v263, %v6993
    %v6995 = vand.u32 %v6994, 4294901760
    %v6996 = vsub.f32 %v6994, %v6995
    %v6997 = vand.u32 %v6996, 4294901760
    %6998 = vmatpush.msra.mxu0 %v6997
    %v6999 = vand.u32 %v259, 4294901760
    %v7000 = vsub.f32 %v259, %v6999
    %v7001 = vand.u32 %v7000, 4294901760
    %v7002 = vsub.f32 %v7000, %v7001
    %v7003 = vand.u32 %v7002, 4294901760
    %7004 = vmatpush.msra.mxu0 %v7003
    %v7005 = vand.u32 %v255, 4294901760
    %v7006 = vsub.f32 %v255, %v7005
    %v7007 = vand.u32 %v7006, 4294901760
    %v7008 = vsub.f32 %v7006, %v7007
    %v7009 = vand.u32 %v7008, 4294901760
    %7010 = vmatpush.msra.mxu0 %v7009
    %v7011 = vand.u32 %v251, 4294901760
    %v7012 = vsub.f32 %v251, %v7011
    %v7013 = vand.u32 %v7012, 4294901760
    %v7014 = vsub.f32 %v7012, %v7013
    %v7015 = vand.u32 %v7014, 4294901760
    %7016 = vmatpush.msra.mxu0 %v7015
    %v7017 = vand.u32 %v247, 4294901760
    %v7018 = vsub.f32 %v247, %v7017
    %v7019 = vand.u32 %v7018, 4294901760
    %v7020 = vsub.f32 %v7018, %v7019
    %v7021 = vand.u32 %v7020, 4294901760
    %7022 = vmatpush.msra.mxu0 %v7021
    %v7023 = vand.u32 %v243, 4294901760
    %v7024 = vsub.f32 %v243, %v7023
    %v7025 = vand.u32 %v7024, 4294901760
    %v7026 = vsub.f32 %v7024, %v7025
    %v7027 = vand.u32 %v7026, 4294901760
    %7028 = vmatpush.msra.mxu0 %v7027
    %v7029 = vand.u32 %v239, 4294901760
    %v7030 = vsub.f32 %v239, %v7029
    %v7031 = vand.u32 %v7030, 4294901760
    %v7032 = vsub.f32 %v7030, %v7031
    %v7033 = vand.u32 %v7032, 4294901760
    %7034 = vmatpush.msra.mxu0 %v7033
    %v7035 = vand.u32 %v235, 4294901760
    %v7036 = vsub.f32 %v235, %v7035
    %v7037 = vand.u32 %v7036, 4294901760
    %v7038 = vsub.f32 %v7036, %v7037
    %v7039 = vand.u32 %v7038, 4294901760
    %7040 = vmatpush.msra.mxu0 %v7039
    %v7041 = vand.u32 %v231, 4294901760
    %v7042 = vsub.f32 %v231, %v7041
    %v7043 = vand.u32 %v7042, 4294901760
    %v7044 = vsub.f32 %v7042, %v7043
    %v7045 = vand.u32 %v7044, 4294901760
    %7046 = vmatpush.msra.mxu0 %v7045
    %v7047 = vand.u32 %v227, 4294901760
    %v7048 = vsub.f32 %v227, %v7047
    %v7049 = vand.u32 %v7048, 4294901760
    %v7050 = vsub.f32 %v7048, %v7049
    %v7051 = vand.u32 %v7050, 4294901760
    %7052 = vmatpush.msra.mxu0 %v7051
    %v7053 = vand.u32 %v223, 4294901760
    %v7054 = vsub.f32 %v223, %v7053
    %v7055 = vand.u32 %v7054, 4294901760
    %v7056 = vsub.f32 %v7054, %v7055
    %v7057 = vand.u32 %v7056, 4294901760
    %7058 = vmatpush.msra.mxu0 %v7057
    %v7059 = vand.u32 %v219, 4294901760
    %v7060 = vsub.f32 %v219, %v7059
    %v7061 = vand.u32 %v7060, 4294901760
    %v7062 = vsub.f32 %v7060, %v7061
    %v7063 = vand.u32 %v7062, 4294901760
    %7064 = vmatpush.msra.mxu0 %v7063
    %v7065 = vand.u32 %v215, 4294901760
    %v7066 = vsub.f32 %v215, %v7065
    %v7067 = vand.u32 %v7066, 4294901760
    %v7068 = vsub.f32 %v7066, %v7067
    %v7069 = vand.u32 %v7068, 4294901760
    %7070 = vmatpush.msra.mxu0 %v7069
    %v7071 = vand.u32 %v211, 4294901760
    %v7072 = vsub.f32 %v211, %v7071
    %v7073 = vand.u32 %v7072, 4294901760
    %v7074 = vsub.f32 %v7072, %v7073
    %v7075 = vand.u32 %v7074, 4294901760
    %7076 = vmatpush.msra.mxu0 %v7075
    %v7077 = vand.u32 %v5916, 4294901760
    %7078 = vmatmul.f32.gmra.mxu0 %v7077
    %v7079 = vpop.f32.mrf.mxu0
    %v7080 = vadd.f32 %v6979, %v7079
    %7081 = vdwg.mxu0
    %v7082 = vand.u32 %v271, 4294901760
    %v7083 = vsub.f32 %v271, %v7082
    %7084 = vmatpush.msra.mxu0 %v7083
    %v7085 = vand.u32 %v267, 4294901760
    %v7086 = vsub.f32 %v267, %v7085
    %7087 = vmatpush.msra.mxu0 %v7086
    %v7088 = vand.u32 %v263, 4294901760
    %v7089 = vsub.f32 %v263, %v7088
    %7090 = vmatpush.msra.mxu0 %v7089
    %v7091 = vand.u32 %v259, 4294901760
    %v7092 = vsub.f32 %v259, %v7091
    %7093 = vmatpush.msra.mxu0 %v7092
    %v7094 = vand.u32 %v255, 4294901760
    %v7095 = vsub.f32 %v255, %v7094
    %7096 = vmatpush.msra.mxu0 %v7095
    %v7097 = vand.u32 %v251, 4294901760
    %v7098 = vsub.f32 %v251, %v7097
    %7099 = vmatpush.msra.mxu0 %v7098
    %v7100 = vand.u32 %v247, 4294901760
    %v7101 = vsub.f32 %v247, %v7100
    %7102 = vmatpush.msra.mxu0 %v7101
    %v7103 = vand.u32 %v243, 4294901760
    %v7104 = vsub.f32 %v243, %v7103
    %7105 = vmatpush.msra.mxu0 %v7104
    %v7106 = vand.u32 %v239, 4294901760
    %v7107 = vsub.f32 %v239, %v7106
    %7108 = vmatpush.msra.mxu0 %v7107
    %v7109 = vand.u32 %v235, 4294901760
    %v7110 = vsub.f32 %v235, %v7109
    %7111 = vmatpush.msra.mxu0 %v7110
    %v7112 = vand.u32 %v231, 4294901760
    %v7113 = vsub.f32 %v231, %v7112
    %7114 = vmatpush.msra.mxu0 %v7113
    %v7115 = vand.u32 %v227, 4294901760
    %v7116 = vsub.f32 %v227, %v7115
    %7117 = vmatpush.msra.mxu0 %v7116
    %v7118 = vand.u32 %v223, 4294901760
    %v7119 = vsub.f32 %v223, %v7118
    %7120 = vmatpush.msra.mxu0 %v7119
    %v7121 = vand.u32 %v219, 4294901760
    %v7122 = vsub.f32 %v219, %v7121
    %7123 = vmatpush.msra.mxu0 %v7122
    %v7124 = vand.u32 %v215, 4294901760
    %v7125 = vsub.f32 %v215, %v7124
    %7126 = vmatpush.msra.mxu0 %v7125
    %v7127 = vand.u32 %v211, 4294901760
    %v7128 = vsub.f32 %v211, %v7127
    %7129 = vmatpush.msra.mxu0 %v7128
    %v7130 = vand.u32 %v5916, 4294901760
    %v7131 = vsub.f32 %v5916, %v7130
    %7132 = vmatmul.f32.gmra.mxu0 %v7131
    %v7133 = vpop.f32.mrf.mxu0
    %v7134 = vadd.f32 %v7080, %v7133
    %7135 = vdwg.mxu0
    %v7136 = vand.u32 %v271, 4294901760
    %7137 = vmatpush.msra.mxu0 %v7136
    %v7138 = vand.u32 %v267, 4294901760
    %7139 = vmatpush.msra.mxu0 %v7138
    %v7140 = vand.u32 %v263, 4294901760
    %7141 = vmatpush.msra.mxu0 %v7140
    %v7142 = vand.u32 %v259, 4294901760
    %7143 = vmatpush.msra.mxu0 %v7142
    %v7144 = vand.u32 %v255, 4294901760
    %7145 = vmatpush.msra.mxu0 %v7144
    %v7146 = vand.u32 %v251, 4294901760
    %7147 = vmatpush.msra.mxu0 %v7146
    %v7148 = vand.u32 %v247, 4294901760
    %7149 = vmatpush.msra.mxu0 %v7148
    %v7150 = vand.u32 %v243, 4294901760
    %7151 = vmatpush.msra.mxu0 %v7150
    %v7152 = vand.u32 %v239, 4294901760
    %7153 = vmatpush.msra.mxu0 %v7152
    %v7154 = vand.u32 %v235, 4294901760
    %7155 = vmatpush.msra.mxu0 %v7154
    %v7156 = vand.u32 %v231, 4294901760
    %7157 = vmatpush.msra.mxu0 %v7156
    %v7158 = vand.u32 %v227, 4294901760
    %7159 = vmatpush.msra.mxu0 %v7158
    %v7160 = vand.u32 %v223, 4294901760
    %7161 = vmatpush.msra.mxu0 %v7160
    %v7162 = vand.u32 %v219, 4294901760
    %7163 = vmatpush.msra.mxu0 %v7162
    %v7164 = vand.u32 %v215, 4294901760
    %7165 = vmatpush.msra.mxu0 %v7164
    %v7166 = vand.u32 %v211, 4294901760
    %7167 = vmatpush.msra.mxu0 %v7166
    %v7168 = vand.u32 %v5916, 4294901760
    %v7169 = vsub.f32 %v5916, %v7168
    %v7170 = vand.u32 %v7169, 4294901760
    %7171 = vmatmul.f32.gmra.mxu0 %v7170
    %v7172 = vpop.f32.mrf.mxu0
    %v7173 = vadd.f32 %v7134, %v7172
    %7174 = vdwg.mxu0
    %v7175 = vand.u32 %v271, 4294901760
    %v7176 = vsub.f32 %v271, %v7175
    %v7177 = vand.u32 %v7176, 4294901760
    %7178 = vmatpush.msra.mxu0 %v7177
    %v7179 = vand.u32 %v267, 4294901760
    %v7180 = vsub.f32 %v267, %v7179
    %v7181 = vand.u32 %v7180, 4294901760
    %7182 = vmatpush.msra.mxu0 %v7181
    %v7183 = vand.u32 %v263, 4294901760
    %v7184 = vsub.f32 %v263, %v7183
    %v7185 = vand.u32 %v7184, 4294901760
    %7186 = vmatpush.msra.mxu0 %v7185
    %v7187 = vand.u32 %v259, 4294901760
    %v7188 = vsub.f32 %v259, %v7187
    %v7189 = vand.u32 %v7188, 4294901760
    %7190 = vmatpush.msra.mxu0 %v7189
    %v7191 = vand.u32 %v255, 4294901760
    %v7192 = vsub.f32 %v255, %v7191
    %v7193 = vand.u32 %v7192, 4294901760
    %7194 = vmatpush.msra.mxu0 %v7193
    %v7195 = vand.u32 %v251, 4294901760
    %v7196 = vsub.f32 %v251, %v7195
    %v7197 = vand.u32 %v7196, 4294901760
    %7198 = vmatpush.msra.mxu0 %v7197
    %v7199 = vand.u32 %v247, 4294901760
    %v7200 = vsub.f32 %v247, %v7199
    %v7201 = vand.u32 %v7200, 4294901760
    %7202 = vmatpush.msra.mxu0 %v7201
    %v7203 = vand.u32 %v243, 4294901760
    %v7204 = vsub.f32 %v243, %v7203
    %v7205 = vand.u32 %v7204, 4294901760
    %7206 = vmatpush.msra.mxu0 %v7205
    %v7207 = vand.u32 %v239, 4294901760
    %v7208 = vsub.f32 %v239, %v7207
    %v7209 = vand.u32 %v7208, 4294901760
    %7210 = vmatpush.msra.mxu0 %v7209
    %v7211 = vand.u32 %v235, 4294901760
    %v7212 = vsub.f32 %v235, %v7211
    %v7213 = vand.u32 %v7212, 4294901760
    %7214 = vmatpush.msra.mxu0 %v7213
    %v7215 = vand.u32 %v231, 4294901760
    %v7216 = vsub.f32 %v231, %v7215
    %v7217 = vand.u32 %v7216, 4294901760
    %7218 = vmatpush.msra.mxu0 %v7217
    %v7219 = vand.u32 %v227, 4294901760
    %v7220 = vsub.f32 %v227, %v7219
    %v7221 = vand.u32 %v7220, 4294901760
    %7222 = vmatpush.msra.mxu0 %v7221
    %v7223 = vand.u32 %v223, 4294901760
    %v7224 = vsub.f32 %v223, %v7223
    %v7225 = vand.u32 %v7224, 4294901760
    %7226 = vmatpush.msra.mxu0 %v7225
    %v7227 = vand.u32 %v219, 4294901760
    %v7228 = vsub.f32 %v219, %v7227
    %v7229 = vand.u32 %v7228, 4294901760
    %7230 = vmatpush.msra.mxu0 %v7229
    %v7231 = vand.u32 %v215, 4294901760
    %v7232 = vsub.f32 %v215, %v7231
    %v7233 = vand.u32 %v7232, 4294901760
    %7234 = vmatpush.msra.mxu0 %v7233
    %v7235 = vand.u32 %v211, 4294901760
    %v7236 = vsub.f32 %v211, %v7235
    %v7237 = vand.u32 %v7236, 4294901760
    %7238 = vmatpush.msra.mxu0 %v7237
    %v7239 = vand.u32 %v5916, 4294901760
    %7240 = vmatmul.f32.gmra.mxu0 %v7239
    %v7241 = vpop.f32.mrf.mxu0
    %v7242 = vadd.f32 %v7173, %v7241
    %7243 = vdwg.mxu0
    %v7244 = vand.u32 %v271, 4294901760
    %7245 = vmatpush.msra.mxu0 %v7244
    %v7246 = vand.u32 %v267, 4294901760
    %7247 = vmatpush.msra.mxu0 %v7246
    %v7248 = vand.u32 %v263, 4294901760
    %7249 = vmatpush.msra.mxu0 %v7248
    %v7250 = vand.u32 %v259, 4294901760
    %7251 = vmatpush.msra.mxu0 %v7250
    %v7252 = vand.u32 %v255, 4294901760
    %7253 = vmatpush.msra.mxu0 %v7252
    %v7254 = vand.u32 %v251, 4294901760
    %7255 = vmatpush.msra.mxu0 %v7254
    %v7256 = vand.u32 %v247, 4294901760
    %7257 = vmatpush.msra.mxu0 %v7256
    %v7258 = vand.u32 %v243, 4294901760
    %7259 = vmatpush.msra.mxu0 %v7258
    %v7260 = vand.u32 %v239, 4294901760
    %7261 = vmatpush.msra.mxu0 %v7260
    %v7262 = vand.u32 %v235, 4294901760
    %7263 = vmatpush.msra.mxu0 %v7262
    %v7264 = vand.u32 %v231, 4294901760
    %7265 = vmatpush.msra.mxu0 %v7264
    %v7266 = vand.u32 %v227, 4294901760
    %7267 = vmatpush.msra.mxu0 %v7266
    %v7268 = vand.u32 %v223, 4294901760
    %7269 = vmatpush.msra.mxu0 %v7268
    %v7270 = vand.u32 %v219, 4294901760
    %7271 = vmatpush.msra.mxu0 %v7270
    %v7272 = vand.u32 %v215, 4294901760
    %7273 = vmatpush.msra.mxu0 %v7272
    %v7274 = vand.u32 %v211, 4294901760
    %7275 = vmatpush.msra.mxu0 %v7274
    %v7276 = vand.u32 %v5916, 4294901760
    %7277 = vmatmul.f32.gmra.mxu0 %v7276
    %v7278 = vpop.f32.mrf.mxu0
    %v7279 = vadd.f32 %v7242, %v7278
    %7280 = vdwg.mxu0
    %v7281 = vand.u32 %v80, 4294901760
    %7282 = vmatpush.msra.mxu0 %v7281
    %v7283 = vand.u32 %v76, 4294901760
    %7284 = vmatpush.msra.mxu0 %v7283
    %v7285 = vand.u32 %v72, 4294901760
    %7286 = vmatpush.msra.mxu0 %v7285
    %v7287 = vand.u32 %v68, 4294901760
    %7288 = vmatpush.msra.mxu0 %v7287
    %v7289 = vand.u32 %v64, 4294901760
    %7290 = vmatpush.msra.mxu0 %v7289
    %v7291 = vand.u32 %v60, 4294901760
    %7292 = vmatpush.msra.mxu0 %v7291
    %v7293 = vand.u32 %v56, 4294901760
    %7294 = vmatpush.msra.mxu0 %v7293
    %v7295 = vand.u32 %v52, 4294901760
    %7296 = vmatpush.msra.mxu0 %v7295
    %v7297 = vand.u32 %v48, 4294901760
    %7298 = vmatpush.msra.mxu0 %v7297
    %v7299 = vand.u32 %v44, 4294901760
    %7300 = vmatpush.msra.mxu0 %v7299
    %v7301 = vand.u32 %v40, 4294901760
    %7302 = vmatpush.msra.mxu0 %v7301
    %v7303 = vand.u32 %v36, 4294901760
    %7304 = vmatpush.msra.mxu0 %v7303
    %v7305 = vand.u32 %v32, 4294901760
    %7306 = vmatpush.msra.mxu0 %v7305
    %v7307 = vand.u32 %v28, 4294901760
    %7308 = vmatpush.msra.mxu0 %v7307
    %v7309 = vand.u32 %v24, 4294901760
    %7310 = vmatpush.msra.mxu0 %v7309
    %v7311 = vand.u32 %v20, 4294901760
    %7312 = vmatpush.msra.mxu0 %v7311
    %v7313 = vand.u32 %v5913, 4294901760
    %v7314 = vsub.f32 %v5913, %v7313
    %v7315 = vand.u32 %v7314, 4294901760
    %v7316 = vsub.f32 %v7314, %v7315
    %v7317 = vand.u32 %v7316, 4294901760
    %7318 = vmatmul.f32.gmra.mxu0 %v7317
    %v7319 = vpop.f32.mrf.mxu0
    %v7320 = vadd.f32 %v278, %v7319
    %7321 = vdwg.mxu0
    %v7322 = vand.u32 %v80, 4294901760
    %v7323 = vsub.f32 %v80, %v7322
    %v7324 = vand.u32 %v7323, 4294901760
    %v7325 = vsub.f32 %v7323, %v7324
    %v7326 = vand.u32 %v7325, 4294901760
    %7327 = vmatpush.msra.mxu0 %v7326
    %v7328 = vand.u32 %v76, 4294901760
    %v7329 = vsub.f32 %v76, %v7328
    %v7330 = vand.u32 %v7329, 4294901760
    %v7331 = vsub.f32 %v7329, %v7330
    %v7332 = vand.u32 %v7331, 4294901760
    %7333 = vmatpush.msra.mxu0 %v7332
    %v7334 = vand.u32 %v72, 4294901760
    %v7335 = vsub.f32 %v72, %v7334
    %v7336 = vand.u32 %v7335, 4294901760
    %v7337 = vsub.f32 %v7335, %v7336
    %v7338 = vand.u32 %v7337, 4294901760
    %7339 = vmatpush.msra.mxu0 %v7338
    %v7340 = vand.u32 %v68, 4294901760
    %v7341 = vsub.f32 %v68, %v7340
    %v7342 = vand.u32 %v7341, 4294901760
    %v7343 = vsub.f32 %v7341, %v7342
    %v7344 = vand.u32 %v7343, 4294901760
    %7345 = vmatpush.msra.mxu0 %v7344
    %v7346 = vand.u32 %v64, 4294901760
    %v7347 = vsub.f32 %v64, %v7346
    %v7348 = vand.u32 %v7347, 4294901760
    %v7349 = vsub.f32 %v7347, %v7348
    %v7350 = vand.u32 %v7349, 4294901760
    %7351 = vmatpush.msra.mxu0 %v7350
    %v7352 = vand.u32 %v60, 4294901760
    %v7353 = vsub.f32 %v60, %v7352
    %v7354 = vand.u32 %v7353, 4294901760
    %v7355 = vsub.f32 %v7353, %v7354
    %v7356 = vand.u32 %v7355, 4294901760
    %7357 = vmatpush.msra.mxu0 %v7356
    %v7358 = vand.u32 %v56, 4294901760
    %v7359 = vsub.f32 %v56, %v7358
    %v7360 = vand.u32 %v7359, 4294901760
    %v7361 = vsub.f32 %v7359, %v7360
    %v7362 = vand.u32 %v7361, 4294901760
    %7363 = vmatpush.msra.mxu0 %v7362
    %v7364 = vand.u32 %v52, 4294901760
    %v7365 = vsub.f32 %v52, %v7364
    %v7366 = vand.u32 %v7365, 4294901760
    %v7367 = vsub.f32 %v7365, %v7366
    %v7368 = vand.u32 %v7367, 4294901760
    %7369 = vmatpush.msra.mxu0 %v7368
    %v7370 = vand.u32 %v48, 4294901760
    %v7371 = vsub.f32 %v48, %v7370
    %v7372 = vand.u32 %v7371, 4294901760
    %v7373 = vsub.f32 %v7371, %v7372
    %v7374 = vand.u32 %v7373, 4294901760
    %7375 = vmatpush.msra.mxu0 %v7374
    %v7376 = vand.u32 %v44, 4294901760
    %v7377 = vsub.f32 %v44, %v7376
    %v7378 = vand.u32 %v7377, 4294901760
    %v7379 = vsub.f32 %v7377, %v7378
    %v7380 = vand.u32 %v7379, 4294901760
    %7381 = vmatpush.msra.mxu0 %v7380
    %v7382 = vand.u32 %v40, 4294901760
    %v7383 = vsub.f32 %v40, %v7382
    %v7384 = vand.u32 %v7383, 4294901760
    %v7385 = vsub.f32 %v7383, %v7384
    %v7386 = vand.u32 %v7385, 4294901760
    %7387 = vmatpush.msra.mxu0 %v7386
    %v7388 = vand.u32 %v36, 4294901760
    %v7389 = vsub.f32 %v36, %v7388
    %v7390 = vand.u32 %v7389, 4294901760
    %v7391 = vsub.f32 %v7389, %v7390
    %v7392 = vand.u32 %v7391, 4294901760
    %7393 = vmatpush.msra.mxu0 %v7392
    %v7394 = vand.u32 %v32, 4294901760
    %v7395 = vsub.f32 %v32, %v7394
    %v7396 = vand.u32 %v7395, 4294901760
    %v7397 = vsub.f32 %v7395, %v7396
    %v7398 = vand.u32 %v7397, 4294901760
    %7399 = vmatpush.msra.mxu0 %v7398
    %v7400 = vand.u32 %v28, 4294901760
    %v7401 = vsub.f32 %v28, %v7400
    %v7402 = vand.u32 %v7401, 4294901760
    %v7403 = vsub.f32 %v7401, %v7402
    %v7404 = vand.u32 %v7403, 4294901760
    %7405 = vmatpush.msra.mxu0 %v7404
    %v7406 = vand.u32 %v24, 4294901760
    %v7407 = vsub.f32 %v24, %v7406
    %v7408 = vand.u32 %v7407, 4294901760
    %v7409 = vsub.f32 %v7407, %v7408
    %v7410 = vand.u32 %v7409, 4294901760
    %7411 = vmatpush.msra.mxu0 %v7410
    %v7412 = vand.u32 %v20, 4294901760
    %v7413 = vsub.f32 %v20, %v7412
    %v7414 = vand.u32 %v7413, 4294901760
    %v7415 = vsub.f32 %v7413, %v7414
    %v7416 = vand.u32 %v7415, 4294901760
    %7417 = vmatpush.msra.mxu0 %v7416
    %v7418 = vand.u32 %v5913, 4294901760
    %7419 = vmatmul.f32.gmra.mxu0 %v7418
    %v7420 = vpop.f32.mrf.mxu0
    %v7421 = vadd.f32 %v7320, %v7420
    %7422 = vdwg.mxu0
    %v7423 = vand.u32 %v80, 4294901760
    %v7424 = vsub.f32 %v80, %v7423
    %7425 = vmatpush.msra.mxu0 %v7424
    %v7426 = vand.u32 %v76, 4294901760
    %v7427 = vsub.f32 %v76, %v7426
    %7428 = vmatpush.msra.mxu0 %v7427
    %v7429 = vand.u32 %v72, 4294901760
    %v7430 = vsub.f32 %v72, %v7429
    %7431 = vmatpush.msra.mxu0 %v7430
    %v7432 = vand.u32 %v68, 4294901760
    %v7433 = vsub.f32 %v68, %v7432
    %7434 = vmatpush.msra.mxu0 %v7433
    %v7435 = vand.u32 %v64, 4294901760
    %v7436 = vsub.f32 %v64, %v7435
    %7437 = vmatpush.msra.mxu0 %v7436
    %v7438 = vand.u32 %v60, 4294901760
    %v7439 = vsub.f32 %v60, %v7438
    %7440 = vmatpush.msra.mxu0 %v7439
    %v7441 = vand.u32 %v56, 4294901760
    %v7442 = vsub.f32 %v56, %v7441
    %7443 = vmatpush.msra.mxu0 %v7442
    %v7444 = vand.u32 %v52, 4294901760
    %v7445 = vsub.f32 %v52, %v7444
    %7446 = vmatpush.msra.mxu0 %v7445
    %v7447 = vand.u32 %v48, 4294901760
    %v7448 = vsub.f32 %v48, %v7447
    %7449 = vmatpush.msra.mxu0 %v7448
    %v7450 = vand.u32 %v44, 4294901760
    %v7451 = vsub.f32 %v44, %v7450
    %7452 = vmatpush.msra.mxu0 %v7451
    %v7453 = vand.u32 %v40, 4294901760
    %v7454 = vsub.f32 %v40, %v7453
    %7455 = vmatpush.msra.mxu0 %v7454
    %v7456 = vand.u32 %v36, 4294901760
    %v7457 = vsub.f32 %v36, %v7456
    %7458 = vmatpush.msra.mxu0 %v7457
    %v7459 = vand.u32 %v32, 4294901760
    %v7460 = vsub.f32 %v32, %v7459
    %7461 = vmatpush.msra.mxu0 %v7460
    %v7462 = vand.u32 %v28, 4294901760
    %v7463 = vsub.f32 %v28, %v7462
    %7464 = vmatpush.msra.mxu0 %v7463
    %v7465 = vand.u32 %v24, 4294901760
    %v7466 = vsub.f32 %v24, %v7465
    %7467 = vmatpush.msra.mxu0 %v7466
    %v7468 = vand.u32 %v20, 4294901760
    %v7469 = vsub.f32 %v20, %v7468
    %7470 = vmatpush.msra.mxu0 %v7469
    %v7471 = vand.u32 %v5913, 4294901760
    %v7472 = vsub.f32 %v5913, %v7471
    %7473 = vmatmul.f32.gmra.mxu0 %v7472
    %v7474 = vpop.f32.mrf.mxu0
    %v7475 = vadd.f32 %v7421, %v7474
    %7476 = vdwg.mxu0
    %v7477 = vand.u32 %v80, 4294901760
    %7478 = vmatpush.msra.mxu0 %v7477
    %v7479 = vand.u32 %v76, 4294901760
    %7480 = vmatpush.msra.mxu0 %v7479
    %v7481 = vand.u32 %v72, 4294901760
    %7482 = vmatpush.msra.mxu0 %v7481
    %v7483 = vand.u32 %v68, 4294901760
    %7484 = vmatpush.msra.mxu0 %v7483
    %v7485 = vand.u32 %v64, 4294901760
    %7486 = vmatpush.msra.mxu0 %v7485
    %v7487 = vand.u32 %v60, 4294901760
    %7488 = vmatpush.msra.mxu0 %v7487
    %v7489 = vand.u32 %v56, 4294901760
    %7490 = vmatpush.msra.mxu0 %v7489
    %v7491 = vand.u32 %v52, 4294901760
    %7492 = vmatpush.msra.mxu0 %v7491
    %v7493 = vand.u32 %v48, 4294901760
    %7494 = vmatpush.msra.mxu0 %v7493
    %v7495 = vand.u32 %v44, 4294901760
    %7496 = vmatpush.msra.mxu0 %v7495
    %v7497 = vand.u32 %v40, 4294901760
    %7498 = vmatpush.msra.mxu0 %v7497
    %v7499 = vand.u32 %v36, 4294901760
    %7500 = vmatpush.msra.mxu0 %v7499
    %v7501 = vand.u32 %v32, 4294901760
    %7502 = vmatpush.msra.mxu0 %v7501
    %v7503 = vand.u32 %v28, 4294901760
    %7504 = vmatpush.msra.mxu0 %v7503
    %v7505 = vand.u32 %v24, 4294901760
    %7506 = vmatpush.msra.mxu0 %v7505
    %v7507 = vand.u32 %v20, 4294901760
    %7508 = vmatpush.msra.mxu0 %v7507
    %v7509 = vand.u32 %v5913, 4294901760
    %v7510 = vsub.f32 %v5913, %v7509
    %v7511 = vand.u32 %v7510, 4294901760
    %7512 = vmatmul.f32.gmra.mxu0 %v7511
    %v7513 = vpop.f32.mrf.mxu0
    %v7514 = vadd.f32 %v7475, %v7513
    %7515 = vdwg.mxu0
    %v7516 = vand.u32 %v80, 4294901760
    %v7517 = vsub.f32 %v80, %v7516
    %v7518 = vand.u32 %v7517, 4294901760
    %7519 = vmatpush.msra.mxu0 %v7518
    %v7520 = vand.u32 %v76, 4294901760
    %v7521 = vsub.f32 %v76, %v7520
    %v7522 = vand.u32 %v7521, 4294901760
    %7523 = vmatpush.msra.mxu0 %v7522
    %v7524 = vand.u32 %v72, 4294901760
    %v7525 = vsub.f32 %v72, %v7524
    %v7526 = vand.u32 %v7525, 4294901760
    %7527 = vmatpush.msra.mxu0 %v7526
    %v7528 = vand.u32 %v68, 4294901760
    %v7529 = vsub.f32 %v68, %v7528
    %v7530 = vand.u32 %v7529, 4294901760
    %7531 = vmatpush.msra.mxu0 %v7530
    %v7532 = vand.u32 %v64, 4294901760
    %v7533 = vsub.f32 %v64, %v7532
    %v7534 = vand.u32 %v7533, 4294901760
    %7535 = vmatpush.msra.mxu0 %v7534
    %v7536 = vand.u32 %v60, 4294901760
    %v7537 = vsub.f32 %v60, %v7536
    %v7538 = vand.u32 %v7537, 4294901760
    %7539 = vmatpush.msra.mxu0 %v7538
    %v7540 = vand.u32 %v56, 4294901760
    %v7541 = vsub.f32 %v56, %v7540
    %v7542 = vand.u32 %v7541, 4294901760
    %7543 = vmatpush.msra.mxu0 %v7542
    %v7544 = vand.u32 %v52, 4294901760
    %v7545 = vsub.f32 %v52, %v7544
    %v7546 = vand.u32 %v7545, 4294901760
    %7547 = vmatpush.msra.mxu0 %v7546
    %v7548 = vand.u32 %v48, 4294901760
    %v7549 = vsub.f32 %v48, %v7548
    %v7550 = vand.u32 %v7549, 4294901760
    %7551 = vmatpush.msra.mxu0 %v7550
    %v7552 = vand.u32 %v44, 4294901760
    %v7553 = vsub.f32 %v44, %v7552
    %v7554 = vand.u32 %v7553, 4294901760
    %7555 = vmatpush.msra.mxu0 %v7554
    %v7556 = vand.u32 %v40, 4294901760
    %v7557 = vsub.f32 %v40, %v7556
    %v7558 = vand.u32 %v7557, 4294901760
    %7559 = vmatpush.msra.mxu0 %v7558
    %v7560 = vand.u32 %v36, 4294901760
    %v7561 = vsub.f32 %v36, %v7560
    %v7562 = vand.u32 %v7561, 4294901760
    %7563 = vmatpush.msra.mxu0 %v7562
    %v7564 = vand.u32 %v32, 4294901760
    %v7565 = vsub.f32 %v32, %v7564
    %v7566 = vand.u32 %v7565, 4294901760
    %7567 = vmatpush.msra.mxu0 %v7566
    %v7568 = vand.u32 %v28, 4294901760
    %v7569 = vsub.f32 %v28, %v7568
    %v7570 = vand.u32 %v7569, 4294901760
    %7571 = vmatpush.msra.mxu0 %v7570
    %v7572 = vand.u32 %v24, 4294901760
    %v7573 = vsub.f32 %v24, %v7572
    %v7574 = vand.u32 %v7573, 4294901760
    %7575 = vmatpush.msra.mxu0 %v7574
    %v7576 = vand.u32 %v20, 4294901760
    %v7577 = vsub.f32 %v20, %v7576
    %v7578 = vand.u32 %v7577, 4294901760
    %7579 = vmatpush.msra.mxu0 %v7578
    %v7580 = vand.u32 %v5913, 4294901760
    %7581 = vmatmul.f32.gmra.mxu0 %v7580
    %v7582 = vpop.f32.mrf.mxu0
    %v7583 = vadd.f32 %v7514, %v7582
    %7584 = vdwg.mxu0
    %v7585 = vand.u32 %v80, 4294901760
    %7586 = vmatpush.msra.mxu0 %v7585
    %v7587 = vand.u32 %v76, 4294901760
    %7588 = vmatpush.msra.mxu0 %v7587
    %v7589 = vand.u32 %v72, 4294901760
    %7590 = vmatpush.msra.mxu0 %v7589
    %v7591 = vand.u32 %v68, 4294901760
    %7592 = vmatpush.msra.mxu0 %v7591
    %v7593 = vand.u32 %v64, 4294901760
    %7594 = vmatpush.msra.mxu0 %v7593
    %v7595 = vand.u32 %v60, 4294901760
    %7596 = vmatpush.msra.mxu0 %v7595
    %v7597 = vand.u32 %v56, 4294901760
    %7598 = vmatpush.msra.mxu0 %v7597
    %v7599 = vand.u32 %v52, 4294901760
    %7600 = vmatpush.msra.mxu0 %v7599
    %v7601 = vand.u32 %v48, 4294901760
    %7602 = vmatpush.msra.mxu0 %v7601
    %v7603 = vand.u32 %v44, 4294901760
    %7604 = vmatpush.msra.mxu0 %v7603
    %v7605 = vand.u32 %v40, 4294901760
    %7606 = vmatpush.msra.mxu0 %v7605
    %v7607 = vand.u32 %v36, 4294901760
    %7608 = vmatpush.msra.mxu0 %v7607
    %v7609 = vand.u32 %v32, 4294901760
    %7610 = vmatpush.msra.mxu0 %v7609
    %v7611 = vand.u32 %v28, 4294901760
    %7612 = vmatpush.msra.mxu0 %v7611
    %v7613 = vand.u32 %v24, 4294901760
    %7614 = vmatpush.msra.mxu0 %v7613
    %v7615 = vand.u32 %v20, 4294901760
    %7616 = vmatpush.msra.mxu0 %v7615
    %v7617 = vand.u32 %v5913, 4294901760
    %7618 = vmatmul.f32.gmra.mxu0 %v7617
    %v7619 = vpop.f32.mrf.mxu0
    %v7620 = vadd.f32 %v7583, %v7619
    %7621 = vdwg.mxu0
    %v7622 = vand.u32 %v144, 4294901760
    %7623 = vmatpush.msra.mxu0 %v7622
    %v7624 = vand.u32 %v140, 4294901760
    %7625 = vmatpush.msra.mxu0 %v7624
    %v7626 = vand.u32 %v136, 4294901760
    %7627 = vmatpush.msra.mxu0 %v7626
    %v7628 = vand.u32 %v132, 4294901760
    %7629 = vmatpush.msra.mxu0 %v7628
    %v7630 = vand.u32 %v128, 4294901760
    %7631 = vmatpush.msra.mxu0 %v7630
    %v7632 = vand.u32 %v124, 4294901760
    %7633 = vmatpush.msra.mxu0 %v7632
    %v7634 = vand.u32 %v120, 4294901760
    %7635 = vmatpush.msra.mxu0 %v7634
    %v7636 = vand.u32 %v116, 4294901760
    %7637 = vmatpush.msra.mxu0 %v7636
    %v7638 = vand.u32 %v112, 4294901760
    %7639 = vmatpush.msra.mxu0 %v7638
    %v7640 = vand.u32 %v108, 4294901760
    %7641 = vmatpush.msra.mxu0 %v7640
    %v7642 = vand.u32 %v104, 4294901760
    %7643 = vmatpush.msra.mxu0 %v7642
    %v7644 = vand.u32 %v100, 4294901760
    %7645 = vmatpush.msra.mxu0 %v7644
    %v7646 = vand.u32 %v96, 4294901760
    %7647 = vmatpush.msra.mxu0 %v7646
    %v7648 = vand.u32 %v92, 4294901760
    %7649 = vmatpush.msra.mxu0 %v7648
    %v7650 = vand.u32 %v88, 4294901760
    %7651 = vmatpush.msra.mxu0 %v7650
    %v7652 = vand.u32 %v84, 4294901760
    %7653 = vmatpush.msra.mxu0 %v7652
    %v7654 = vand.u32 %v5914, 4294901760
    %v7655 = vsub.f32 %v5914, %v7654
    %v7656 = vand.u32 %v7655, 4294901760
    %v7657 = vsub.f32 %v7655, %v7656
    %v7658 = vand.u32 %v7657, 4294901760
    %7659 = vmatmul.f32.gmra.mxu0 %v7658
    %v7660 = vpop.f32.mrf.mxu0
    %v7661 = vadd.f32 %v7620, %v7660
    %7662 = vdwg.mxu0
    %v7663 = vand.u32 %v144, 4294901760
    %v7664 = vsub.f32 %v144, %v7663
    %v7665 = vand.u32 %v7664, 4294901760
    %v7666 = vsub.f32 %v7664, %v7665
    %v7667 = vand.u32 %v7666, 4294901760
    %7668 = vmatpush.msra.mxu0 %v7667
    %v7669 = vand.u32 %v140, 4294901760
    %v7670 = vsub.f32 %v140, %v7669
    %v7671 = vand.u32 %v7670, 4294901760
    %v7672 = vsub.f32 %v7670, %v7671
    %v7673 = vand.u32 %v7672, 4294901760
    %7674 = vmatpush.msra.mxu0 %v7673
    %v7675 = vand.u32 %v136, 4294901760
    %v7676 = vsub.f32 %v136, %v7675
    %v7677 = vand.u32 %v7676, 4294901760
    %v7678 = vsub.f32 %v7676, %v7677
    %v7679 = vand.u32 %v7678, 4294901760
    %7680 = vmatpush.msra.mxu0 %v7679
    %v7681 = vand.u32 %v132, 4294901760
    %v7682 = vsub.f32 %v132, %v7681
    %v7683 = vand.u32 %v7682, 4294901760
    %v7684 = vsub.f32 %v7682, %v7683
    %v7685 = vand.u32 %v7684, 4294901760
    %7686 = vmatpush.msra.mxu0 %v7685
    %v7687 = vand.u32 %v128, 4294901760
    %v7688 = vsub.f32 %v128, %v7687
    %v7689 = vand.u32 %v7688, 4294901760
    %v7690 = vsub.f32 %v7688, %v7689
    %v7691 = vand.u32 %v7690, 4294901760
    %7692 = vmatpush.msra.mxu0 %v7691
    %v7693 = vand.u32 %v124, 4294901760
    %v7694 = vsub.f32 %v124, %v7693
    %v7695 = vand.u32 %v7694, 4294901760
    %v7696 = vsub.f32 %v7694, %v7695
    %v7697 = vand.u32 %v7696, 4294901760
    %7698 = vmatpush.msra.mxu0 %v7697
    %v7699 = vand.u32 %v120, 4294901760
    %v7700 = vsub.f32 %v120, %v7699
    %v7701 = vand.u32 %v7700, 4294901760
    %v7702 = vsub.f32 %v7700, %v7701
    %v7703 = vand.u32 %v7702, 4294901760
    %7704 = vmatpush.msra.mxu0 %v7703
    %v7705 = vand.u32 %v116, 4294901760
    %v7706 = vsub.f32 %v116, %v7705
    %v7707 = vand.u32 %v7706, 4294901760
    %v7708 = vsub.f32 %v7706, %v7707
    %v7709 = vand.u32 %v7708, 4294901760
    %7710 = vmatpush.msra.mxu0 %v7709
    %v7711 = vand.u32 %v112, 4294901760
    %v7712 = vsub.f32 %v112, %v7711
    %v7713 = vand.u32 %v7712, 4294901760
    %v7714 = vsub.f32 %v7712, %v7713
    %v7715 = vand.u32 %v7714, 4294901760
    %7716 = vmatpush.msra.mxu0 %v7715
    %v7717 = vand.u32 %v108, 4294901760
    %v7718 = vsub.f32 %v108, %v7717
    %v7719 = vand.u32 %v7718, 4294901760
    %v7720 = vsub.f32 %v7718, %v7719
    %v7721 = vand.u32 %v7720, 4294901760
    %7722 = vmatpush.msra.mxu0 %v7721
    %v7723 = vand.u32 %v104, 4294901760
    %v7724 = vsub.f32 %v104, %v7723
    %v7725 = vand.u32 %v7724, 4294901760
    %v7726 = vsub.f32 %v7724, %v7725
    %v7727 = vand.u32 %v7726, 4294901760
    %7728 = vmatpush.msra.mxu0 %v7727
    %v7729 = vand.u32 %v100, 4294901760
    %v7730 = vsub.f32 %v100, %v7729
    %v7731 = vand.u32 %v7730, 4294901760
    %v7732 = vsub.f32 %v7730, %v7731
    %v7733 = vand.u32 %v7732, 4294901760
    %7734 = vmatpush.msra.mxu0 %v7733
    %v7735 = vand.u32 %v96, 4294901760
    %v7736 = vsub.f32 %v96, %v7735
    %v7737 = vand.u32 %v7736, 4294901760
    %v7738 = vsub.f32 %v7736, %v7737
    %v7739 = vand.u32 %v7738, 4294901760
    %7740 = vmatpush.msra.mxu0 %v7739
    %v7741 = vand.u32 %v92, 4294901760
    %v7742 = vsub.f32 %v92, %v7741
    %v7743 = vand.u32 %v7742, 4294901760
    %v7744 = vsub.f32 %v7742, %v7743
    %v7745 = vand.u32 %v7744, 4294901760
    %7746 = vmatpush.msra.mxu0 %v7745
    %v7747 = vand.u32 %v88, 4294901760
    %v7748 = vsub.f32 %v88, %v7747
    %v7749 = vand.u32 %v7748, 4294901760
    %v7750 = vsub.f32 %v7748, %v7749
    %v7751 = vand.u32 %v7750, 4294901760
    %7752 = vmatpush.msra.mxu0 %v7751
    %v7753 = vand.u32 %v84, 4294901760
    %v7754 = vsub.f32 %v84, %v7753
    %v7755 = vand.u32 %v7754, 4294901760
    %v7756 = vsub.f32 %v7754, %v7755
    %v7757 = vand.u32 %v7756, 4294901760
    %7758 = vmatpush.msra.mxu0 %v7757
    %v7759 = vand.u32 %v5914, 4294901760
    %7760 = vmatmul.f32.gmra.mxu0 %v7759
    %v7761 = vpop.f32.mrf.mxu0
    %v7762 = vadd.f32 %v7661, %v7761
    %7763 = vdwg.mxu0
    %v7764 = vand.u32 %v144, 4294901760
    %v7765 = vsub.f32 %v144, %v7764
    %7766 = vmatpush.msra.mxu0 %v7765
    %v7767 = vand.u32 %v140, 4294901760
    %v7768 = vsub.f32 %v140, %v7767
    %7769 = vmatpush.msra.mxu0 %v7768
    %v7770 = vand.u32 %v136, 4294901760
    %v7771 = vsub.f32 %v136, %v7770
    %7772 = vmatpush.msra.mxu0 %v7771
    %v7773 = vand.u32 %v132, 4294901760
    %v7774 = vsub.f32 %v132, %v7773
    %7775 = vmatpush.msra.mxu0 %v7774
    %v7776 = vand.u32 %v128, 4294901760
    %v7777 = vsub.f32 %v128, %v7776
    %7778 = vmatpush.msra.mxu0 %v7777
    %v7779 = vand.u32 %v124, 4294901760
    %v7780 = vsub.f32 %v124, %v7779
    %7781 = vmatpush.msra.mxu0 %v7780
    %v7782 = vand.u32 %v120, 4294901760
    %v7783 = vsub.f32 %v120, %v7782
    %7784 = vmatpush.msra.mxu0 %v7783
    %v7785 = vand.u32 %v116, 4294901760
    %v7786 = vsub.f32 %v116, %v7785
    %7787 = vmatpush.msra.mxu0 %v7786
    %v7788 = vand.u32 %v112, 4294901760
    %v7789 = vsub.f32 %v112, %v7788
    %7790 = vmatpush.msra.mxu0 %v7789
    %v7791 = vand.u32 %v108, 4294901760
    %v7792 = vsub.f32 %v108, %v7791
    %7793 = vmatpush.msra.mxu0 %v7792
    %v7794 = vand.u32 %v104, 4294901760
    %v7795 = vsub.f32 %v104, %v7794
    %7796 = vmatpush.msra.mxu0 %v7795
    %v7797 = vand.u32 %v100, 4294901760
    %v7798 = vsub.f32 %v100, %v7797
    %7799 = vmatpush.msra.mxu0 %v7798
    %v7800 = vand.u32 %v96, 4294901760
    %v7801 = vsub.f32 %v96, %v7800
    %7802 = vmatpush.msra.mxu0 %v7801
    %v7803 = vand.u32 %v92, 4294901760
    %v7804 = vsub.f32 %v92, %v7803
    %7805 = vmatpush.msra.mxu0 %v7804
    %v7806 = vand.u32 %v88, 4294901760
    %v7807 = vsub.f32 %v88, %v7806
    %7808 = vmatpush.msra.mxu0 %v7807
    %v7809 = vand.u32 %v84, 4294901760
    %v7810 = vsub.f32 %v84, %v7809
    %7811 = vmatpush.msra.mxu0 %v7810
    %v7812 = vand.u32 %v5914, 4294901760
    %v7813 = vsub.f32 %v5914, %v7812
    %7814 = vmatmul.f32.gmra.mxu0 %v7813
    %v7815 = vpop.f32.mrf.mxu0
    %v7816 = vadd.f32 %v7762, %v7815
    %7817 = vdwg.mxu0
    %v7818 = vand.u32 %v144, 4294901760
    %7819 = vmatpush.msra.mxu0 %v7818
    %v7820 = vand.u32 %v140, 4294901760
    %7821 = vmatpush.msra.mxu0 %v7820
    %v7822 = vand.u32 %v136, 4294901760
    %7823 = vmatpush.msra.mxu0 %v7822
    %v7824 = vand.u32 %v132, 4294901760
    %7825 = vmatpush.msra.mxu0 %v7824
    %v7826 = vand.u32 %v128, 4294901760
    %7827 = vmatpush.msra.mxu0 %v7826
    %v7828 = vand.u32 %v124, 4294901760
    %7829 = vmatpush.msra.mxu0 %v7828
    %v7830 = vand.u32 %v120, 4294901760
    %7831 = vmatpush.msra.mxu0 %v7830
    %v7832 = vand.u32 %v116, 4294901760
    %7833 = vmatpush.msra.mxu0 %v7832
    %v7834 = vand.u32 %v112, 4294901760
    %7835 = vmatpush.msra.mxu0 %v7834
    %v7836 = vand.u32 %v108, 4294901760
    %7837 = vmatpush.msra.mxu0 %v7836
    %v7838 = vand.u32 %v104, 4294901760
    %7839 = vmatpush.msra.mxu0 %v7838
    %v7840 = vand.u32 %v100, 4294901760
    %7841 = vmatpush.msra.mxu0 %v7840
    %v7842 = vand.u32 %v96, 4294901760
    %7843 = vmatpush.msra.mxu0 %v7842
    %v7844 = vand.u32 %v92, 4294901760
    %7845 = vmatpush.msra.mxu0 %v7844
    %v7846 = vand.u32 %v88, 4294901760
    %7847 = vmatpush.msra.mxu0 %v7846
    %v7848 = vand.u32 %v84, 4294901760
    %7849 = vmatpush.msra.mxu0 %v7848
    %v7850 = vand.u32 %v5914, 4294901760
    %v7851 = vsub.f32 %v5914, %v7850
    %v7852 = vand.u32 %v7851, 4294901760
    %7853 = vmatmul.f32.gmra.mxu0 %v7852
    %v7854 = vpop.f32.mrf.mxu0
    %v7855 = vadd.f32 %v7816, %v7854
    %7856 = vdwg.mxu0
    %v7857 = vand.u32 %v144, 4294901760
    %v7858 = vsub.f32 %v144, %v7857
    %v7859 = vand.u32 %v7858, 4294901760
    %7860 = vmatpush.msra.mxu0 %v7859
    %v7861 = vand.u32 %v140, 4294901760
    %v7862 = vsub.f32 %v140, %v7861
    %v7863 = vand.u32 %v7862, 4294901760
    %7864 = vmatpush.msra.mxu0 %v7863
    %v7865 = vand.u32 %v136, 4294901760
    %v7866 = vsub.f32 %v136, %v7865
    %v7867 = vand.u32 %v7866, 4294901760
    %7868 = vmatpush.msra.mxu0 %v7867
    %v7869 = vand.u32 %v132, 4294901760
    %v7870 = vsub.f32 %v132, %v7869
    %v7871 = vand.u32 %v7870, 4294901760
    %7872 = vmatpush.msra.mxu0 %v7871
    %v7873 = vand.u32 %v128, 4294901760
    %v7874 = vsub.f32 %v128, %v7873
    %v7875 = vand.u32 %v7874, 4294901760
    %7876 = vmatpush.msra.mxu0 %v7875
    %v7877 = vand.u32 %v124, 4294901760
    %v7878 = vsub.f32 %v124, %v7877
    %v7879 = vand.u32 %v7878, 4294901760
    %7880 = vmatpush.msra.mxu0 %v7879
    %v7881 = vand.u32 %v120, 4294901760
    %v7882 = vsub.f32 %v120, %v7881
    %v7883 = vand.u32 %v7882, 4294901760
    %7884 = vmatpush.msra.mxu0 %v7883
    %v7885 = vand.u32 %v116, 4294901760
    %v7886 = vsub.f32 %v116, %v7885
    %v7887 = vand.u32 %v7886, 4294901760
    %7888 = vmatpush.msra.mxu0 %v7887
    %v7889 = vand.u32 %v112, 4294901760
    %v7890 = vsub.f32 %v112, %v7889
    %v7891 = vand.u32 %v7890, 4294901760
    %7892 = vmatpush.msra.mxu0 %v7891
    %v7893 = vand.u32 %v108, 4294901760
    %v7894 = vsub.f32 %v108, %v7893
    %v7895 = vand.u32 %v7894, 4294901760
    %7896 = vmatpush.msra.mxu0 %v7895
    %v7897 = vand.u32 %v104, 4294901760
    %v7898 = vsub.f32 %v104, %v7897
    %v7899 = vand.u32 %v7898, 4294901760
    %7900 = vmatpush.msra.mxu0 %v7899
    %v7901 = vand.u32 %v100, 4294901760
    %v7902 = vsub.f32 %v100, %v7901
    %v7903 = vand.u32 %v7902, 4294901760
    %7904 = vmatpush.msra.mxu0 %v7903
    %v7905 = vand.u32 %v96, 4294901760
    %v7906 = vsub.f32 %v96, %v7905
    %v7907 = vand.u32 %v7906, 4294901760
    %7908 = vmatpush.msra.mxu0 %v7907
    %v7909 = vand.u32 %v92, 4294901760
    %v7910 = vsub.f32 %v92, %v7909
    %v7911 = vand.u32 %v7910, 4294901760
    %7912 = vmatpush.msra.mxu0 %v7911
    %v7913 = vand.u32 %v88, 4294901760
    %v7914 = vsub.f32 %v88, %v7913
    %v7915 = vand.u32 %v7914, 4294901760
    %7916 = vmatpush.msra.mxu0 %v7915
    %v7917 = vand.u32 %v84, 4294901760
    %v7918 = vsub.f32 %v84, %v7917
    %v7919 = vand.u32 %v7918, 4294901760
    %7920 = vmatpush.msra.mxu0 %v7919
    %v7921 = vand.u32 %v5914, 4294901760
    %7922 = vmatmul.f32.gmra.mxu0 %v7921
    %v7923 = vpop.f32.mrf.mxu0
    %v7924 = vadd.f32 %v7855, %v7923
    %7925 = vdwg.mxu0
    %v7926 = vand.u32 %v144, 4294901760
    %7927 = vmatpush.msra.mxu0 %v7926
    %v7928 = vand.u32 %v140, 4294901760
    %7929 = vmatpush.msra.mxu0 %v7928
    %v7930 = vand.u32 %v136, 4294901760
    %7931 = vmatpush.msra.mxu0 %v7930
    %v7932 = vand.u32 %v132, 4294901760
    %7933 = vmatpush.msra.mxu0 %v7932
    %v7934 = vand.u32 %v128, 4294901760
    %7935 = vmatpush.msra.mxu0 %v7934
    %v7936 = vand.u32 %v124, 4294901760
    %7937 = vmatpush.msra.mxu0 %v7936
    %v7938 = vand.u32 %v120, 4294901760
    %7939 = vmatpush.msra.mxu0 %v7938
    %v7940 = vand.u32 %v116, 4294901760
    %7941 = vmatpush.msra.mxu0 %v7940
    %v7942 = vand.u32 %v112, 4294901760
    %7943 = vmatpush.msra.mxu0 %v7942
    %v7944 = vand.u32 %v108, 4294901760
    %7945 = vmatpush.msra.mxu0 %v7944
    %v7946 = vand.u32 %v104, 4294901760
    %7947 = vmatpush.msra.mxu0 %v7946
    %v7948 = vand.u32 %v100, 4294901760
    %7949 = vmatpush.msra.mxu0 %v7948
    %v7950 = vand.u32 %v96, 4294901760
    %7951 = vmatpush.msra.mxu0 %v7950
    %v7952 = vand.u32 %v92, 4294901760
    %7953 = vmatpush.msra.mxu0 %v7952
    %v7954 = vand.u32 %v88, 4294901760
    %7955 = vmatpush.msra.mxu0 %v7954
    %v7956 = vand.u32 %v84, 4294901760
    %7957 = vmatpush.msra.mxu0 %v7956
    %v7958 = vand.u32 %v5914, 4294901760
    %7959 = vmatmul.f32.gmra.mxu0 %v7958
    %v7960 = vpop.f32.mrf.mxu0
    %v7961 = vadd.f32 %v7924, %v7960
    %7962 = vdwg.mxu0
    %v7963 = vand.u32 %v208, 4294901760
    %7964 = vmatpush.msra.mxu0 %v7963
    %v7965 = vand.u32 %v204, 4294901760
    %7966 = vmatpush.msra.mxu0 %v7965
    %v7967 = vand.u32 %v200, 4294901760
    %7968 = vmatpush.msra.mxu0 %v7967
    %v7969 = vand.u32 %v196, 4294901760
    %7970 = vmatpush.msra.mxu0 %v7969
    %v7971 = vand.u32 %v192, 4294901760
    %7972 = vmatpush.msra.mxu0 %v7971
    %v7973 = vand.u32 %v188, 4294901760
    %7974 = vmatpush.msra.mxu0 %v7973
    %v7975 = vand.u32 %v184, 4294901760
    %7976 = vmatpush.msra.mxu0 %v7975
    %v7977 = vand.u32 %v180, 4294901760
    %7978 = vmatpush.msra.mxu0 %v7977
    %v7979 = vand.u32 %v176, 4294901760
    %7980 = vmatpush.msra.mxu0 %v7979
    %v7981 = vand.u32 %v172, 4294901760
    %7982 = vmatpush.msra.mxu0 %v7981
    %v7983 = vand.u32 %v168, 4294901760
    %7984 = vmatpush.msra.mxu0 %v7983
    %v7985 = vand.u32 %v164, 4294901760
    %7986 = vmatpush.msra.mxu0 %v7985
    %v7987 = vand.u32 %v160, 4294901760
    %7988 = vmatpush.msra.mxu0 %v7987
    %v7989 = vand.u32 %v156, 4294901760
    %7990 = vmatpush.msra.mxu0 %v7989
    %v7991 = vand.u32 %v152, 4294901760
    %7992 = vmatpush.msra.mxu0 %v7991
    %v7993 = vand.u32 %v148, 4294901760
    %7994 = vmatpush.msra.mxu0 %v7993
    %v7995 = vand.u32 %v5915, 4294901760
    %v7996 = vsub.f32 %v5915, %v7995
    %v7997 = vand.u32 %v7996, 4294901760
    %v7998 = vsub.f32 %v7996, %v7997
    %v7999 = vand.u32 %v7998, 4294901760
    %8000 = vmatmul.f32.gmra.mxu0 %v7999
    %v8001 = vpop.f32.mrf.mxu0
    %v8002 = vadd.f32 %v7961, %v8001
    %8003 = vdwg.mxu0
    %v8004 = vand.u32 %v208, 4294901760
    %v8005 = vsub.f32 %v208, %v8004
    %v8006 = vand.u32 %v8005, 4294901760
    %v8007 = vsub.f32 %v8005, %v8006
    %v8008 = vand.u32 %v8007, 4294901760
    %8009 = vmatpush.msra.mxu0 %v8008
    %v8010 = vand.u32 %v204, 4294901760
    %v8011 = vsub.f32 %v204, %v8010
    %v8012 = vand.u32 %v8011, 4294901760
    %v8013 = vsub.f32 %v8011, %v8012
    %v8014 = vand.u32 %v8013, 4294901760
    %8015 = vmatpush.msra.mxu0 %v8014
    %v8016 = vand.u32 %v200, 4294901760
    %v8017 = vsub.f32 %v200, %v8016
    %v8018 = vand.u32 %v8017, 4294901760
    %v8019 = vsub.f32 %v8017, %v8018
    %v8020 = vand.u32 %v8019, 4294901760
    %8021 = vmatpush.msra.mxu0 %v8020
    %v8022 = vand.u32 %v196, 4294901760
    %v8023 = vsub.f32 %v196, %v8022
    %v8024 = vand.u32 %v8023, 4294901760
    %v8025 = vsub.f32 %v8023, %v8024
    %v8026 = vand.u32 %v8025, 4294901760
    %8027 = vmatpush.msra.mxu0 %v8026
    %v8028 = vand.u32 %v192, 4294901760
    %v8029 = vsub.f32 %v192, %v8028
    %v8030 = vand.u32 %v8029, 4294901760
    %v8031 = vsub.f32 %v8029, %v8030
    %v8032 = vand.u32 %v8031, 4294901760
    %8033 = vmatpush.msra.mxu0 %v8032
    %v8034 = vand.u32 %v188, 4294901760
    %v8035 = vsub.f32 %v188, %v8034
    %v8036 = vand.u32 %v8035, 4294901760
    %v8037 = vsub.f32 %v8035, %v8036
    %v8038 = vand.u32 %v8037, 4294901760
    %8039 = vmatpush.msra.mxu0 %v8038
    %v8040 = vand.u32 %v184, 4294901760
    %v8041 = vsub.f32 %v184, %v8040
    %v8042 = vand.u32 %v8041, 4294901760
    %v8043 = vsub.f32 %v8041, %v8042
    %v8044 = vand.u32 %v8043, 4294901760
    %8045 = vmatpush.msra.mxu0 %v8044
    %v8046 = vand.u32 %v180, 4294901760
    %v8047 = vsub.f32 %v180, %v8046
    %v8048 = vand.u32 %v8047, 4294901760
    %v8049 = vsub.f32 %v8047, %v8048
    %v8050 = vand.u32 %v8049, 4294901760
    %8051 = vmatpush.msra.mxu0 %v8050
    %v8052 = vand.u32 %v176, 4294901760
    %v8053 = vsub.f32 %v176, %v8052
    %v8054 = vand.u32 %v8053, 4294901760
    %v8055 = vsub.f32 %v8053, %v8054
    %v8056 = vand.u32 %v8055, 4294901760
    %8057 = vmatpush.msra.mxu0 %v8056
    %v8058 = vand.u32 %v172, 4294901760
    %v8059 = vsub.f32 %v172, %v8058
    %v8060 = vand.u32 %v8059, 4294901760
    %v8061 = vsub.f32 %v8059, %v8060
    %v8062 = vand.u32 %v8061, 4294901760
    %8063 = vmatpush.msra.mxu0 %v8062
    %v8064 = vand.u32 %v168, 4294901760
    %v8065 = vsub.f32 %v168, %v8064
    %v8066 = vand.u32 %v8065, 4294901760
    %v8067 = vsub.f32 %v8065, %v8066
    %v8068 = vand.u32 %v8067, 4294901760
    %8069 = vmatpush.msra.mxu0 %v8068
    %v8070 = vand.u32 %v164, 4294901760
    %v8071 = vsub.f32 %v164, %v8070
    %v8072 = vand.u32 %v8071, 4294901760
    %v8073 = vsub.f32 %v8071, %v8072
    %v8074 = vand.u32 %v8073, 4294901760
    %8075 = vmatpush.msra.mxu0 %v8074
    %v8076 = vand.u32 %v160, 4294901760
    %v8077 = vsub.f32 %v160, %v8076
    %v8078 = vand.u32 %v8077, 4294901760
    %v8079 = vsub.f32 %v8077, %v8078
    %v8080 = vand.u32 %v8079, 4294901760
    %8081 = vmatpush.msra.mxu0 %v8080
    %v8082 = vand.u32 %v156, 4294901760
    %v8083 = vsub.f32 %v156, %v8082
    %v8084 = vand.u32 %v8083, 4294901760
    %v8085 = vsub.f32 %v8083, %v8084
    %v8086 = vand.u32 %v8085, 4294901760
    %8087 = vmatpush.msra.mxu0 %v8086
    %v8088 = vand.u32 %v152, 4294901760
    %v8089 = vsub.f32 %v152, %v8088
    %v8090 = vand.u32 %v8089, 4294901760
    %v8091 = vsub.f32 %v8089, %v8090
    %v8092 = vand.u32 %v8091, 4294901760
    %8093 = vmatpush.msra.mxu0 %v8092
    %v8094 = vand.u32 %v148, 4294901760
    %v8095 = vsub.f32 %v148, %v8094
    %v8096 = vand.u32 %v8095, 4294901760
    %v8097 = vsub.f32 %v8095, %v8096
    %v8098 = vand.u32 %v8097, 4294901760
    %8099 = vmatpush.msra.mxu0 %v8098
    %v8100 = vand.u32 %v5915, 4294901760
    %8101 = vmatmul.f32.gmra.mxu0 %v8100
    %v8102 = vpop.f32.mrf.mxu0
    %v8103 = vadd.f32 %v8002, %v8102
    %8104 = vdwg.mxu0
    %v8105 = vand.u32 %v208, 4294901760
    %v8106 = vsub.f32 %v208, %v8105
    %8107 = vmatpush.msra.mxu0 %v8106
    %v8108 = vand.u32 %v204, 4294901760
    %v8109 = vsub.f32 %v204, %v8108
    %8110 = vmatpush.msra.mxu0 %v8109
    %v8111 = vand.u32 %v200, 4294901760
    %v8112 = vsub.f32 %v200, %v8111
    %8113 = vmatpush.msra.mxu0 %v8112
    %v8114 = vand.u32 %v196, 4294901760
    %v8115 = vsub.f32 %v196, %v8114
    %8116 = vmatpush.msra.mxu0 %v8115
    %v8117 = vand.u32 %v192, 4294901760
    %v8118 = vsub.f32 %v192, %v8117
    %8119 = vmatpush.msra.mxu0 %v8118
    %v8120 = vand.u32 %v188, 4294901760
    %v8121 = vsub.f32 %v188, %v8120
    %8122 = vmatpush.msra.mxu0 %v8121
    %v8123 = vand.u32 %v184, 4294901760
    %v8124 = vsub.f32 %v184, %v8123
    %8125 = vmatpush.msra.mxu0 %v8124
    %v8126 = vand.u32 %v180, 4294901760
    %v8127 = vsub.f32 %v180, %v8126
    %8128 = vmatpush.msra.mxu0 %v8127
    %v8129 = vand.u32 %v176, 4294901760
    %v8130 = vsub.f32 %v176, %v8129
    %8131 = vmatpush.msra.mxu0 %v8130
    %v8132 = vand.u32 %v172, 4294901760
    %v8133 = vsub.f32 %v172, %v8132
    %8134 = vmatpush.msra.mxu0 %v8133
    %v8135 = vand.u32 %v168, 4294901760
    %v8136 = vsub.f32 %v168, %v8135
    %8137 = vmatpush.msra.mxu0 %v8136
    %v8138 = vand.u32 %v164, 4294901760
    %v8139 = vsub.f32 %v164, %v8138
    %8140 = vmatpush.msra.mxu0 %v8139
    %v8141 = vand.u32 %v160, 4294901760
    %v8142 = vsub.f32 %v160, %v8141
    %8143 = vmatpush.msra.mxu0 %v8142
    %v8144 = vand.u32 %v156, 4294901760
    %v8145 = vsub.f32 %v156, %v8144
    %8146 = vmatpush.msra.mxu0 %v8145
    %v8147 = vand.u32 %v152, 4294901760
    %v8148 = vsub.f32 %v152, %v8147
    %8149 = vmatpush.msra.mxu0 %v8148
    %v8150 = vand.u32 %v148, 4294901760
    %v8151 = vsub.f32 %v148, %v8150
    %8152 = vmatpush.msra.mxu0 %v8151
    %v8153 = vand.u32 %v5915, 4294901760
    %v8154 = vsub.f32 %v5915, %v8153
    %8155 = vmatmul.f32.gmra.mxu0 %v8154
    %v8156 = vpop.f32.mrf.mxu0
    %v8157 = vadd.f32 %v8103, %v8156
    %8158 = vdwg.mxu0
    %v8159 = vand.u32 %v208, 4294901760
    %8160 = vmatpush.msra.mxu0 %v8159
    %v8161 = vand.u32 %v204, 4294901760
    %8162 = vmatpush.msra.mxu0 %v8161
    %v8163 = vand.u32 %v200, 4294901760
    %8164 = vmatpush.msra.mxu0 %v8163
    %v8165 = vand.u32 %v196, 4294901760
    %8166 = vmatpush.msra.mxu0 %v8165
    %v8167 = vand.u32 %v192, 4294901760
    %8168 = vmatpush.msra.mxu0 %v8167
    %v8169 = vand.u32 %v188, 4294901760
    %8170 = vmatpush.msra.mxu0 %v8169
    %v8171 = vand.u32 %v184, 4294901760
    %8172 = vmatpush.msra.mxu0 %v8171
    %v8173 = vand.u32 %v180, 4294901760
    %8174 = vmatpush.msra.mxu0 %v8173
    %v8175 = vand.u32 %v176, 4294901760
    %8176 = vmatpush.msra.mxu0 %v8175
    %v8177 = vand.u32 %v172, 4294901760
    %8178 = vmatpush.msra.mxu0 %v8177
    %v8179 = vand.u32 %v168, 4294901760
    %8180 = vmatpush.msra.mxu0 %v8179
    %v8181 = vand.u32 %v164, 4294901760
    %8182 = vmatpush.msra.mxu0 %v8181
    %v8183 = vand.u32 %v160, 4294901760
    %8184 = vmatpush.msra.mxu0 %v8183
    %v8185 = vand.u32 %v156, 4294901760
    %8186 = vmatpush.msra.mxu0 %v8185
    %v8187 = vand.u32 %v152, 4294901760
    %8188 = vmatpush.msra.mxu0 %v8187
    %v8189 = vand.u32 %v148, 4294901760
    %8190 = vmatpush.msra.mxu0 %v8189
    %v8191 = vand.u32 %v5915, 4294901760
    %v8192 = vsub.f32 %v5915, %v8191
    %v8193 = vand.u32 %v8192, 4294901760
    %8194 = vmatmul.f32.gmra.mxu0 %v8193
    %v8195 = vpop.f32.mrf.mxu0
    %v8196 = vadd.f32 %v8157, %v8195
    %8197 = vdwg.mxu0
    %v8198 = vand.u32 %v208, 4294901760
    %v8199 = vsub.f32 %v208, %v8198
    %v8200 = vand.u32 %v8199, 4294901760
    %8201 = vmatpush.msra.mxu0 %v8200
    %v8202 = vand.u32 %v204, 4294901760
    %v8203 = vsub.f32 %v204, %v8202
    %v8204 = vand.u32 %v8203, 4294901760
    %8205 = vmatpush.msra.mxu0 %v8204
    %v8206 = vand.u32 %v200, 4294901760
    %v8207 = vsub.f32 %v200, %v8206
    %v8208 = vand.u32 %v8207, 4294901760
    %8209 = vmatpush.msra.mxu0 %v8208
    %v8210 = vand.u32 %v196, 4294901760
    %v8211 = vsub.f32 %v196, %v8210
    %v8212 = vand.u32 %v8211, 4294901760
    %8213 = vmatpush.msra.mxu0 %v8212
    %v8214 = vand.u32 %v192, 4294901760
    %v8215 = vsub.f32 %v192, %v8214
    %v8216 = vand.u32 %v8215, 4294901760
    %8217 = vmatpush.msra.mxu0 %v8216
    %v8218 = vand.u32 %v188, 4294901760
    %v8219 = vsub.f32 %v188, %v8218
    %v8220 = vand.u32 %v8219, 4294901760
    %8221 = vmatpush.msra.mxu0 %v8220
    %v8222 = vand.u32 %v184, 4294901760
    %v8223 = vsub.f32 %v184, %v8222
    %v8224 = vand.u32 %v8223, 4294901760
    %8225 = vmatpush.msra.mxu0 %v8224
    %v8226 = vand.u32 %v180, 4294901760
    %v8227 = vsub.f32 %v180, %v8226
    %v8228 = vand.u32 %v8227, 4294901760
    %8229 = vmatpush.msra.mxu0 %v8228
    %v8230 = vand.u32 %v176, 4294901760
    %v8231 = vsub.f32 %v176, %v8230
    %v8232 = vand.u32 %v8231, 4294901760
    %8233 = vmatpush.msra.mxu0 %v8232
    %v8234 = vand.u32 %v172, 4294901760
    %v8235 = vsub.f32 %v172, %v8234
    %v8236 = vand.u32 %v8235, 4294901760
    %8237 = vmatpush.msra.mxu0 %v8236
    %v8238 = vand.u32 %v168, 4294901760
    %v8239 = vsub.f32 %v168, %v8238
    %v8240 = vand.u32 %v8239, 4294901760
    %8241 = vmatpush.msra.mxu0 %v8240
    %v8242 = vand.u32 %v164, 4294901760
    %v8243 = vsub.f32 %v164, %v8242
    %v8244 = vand.u32 %v8243, 4294901760
    %8245 = vmatpush.msra.mxu0 %v8244
    %v8246 = vand.u32 %v160, 4294901760
    %v8247 = vsub.f32 %v160, %v8246
    %v8248 = vand.u32 %v8247, 4294901760
    %8249 = vmatpush.msra.mxu0 %v8248
    %v8250 = vand.u32 %v156, 4294901760
    %v8251 = vsub.f32 %v156, %v8250
    %v8252 = vand.u32 %v8251, 4294901760
    %8253 = vmatpush.msra.mxu0 %v8252
    %v8254 = vand.u32 %v152, 4294901760
    %v8255 = vsub.f32 %v152, %v8254
    %v8256 = vand.u32 %v8255, 4294901760
    %8257 = vmatpush.msra.mxu0 %v8256
    %v8258 = vand.u32 %v148, 4294901760
    %v8259 = vsub.f32 %v148, %v8258
    %v8260 = vand.u32 %v8259, 4294901760
    %8261 = vmatpush.msra.mxu0 %v8260
    %v8262 = vand.u32 %v5915, 4294901760
    %8263 = vmatmul.f32.gmra.mxu0 %v8262
    %v8264 = vpop.f32.mrf.mxu0
    %v8265 = vadd.f32 %v8196, %v8264
    %8266 = vdwg.mxu0
    %v8267 = vand.u32 %v208, 4294901760
    %8268 = vmatpush.msra.mxu0 %v8267
    %v8269 = vand.u32 %v204, 4294901760
    %8270 = vmatpush.msra.mxu0 %v8269
    %v8271 = vand.u32 %v200, 4294901760
    %8272 = vmatpush.msra.mxu0 %v8271
    %v8273 = vand.u32 %v196, 4294901760
    %8274 = vmatpush.msra.mxu0 %v8273
    %v8275 = vand.u32 %v192, 4294901760
    %8276 = vmatpush.msra.mxu0 %v8275
    %v8277 = vand.u32 %v188, 4294901760
    %8278 = vmatpush.msra.mxu0 %v8277
    %v8279 = vand.u32 %v184, 4294901760
    %8280 = vmatpush.msra.mxu0 %v8279
    %v8281 = vand.u32 %v180, 4294901760
    %8282 = vmatpush.msra.mxu0 %v8281
    %v8283 = vand.u32 %v176, 4294901760
    %8284 = vmatpush.msra.mxu0 %v8283
    %v8285 = vand.u32 %v172, 4294901760
    %8286 = vmatpush.msra.mxu0 %v8285
    %v8287 = vand.u32 %v168, 4294901760
    %8288 = vmatpush.msra.mxu0 %v8287
    %v8289 = vand.u32 %v164, 4294901760
    %8290 = vmatpush.msra.mxu0 %v8289
    %v8291 = vand.u32 %v160, 4294901760
    %8292 = vmatpush.msra.mxu0 %v8291
    %v8293 = vand.u32 %v156, 4294901760
    %8294 = vmatpush.msra.mxu0 %v8293
    %v8295 = vand.u32 %v152, 4294901760
    %8296 = vmatpush.msra.mxu0 %v8295
    %v8297 = vand.u32 %v148, 4294901760
    %8298 = vmatpush.msra.mxu0 %v8297
    %v8299 = vand.u32 %v5915, 4294901760
    %8300 = vmatmul.f32.gmra.mxu0 %v8299
    %v8301 = vpop.f32.mrf.mxu0
    %v8302 = vadd.f32 %v8265, %v8301
    %8303 = vdwg.mxu0
    %v8304 = vand.u32 %v272, 4294901760
    %8305 = vmatpush.msra.mxu0 %v8304
    %v8306 = vand.u32 %v268, 4294901760
    %8307 = vmatpush.msra.mxu0 %v8306
    %v8308 = vand.u32 %v264, 4294901760
    %8309 = vmatpush.msra.mxu0 %v8308
    %v8310 = vand.u32 %v260, 4294901760
    %8311 = vmatpush.msra.mxu0 %v8310
    %v8312 = vand.u32 %v256, 4294901760
    %8313 = vmatpush.msra.mxu0 %v8312
    %v8314 = vand.u32 %v252, 4294901760
    %8315 = vmatpush.msra.mxu0 %v8314
    %v8316 = vand.u32 %v248, 4294901760
    %8317 = vmatpush.msra.mxu0 %v8316
    %v8318 = vand.u32 %v244, 4294901760
    %8319 = vmatpush.msra.mxu0 %v8318
    %v8320 = vand.u32 %v240, 4294901760
    %8321 = vmatpush.msra.mxu0 %v8320
    %v8322 = vand.u32 %v236, 4294901760
    %8323 = vmatpush.msra.mxu0 %v8322
    %v8324 = vand.u32 %v232, 4294901760
    %8325 = vmatpush.msra.mxu0 %v8324
    %v8326 = vand.u32 %v228, 4294901760
    %8327 = vmatpush.msra.mxu0 %v8326
    %v8328 = vand.u32 %v224, 4294901760
    %8329 = vmatpush.msra.mxu0 %v8328
    %v8330 = vand.u32 %v220, 4294901760
    %8331 = vmatpush.msra.mxu0 %v8330
    %v8332 = vand.u32 %v216, 4294901760
    %8333 = vmatpush.msra.mxu0 %v8332
    %v8334 = vand.u32 %v212, 4294901760
    %8335 = vmatpush.msra.mxu0 %v8334
    %v8336 = vand.u32 %v5916, 4294901760
    %v8337 = vsub.f32 %v5916, %v8336
    %v8338 = vand.u32 %v8337, 4294901760
    %v8339 = vsub.f32 %v8337, %v8338
    %v8340 = vand.u32 %v8339, 4294901760
    %8341 = vmatmul.f32.gmra.mxu0 %v8340
    %v8342 = vpop.f32.mrf.mxu0
    %v8343 = vadd.f32 %v8302, %v8342
    %8344 = vdwg.mxu0
    %v8345 = vand.u32 %v272, 4294901760
    %v8346 = vsub.f32 %v272, %v8345
    %v8347 = vand.u32 %v8346, 4294901760
    %v8348 = vsub.f32 %v8346, %v8347
    %v8349 = vand.u32 %v8348, 4294901760
    %8350 = vmatpush.msra.mxu0 %v8349
    %v8351 = vand.u32 %v268, 4294901760
    %v8352 = vsub.f32 %v268, %v8351
    %v8353 = vand.u32 %v8352, 4294901760
    %v8354 = vsub.f32 %v8352, %v8353
    %v8355 = vand.u32 %v8354, 4294901760
    %8356 = vmatpush.msra.mxu0 %v8355
    %v8357 = vand.u32 %v264, 4294901760
    %v8358 = vsub.f32 %v264, %v8357
    %v8359 = vand.u32 %v8358, 4294901760
    %v8360 = vsub.f32 %v8358, %v8359
    %v8361 = vand.u32 %v8360, 4294901760
    %8362 = vmatpush.msra.mxu0 %v8361
    %v8363 = vand.u32 %v260, 4294901760
    %v8364 = vsub.f32 %v260, %v8363
    %v8365 = vand.u32 %v8364, 4294901760
    %v8366 = vsub.f32 %v8364, %v8365
    %v8367 = vand.u32 %v8366, 4294901760
    %8368 = vmatpush.msra.mxu0 %v8367
    %v8369 = vand.u32 %v256, 4294901760
    %v8370 = vsub.f32 %v256, %v8369
    %v8371 = vand.u32 %v8370, 4294901760
    %v8372 = vsub.f32 %v8370, %v8371
    %v8373 = vand.u32 %v8372, 4294901760
    %8374 = vmatpush.msra.mxu0 %v8373
    %v8375 = vand.u32 %v252, 4294901760
    %v8376 = vsub.f32 %v252, %v8375
    %v8377 = vand.u32 %v8376, 4294901760
    %v8378 = vsub.f32 %v8376, %v8377
    %v8379 = vand.u32 %v8378, 4294901760
    %8380 = vmatpush.msra.mxu0 %v8379
    %v8381 = vand.u32 %v248, 4294901760
    %v8382 = vsub.f32 %v248, %v8381
    %v8383 = vand.u32 %v8382, 4294901760
    %v8384 = vsub.f32 %v8382, %v8383
    %v8385 = vand.u32 %v8384, 4294901760
    %8386 = vmatpush.msra.mxu0 %v8385
    %v8387 = vand.u32 %v244, 4294901760
    %v8388 = vsub.f32 %v244, %v8387
    %v8389 = vand.u32 %v8388, 4294901760
    %v8390 = vsub.f32 %v8388, %v8389
    %v8391 = vand.u32 %v8390, 4294901760
    %8392 = vmatpush.msra.mxu0 %v8391
    %v8393 = vand.u32 %v240, 4294901760
    %v8394 = vsub.f32 %v240, %v8393
    %v8395 = vand.u32 %v8394, 4294901760
    %v8396 = vsub.f32 %v8394, %v8395
    %v8397 = vand.u32 %v8396, 4294901760
    %8398 = vmatpush.msra.mxu0 %v8397
    %v8399 = vand.u32 %v236, 4294901760
    %v8400 = vsub.f32 %v236, %v8399
    %v8401 = vand.u32 %v8400, 4294901760
    %v8402 = vsub.f32 %v8400, %v8401
    %v8403 = vand.u32 %v8402, 4294901760
    %8404 = vmatpush.msra.mxu0 %v8403
    %v8405 = vand.u32 %v232, 4294901760
    %v8406 = vsub.f32 %v232, %v8405
    %v8407 = vand.u32 %v8406, 4294901760
    %v8408 = vsub.f32 %v8406, %v8407
    %v8409 = vand.u32 %v8408, 4294901760
    %8410 = vmatpush.msra.mxu0 %v8409
    %v8411 = vand.u32 %v228, 4294901760
    %v8412 = vsub.f32 %v228, %v8411
    %v8413 = vand.u32 %v8412, 4294901760
    %v8414 = vsub.f32 %v8412, %v8413
    %v8415 = vand.u32 %v8414, 4294901760
    %8416 = vmatpush.msra.mxu0 %v8415
    %v8417 = vand.u32 %v224, 4294901760
    %v8418 = vsub.f32 %v224, %v8417
    %v8419 = vand.u32 %v8418, 4294901760
    %v8420 = vsub.f32 %v8418, %v8419
    %v8421 = vand.u32 %v8420, 4294901760
    %8422 = vmatpush.msra.mxu0 %v8421
    %v8423 = vand.u32 %v220, 4294901760
    %v8424 = vsub.f32 %v220, %v8423
    %v8425 = vand.u32 %v8424, 4294901760
    %v8426 = vsub.f32 %v8424, %v8425
    %v8427 = vand.u32 %v8426, 4294901760
    %8428 = vmatpush.msra.mxu0 %v8427
    %v8429 = vand.u32 %v216, 4294901760
    %v8430 = vsub.f32 %v216, %v8429
    %v8431 = vand.u32 %v8430, 4294901760
    %v8432 = vsub.f32 %v8430, %v8431
    %v8433 = vand.u32 %v8432, 4294901760
    %8434 = vmatpush.msra.mxu0 %v8433
    %v8435 = vand.u32 %v212, 4294901760
    %v8436 = vsub.f32 %v212, %v8435
    %v8437 = vand.u32 %v8436, 4294901760
    %v8438 = vsub.f32 %v8436, %v8437
    %v8439 = vand.u32 %v8438, 4294901760
    %8440 = vmatpush.msra.mxu0 %v8439
    %v8441 = vand.u32 %v5916, 4294901760
    %8442 = vmatmul.f32.gmra.mxu0 %v8441
    %v8443 = vpop.f32.mrf.mxu0
    %v8444 = vadd.f32 %v8343, %v8443
    %8445 = vdwg.mxu0
    %v8446 = vand.u32 %v272, 4294901760
    %v8447 = vsub.f32 %v272, %v8446
    %8448 = vmatpush.msra.mxu0 %v8447
    %v8449 = vand.u32 %v268, 4294901760
    %v8450 = vsub.f32 %v268, %v8449
    %8451 = vmatpush.msra.mxu0 %v8450
    %v8452 = vand.u32 %v264, 4294901760
    %v8453 = vsub.f32 %v264, %v8452
    %8454 = vmatpush.msra.mxu0 %v8453
    %v8455 = vand.u32 %v260, 4294901760
    %v8456 = vsub.f32 %v260, %v8455
    %8457 = vmatpush.msra.mxu0 %v8456
    %v8458 = vand.u32 %v256, 4294901760
    %v8459 = vsub.f32 %v256, %v8458
    %8460 = vmatpush.msra.mxu0 %v8459
    %v8461 = vand.u32 %v252, 4294901760
    %v8462 = vsub.f32 %v252, %v8461
    %8463 = vmatpush.msra.mxu0 %v8462
    %v8464 = vand.u32 %v248, 4294901760
    %v8465 = vsub.f32 %v248, %v8464
    %8466 = vmatpush.msra.mxu0 %v8465
    %v8467 = vand.u32 %v244, 4294901760
    %v8468 = vsub.f32 %v244, %v8467
    %8469 = vmatpush.msra.mxu0 %v8468
    %v8470 = vand.u32 %v240, 4294901760
    %v8471 = vsub.f32 %v240, %v8470
    %8472 = vmatpush.msra.mxu0 %v8471
    %v8473 = vand.u32 %v236, 4294901760
    %v8474 = vsub.f32 %v236, %v8473
    %8475 = vmatpush.msra.mxu0 %v8474
    %v8476 = vand.u32 %v232, 4294901760
    %v8477 = vsub.f32 %v232, %v8476
    %8478 = vmatpush.msra.mxu0 %v8477
    %v8479 = vand.u32 %v228, 4294901760
    %v8480 = vsub.f32 %v228, %v8479
    %8481 = vmatpush.msra.mxu0 %v8480
    %v8482 = vand.u32 %v224, 4294901760
    %v8483 = vsub.f32 %v224, %v8482
    %8484 = vmatpush.msra.mxu0 %v8483
    %v8485 = vand.u32 %v220, 4294901760
    %v8486 = vsub.f32 %v220, %v8485
    %8487 = vmatpush.msra.mxu0 %v8486
    %v8488 = vand.u32 %v216, 4294901760
    %v8489 = vsub.f32 %v216, %v8488
    %8490 = vmatpush.msra.mxu0 %v8489
    %v8491 = vand.u32 %v212, 4294901760
    %v8492 = vsub.f32 %v212, %v8491
    %8493 = vmatpush.msra.mxu0 %v8492
    %v8494 = vand.u32 %v5916, 4294901760
    %v8495 = vsub.f32 %v5916, %v8494
    %8496 = vmatmul.f32.gmra.mxu0 %v8495
    %v8497 = vpop.f32.mrf.mxu0
    %v8498 = vadd.f32 %v8444, %v8497
    %8499 = vdwg.mxu0
    %v8500 = vand.u32 %v272, 4294901760
    %8501 = vmatpush.msra.mxu0 %v8500
    %v8502 = vand.u32 %v268, 4294901760
    %8503 = vmatpush.msra.mxu0 %v8502
    %v8504 = vand.u32 %v264, 4294901760
    %8505 = vmatpush.msra.mxu0 %v8504
    %v8506 = vand.u32 %v260, 4294901760
    %8507 = vmatpush.msra.mxu0 %v8506
    %v8508 = vand.u32 %v256, 4294901760
    %8509 = vmatpush.msra.mxu0 %v8508
    %v8510 = vand.u32 %v252, 4294901760
    %8511 = vmatpush.msra.mxu0 %v8510
    %v8512 = vand.u32 %v248, 4294901760
    %8513 = vmatpush.msra.mxu0 %v8512
    %v8514 = vand.u32 %v244, 4294901760
    %8515 = vmatpush.msra.mxu0 %v8514
    %v8516 = vand.u32 %v240, 4294901760
    %8517 = vmatpush.msra.mxu0 %v8516
    %v8518 = vand.u32 %v236, 4294901760
    %8519 = vmatpush.msra.mxu0 %v8518
    %v8520 = vand.u32 %v232, 4294901760
    %8521 = vmatpush.msra.mxu0 %v8520
    %v8522 = vand.u32 %v228, 4294901760
    %8523 = vmatpush.msra.mxu0 %v8522
    %v8524 = vand.u32 %v224, 4294901760
    %8525 = vmatpush.msra.mxu0 %v8524
    %v8526 = vand.u32 %v220, 4294901760
    %8527 = vmatpush.msra.mxu0 %v8526
    %v8528 = vand.u32 %v216, 4294901760
    %8529 = vmatpush.msra.mxu0 %v8528
    %v8530 = vand.u32 %v212, 4294901760
    %8531 = vmatpush.msra.mxu0 %v8530
    %v8532 = vand.u32 %v5916, 4294901760
    %v8533 = vsub.f32 %v5916, %v8532
    %v8534 = vand.u32 %v8533, 4294901760
    %8535 = vmatmul.f32.gmra.mxu0 %v8534
    %v8536 = vpop.f32.mrf.mxu0
    %v8537 = vadd.f32 %v8498, %v8536
    %8538 = vdwg.mxu0
    %v8539 = vand.u32 %v272, 4294901760
    %v8540 = vsub.f32 %v272, %v8539
    %v8541 = vand.u32 %v8540, 4294901760
    %8542 = vmatpush.msra.mxu0 %v8541
    %v8543 = vand.u32 %v268, 4294901760
    %v8544 = vsub.f32 %v268, %v8543
    %v8545 = vand.u32 %v8544, 4294901760
    %8546 = vmatpush.msra.mxu0 %v8545
    %v8547 = vand.u32 %v264, 4294901760
    %v8548 = vsub.f32 %v264, %v8547
    %v8549 = vand.u32 %v8548, 4294901760
    %8550 = vmatpush.msra.mxu0 %v8549
    %v8551 = vand.u32 %v260, 4294901760
    %v8552 = vsub.f32 %v260, %v8551
    %v8553 = vand.u32 %v8552, 4294901760
    %8554 = vmatpush.msra.mxu0 %v8553
    %v8555 = vand.u32 %v256, 4294901760
    %v8556 = vsub.f32 %v256, %v8555
    %v8557 = vand.u32 %v8556, 4294901760
    %8558 = vmatpush.msra.mxu0 %v8557
    %v8559 = vand.u32 %v252, 4294901760
    %v8560 = vsub.f32 %v252, %v8559
    %v8561 = vand.u32 %v8560, 4294901760
    %8562 = vmatpush.msra.mxu0 %v8561
    %v8563 = vand.u32 %v248, 4294901760
    %v8564 = vsub.f32 %v248, %v8563
    %v8565 = vand.u32 %v8564, 4294901760
    %8566 = vmatpush.msra.mxu0 %v8565
    %v8567 = vand.u32 %v244, 4294901760
    %v8568 = vsub.f32 %v244, %v8567
    %v8569 = vand.u32 %v8568, 4294901760
    %8570 = vmatpush.msra.mxu0 %v8569
    %v8571 = vand.u32 %v240, 4294901760
    %v8572 = vsub.f32 %v240, %v8571
    %v8573 = vand.u32 %v8572, 4294901760
    %8574 = vmatpush.msra.mxu0 %v8573
    %v8575 = vand.u32 %v236, 4294901760
    %v8576 = vsub.f32 %v236, %v8575
    %v8577 = vand.u32 %v8576, 4294901760
    %8578 = vmatpush.msra.mxu0 %v8577
    %v8579 = vand.u32 %v232, 4294901760
    %v8580 = vsub.f32 %v232, %v8579
    %v8581 = vand.u32 %v8580, 4294901760
    %8582 = vmatpush.msra.mxu0 %v8581
    %v8583 = vand.u32 %v228, 4294901760
    %v8584 = vsub.f32 %v228, %v8583
    %v8585 = vand.u32 %v8584, 4294901760
    %8586 = vmatpush.msra.mxu0 %v8585
    %v8587 = vand.u32 %v224, 4294901760
    %v8588 = vsub.f32 %v224, %v8587
    %v8589 = vand.u32 %v8588, 4294901760
    %8590 = vmatpush.msra.mxu0 %v8589
    %v8591 = vand.u32 %v220, 4294901760
    %v8592 = vsub.f32 %v220, %v8591
    %v8593 = vand.u32 %v8592, 4294901760
    %8594 = vmatpush.msra.mxu0 %v8593
    %v8595 = vand.u32 %v216, 4294901760
    %v8596 = vsub.f32 %v216, %v8595
    %v8597 = vand.u32 %v8596, 4294901760
    %8598 = vmatpush.msra.mxu0 %v8597
    %v8599 = vand.u32 %v212, 4294901760
    %v8600 = vsub.f32 %v212, %v8599
    %v8601 = vand.u32 %v8600, 4294901760
    %8602 = vmatpush.msra.mxu0 %v8601
    %v8603 = vand.u32 %v5916, 4294901760
    %8604 = vmatmul.f32.gmra.mxu0 %v8603
    %v8605 = vpop.f32.mrf.mxu0
    %v8606 = vadd.f32 %v8537, %v8605
    %8607 = vdwg.mxu0
    %v8608 = vand.u32 %v272, 4294901760
    %8609 = vmatpush.msra.mxu0 %v8608
    %v8610 = vand.u32 %v268, 4294901760
    %8611 = vmatpush.msra.mxu0 %v8610
    %v8612 = vand.u32 %v264, 4294901760
    %8613 = vmatpush.msra.mxu0 %v8612
    %v8614 = vand.u32 %v260, 4294901760
    %8615 = vmatpush.msra.mxu0 %v8614
    %v8616 = vand.u32 %v256, 4294901760
    %8617 = vmatpush.msra.mxu0 %v8616
    %v8618 = vand.u32 %v252, 4294901760
    %8619 = vmatpush.msra.mxu0 %v8618
    %v8620 = vand.u32 %v248, 4294901760
    %8621 = vmatpush.msra.mxu0 %v8620
    %v8622 = vand.u32 %v244, 4294901760
    %8623 = vmatpush.msra.mxu0 %v8622
    %v8624 = vand.u32 %v240, 4294901760
    %8625 = vmatpush.msra.mxu0 %v8624
    %v8626 = vand.u32 %v236, 4294901760
    %8627 = vmatpush.msra.mxu0 %v8626
    %v8628 = vand.u32 %v232, 4294901760
    %8629 = vmatpush.msra.mxu0 %v8628
    %v8630 = vand.u32 %v228, 4294901760
    %8631 = vmatpush.msra.mxu0 %v8630
    %v8632 = vand.u32 %v224, 4294901760
    %8633 = vmatpush.msra.mxu0 %v8632
    %v8634 = vand.u32 %v220, 4294901760
    %8635 = vmatpush.msra.mxu0 %v8634
    %v8636 = vand.u32 %v216, 4294901760
    %8637 = vmatpush.msra.mxu0 %v8636
    %v8638 = vand.u32 %v212, 4294901760
    %8639 = vmatpush.msra.mxu0 %v8638
    %v8640 = vand.u32 %v5916, 4294901760
    %8641 = vmatmul.f32.gmra.mxu0 %v8640
    %v8642 = vpop.f32.mrf.mxu0
    %v8643 = vadd.f32 %v8606, %v8642
    %8644 = vdwg.mxu0
    %v8645 = vand.u32 %v81, 4294901760
    %8646 = vmatpush.msra.mxu0 %v8645
    %v8647 = vand.u32 %v77, 4294901760
    %8648 = vmatpush.msra.mxu0 %v8647
    %v8649 = vand.u32 %v73, 4294901760
    %8650 = vmatpush.msra.mxu0 %v8649
    %v8651 = vand.u32 %v69, 4294901760
    %8652 = vmatpush.msra.mxu0 %v8651
    %v8653 = vand.u32 %v65, 4294901760
    %8654 = vmatpush.msra.mxu0 %v8653
    %v8655 = vand.u32 %v61, 4294901760
    %8656 = vmatpush.msra.mxu0 %v8655
    %v8657 = vand.u32 %v57, 4294901760
    %8658 = vmatpush.msra.mxu0 %v8657
    %v8659 = vand.u32 %v53, 4294901760
    %8660 = vmatpush.msra.mxu0 %v8659
    %v8661 = vand.u32 %v49, 4294901760
    %8662 = vmatpush.msra.mxu0 %v8661
    %v8663 = vand.u32 %v45, 4294901760
    %8664 = vmatpush.msra.mxu0 %v8663
    %v8665 = vand.u32 %v41, 4294901760
    %8666 = vmatpush.msra.mxu0 %v8665
    %v8667 = vand.u32 %v37, 4294901760
    %8668 = vmatpush.msra.mxu0 %v8667
    %v8669 = vand.u32 %v33, 4294901760
    %8670 = vmatpush.msra.mxu0 %v8669
    %v8671 = vand.u32 %v29, 4294901760
    %8672 = vmatpush.msra.mxu0 %v8671
    %v8673 = vand.u32 %v25, 4294901760
    %8674 = vmatpush.msra.mxu0 %v8673
    %v8675 = vand.u32 %v21, 4294901760
    %8676 = vmatpush.msra.mxu0 %v8675
    %v8677 = vand.u32 %v5913, 4294901760
    %v8678 = vsub.f32 %v5913, %v8677
    %v8679 = vand.u32 %v8678, 4294901760
    %v8680 = vsub.f32 %v8678, %v8679
    %v8681 = vand.u32 %v8680, 4294901760
    %8682 = vmatmul.f32.gmra.mxu0 %v8681
    %v8683 = vpop.f32.mrf.mxu0
    %v8684 = vadd.f32 %v279, %v8683
    %8685 = vdwg.mxu0
    %v8686 = vand.u32 %v81, 4294901760
    %v8687 = vsub.f32 %v81, %v8686
    %v8688 = vand.u32 %v8687, 4294901760
    %v8689 = vsub.f32 %v8687, %v8688
    %v8690 = vand.u32 %v8689, 4294901760
    %8691 = vmatpush.msra.mxu0 %v8690
    %v8692 = vand.u32 %v77, 4294901760
    %v8693 = vsub.f32 %v77, %v8692
    %v8694 = vand.u32 %v8693, 4294901760
    %v8695 = vsub.f32 %v8693, %v8694
    %v8696 = vand.u32 %v8695, 4294901760
    %8697 = vmatpush.msra.mxu0 %v8696
    %v8698 = vand.u32 %v73, 4294901760
    %v8699 = vsub.f32 %v73, %v8698
    %v8700 = vand.u32 %v8699, 4294901760
    %v8701 = vsub.f32 %v8699, %v8700
    %v8702 = vand.u32 %v8701, 4294901760
    %8703 = vmatpush.msra.mxu0 %v8702
    %v8704 = vand.u32 %v69, 4294901760
    %v8705 = vsub.f32 %v69, %v8704
    %v8706 = vand.u32 %v8705, 4294901760
    %v8707 = vsub.f32 %v8705, %v8706
    %v8708 = vand.u32 %v8707, 4294901760
    %8709 = vmatpush.msra.mxu0 %v8708
    %v8710 = vand.u32 %v65, 4294901760
    %v8711 = vsub.f32 %v65, %v8710
    %v8712 = vand.u32 %v8711, 4294901760
    %v8713 = vsub.f32 %v8711, %v8712
    %v8714 = vand.u32 %v8713, 4294901760
    %8715 = vmatpush.msra.mxu0 %v8714
    %v8716 = vand.u32 %v61, 4294901760
    %v8717 = vsub.f32 %v61, %v8716
    %v8718 = vand.u32 %v8717, 4294901760
    %v8719 = vsub.f32 %v8717, %v8718
    %v8720 = vand.u32 %v8719, 4294901760
    %8721 = vmatpush.msra.mxu0 %v8720
    %v8722 = vand.u32 %v57, 4294901760
    %v8723 = vsub.f32 %v57, %v8722
    %v8724 = vand.u32 %v8723, 4294901760
    %v8725 = vsub.f32 %v8723, %v8724
    %v8726 = vand.u32 %v8725, 4294901760
    %8727 = vmatpush.msra.mxu0 %v8726
    %v8728 = vand.u32 %v53, 4294901760
    %v8729 = vsub.f32 %v53, %v8728
    %v8730 = vand.u32 %v8729, 4294901760
    %v8731 = vsub.f32 %v8729, %v8730
    %v8732 = vand.u32 %v8731, 4294901760
    %8733 = vmatpush.msra.mxu0 %v8732
    %v8734 = vand.u32 %v49, 4294901760
    %v8735 = vsub.f32 %v49, %v8734
    %v8736 = vand.u32 %v8735, 4294901760
    %v8737 = vsub.f32 %v8735, %v8736
    %v8738 = vand.u32 %v8737, 4294901760
    %8739 = vmatpush.msra.mxu0 %v8738
    %v8740 = vand.u32 %v45, 4294901760
    %v8741 = vsub.f32 %v45, %v8740
    %v8742 = vand.u32 %v8741, 4294901760
    %v8743 = vsub.f32 %v8741, %v8742
    %v8744 = vand.u32 %v8743, 4294901760
    %8745 = vmatpush.msra.mxu0 %v8744
    %v8746 = vand.u32 %v41, 4294901760
    %v8747 = vsub.f32 %v41, %v8746
    %v8748 = vand.u32 %v8747, 4294901760
    %v8749 = vsub.f32 %v8747, %v8748
    %v8750 = vand.u32 %v8749, 4294901760
    %8751 = vmatpush.msra.mxu0 %v8750
    %v8752 = vand.u32 %v37, 4294901760
    %v8753 = vsub.f32 %v37, %v8752
    %v8754 = vand.u32 %v8753, 4294901760
    %v8755 = vsub.f32 %v8753, %v8754
    %v8756 = vand.u32 %v8755, 4294901760
    %8757 = vmatpush.msra.mxu0 %v8756
    %v8758 = vand.u32 %v33, 4294901760
    %v8759 = vsub.f32 %v33, %v8758
    %v8760 = vand.u32 %v8759, 4294901760
    %v8761 = vsub.f32 %v8759, %v8760
    %v8762 = vand.u32 %v8761, 4294901760
    %8763 = vmatpush.msra.mxu0 %v8762
    %v8764 = vand.u32 %v29, 4294901760
    %v8765 = vsub.f32 %v29, %v8764
    %v8766 = vand.u32 %v8765, 4294901760
    %v8767 = vsub.f32 %v8765, %v8766
    %v8768 = vand.u32 %v8767, 4294901760
    %8769 = vmatpush.msra.mxu0 %v8768
    %v8770 = vand.u32 %v25, 4294901760
    %v8771 = vsub.f32 %v25, %v8770
    %v8772 = vand.u32 %v8771, 4294901760
    %v8773 = vsub.f32 %v8771, %v8772
    %v8774 = vand.u32 %v8773, 4294901760
    %8775 = vmatpush.msra.mxu0 %v8774
    %v8776 = vand.u32 %v21, 4294901760
    %v8777 = vsub.f32 %v21, %v8776
    %v8778 = vand.u32 %v8777, 4294901760
    %v8779 = vsub.f32 %v8777, %v8778
    %v8780 = vand.u32 %v8779, 4294901760
    %8781 = vmatpush.msra.mxu0 %v8780
    %v8782 = vand.u32 %v5913, 4294901760
    %8783 = vmatmul.f32.gmra.mxu0 %v8782
    %v8784 = vpop.f32.mrf.mxu0
    %v8785 = vadd.f32 %v8684, %v8784
    %8786 = vdwg.mxu0
    %v8787 = vand.u32 %v81, 4294901760
    %v8788 = vsub.f32 %v81, %v8787
    %8789 = vmatpush.msra.mxu0 %v8788
    %v8790 = vand.u32 %v77, 4294901760
    %v8791 = vsub.f32 %v77, %v8790
    %8792 = vmatpush.msra.mxu0 %v8791
    %v8793 = vand.u32 %v73, 4294901760
    %v8794 = vsub.f32 %v73, %v8793
    %8795 = vmatpush.msra.mxu0 %v8794
    %v8796 = vand.u32 %v69, 4294901760
    %v8797 = vsub.f32 %v69, %v8796
    %8798 = vmatpush.msra.mxu0 %v8797
    %v8799 = vand.u32 %v65, 4294901760
    %v8800 = vsub.f32 %v65, %v8799
    %8801 = vmatpush.msra.mxu0 %v8800
    %v8802 = vand.u32 %v61, 4294901760
    %v8803 = vsub.f32 %v61, %v8802
    %8804 = vmatpush.msra.mxu0 %v8803
    %v8805 = vand.u32 %v57, 4294901760
    %v8806 = vsub.f32 %v57, %v8805
    %8807 = vmatpush.msra.mxu0 %v8806
    %v8808 = vand.u32 %v53, 4294901760
    %v8809 = vsub.f32 %v53, %v8808
    %8810 = vmatpush.msra.mxu0 %v8809
    %v8811 = vand.u32 %v49, 4294901760
    %v8812 = vsub.f32 %v49, %v8811
    %8813 = vmatpush.msra.mxu0 %v8812
    %v8814 = vand.u32 %v45, 4294901760
    %v8815 = vsub.f32 %v45, %v8814
    %8816 = vmatpush.msra.mxu0 %v8815
    %v8817 = vand.u32 %v41, 4294901760
    %v8818 = vsub.f32 %v41, %v8817
    %8819 = vmatpush.msra.mxu0 %v8818
    %v8820 = vand.u32 %v37, 4294901760
    %v8821 = vsub.f32 %v37, %v8820
    %8822 = vmatpush.msra.mxu0 %v8821
    %v8823 = vand.u32 %v33, 4294901760
    %v8824 = vsub.f32 %v33, %v8823
    %8825 = vmatpush.msra.mxu0 %v8824
    %v8826 = vand.u32 %v29, 4294901760
    %v8827 = vsub.f32 %v29, %v8826
    %8828 = vmatpush.msra.mxu0 %v8827
    %v8829 = vand.u32 %v25, 4294901760
    %v8830 = vsub.f32 %v25, %v8829
    %8831 = vmatpush.msra.mxu0 %v8830
    %v8832 = vand.u32 %v21, 4294901760
    %v8833 = vsub.f32 %v21, %v8832
    %8834 = vmatpush.msra.mxu0 %v8833
    %v8835 = vand.u32 %v5913, 4294901760
    %v8836 = vsub.f32 %v5913, %v8835
    %8837 = vmatmul.f32.gmra.mxu0 %v8836
    %v8838 = vpop.f32.mrf.mxu0
    %v8839 = vadd.f32 %v8785, %v8838
    %8840 = vdwg.mxu0
    %v8841 = vand.u32 %v81, 4294901760
    %8842 = vmatpush.msra.mxu0 %v8841
    %v8843 = vand.u32 %v77, 4294901760
    %8844 = vmatpush.msra.mxu0 %v8843
    %v8845 = vand.u32 %v73, 4294901760
    %8846 = vmatpush.msra.mxu0 %v8845
    %v8847 = vand.u32 %v69, 4294901760
    %8848 = vmatpush.msra.mxu0 %v8847
    %v8849 = vand.u32 %v65, 4294901760
    %8850 = vmatpush.msra.mxu0 %v8849
    %v8851 = vand.u32 %v61, 4294901760
    %8852 = vmatpush.msra.mxu0 %v8851
    %v8853 = vand.u32 %v57, 4294901760
    %8854 = vmatpush.msra.mxu0 %v8853
    %v8855 = vand.u32 %v53, 4294901760
    %8856 = vmatpush.msra.mxu0 %v8855
    %v8857 = vand.u32 %v49, 4294901760
    %8858 = vmatpush.msra.mxu0 %v8857
    %v8859 = vand.u32 %v45, 4294901760
    %8860 = vmatpush.msra.mxu0 %v8859
    %v8861 = vand.u32 %v41, 4294901760
    %8862 = vmatpush.msra.mxu0 %v8861
    %v8863 = vand.u32 %v37, 4294901760
    %8864 = vmatpush.msra.mxu0 %v8863
    %v8865 = vand.u32 %v33, 4294901760
    %8866 = vmatpush.msra.mxu0 %v8865
    %v8867 = vand.u32 %v29, 4294901760
    %8868 = vmatpush.msra.mxu0 %v8867
    %v8869 = vand.u32 %v25, 4294901760
    %8870 = vmatpush.msra.mxu0 %v8869
    %v8871 = vand.u32 %v21, 4294901760
    %8872 = vmatpush.msra.mxu0 %v8871
    %v8873 = vand.u32 %v5913, 4294901760
    %v8874 = vsub.f32 %v5913, %v8873
    %v8875 = vand.u32 %v8874, 4294901760
    %8876 = vmatmul.f32.gmra.mxu0 %v8875
    %v8877 = vpop.f32.mrf.mxu0
    %v8878 = vadd.f32 %v8839, %v8877
    %8879 = vdwg.mxu0
    %v8880 = vand.u32 %v81, 4294901760
    %v8881 = vsub.f32 %v81, %v8880
    %v8882 = vand.u32 %v8881, 4294901760
    %8883 = vmatpush.msra.mxu0 %v8882
    %v8884 = vand.u32 %v77, 4294901760
    %v8885 = vsub.f32 %v77, %v8884
    %v8886 = vand.u32 %v8885, 4294901760
    %8887 = vmatpush.msra.mxu0 %v8886
    %v8888 = vand.u32 %v73, 4294901760
    %v8889 = vsub.f32 %v73, %v8888
    %v8890 = vand.u32 %v8889, 4294901760
    %8891 = vmatpush.msra.mxu0 %v8890
    %v8892 = vand.u32 %v69, 4294901760
    %v8893 = vsub.f32 %v69, %v8892
    %v8894 = vand.u32 %v8893, 4294901760
    %8895 = vmatpush.msra.mxu0 %v8894
    %v8896 = vand.u32 %v65, 4294901760
    %v8897 = vsub.f32 %v65, %v8896
    %v8898 = vand.u32 %v8897, 4294901760
    %8899 = vmatpush.msra.mxu0 %v8898
    %v8900 = vand.u32 %v61, 4294901760
    %v8901 = vsub.f32 %v61, %v8900
    %v8902 = vand.u32 %v8901, 4294901760
    %8903 = vmatpush.msra.mxu0 %v8902
    %v8904 = vand.u32 %v57, 4294901760
    %v8905 = vsub.f32 %v57, %v8904
    %v8906 = vand.u32 %v8905, 4294901760
    %8907 = vmatpush.msra.mxu0 %v8906
    %v8908 = vand.u32 %v53, 4294901760
    %v8909 = vsub.f32 %v53, %v8908
    %v8910 = vand.u32 %v8909, 4294901760
    %8911 = vmatpush.msra.mxu0 %v8910
    %v8912 = vand.u32 %v49, 4294901760
    %v8913 = vsub.f32 %v49, %v8912
    %v8914 = vand.u32 %v8913, 4294901760
    %8915 = vmatpush.msra.mxu0 %v8914
    %v8916 = vand.u32 %v45, 4294901760
    %v8917 = vsub.f32 %v45, %v8916
    %v8918 = vand.u32 %v8917, 4294901760
    %8919 = vmatpush.msra.mxu0 %v8918
    %v8920 = vand.u32 %v41, 4294901760
    %v8921 = vsub.f32 %v41, %v8920
    %v8922 = vand.u32 %v8921, 4294901760
    %8923 = vmatpush.msra.mxu0 %v8922
    %v8924 = vand.u32 %v37, 4294901760
    %v8925 = vsub.f32 %v37, %v8924
    %v8926 = vand.u32 %v8925, 4294901760
    %8927 = vmatpush.msra.mxu0 %v8926
    %v8928 = vand.u32 %v33, 4294901760
    %v8929 = vsub.f32 %v33, %v8928
    %v8930 = vand.u32 %v8929, 4294901760
    %8931 = vmatpush.msra.mxu0 %v8930
    %v8932 = vand.u32 %v29, 4294901760
    %v8933 = vsub.f32 %v29, %v8932
    %v8934 = vand.u32 %v8933, 4294901760
    %8935 = vmatpush.msra.mxu0 %v8934
    %v8936 = vand.u32 %v25, 4294901760
    %v8937 = vsub.f32 %v25, %v8936
    %v8938 = vand.u32 %v8937, 4294901760
    %8939 = vmatpush.msra.mxu0 %v8938
    %v8940 = vand.u32 %v21, 4294901760
    %v8941 = vsub.f32 %v21, %v8940
    %v8942 = vand.u32 %v8941, 4294901760
    %8943 = vmatpush.msra.mxu0 %v8942
    %v8944 = vand.u32 %v5913, 4294901760
    %8945 = vmatmul.f32.gmra.mxu0 %v8944
    %v8946 = vpop.f32.mrf.mxu0
    %v8947 = vadd.f32 %v8878, %v8946
    %8948 = vdwg.mxu0
    %v8949 = vand.u32 %v81, 4294901760
    %8950 = vmatpush.msra.mxu0 %v8949
    %v8951 = vand.u32 %v77, 4294901760
    %8952 = vmatpush.msra.mxu0 %v8951
    %v8953 = vand.u32 %v73, 4294901760
    %8954 = vmatpush.msra.mxu0 %v8953
    %v8955 = vand.u32 %v69, 4294901760
    %8956 = vmatpush.msra.mxu0 %v8955
    %v8957 = vand.u32 %v65, 4294901760
    %8958 = vmatpush.msra.mxu0 %v8957
    %v8959 = vand.u32 %v61, 4294901760
    %8960 = vmatpush.msra.mxu0 %v8959
    %v8961 = vand.u32 %v57, 4294901760
    %8962 = vmatpush.msra.mxu0 %v8961
    %v8963 = vand.u32 %v53, 4294901760
    %8964 = vmatpush.msra.mxu0 %v8963
    %v8965 = vand.u32 %v49, 4294901760
    %8966 = vmatpush.msra.mxu0 %v8965
    %v8967 = vand.u32 %v45, 4294901760
    %8968 = vmatpush.msra.mxu0 %v8967
    %v8969 = vand.u32 %v41, 4294901760
    %8970 = vmatpush.msra.mxu0 %v8969
    %v8971 = vand.u32 %v37, 4294901760
    %8972 = vmatpush.msra.mxu0 %v8971
    %v8973 = vand.u32 %v33, 4294901760
    %8974 = vmatpush.msra.mxu0 %v8973
    %v8975 = vand.u32 %v29, 4294901760
    %8976 = vmatpush.msra.mxu0 %v8975
    %v8977 = vand.u32 %v25, 4294901760
    %8978 = vmatpush.msra.mxu0 %v8977
    %v8979 = vand.u32 %v21, 4294901760
    %8980 = vmatpush.msra.mxu0 %v8979
    %v8981 = vand.u32 %v5913, 4294901760
    %8982 = vmatmul.f32.gmra.mxu0 %v8981
    %v8983 = vpop.f32.mrf.mxu0
    %v8984 = vadd.f32 %v8947, %v8983
    %8985 = vdwg.mxu0
    %v8986 = vand.u32 %v145, 4294901760
    %8987 = vmatpush.msra.mxu0 %v8986
    %v8988 = vand.u32 %v141, 4294901760
    %8989 = vmatpush.msra.mxu0 %v8988
    %v8990 = vand.u32 %v137, 4294901760
    %8991 = vmatpush.msra.mxu0 %v8990
    %v8992 = vand.u32 %v133, 4294901760
    %8993 = vmatpush.msra.mxu0 %v8992
    %v8994 = vand.u32 %v129, 4294901760
    %8995 = vmatpush.msra.mxu0 %v8994
    %v8996 = vand.u32 %v125, 4294901760
    %8997 = vmatpush.msra.mxu0 %v8996
    %v8998 = vand.u32 %v121, 4294901760
    %8999 = vmatpush.msra.mxu0 %v8998
    %v9000 = vand.u32 %v117, 4294901760
    %9001 = vmatpush.msra.mxu0 %v9000
    %v9002 = vand.u32 %v113, 4294901760
    %9003 = vmatpush.msra.mxu0 %v9002
    %v9004 = vand.u32 %v109, 4294901760
    %9005 = vmatpush.msra.mxu0 %v9004
    %v9006 = vand.u32 %v105, 4294901760
    %9007 = vmatpush.msra.mxu0 %v9006
    %v9008 = vand.u32 %v101, 4294901760
    %9009 = vmatpush.msra.mxu0 %v9008
    %v9010 = vand.u32 %v97, 4294901760
    %9011 = vmatpush.msra.mxu0 %v9010
    %v9012 = vand.u32 %v93, 4294901760
    %9013 = vmatpush.msra.mxu0 %v9012
    %v9014 = vand.u32 %v89, 4294901760
    %9015 = vmatpush.msra.mxu0 %v9014
    %v9016 = vand.u32 %v85, 4294901760
    %9017 = vmatpush.msra.mxu0 %v9016
    %v9018 = vand.u32 %v5914, 4294901760
    %v9019 = vsub.f32 %v5914, %v9018
    %v9020 = vand.u32 %v9019, 4294901760
    %v9021 = vsub.f32 %v9019, %v9020
    %v9022 = vand.u32 %v9021, 4294901760
    %9023 = vmatmul.f32.gmra.mxu0 %v9022
    %v9024 = vpop.f32.mrf.mxu0
    %v9025 = vadd.f32 %v8984, %v9024
    %9026 = vdwg.mxu0
    %v9027 = vand.u32 %v145, 4294901760
    %v9028 = vsub.f32 %v145, %v9027
    %v9029 = vand.u32 %v9028, 4294901760
    %v9030 = vsub.f32 %v9028, %v9029
    %v9031 = vand.u32 %v9030, 4294901760
    %9032 = vmatpush.msra.mxu0 %v9031
    %v9033 = vand.u32 %v141, 4294901760
    %v9034 = vsub.f32 %v141, %v9033
    %v9035 = vand.u32 %v9034, 4294901760
    %v9036 = vsub.f32 %v9034, %v9035
    %v9037 = vand.u32 %v9036, 4294901760
    %9038 = vmatpush.msra.mxu0 %v9037
    %v9039 = vand.u32 %v137, 4294901760
    %v9040 = vsub.f32 %v137, %v9039
    %v9041 = vand.u32 %v9040, 4294901760
    %v9042 = vsub.f32 %v9040, %v9041
    %v9043 = vand.u32 %v9042, 4294901760
    %9044 = vmatpush.msra.mxu0 %v9043
    %v9045 = vand.u32 %v133, 4294901760
    %v9046 = vsub.f32 %v133, %v9045
    %v9047 = vand.u32 %v9046, 4294901760
    %v9048 = vsub.f32 %v9046, %v9047
    %v9049 = vand.u32 %v9048, 4294901760
    %9050 = vmatpush.msra.mxu0 %v9049
    %v9051 = vand.u32 %v129, 4294901760
    %v9052 = vsub.f32 %v129, %v9051
    %v9053 = vand.u32 %v9052, 4294901760
    %v9054 = vsub.f32 %v9052, %v9053
    %v9055 = vand.u32 %v9054, 4294901760
    %9056 = vmatpush.msra.mxu0 %v9055
    %v9057 = vand.u32 %v125, 4294901760
    %v9058 = vsub.f32 %v125, %v9057
    %v9059 = vand.u32 %v9058, 4294901760
    %v9060 = vsub.f32 %v9058, %v9059
    %v9061 = vand.u32 %v9060, 4294901760
    %9062 = vmatpush.msra.mxu0 %v9061
    %v9063 = vand.u32 %v121, 4294901760
    %v9064 = vsub.f32 %v121, %v9063
    %v9065 = vand.u32 %v9064, 4294901760
    %v9066 = vsub.f32 %v9064, %v9065
    %v9067 = vand.u32 %v9066, 4294901760
    %9068 = vmatpush.msra.mxu0 %v9067
    %v9069 = vand.u32 %v117, 4294901760
    %v9070 = vsub.f32 %v117, %v9069
    %v9071 = vand.u32 %v9070, 4294901760
    %v9072 = vsub.f32 %v9070, %v9071
    %v9073 = vand.u32 %v9072, 4294901760
    %9074 = vmatpush.msra.mxu0 %v9073
    %v9075 = vand.u32 %v113, 4294901760
    %v9076 = vsub.f32 %v113, %v9075
    %v9077 = vand.u32 %v9076, 4294901760
    %v9078 = vsub.f32 %v9076, %v9077
    %v9079 = vand.u32 %v9078, 4294901760
    %9080 = vmatpush.msra.mxu0 %v9079
    %v9081 = vand.u32 %v109, 4294901760
    %v9082 = vsub.f32 %v109, %v9081
    %v9083 = vand.u32 %v9082, 4294901760
    %v9084 = vsub.f32 %v9082, %v9083
    %v9085 = vand.u32 %v9084, 4294901760
    %9086 = vmatpush.msra.mxu0 %v9085
    %v9087 = vand.u32 %v105, 4294901760
    %v9088 = vsub.f32 %v105, %v9087
    %v9089 = vand.u32 %v9088, 4294901760
    %v9090 = vsub.f32 %v9088, %v9089
    %v9091 = vand.u32 %v9090, 4294901760
    %9092 = vmatpush.msra.mxu0 %v9091
    %v9093 = vand.u32 %v101, 4294901760
    %v9094 = vsub.f32 %v101, %v9093
    %v9095 = vand.u32 %v9094, 4294901760
    %v9096 = vsub.f32 %v9094, %v9095
    %v9097 = vand.u32 %v9096, 4294901760
    %9098 = vmatpush.msra.mxu0 %v9097
    %v9099 = vand.u32 %v97, 4294901760
    %v9100 = vsub.f32 %v97, %v9099
    %v9101 = vand.u32 %v9100, 4294901760
    %v9102 = vsub.f32 %v9100, %v9101
    %v9103 = vand.u32 %v9102, 4294901760
    %9104 = vmatpush.msra.mxu0 %v9103
    %v9105 = vand.u32 %v93, 4294901760
    %v9106 = vsub.f32 %v93, %v9105
    %v9107 = vand.u32 %v9106, 4294901760
    %v9108 = vsub.f32 %v9106, %v9107
    %v9109 = vand.u32 %v9108, 4294901760
    %9110 = vmatpush.msra.mxu0 %v9109
    %v9111 = vand.u32 %v89, 4294901760
    %v9112 = vsub.f32 %v89, %v9111
    %v9113 = vand.u32 %v9112, 4294901760
    %v9114 = vsub.f32 %v9112, %v9113
    %v9115 = vand.u32 %v9114, 4294901760
    %9116 = vmatpush.msra.mxu0 %v9115
    %v9117 = vand.u32 %v85, 4294901760
    %v9118 = vsub.f32 %v85, %v9117
    %v9119 = vand.u32 %v9118, 4294901760
    %v9120 = vsub.f32 %v9118, %v9119
    %v9121 = vand.u32 %v9120, 4294901760
    %9122 = vmatpush.msra.mxu0 %v9121
    %v9123 = vand.u32 %v5914, 4294901760
    %9124 = vmatmul.f32.gmra.mxu0 %v9123
    %v9125 = vpop.f32.mrf.mxu0
    %v9126 = vadd.f32 %v9025, %v9125
    %9127 = vdwg.mxu0
    %v9128 = vand.u32 %v145, 4294901760
    %v9129 = vsub.f32 %v145, %v9128
    %9130 = vmatpush.msra.mxu0 %v9129
    %v9131 = vand.u32 %v141, 4294901760
    %v9132 = vsub.f32 %v141, %v9131
    %9133 = vmatpush.msra.mxu0 %v9132
    %v9134 = vand.u32 %v137, 4294901760
    %v9135 = vsub.f32 %v137, %v9134
    %9136 = vmatpush.msra.mxu0 %v9135
    %v9137 = vand.u32 %v133, 4294901760
    %v9138 = vsub.f32 %v133, %v9137
    %9139 = vmatpush.msra.mxu0 %v9138
    %v9140 = vand.u32 %v129, 4294901760
    %v9141 = vsub.f32 %v129, %v9140
    %9142 = vmatpush.msra.mxu0 %v9141
    %v9143 = vand.u32 %v125, 4294901760
    %v9144 = vsub.f32 %v125, %v9143
    %9145 = vmatpush.msra.mxu0 %v9144
    %v9146 = vand.u32 %v121, 4294901760
    %v9147 = vsub.f32 %v121, %v9146
    %9148 = vmatpush.msra.mxu0 %v9147
    %v9149 = vand.u32 %v117, 4294901760
    %v9150 = vsub.f32 %v117, %v9149
    %9151 = vmatpush.msra.mxu0 %v9150
    %v9152 = vand.u32 %v113, 4294901760
    %v9153 = vsub.f32 %v113, %v9152
    %9154 = vmatpush.msra.mxu0 %v9153
    %v9155 = vand.u32 %v109, 4294901760
    %v9156 = vsub.f32 %v109, %v9155
    %9157 = vmatpush.msra.mxu0 %v9156
    %v9158 = vand.u32 %v105, 4294901760
    %v9159 = vsub.f32 %v105, %v9158
    %9160 = vmatpush.msra.mxu0 %v9159
    %v9161 = vand.u32 %v101, 4294901760
    %v9162 = vsub.f32 %v101, %v9161
    %9163 = vmatpush.msra.mxu0 %v9162
    %v9164 = vand.u32 %v97, 4294901760
    %v9165 = vsub.f32 %v97, %v9164
    %9166 = vmatpush.msra.mxu0 %v9165
    %v9167 = vand.u32 %v93, 4294901760
    %v9168 = vsub.f32 %v93, %v9167
    %9169 = vmatpush.msra.mxu0 %v9168
    %v9170 = vand.u32 %v89, 4294901760
    %v9171 = vsub.f32 %v89, %v9170
    %9172 = vmatpush.msra.mxu0 %v9171
    %v9173 = vand.u32 %v85, 4294901760
    %v9174 = vsub.f32 %v85, %v9173
    %9175 = vmatpush.msra.mxu0 %v9174
    %v9176 = vand.u32 %v5914, 4294901760
    %v9177 = vsub.f32 %v5914, %v9176
    %9178 = vmatmul.f32.gmra.mxu0 %v9177
    %v9179 = vpop.f32.mrf.mxu0
    %v9180 = vadd.f32 %v9126, %v9179
    %9181 = vdwg.mxu0
    %v9182 = vand.u32 %v145, 4294901760
    %9183 = vmatpush.msra.mxu0 %v9182
    %v9184 = vand.u32 %v141, 4294901760
    %9185 = vmatpush.msra.mxu0 %v9184
    %v9186 = vand.u32 %v137, 4294901760
    %9187 = vmatpush.msra.mxu0 %v9186
    %v9188 = vand.u32 %v133, 4294901760
    %9189 = vmatpush.msra.mxu0 %v9188
    %v9190 = vand.u32 %v129, 4294901760
    %9191 = vmatpush.msra.mxu0 %v9190
    %v9192 = vand.u32 %v125, 4294901760
    %9193 = vmatpush.msra.mxu0 %v9192
    %v9194 = vand.u32 %v121, 4294901760
    %9195 = vmatpush.msra.mxu0 %v9194
    %v9196 = vand.u32 %v117, 4294901760
    %9197 = vmatpush.msra.mxu0 %v9196
    %v9198 = vand.u32 %v113, 4294901760
    %9199 = vmatpush.msra.mxu0 %v9198
    %v9200 = vand.u32 %v109, 4294901760
    %9201 = vmatpush.msra.mxu0 %v9200
    %v9202 = vand.u32 %v105, 4294901760
    %9203 = vmatpush.msra.mxu0 %v9202
    %v9204 = vand.u32 %v101, 4294901760
    %9205 = vmatpush.msra.mxu0 %v9204
    %v9206 = vand.u32 %v97, 4294901760
    %9207 = vmatpush.msra.mxu0 %v9206
    %v9208 = vand.u32 %v93, 4294901760
    %9209 = vmatpush.msra.mxu0 %v9208
    %v9210 = vand.u32 %v89, 4294901760
    %9211 = vmatpush.msra.mxu0 %v9210
    %v9212 = vand.u32 %v85, 4294901760
    %9213 = vmatpush.msra.mxu0 %v9212
    %v9214 = vand.u32 %v5914, 4294901760
    %v9215 = vsub.f32 %v5914, %v9214
    %v9216 = vand.u32 %v9215, 4294901760
    %9217 = vmatmul.f32.gmra.mxu0 %v9216
    %v9218 = vpop.f32.mrf.mxu0
    %v9219 = vadd.f32 %v9180, %v9218
    %9220 = vdwg.mxu0
    %v9221 = vand.u32 %v145, 4294901760
    %v9222 = vsub.f32 %v145, %v9221
    %v9223 = vand.u32 %v9222, 4294901760
    %9224 = vmatpush.msra.mxu0 %v9223
    %v9225 = vand.u32 %v141, 4294901760
    %v9226 = vsub.f32 %v141, %v9225
    %v9227 = vand.u32 %v9226, 4294901760
    %9228 = vmatpush.msra.mxu0 %v9227
    %v9229 = vand.u32 %v137, 4294901760
    %v9230 = vsub.f32 %v137, %v9229
    %v9231 = vand.u32 %v9230, 4294901760
    %9232 = vmatpush.msra.mxu0 %v9231
    %v9233 = vand.u32 %v133, 4294901760
    %v9234 = vsub.f32 %v133, %v9233
    %v9235 = vand.u32 %v9234, 4294901760
    %9236 = vmatpush.msra.mxu0 %v9235
    %v9237 = vand.u32 %v129, 4294901760
    %v9238 = vsub.f32 %v129, %v9237
    %v9239 = vand.u32 %v9238, 4294901760
    %9240 = vmatpush.msra.mxu0 %v9239
    %v9241 = vand.u32 %v125, 4294901760
    %v9242 = vsub.f32 %v125, %v9241
    %v9243 = vand.u32 %v9242, 4294901760
    %9244 = vmatpush.msra.mxu0 %v9243
    %v9245 = vand.u32 %v121, 4294901760
    %v9246 = vsub.f32 %v121, %v9245
    %v9247 = vand.u32 %v9246, 4294901760
    %9248 = vmatpush.msra.mxu0 %v9247
    %v9249 = vand.u32 %v117, 4294901760
    %v9250 = vsub.f32 %v117, %v9249
    %v9251 = vand.u32 %v9250, 4294901760
    %9252 = vmatpush.msra.mxu0 %v9251
    %v9253 = vand.u32 %v113, 4294901760
    %v9254 = vsub.f32 %v113, %v9253
    %v9255 = vand.u32 %v9254, 4294901760
    %9256 = vmatpush.msra.mxu0 %v9255
    %v9257 = vand.u32 %v109, 4294901760
    %v9258 = vsub.f32 %v109, %v9257
    %v9259 = vand.u32 %v9258, 4294901760
    %9260 = vmatpush.msra.mxu0 %v9259
    %v9261 = vand.u32 %v105, 4294901760
    %v9262 = vsub.f32 %v105, %v9261
    %v9263 = vand.u32 %v9262, 4294901760
    %9264 = vmatpush.msra.mxu0 %v9263
    %v9265 = vand.u32 %v101, 4294901760
    %v9266 = vsub.f32 %v101, %v9265
    %v9267 = vand.u32 %v9266, 4294901760
    %9268 = vmatpush.msra.mxu0 %v9267
    %v9269 = vand.u32 %v97, 4294901760
    %v9270 = vsub.f32 %v97, %v9269
    %v9271 = vand.u32 %v9270, 4294901760
    %9272 = vmatpush.msra.mxu0 %v9271
    %v9273 = vand.u32 %v93, 4294901760
    %v9274 = vsub.f32 %v93, %v9273
    %v9275 = vand.u32 %v9274, 4294901760
    %9276 = vmatpush.msra.mxu0 %v9275
    %v9277 = vand.u32 %v89, 4294901760
    %v9278 = vsub.f32 %v89, %v9277
    %v9279 = vand.u32 %v9278, 4294901760
    %9280 = vmatpush.msra.mxu0 %v9279
    %v9281 = vand.u32 %v85, 4294901760
    %v9282 = vsub.f32 %v85, %v9281
    %v9283 = vand.u32 %v9282, 4294901760
    %9284 = vmatpush.msra.mxu0 %v9283
    %v9285 = vand.u32 %v5914, 4294901760
    %9286 = vmatmul.f32.gmra.mxu0 %v9285
    %v9287 = vpop.f32.mrf.mxu0
    %v9288 = vadd.f32 %v9219, %v9287
    %9289 = vdwg.mxu0
    %v9290 = vand.u32 %v145, 4294901760
    %9291 = vmatpush.msra.mxu0 %v9290
    %v9292 = vand.u32 %v141, 4294901760
    %9293 = vmatpush.msra.mxu0 %v9292
    %v9294 = vand.u32 %v137, 4294901760
    %9295 = vmatpush.msra.mxu0 %v9294
    %v9296 = vand.u32 %v133, 4294901760
    %9297 = vmatpush.msra.mxu0 %v9296
    %v9298 = vand.u32 %v129, 4294901760
    %9299 = vmatpush.msra.mxu0 %v9298
    %v9300 = vand.u32 %v125, 4294901760
    %9301 = vmatpush.msra.mxu0 %v9300
    %v9302 = vand.u32 %v121, 4294901760
    %9303 = vmatpush.msra.mxu0 %v9302
    %v9304 = vand.u32 %v117, 4294901760
    %9305 = vmatpush.msra.mxu0 %v9304
    %v9306 = vand.u32 %v113, 4294901760
    %9307 = vmatpush.msra.mxu0 %v9306
    %v9308 = vand.u32 %v109, 4294901760
    %9309 = vmatpush.msra.mxu0 %v9308
    %v9310 = vand.u32 %v105, 4294901760
    %9311 = vmatpush.msra.mxu0 %v9310
    %v9312 = vand.u32 %v101, 4294901760
    %9313 = vmatpush.msra.mxu0 %v9312
    %v9314 = vand.u32 %v97, 4294901760
    %9315 = vmatpush.msra.mxu0 %v9314
    %v9316 = vand.u32 %v93, 4294901760
    %9317 = vmatpush.msra.mxu0 %v9316
    %v9318 = vand.u32 %v89, 4294901760
    %9319 = vmatpush.msra.mxu0 %v9318
    %v9320 = vand.u32 %v85, 4294901760
    %9321 = vmatpush.msra.mxu0 %v9320
    %v9322 = vand.u32 %v5914, 4294901760
    %9323 = vmatmul.f32.gmra.mxu0 %v9322
    %v9324 = vpop.f32.mrf.mxu0
    %v9325 = vadd.f32 %v9288, %v9324
    %9326 = vdwg.mxu0
    %v9327 = vand.u32 %v209, 4294901760
    %9328 = vmatpush.msra.mxu0 %v9327
    %v9329 = vand.u32 %v205, 4294901760
    %9330 = vmatpush.msra.mxu0 %v9329
    %v9331 = vand.u32 %v201, 4294901760
    %9332 = vmatpush.msra.mxu0 %v9331
    %v9333 = vand.u32 %v197, 4294901760
    %9334 = vmatpush.msra.mxu0 %v9333
    %v9335 = vand.u32 %v193, 4294901760
    %9336 = vmatpush.msra.mxu0 %v9335
    %v9337 = vand.u32 %v189, 4294901760
    %9338 = vmatpush.msra.mxu0 %v9337
    %v9339 = vand.u32 %v185, 4294901760
    %9340 = vmatpush.msra.mxu0 %v9339
    %v9341 = vand.u32 %v181, 4294901760
    %9342 = vmatpush.msra.mxu0 %v9341
    %v9343 = vand.u32 %v177, 4294901760
    %9344 = vmatpush.msra.mxu0 %v9343
    %v9345 = vand.u32 %v173, 4294901760
    %9346 = vmatpush.msra.mxu0 %v9345
    %v9347 = vand.u32 %v169, 4294901760
    %9348 = vmatpush.msra.mxu0 %v9347
    %v9349 = vand.u32 %v165, 4294901760
    %9350 = vmatpush.msra.mxu0 %v9349
    %v9351 = vand.u32 %v161, 4294901760
    %9352 = vmatpush.msra.mxu0 %v9351
    %v9353 = vand.u32 %v157, 4294901760
    %9354 = vmatpush.msra.mxu0 %v9353
    %v9355 = vand.u32 %v153, 4294901760
    %9356 = vmatpush.msra.mxu0 %v9355
    %v9357 = vand.u32 %v149, 4294901760
    %9358 = vmatpush.msra.mxu0 %v9357
    %v9359 = vand.u32 %v5915, 4294901760
    %v9360 = vsub.f32 %v5915, %v9359
    %v9361 = vand.u32 %v9360, 4294901760
    %v9362 = vsub.f32 %v9360, %v9361
    %v9363 = vand.u32 %v9362, 4294901760
    %9364 = vmatmul.f32.gmra.mxu0 %v9363
    %v9365 = vpop.f32.mrf.mxu0
    %v9366 = vadd.f32 %v9325, %v9365
    %9367 = vdwg.mxu0
    %v9368 = vand.u32 %v209, 4294901760
    %v9369 = vsub.f32 %v209, %v9368
    %v9370 = vand.u32 %v9369, 4294901760
    %v9371 = vsub.f32 %v9369, %v9370
    %v9372 = vand.u32 %v9371, 4294901760
    %9373 = vmatpush.msra.mxu0 %v9372
    %v9374 = vand.u32 %v205, 4294901760
    %v9375 = vsub.f32 %v205, %v9374
    %v9376 = vand.u32 %v9375, 4294901760
    %v9377 = vsub.f32 %v9375, %v9376
    %v9378 = vand.u32 %v9377, 4294901760
    %9379 = vmatpush.msra.mxu0 %v9378
    %v9380 = vand.u32 %v201, 4294901760
    %v9381 = vsub.f32 %v201, %v9380
    %v9382 = vand.u32 %v9381, 4294901760
    %v9383 = vsub.f32 %v9381, %v9382
    %v9384 = vand.u32 %v9383, 4294901760
    %9385 = vmatpush.msra.mxu0 %v9384
    %v9386 = vand.u32 %v197, 4294901760
    %v9387 = vsub.f32 %v197, %v9386
    %v9388 = vand.u32 %v9387, 4294901760
    %v9389 = vsub.f32 %v9387, %v9388
    %v9390 = vand.u32 %v9389, 4294901760
    %9391 = vmatpush.msra.mxu0 %v9390
    %v9392 = vand.u32 %v193, 4294901760
    %v9393 = vsub.f32 %v193, %v9392
    %v9394 = vand.u32 %v9393, 4294901760
    %v9395 = vsub.f32 %v9393, %v9394
    %v9396 = vand.u32 %v9395, 4294901760
    %9397 = vmatpush.msra.mxu0 %v9396
    %v9398 = vand.u32 %v189, 4294901760
    %v9399 = vsub.f32 %v189, %v9398
    %v9400 = vand.u32 %v9399, 4294901760
    %v9401 = vsub.f32 %v9399, %v9400
    %v9402 = vand.u32 %v9401, 4294901760
    %9403 = vmatpush.msra.mxu0 %v9402
    %v9404 = vand.u32 %v185, 4294901760
    %v9405 = vsub.f32 %v185, %v9404
    %v9406 = vand.u32 %v9405, 4294901760
    %v9407 = vsub.f32 %v9405, %v9406
    %v9408 = vand.u32 %v9407, 4294901760
    %9409 = vmatpush.msra.mxu0 %v9408
    %v9410 = vand.u32 %v181, 4294901760
    %v9411 = vsub.f32 %v181, %v9410
    %v9412 = vand.u32 %v9411, 4294901760
    %v9413 = vsub.f32 %v9411, %v9412
    %v9414 = vand.u32 %v9413, 4294901760
    %9415 = vmatpush.msra.mxu0 %v9414
    %v9416 = vand.u32 %v177, 4294901760
    %v9417 = vsub.f32 %v177, %v9416
    %v9418 = vand.u32 %v9417, 4294901760
    %v9419 = vsub.f32 %v9417, %v9418
    %v9420 = vand.u32 %v9419, 4294901760
    %9421 = vmatpush.msra.mxu0 %v9420
    %v9422 = vand.u32 %v173, 4294901760
    %v9423 = vsub.f32 %v173, %v9422
    %v9424 = vand.u32 %v9423, 4294901760
    %v9425 = vsub.f32 %v9423, %v9424
    %v9426 = vand.u32 %v9425, 4294901760
    %9427 = vmatpush.msra.mxu0 %v9426
    %v9428 = vand.u32 %v169, 4294901760
    %v9429 = vsub.f32 %v169, %v9428
    %v9430 = vand.u32 %v9429, 4294901760
    %v9431 = vsub.f32 %v9429, %v9430
    %v9432 = vand.u32 %v9431, 4294901760
    %9433 = vmatpush.msra.mxu0 %v9432
    %v9434 = vand.u32 %v165, 4294901760
    %v9435 = vsub.f32 %v165, %v9434
    %v9436 = vand.u32 %v9435, 4294901760
    %v9437 = vsub.f32 %v9435, %v9436
    %v9438 = vand.u32 %v9437, 4294901760
    %9439 = vmatpush.msra.mxu0 %v9438
    %v9440 = vand.u32 %v161, 4294901760
    %v9441 = vsub.f32 %v161, %v9440
    %v9442 = vand.u32 %v9441, 4294901760
    %v9443 = vsub.f32 %v9441, %v9442
    %v9444 = vand.u32 %v9443, 4294901760
    %9445 = vmatpush.msra.mxu0 %v9444
    %v9446 = vand.u32 %v157, 4294901760
    %v9447 = vsub.f32 %v157, %v9446
    %v9448 = vand.u32 %v9447, 4294901760
    %v9449 = vsub.f32 %v9447, %v9448
    %v9450 = vand.u32 %v9449, 4294901760
    %9451 = vmatpush.msra.mxu0 %v9450
    %v9452 = vand.u32 %v153, 4294901760
    %v9453 = vsub.f32 %v153, %v9452
    %v9454 = vand.u32 %v9453, 4294901760
    %v9455 = vsub.f32 %v9453, %v9454
    %v9456 = vand.u32 %v9455, 4294901760
    %9457 = vmatpush.msra.mxu0 %v9456
    %v9458 = vand.u32 %v149, 4294901760
    %v9459 = vsub.f32 %v149, %v9458
    %v9460 = vand.u32 %v9459, 4294901760
    %v9461 = vsub.f32 %v9459, %v9460
    %v9462 = vand.u32 %v9461, 4294901760
    %9463 = vmatpush.msra.mxu0 %v9462
    %v9464 = vand.u32 %v5915, 4294901760
    %9465 = vmatmul.f32.gmra.mxu0 %v9464
    %v9466 = vpop.f32.mrf.mxu0
    %v9467 = vadd.f32 %v9366, %v9466
    %9468 = vdwg.mxu0
    %v9469 = vand.u32 %v209, 4294901760
    %v9470 = vsub.f32 %v209, %v9469
    %9471 = vmatpush.msra.mxu0 %v9470
    %v9472 = vand.u32 %v205, 4294901760
    %v9473 = vsub.f32 %v205, %v9472
    %9474 = vmatpush.msra.mxu0 %v9473
    %v9475 = vand.u32 %v201, 4294901760
    %v9476 = vsub.f32 %v201, %v9475
    %9477 = vmatpush.msra.mxu0 %v9476
    %v9478 = vand.u32 %v197, 4294901760
    %v9479 = vsub.f32 %v197, %v9478
    %9480 = vmatpush.msra.mxu0 %v9479
    %v9481 = vand.u32 %v193, 4294901760
    %v9482 = vsub.f32 %v193, %v9481
    %9483 = vmatpush.msra.mxu0 %v9482
    %v9484 = vand.u32 %v189, 4294901760
    %v9485 = vsub.f32 %v189, %v9484
    %9486 = vmatpush.msra.mxu0 %v9485
    %v9487 = vand.u32 %v185, 4294901760
    %v9488 = vsub.f32 %v185, %v9487
    %9489 = vmatpush.msra.mxu0 %v9488
    %v9490 = vand.u32 %v181, 4294901760
    %v9491 = vsub.f32 %v181, %v9490
    %9492 = vmatpush.msra.mxu0 %v9491
    %v9493 = vand.u32 %v177, 4294901760
    %v9494 = vsub.f32 %v177, %v9493
    %9495 = vmatpush.msra.mxu0 %v9494
    %v9496 = vand.u32 %v173, 4294901760
    %v9497 = vsub.f32 %v173, %v9496
    %9498 = vmatpush.msra.mxu0 %v9497
    %v9499 = vand.u32 %v169, 4294901760
    %v9500 = vsub.f32 %v169, %v9499
    %9501 = vmatpush.msra.mxu0 %v9500
    %v9502 = vand.u32 %v165, 4294901760
    %v9503 = vsub.f32 %v165, %v9502
    %9504 = vmatpush.msra.mxu0 %v9503
    %v9505 = vand.u32 %v161, 4294901760
    %v9506 = vsub.f32 %v161, %v9505
    %9507 = vmatpush.msra.mxu0 %v9506
    %v9508 = vand.u32 %v157, 4294901760
    %v9509 = vsub.f32 %v157, %v9508
    %9510 = vmatpush.msra.mxu0 %v9509
    %v9511 = vand.u32 %v153, 4294901760
    %v9512 = vsub.f32 %v153, %v9511
    %9513 = vmatpush.msra.mxu0 %v9512
    %v9514 = vand.u32 %v149, 4294901760
    %v9515 = vsub.f32 %v149, %v9514
    %9516 = vmatpush.msra.mxu0 %v9515
    %v9517 = vand.u32 %v5915, 4294901760
    %v9518 = vsub.f32 %v5915, %v9517
    %9519 = vmatmul.f32.gmra.mxu0 %v9518
    %v9520 = vpop.f32.mrf.mxu0
    %v9521 = vadd.f32 %v9467, %v9520
    %9522 = vdwg.mxu0
    %v9523 = vand.u32 %v209, 4294901760
    %9524 = vmatpush.msra.mxu0 %v9523
    %v9525 = vand.u32 %v205, 4294901760
    %9526 = vmatpush.msra.mxu0 %v9525
    %v9527 = vand.u32 %v201, 4294901760
    %9528 = vmatpush.msra.mxu0 %v9527
    %v9529 = vand.u32 %v197, 4294901760
    %9530 = vmatpush.msra.mxu0 %v9529
    %v9531 = vand.u32 %v193, 4294901760
    %9532 = vmatpush.msra.mxu0 %v9531
    %v9533 = vand.u32 %v189, 4294901760
    %9534 = vmatpush.msra.mxu0 %v9533
    %v9535 = vand.u32 %v185, 4294901760
    %9536 = vmatpush.msra.mxu0 %v9535
    %v9537 = vand.u32 %v181, 4294901760
    %9538 = vmatpush.msra.mxu0 %v9537
    %v9539 = vand.u32 %v177, 4294901760
    %9540 = vmatpush.msra.mxu0 %v9539
    %v9541 = vand.u32 %v173, 4294901760
    %9542 = vmatpush.msra.mxu0 %v9541
    %v9543 = vand.u32 %v169, 4294901760
    %9544 = vmatpush.msra.mxu0 %v9543
    %v9545 = vand.u32 %v165, 4294901760
    %9546 = vmatpush.msra.mxu0 %v9545
    %v9547 = vand.u32 %v161, 4294901760
    %9548 = vmatpush.msra.mxu0 %v9547
    %v9549 = vand.u32 %v157, 4294901760
    %9550 = vmatpush.msra.mxu0 %v9549
    %v9551 = vand.u32 %v153, 4294901760
    %9552 = vmatpush.msra.mxu0 %v9551
    %v9553 = vand.u32 %v149, 4294901760
    %9554 = vmatpush.msra.mxu0 %v9553
    %v9555 = vand.u32 %v5915, 4294901760
    %v9556 = vsub.f32 %v5915, %v9555
    %v9557 = vand.u32 %v9556, 4294901760
    %9558 = vmatmul.f32.gmra.mxu0 %v9557
    %v9559 = vpop.f32.mrf.mxu0
    %v9560 = vadd.f32 %v9521, %v9559
    %9561 = vdwg.mxu0
    %v9562 = vand.u32 %v209, 4294901760
    %v9563 = vsub.f32 %v209, %v9562
    %v9564 = vand.u32 %v9563, 4294901760
    %9565 = vmatpush.msra.mxu0 %v9564
    %v9566 = vand.u32 %v205, 4294901760
    %v9567 = vsub.f32 %v205, %v9566
    %v9568 = vand.u32 %v9567, 4294901760
    %9569 = vmatpush.msra.mxu0 %v9568
    %v9570 = vand.u32 %v201, 4294901760
    %v9571 = vsub.f32 %v201, %v9570
    %v9572 = vand.u32 %v9571, 4294901760
    %9573 = vmatpush.msra.mxu0 %v9572
    %v9574 = vand.u32 %v197, 4294901760
    %v9575 = vsub.f32 %v197, %v9574
    %v9576 = vand.u32 %v9575, 4294901760
    %9577 = vmatpush.msra.mxu0 %v9576
    %v9578 = vand.u32 %v193, 4294901760
    %v9579 = vsub.f32 %v193, %v9578
    %v9580 = vand.u32 %v9579, 4294901760
    %9581 = vmatpush.msra.mxu0 %v9580
    %v9582 = vand.u32 %v189, 4294901760
    %v9583 = vsub.f32 %v189, %v9582
    %v9584 = vand.u32 %v9583, 4294901760
    %9585 = vmatpush.msra.mxu0 %v9584
    %v9586 = vand.u32 %v185, 4294901760
    %v9587 = vsub.f32 %v185, %v9586
    %v9588 = vand.u32 %v9587, 4294901760
    %9589 = vmatpush.msra.mxu0 %v9588
    %v9590 = vand.u32 %v181, 4294901760
    %v9591 = vsub.f32 %v181, %v9590
    %v9592 = vand.u32 %v9591, 4294901760
    %9593 = vmatpush.msra.mxu0 %v9592
    %v9594 = vand.u32 %v177, 4294901760
    %v9595 = vsub.f32 %v177, %v9594
    %v9596 = vand.u32 %v9595, 4294901760
    %9597 = vmatpush.msra.mxu0 %v9596
    %v9598 = vand.u32 %v173, 4294901760
    %v9599 = vsub.f32 %v173, %v9598
    %v9600 = vand.u32 %v9599, 4294901760
    %9601 = vmatpush.msra.mxu0 %v9600
    %v9602 = vand.u32 %v169, 4294901760
    %v9603 = vsub.f32 %v169, %v9602
    %v9604 = vand.u32 %v9603, 4294901760
    %9605 = vmatpush.msra.mxu0 %v9604
    %v9606 = vand.u32 %v165, 4294901760
    %v9607 = vsub.f32 %v165, %v9606
    %v9608 = vand.u32 %v9607, 4294901760
    %9609 = vmatpush.msra.mxu0 %v9608
    %v9610 = vand.u32 %v161, 4294901760
    %v9611 = vsub.f32 %v161, %v9610
    %v9612 = vand.u32 %v9611, 4294901760
    %9613 = vmatpush.msra.mxu0 %v9612
    %v9614 = vand.u32 %v157, 4294901760
    %v9615 = vsub.f32 %v157, %v9614
    %v9616 = vand.u32 %v9615, 4294901760
    %9617 = vmatpush.msra.mxu0 %v9616
    %v9618 = vand.u32 %v153, 4294901760
    %v9619 = vsub.f32 %v153, %v9618
    %v9620 = vand.u32 %v9619, 4294901760
    %9621 = vmatpush.msra.mxu0 %v9620
    %v9622 = vand.u32 %v149, 4294901760
    %v9623 = vsub.f32 %v149, %v9622
    %v9624 = vand.u32 %v9623, 4294901760
    %9625 = vmatpush.msra.mxu0 %v9624
    %v9626 = vand.u32 %v5915, 4294901760
    %9627 = vmatmul.f32.gmra.mxu0 %v9626
    %v9628 = vpop.f32.mrf.mxu0
    %v9629 = vadd.f32 %v9560, %v9628
    %9630 = vdwg.mxu0
    %v9631 = vand.u32 %v209, 4294901760
    %9632 = vmatpush.msra.mxu0 %v9631
    %v9633 = vand.u32 %v205, 4294901760
    %9634 = vmatpush.msra.mxu0 %v9633
    %v9635 = vand.u32 %v201, 4294901760
    %9636 = vmatpush.msra.mxu0 %v9635
    %v9637 = vand.u32 %v197, 4294901760
    %9638 = vmatpush.msra.mxu0 %v9637
    %v9639 = vand.u32 %v193, 4294901760
    %9640 = vmatpush.msra.mxu0 %v9639
    %v9641 = vand.u32 %v189, 4294901760
    %9642 = vmatpush.msra.mxu0 %v9641
    %v9643 = vand.u32 %v185, 4294901760
    %9644 = vmatpush.msra.mxu0 %v9643
    %v9645 = vand.u32 %v181, 4294901760
    %9646 = vmatpush.msra.mxu0 %v9645
    %v9647 = vand.u32 %v177, 4294901760
    %9648 = vmatpush.msra.mxu0 %v9647
    %v9649 = vand.u32 %v173, 4294901760
    %9650 = vmatpush.msra.mxu0 %v9649
    %v9651 = vand.u32 %v169, 4294901760
    %9652 = vmatpush.msra.mxu0 %v9651
    %v9653 = vand.u32 %v165, 4294901760
    %9654 = vmatpush.msra.mxu0 %v9653
    %v9655 = vand.u32 %v161, 4294901760
    %9656 = vmatpush.msra.mxu0 %v9655
    %v9657 = vand.u32 %v157, 4294901760
    %9658 = vmatpush.msra.mxu0 %v9657
    %v9659 = vand.u32 %v153, 4294901760
    %9660 = vmatpush.msra.mxu0 %v9659
    %v9661 = vand.u32 %v149, 4294901760
    %9662 = vmatpush.msra.mxu0 %v9661
    %v9663 = vand.u32 %v5915, 4294901760
    %9664 = vmatmul.f32.gmra.mxu0 %v9663
    %v9665 = vpop.f32.mrf.mxu0
    %v9666 = vadd.f32 %v9629, %v9665
    %9667 = vdwg.mxu0
    %v9668 = vand.u32 %v273, 4294901760
    %9669 = vmatpush.msra.mxu0 %v9668
    %v9670 = vand.u32 %v269, 4294901760
    %9671 = vmatpush.msra.mxu0 %v9670
    %v9672 = vand.u32 %v265, 4294901760
    %9673 = vmatpush.msra.mxu0 %v9672
    %v9674 = vand.u32 %v261, 4294901760
    %9675 = vmatpush.msra.mxu0 %v9674
    %v9676 = vand.u32 %v257, 4294901760
    %9677 = vmatpush.msra.mxu0 %v9676
    %v9678 = vand.u32 %v253, 4294901760
    %9679 = vmatpush.msra.mxu0 %v9678
    %v9680 = vand.u32 %v249, 4294901760
    %9681 = vmatpush.msra.mxu0 %v9680
    %v9682 = vand.u32 %v245, 4294901760
    %9683 = vmatpush.msra.mxu0 %v9682
    %v9684 = vand.u32 %v241, 4294901760
    %9685 = vmatpush.msra.mxu0 %v9684
    %v9686 = vand.u32 %v237, 4294901760
    %9687 = vmatpush.msra.mxu0 %v9686
    %v9688 = vand.u32 %v233, 4294901760
    %9689 = vmatpush.msra.mxu0 %v9688
    %v9690 = vand.u32 %v229, 4294901760
    %9691 = vmatpush.msra.mxu0 %v9690
    %v9692 = vand.u32 %v225, 4294901760
    %9693 = vmatpush.msra.mxu0 %v9692
    %v9694 = vand.u32 %v221, 4294901760
    %9695 = vmatpush.msra.mxu0 %v9694
    %v9696 = vand.u32 %v217, 4294901760
    %9697 = vmatpush.msra.mxu0 %v9696
    %v9698 = vand.u32 %v213, 4294901760
    %9699 = vmatpush.msra.mxu0 %v9698
    %v9700 = vand.u32 %v5916, 4294901760
    %v9701 = vsub.f32 %v5916, %v9700
    %v9702 = vand.u32 %v9701, 4294901760
    %v9703 = vsub.f32 %v9701, %v9702
    %v9704 = vand.u32 %v9703, 4294901760
    %9705 = vmatmul.f32.gmra.mxu0 %v9704
    %v9706 = vpop.f32.mrf.mxu0
    %v9707 = vadd.f32 %v9666, %v9706
    %9708 = vdwg.mxu0
    %v9709 = vand.u32 %v273, 4294901760
    %v9710 = vsub.f32 %v273, %v9709
    %v9711 = vand.u32 %v9710, 4294901760
    %v9712 = vsub.f32 %v9710, %v9711
    %v9713 = vand.u32 %v9712, 4294901760
    %9714 = vmatpush.msra.mxu0 %v9713
    %v9715 = vand.u32 %v269, 4294901760
    %v9716 = vsub.f32 %v269, %v9715
    %v9717 = vand.u32 %v9716, 4294901760
    %v9718 = vsub.f32 %v9716, %v9717
    %v9719 = vand.u32 %v9718, 4294901760
    %9720 = vmatpush.msra.mxu0 %v9719
    %v9721 = vand.u32 %v265, 4294901760
    %v9722 = vsub.f32 %v265, %v9721
    %v9723 = vand.u32 %v9722, 4294901760
    %v9724 = vsub.f32 %v9722, %v9723
    %v9725 = vand.u32 %v9724, 4294901760
    %9726 = vmatpush.msra.mxu0 %v9725
    %v9727 = vand.u32 %v261, 4294901760
    %v9728 = vsub.f32 %v261, %v9727
    %v9729 = vand.u32 %v9728, 4294901760
    %v9730 = vsub.f32 %v9728, %v9729
    %v9731 = vand.u32 %v9730, 4294901760
    %9732 = vmatpush.msra.mxu0 %v9731
    %v9733 = vand.u32 %v257, 4294901760
    %v9734 = vsub.f32 %v257, %v9733
    %v9735 = vand.u32 %v9734, 4294901760
    %v9736 = vsub.f32 %v9734, %v9735
    %v9737 = vand.u32 %v9736, 4294901760
    %9738 = vmatpush.msra.mxu0 %v9737
    %v9739 = vand.u32 %v253, 4294901760
    %v9740 = vsub.f32 %v253, %v9739
    %v9741 = vand.u32 %v9740, 4294901760
    %v9742 = vsub.f32 %v9740, %v9741
    %v9743 = vand.u32 %v9742, 4294901760
    %9744 = vmatpush.msra.mxu0 %v9743
    %v9745 = vand.u32 %v249, 4294901760
    %v9746 = vsub.f32 %v249, %v9745
    %v9747 = vand.u32 %v9746, 4294901760
    %v9748 = vsub.f32 %v9746, %v9747
    %v9749 = vand.u32 %v9748, 4294901760
    %9750 = vmatpush.msra.mxu0 %v9749
    %v9751 = vand.u32 %v245, 4294901760
    %v9752 = vsub.f32 %v245, %v9751
    %v9753 = vand.u32 %v9752, 4294901760
    %v9754 = vsub.f32 %v9752, %v9753
    %v9755 = vand.u32 %v9754, 4294901760
    %9756 = vmatpush.msra.mxu0 %v9755
    %v9757 = vand.u32 %v241, 4294901760
    %v9758 = vsub.f32 %v241, %v9757
    %v9759 = vand.u32 %v9758, 4294901760
    %v9760 = vsub.f32 %v9758, %v9759
    %v9761 = vand.u32 %v9760, 4294901760
    %9762 = vmatpush.msra.mxu0 %v9761
    %v9763 = vand.u32 %v237, 4294901760
    %v9764 = vsub.f32 %v237, %v9763
    %v9765 = vand.u32 %v9764, 4294901760
    %v9766 = vsub.f32 %v9764, %v9765
    %v9767 = vand.u32 %v9766, 4294901760
    %9768 = vmatpush.msra.mxu0 %v9767
    %v9769 = vand.u32 %v233, 4294901760
    %v9770 = vsub.f32 %v233, %v9769
    %v9771 = vand.u32 %v9770, 4294901760
    %v9772 = vsub.f32 %v9770, %v9771
    %v9773 = vand.u32 %v9772, 4294901760
    %9774 = vmatpush.msra.mxu0 %v9773
    %v9775 = vand.u32 %v229, 4294901760
    %v9776 = vsub.f32 %v229, %v9775
    %v9777 = vand.u32 %v9776, 4294901760
    %v9778 = vsub.f32 %v9776, %v9777
    %v9779 = vand.u32 %v9778, 4294901760
    %9780 = vmatpush.msra.mxu0 %v9779
    %v9781 = vand.u32 %v225, 4294901760
    %v9782 = vsub.f32 %v225, %v9781
    %v9783 = vand.u32 %v9782, 4294901760
    %v9784 = vsub.f32 %v9782, %v9783
    %v9785 = vand.u32 %v9784, 4294901760
    %9786 = vmatpush.msra.mxu0 %v9785
    %v9787 = vand.u32 %v221, 4294901760
    %v9788 = vsub.f32 %v221, %v9787
    %v9789 = vand.u32 %v9788, 4294901760
    %v9790 = vsub.f32 %v9788, %v9789
    %v9791 = vand.u32 %v9790, 4294901760
    %9792 = vmatpush.msra.mxu0 %v9791
    %v9793 = vand.u32 %v217, 4294901760
    %v9794 = vsub.f32 %v217, %v9793
    %v9795 = vand.u32 %v9794, 4294901760
    %v9796 = vsub.f32 %v9794, %v9795
    %v9797 = vand.u32 %v9796, 4294901760
    %9798 = vmatpush.msra.mxu0 %v9797
    %v9799 = vand.u32 %v213, 4294901760
    %v9800 = vsub.f32 %v213, %v9799
    %v9801 = vand.u32 %v9800, 4294901760
    %v9802 = vsub.f32 %v9800, %v9801
    %v9803 = vand.u32 %v9802, 4294901760
    %9804 = vmatpush.msra.mxu0 %v9803
    %v9805 = vand.u32 %v5916, 4294901760
    %9806 = vmatmul.f32.gmra.mxu0 %v9805
    %v9807 = vpop.f32.mrf.mxu0
    %v9808 = vadd.f32 %v9707, %v9807
    %9809 = vdwg.mxu0
    %v9810 = vand.u32 %v273, 4294901760
    %v9811 = vsub.f32 %v273, %v9810
    %9812 = vmatpush.msra.mxu0 %v9811
    %v9813 = vand.u32 %v269, 4294901760
    %v9814 = vsub.f32 %v269, %v9813
    %9815 = vmatpush.msra.mxu0 %v9814
    %v9816 = vand.u32 %v265, 4294901760
    %v9817 = vsub.f32 %v265, %v9816
    %9818 = vmatpush.msra.mxu0 %v9817
    %v9819 = vand.u32 %v261, 4294901760
    %v9820 = vsub.f32 %v261, %v9819
    %9821 = vmatpush.msra.mxu0 %v9820
    %v9822 = vand.u32 %v257, 4294901760
    %v9823 = vsub.f32 %v257, %v9822
    %9824 = vmatpush.msra.mxu0 %v9823
    %v9825 = vand.u32 %v253, 4294901760
    %v9826 = vsub.f32 %v253, %v9825
    %9827 = vmatpush.msra.mxu0 %v9826
    %v9828 = vand.u32 %v249, 4294901760
    %v9829 = vsub.f32 %v249, %v9828
    %9830 = vmatpush.msra.mxu0 %v9829
    %v9831 = vand.u32 %v245, 4294901760
    %v9832 = vsub.f32 %v245, %v9831
    %9833 = vmatpush.msra.mxu0 %v9832
    %v9834 = vand.u32 %v241, 4294901760
    %v9835 = vsub.f32 %v241, %v9834
    %9836 = vmatpush.msra.mxu0 %v9835
    %v9837 = vand.u32 %v237, 4294901760
    %v9838 = vsub.f32 %v237, %v9837
    %9839 = vmatpush.msra.mxu0 %v9838
    %v9840 = vand.u32 %v233, 4294901760
    %v9841 = vsub.f32 %v233, %v9840
    %9842 = vmatpush.msra.mxu0 %v9841
    %v9843 = vand.u32 %v229, 4294901760
    %v9844 = vsub.f32 %v229, %v9843
    %9845 = vmatpush.msra.mxu0 %v9844
    %v9846 = vand.u32 %v225, 4294901760
    %v9847 = vsub.f32 %v225, %v9846
    %9848 = vmatpush.msra.mxu0 %v9847
    %v9849 = vand.u32 %v221, 4294901760
    %v9850 = vsub.f32 %v221, %v9849
    %9851 = vmatpush.msra.mxu0 %v9850
    %v9852 = vand.u32 %v217, 4294901760
    %v9853 = vsub.f32 %v217, %v9852
    %9854 = vmatpush.msra.mxu0 %v9853
    %v9855 = vand.u32 %v213, 4294901760
    %v9856 = vsub.f32 %v213, %v9855
    %9857 = vmatpush.msra.mxu0 %v9856
    %v9858 = vand.u32 %v5916, 4294901760
    %v9859 = vsub.f32 %v5916, %v9858
    %9860 = vmatmul.f32.gmra.mxu0 %v9859
    %v9861 = vpop.f32.mrf.mxu0
    %v9862 = vadd.f32 %v9808, %v9861
    %9863 = vdwg.mxu0
    %v9864 = vand.u32 %v273, 4294901760
    %9865 = vmatpush.msra.mxu0 %v9864
    %v9866 = vand.u32 %v269, 4294901760
    %9867 = vmatpush.msra.mxu0 %v9866
    %v9868 = vand.u32 %v265, 4294901760
    %9869 = vmatpush.msra.mxu0 %v9868
    %v9870 = vand.u32 %v261, 4294901760
    %9871 = vmatpush.msra.mxu0 %v9870
    %v9872 = vand.u32 %v257, 4294901760
    %9873 = vmatpush.msra.mxu0 %v9872
    %v9874 = vand.u32 %v253, 4294901760
    %9875 = vmatpush.msra.mxu0 %v9874
    %v9876 = vand.u32 %v249, 4294901760
    %9877 = vmatpush.msra.mxu0 %v9876
    %v9878 = vand.u32 %v245, 4294901760
    %9879 = vmatpush.msra.mxu0 %v9878
    %v9880 = vand.u32 %v241, 4294901760
    %9881 = vmatpush.msra.mxu0 %v9880
    %v9882 = vand.u32 %v237, 4294901760
    %9883 = vmatpush.msra.mxu0 %v9882
    %v9884 = vand.u32 %v233, 4294901760
    %9885 = vmatpush.msra.mxu0 %v9884
    %v9886 = vand.u32 %v229, 4294901760
    %9887 = vmatpush.msra.mxu0 %v9886
    %v9888 = vand.u32 %v225, 4294901760
    %9889 = vmatpush.msra.mxu0 %v9888
    %v9890 = vand.u32 %v221, 4294901760
    %9891 = vmatpush.msra.mxu0 %v9890
    %v9892 = vand.u32 %v217, 4294901760
    %9893 = vmatpush.msra.mxu0 %v9892
    %v9894 = vand.u32 %v213, 4294901760
    %9895 = vmatpush.msra.mxu0 %v9894
    %v9896 = vand.u32 %v5916, 4294901760
    %v9897 = vsub.f32 %v5916, %v9896
    %v9898 = vand.u32 %v9897, 4294901760
    %9899 = vmatmul.f32.gmra.mxu0 %v9898
    %v9900 = vpop.f32.mrf.mxu0
    %v9901 = vadd.f32 %v9862, %v9900
    %9902 = vdwg.mxu0
    %v9903 = vand.u32 %v273, 4294901760
    %v9904 = vsub.f32 %v273, %v9903
    %v9905 = vand.u32 %v9904, 4294901760
    %9906 = vmatpush.msra.mxu0 %v9905
    %v9907 = vand.u32 %v269, 4294901760
    %v9908 = vsub.f32 %v269, %v9907
    %v9909 = vand.u32 %v9908, 4294901760
    %9910 = vmatpush.msra.mxu0 %v9909
    %v9911 = vand.u32 %v265, 4294901760
    %v9912 = vsub.f32 %v265, %v9911
    %v9913 = vand.u32 %v9912, 4294901760
    %9914 = vmatpush.msra.mxu0 %v9913
    %v9915 = vand.u32 %v261, 4294901760
    %v9916 = vsub.f32 %v261, %v9915
    %v9917 = vand.u32 %v9916, 4294901760
    %9918 = vmatpush.msra.mxu0 %v9917
    %v9919 = vand.u32 %v257, 4294901760
    %v9920 = vsub.f32 %v257, %v9919
    %v9921 = vand.u32 %v9920, 4294901760
    %9922 = vmatpush.msra.mxu0 %v9921
    %v9923 = vand.u32 %v253, 4294901760
    %v9924 = vsub.f32 %v253, %v9923
    %v9925 = vand.u32 %v9924, 4294901760
    %9926 = vmatpush.msra.mxu0 %v9925
    %v9927 = vand.u32 %v249, 4294901760
    %v9928 = vsub.f32 %v249, %v9927
    %v9929 = vand.u32 %v9928, 4294901760
    %9930 = vmatpush.msra.mxu0 %v9929
    %v9931 = vand.u32 %v245, 4294901760
    %v9932 = vsub.f32 %v245, %v9931
    %v9933 = vand.u32 %v9932, 4294901760
    %9934 = vmatpush.msra.mxu0 %v9933
    %v9935 = vand.u32 %v241, 4294901760
    %v9936 = vsub.f32 %v241, %v9935
    %v9937 = vand.u32 %v9936, 4294901760
    %9938 = vmatpush.msra.mxu0 %v9937
    %v9939 = vand.u32 %v237, 4294901760
    %v9940 = vsub.f32 %v237, %v9939
    %v9941 = vand.u32 %v9940, 4294901760
    %9942 = vmatpush.msra.mxu0 %v9941
    %v9943 = vand.u32 %v233, 4294901760
    %v9944 = vsub.f32 %v233, %v9943
    %v9945 = vand.u32 %v9944, 4294901760
    %9946 = vmatpush.msra.mxu0 %v9945
    %v9947 = vand.u32 %v229, 4294901760
    %v9948 = vsub.f32 %v229, %v9947
    %v9949 = vand.u32 %v9948, 4294901760
    %9950 = vmatpush.msra.mxu0 %v9949
    %v9951 = vand.u32 %v225, 4294901760
    %v9952 = vsub.f32 %v225, %v9951
    %v9953 = vand.u32 %v9952, 4294901760
    %9954 = vmatpush.msra.mxu0 %v9953
    %v9955 = vand.u32 %v221, 4294901760
    %v9956 = vsub.f32 %v221, %v9955
    %v9957 = vand.u32 %v9956, 4294901760
    %9958 = vmatpush.msra.mxu0 %v9957
    %v9959 = vand.u32 %v217, 4294901760
    %v9960 = vsub.f32 %v217, %v9959
    %v9961 = vand.u32 %v9960, 4294901760
    %9962 = vmatpush.msra.mxu0 %v9961
    %v9963 = vand.u32 %v213, 4294901760
    %v9964 = vsub.f32 %v213, %v9963
    %v9965 = vand.u32 %v9964, 4294901760
    %9966 = vmatpush.msra.mxu0 %v9965
    %v9967 = vand.u32 %v5916, 4294901760
    %9968 = vmatmul.f32.gmra.mxu0 %v9967
    %v9969 = vpop.f32.mrf.mxu0
    %v9970 = vadd.f32 %v9901, %v9969
    %9971 = vdwg.mxu0
    %v9972 = vand.u32 %v273, 4294901760
    %9973 = vmatpush.msra.mxu0 %v9972
    %v9974 = vand.u32 %v269, 4294901760
    %9975 = vmatpush.msra.mxu0 %v9974
    %v9976 = vand.u32 %v265, 4294901760
    %9977 = vmatpush.msra.mxu0 %v9976
    %v9978 = vand.u32 %v261, 4294901760
    %9979 = vmatpush.msra.mxu0 %v9978
    %v9980 = vand.u32 %v257, 4294901760
    %9981 = vmatpush.msra.mxu0 %v9980
    %v9982 = vand.u32 %v253, 4294901760
    %9983 = vmatpush.msra.mxu0 %v9982
    %v9984 = vand.u32 %v249, 4294901760
    %9985 = vmatpush.msra.mxu0 %v9984
    %v9986 = vand.u32 %v245, 4294901760
    %9987 = vmatpush.msra.mxu0 %v9986
    %v9988 = vand.u32 %v241, 4294901760
    %9989 = vmatpush.msra.mxu0 %v9988
    %v9990 = vand.u32 %v237, 4294901760
    %9991 = vmatpush.msra.mxu0 %v9990
    %v9992 = vand.u32 %v233, 4294901760
    %9993 = vmatpush.msra.mxu0 %v9992
    %v9994 = vand.u32 %v229, 4294901760
    %9995 = vmatpush.msra.mxu0 %v9994
    %v9996 = vand.u32 %v225, 4294901760
    %9997 = vmatpush.msra.mxu0 %v9996
    %v9998 = vand.u32 %v221, 4294901760
    %9999 = vmatpush.msra.mxu0 %v9998
    %v10000 = vand.u32 %v217, 4294901760
    %10001 = vmatpush.msra.mxu0 %v10000
    %v10002 = vand.u32 %v213, 4294901760
    %10003 = vmatpush.msra.mxu0 %v10002
    %v10004 = vand.u32 %v5916, 4294901760
    %10005 = vmatmul.f32.gmra.mxu0 %v10004
    %v10006 = vpop.f32.mrf.mxu0
    %v10007 = vadd.f32 %v9970, %v10006
    %10008 = vdwg.mxu0
    %v10009 = vand.u32 %v82, 4294901760
    %10010 = vmatpush.msra.mxu0 %v10009
    %v10011 = vand.u32 %v78, 4294901760
    %10012 = vmatpush.msra.mxu0 %v10011
    %v10013 = vand.u32 %v74, 4294901760
    %10014 = vmatpush.msra.mxu0 %v10013
    %v10015 = vand.u32 %v70, 4294901760
    %10016 = vmatpush.msra.mxu0 %v10015
    %v10017 = vand.u32 %v66, 4294901760
    %10018 = vmatpush.msra.mxu0 %v10017
    %v10019 = vand.u32 %v62, 4294901760
    %10020 = vmatpush.msra.mxu0 %v10019
    %v10021 = vand.u32 %v58, 4294901760
    %10022 = vmatpush.msra.mxu0 %v10021
    %v10023 = vand.u32 %v54, 4294901760
    %10024 = vmatpush.msra.mxu0 %v10023
    %v10025 = vand.u32 %v50, 4294901760
    %10026 = vmatpush.msra.mxu0 %v10025
    %v10027 = vand.u32 %v46, 4294901760
    %10028 = vmatpush.msra.mxu0 %v10027
    %v10029 = vand.u32 %v42, 4294901760
    %10030 = vmatpush.msra.mxu0 %v10029
    %v10031 = vand.u32 %v38, 4294901760
    %10032 = vmatpush.msra.mxu0 %v10031
    %v10033 = vand.u32 %v34, 4294901760
    %10034 = vmatpush.msra.mxu0 %v10033
    %v10035 = vand.u32 %v30, 4294901760
    %10036 = vmatpush.msra.mxu0 %v10035
    %v10037 = vand.u32 %v26, 4294901760
    %10038 = vmatpush.msra.mxu0 %v10037
    %v10039 = vand.u32 %v22, 4294901760
    %10040 = vmatpush.msra.mxu0 %v10039
    %v10041 = vand.u32 %v5913, 4294901760
    %v10042 = vsub.f32 %v5913, %v10041
    %v10043 = vand.u32 %v10042, 4294901760
    %v10044 = vsub.f32 %v10042, %v10043
    %v10045 = vand.u32 %v10044, 4294901760
    %10046 = vmatmul.f32.gmra.mxu0 %v10045
    %v10047 = vpop.f32.mrf.mxu0
    %v10048 = vadd.f32 %v280, %v10047
    %10049 = vdwg.mxu0
    %v10050 = vand.u32 %v82, 4294901760
    %v10051 = vsub.f32 %v82, %v10050
    %v10052 = vand.u32 %v10051, 4294901760
    %v10053 = vsub.f32 %v10051, %v10052
    %v10054 = vand.u32 %v10053, 4294901760
    %10055 = vmatpush.msra.mxu0 %v10054
    %v10056 = vand.u32 %v78, 4294901760
    %v10057 = vsub.f32 %v78, %v10056
    %v10058 = vand.u32 %v10057, 4294901760
    %v10059 = vsub.f32 %v10057, %v10058
    %v10060 = vand.u32 %v10059, 4294901760
    %10061 = vmatpush.msra.mxu0 %v10060
    %v10062 = vand.u32 %v74, 4294901760
    %v10063 = vsub.f32 %v74, %v10062
    %v10064 = vand.u32 %v10063, 4294901760
    %v10065 = vsub.f32 %v10063, %v10064
    %v10066 = vand.u32 %v10065, 4294901760
    %10067 = vmatpush.msra.mxu0 %v10066
    %v10068 = vand.u32 %v70, 4294901760
    %v10069 = vsub.f32 %v70, %v10068
    %v10070 = vand.u32 %v10069, 4294901760
    %v10071 = vsub.f32 %v10069, %v10070
    %v10072 = vand.u32 %v10071, 4294901760
    %10073 = vmatpush.msra.mxu0 %v10072
    %v10074 = vand.u32 %v66, 4294901760
    %v10075 = vsub.f32 %v66, %v10074
    %v10076 = vand.u32 %v10075, 4294901760
    %v10077 = vsub.f32 %v10075, %v10076
    %v10078 = vand.u32 %v10077, 4294901760
    %10079 = vmatpush.msra.mxu0 %v10078
    %v10080 = vand.u32 %v62, 4294901760
    %v10081 = vsub.f32 %v62, %v10080
    %v10082 = vand.u32 %v10081, 4294901760
    %v10083 = vsub.f32 %v10081, %v10082
    %v10084 = vand.u32 %v10083, 4294901760
    %10085 = vmatpush.msra.mxu0 %v10084
    %v10086 = vand.u32 %v58, 4294901760
    %v10087 = vsub.f32 %v58, %v10086
    %v10088 = vand.u32 %v10087, 4294901760
    %v10089 = vsub.f32 %v10087, %v10088
    %v10090 = vand.u32 %v10089, 4294901760
    %10091 = vmatpush.msra.mxu0 %v10090
    %v10092 = vand.u32 %v54, 4294901760
    %v10093 = vsub.f32 %v54, %v10092
    %v10094 = vand.u32 %v10093, 4294901760
    %v10095 = vsub.f32 %v10093, %v10094
    %v10096 = vand.u32 %v10095, 4294901760
    %10097 = vmatpush.msra.mxu0 %v10096
    %v10098 = vand.u32 %v50, 4294901760
    %v10099 = vsub.f32 %v50, %v10098
    %v10100 = vand.u32 %v10099, 4294901760
    %v10101 = vsub.f32 %v10099, %v10100
    %v10102 = vand.u32 %v10101, 4294901760
    %10103 = vmatpush.msra.mxu0 %v10102
    %v10104 = vand.u32 %v46, 4294901760
    %v10105 = vsub.f32 %v46, %v10104
    %v10106 = vand.u32 %v10105, 4294901760
    %v10107 = vsub.f32 %v10105, %v10106
    %v10108 = vand.u32 %v10107, 4294901760
    %10109 = vmatpush.msra.mxu0 %v10108
    %v10110 = vand.u32 %v42, 4294901760
    %v10111 = vsub.f32 %v42, %v10110
    %v10112 = vand.u32 %v10111, 4294901760
    %v10113 = vsub.f32 %v10111, %v10112
    %v10114 = vand.u32 %v10113, 4294901760
    %10115 = vmatpush.msra.mxu0 %v10114
    %v10116 = vand.u32 %v38, 4294901760
    %v10117 = vsub.f32 %v38, %v10116
    %v10118 = vand.u32 %v10117, 4294901760
    %v10119 = vsub.f32 %v10117, %v10118
    %v10120 = vand.u32 %v10119, 4294901760
    %10121 = vmatpush.msra.mxu0 %v10120
    %v10122 = vand.u32 %v34, 4294901760
    %v10123 = vsub.f32 %v34, %v10122
    %v10124 = vand.u32 %v10123, 4294901760
    %v10125 = vsub.f32 %v10123, %v10124
    %v10126 = vand.u32 %v10125, 4294901760
    %10127 = vmatpush.msra.mxu0 %v10126
    %v10128 = vand.u32 %v30, 4294901760
    %v10129 = vsub.f32 %v30, %v10128
    %v10130 = vand.u32 %v10129, 4294901760
    %v10131 = vsub.f32 %v10129, %v10130
    %v10132 = vand.u32 %v10131, 4294901760
    %10133 = vmatpush.msra.mxu0 %v10132
    %v10134 = vand.u32 %v26, 4294901760
    %v10135 = vsub.f32 %v26, %v10134
    %v10136 = vand.u32 %v10135, 4294901760
    %v10137 = vsub.f32 %v10135, %v10136
    %v10138 = vand.u32 %v10137, 4294901760
    %10139 = vmatpush.msra.mxu0 %v10138
    %v10140 = vand.u32 %v22, 4294901760
    %v10141 = vsub.f32 %v22, %v10140
    %v10142 = vand.u32 %v10141, 4294901760
    %v10143 = vsub.f32 %v10141, %v10142
    %v10144 = vand.u32 %v10143, 4294901760
    %10145 = vmatpush.msra.mxu0 %v10144
    %v10146 = vand.u32 %v5913, 4294901760
    %10147 = vmatmul.f32.gmra.mxu0 %v10146
    %v10148 = vpop.f32.mrf.mxu0
    %v10149 = vadd.f32 %v10048, %v10148
    %10150 = vdwg.mxu0
    %v10151 = vand.u32 %v82, 4294901760
    %v10152 = vsub.f32 %v82, %v10151
    %10153 = vmatpush.msra.mxu0 %v10152
    %v10154 = vand.u32 %v78, 4294901760
    %v10155 = vsub.f32 %v78, %v10154
    %10156 = vmatpush.msra.mxu0 %v10155
    %v10157 = vand.u32 %v74, 4294901760
    %v10158 = vsub.f32 %v74, %v10157
    %10159 = vmatpush.msra.mxu0 %v10158
    %v10160 = vand.u32 %v70, 4294901760
    %v10161 = vsub.f32 %v70, %v10160
    %10162 = vmatpush.msra.mxu0 %v10161
    %v10163 = vand.u32 %v66, 4294901760
    %v10164 = vsub.f32 %v66, %v10163
    %10165 = vmatpush.msra.mxu0 %v10164
    %v10166 = vand.u32 %v62, 4294901760
    %v10167 = vsub.f32 %v62, %v10166
    %10168 = vmatpush.msra.mxu0 %v10167
    %v10169 = vand.u32 %v58, 4294901760
    %v10170 = vsub.f32 %v58, %v10169
    %10171 = vmatpush.msra.mxu0 %v10170
    %v10172 = vand.u32 %v54, 4294901760
    %v10173 = vsub.f32 %v54, %v10172
    %10174 = vmatpush.msra.mxu0 %v10173
    %v10175 = vand.u32 %v50, 4294901760
    %v10176 = vsub.f32 %v50, %v10175
    %10177 = vmatpush.msra.mxu0 %v10176
    %v10178 = vand.u32 %v46, 4294901760
    %v10179 = vsub.f32 %v46, %v10178
    %10180 = vmatpush.msra.mxu0 %v10179
    %v10181 = vand.u32 %v42, 4294901760
    %v10182 = vsub.f32 %v42, %v10181
    %10183 = vmatpush.msra.mxu0 %v10182
    %v10184 = vand.u32 %v38, 4294901760
    %v10185 = vsub.f32 %v38, %v10184
    %10186 = vmatpush.msra.mxu0 %v10185
    %v10187 = vand.u32 %v34, 4294901760
    %v10188 = vsub.f32 %v34, %v10187
    %10189 = vmatpush.msra.mxu0 %v10188
    %v10190 = vand.u32 %v30, 4294901760
    %v10191 = vsub.f32 %v30, %v10190
    %10192 = vmatpush.msra.mxu0 %v10191
    %v10193 = vand.u32 %v26, 4294901760
    %v10194 = vsub.f32 %v26, %v10193
    %10195 = vmatpush.msra.mxu0 %v10194
    %v10196 = vand.u32 %v22, 4294901760
    %v10197 = vsub.f32 %v22, %v10196
    %10198 = vmatpush.msra.mxu0 %v10197
    %v10199 = vand.u32 %v5913, 4294901760
    %v10200 = vsub.f32 %v5913, %v10199
    %10201 = vmatmul.f32.gmra.mxu0 %v10200
    %v10202 = vpop.f32.mrf.mxu0
    %v10203 = vadd.f32 %v10149, %v10202
    %10204 = vdwg.mxu0
    %v10205 = vand.u32 %v82, 4294901760
    %10206 = vmatpush.msra.mxu0 %v10205
    %v10207 = vand.u32 %v78, 4294901760
    %10208 = vmatpush.msra.mxu0 %v10207
    %v10209 = vand.u32 %v74, 4294901760
    %10210 = vmatpush.msra.mxu0 %v10209
    %v10211 = vand.u32 %v70, 4294901760
    %10212 = vmatpush.msra.mxu0 %v10211
    %v10213 = vand.u32 %v66, 4294901760
    %10214 = vmatpush.msra.mxu0 %v10213
    %v10215 = vand.u32 %v62, 4294901760
    %10216 = vmatpush.msra.mxu0 %v10215
    %v10217 = vand.u32 %v58, 4294901760
    %10218 = vmatpush.msra.mxu0 %v10217
    %v10219 = vand.u32 %v54, 4294901760
    %10220 = vmatpush.msra.mxu0 %v10219
    %v10221 = vand.u32 %v50, 4294901760
    %10222 = vmatpush.msra.mxu0 %v10221
    %v10223 = vand.u32 %v46, 4294901760
    %10224 = vmatpush.msra.mxu0 %v10223
    %v10225 = vand.u32 %v42, 4294901760
    %10226 = vmatpush.msra.mxu0 %v10225
    %v10227 = vand.u32 %v38, 4294901760
    %10228 = vmatpush.msra.mxu0 %v10227
    %v10229 = vand.u32 %v34, 4294901760
    %10230 = vmatpush.msra.mxu0 %v10229
    %v10231 = vand.u32 %v30, 4294901760
    %10232 = vmatpush.msra.mxu0 %v10231
    %v10233 = vand.u32 %v26, 4294901760
    %10234 = vmatpush.msra.mxu0 %v10233
    %v10235 = vand.u32 %v22, 4294901760
    %10236 = vmatpush.msra.mxu0 %v10235
    %v10237 = vand.u32 %v5913, 4294901760
    %v10238 = vsub.f32 %v5913, %v10237
    %v10239 = vand.u32 %v10238, 4294901760
    %10240 = vmatmul.f32.gmra.mxu0 %v10239
    %v10241 = vpop.f32.mrf.mxu0
    %v10242 = vadd.f32 %v10203, %v10241
    %10243 = vdwg.mxu0
    %v10244 = vand.u32 %v82, 4294901760
    %v10245 = vsub.f32 %v82, %v10244
    %v10246 = vand.u32 %v10245, 4294901760
    %10247 = vmatpush.msra.mxu0 %v10246
    %v10248 = vand.u32 %v78, 4294901760
    %v10249 = vsub.f32 %v78, %v10248
    %v10250 = vand.u32 %v10249, 4294901760
    %10251 = vmatpush.msra.mxu0 %v10250
    %v10252 = vand.u32 %v74, 4294901760
    %v10253 = vsub.f32 %v74, %v10252
    %v10254 = vand.u32 %v10253, 4294901760
    %10255 = vmatpush.msra.mxu0 %v10254
    %v10256 = vand.u32 %v70, 4294901760
    %v10257 = vsub.f32 %v70, %v10256
    %v10258 = vand.u32 %v10257, 4294901760
    %10259 = vmatpush.msra.mxu0 %v10258
    %v10260 = vand.u32 %v66, 4294901760
    %v10261 = vsub.f32 %v66, %v10260
    %v10262 = vand.u32 %v10261, 4294901760
    %10263 = vmatpush.msra.mxu0 %v10262
    %v10264 = vand.u32 %v62, 4294901760
    %v10265 = vsub.f32 %v62, %v10264
    %v10266 = vand.u32 %v10265, 4294901760
    %10267 = vmatpush.msra.mxu0 %v10266
    %v10268 = vand.u32 %v58, 4294901760
    %v10269 = vsub.f32 %v58, %v10268
    %v10270 = vand.u32 %v10269, 4294901760
    %10271 = vmatpush.msra.mxu0 %v10270
    %v10272 = vand.u32 %v54, 4294901760
    %v10273 = vsub.f32 %v54, %v10272
    %v10274 = vand.u32 %v10273, 4294901760
    %10275 = vmatpush.msra.mxu0 %v10274
    %v10276 = vand.u32 %v50, 4294901760
    %v10277 = vsub.f32 %v50, %v10276
    %v10278 = vand.u32 %v10277, 4294901760
    %10279 = vmatpush.msra.mxu0 %v10278
    %v10280 = vand.u32 %v46, 4294901760
    %v10281 = vsub.f32 %v46, %v10280
    %v10282 = vand.u32 %v10281, 4294901760
    %10283 = vmatpush.msra.mxu0 %v10282
    %v10284 = vand.u32 %v42, 4294901760
    %v10285 = vsub.f32 %v42, %v10284
    %v10286 = vand.u32 %v10285, 4294901760
    %10287 = vmatpush.msra.mxu0 %v10286
    %v10288 = vand.u32 %v38, 4294901760
    %v10289 = vsub.f32 %v38, %v10288
    %v10290 = vand.u32 %v10289, 4294901760
    %10291 = vmatpush.msra.mxu0 %v10290
    %v10292 = vand.u32 %v34, 4294901760
    %v10293 = vsub.f32 %v34, %v10292
    %v10294 = vand.u32 %v10293, 4294901760
    %10295 = vmatpush.msra.mxu0 %v10294
    %v10296 = vand.u32 %v30, 4294901760
    %v10297 = vsub.f32 %v30, %v10296
    %v10298 = vand.u32 %v10297, 4294901760
    %10299 = vmatpush.msra.mxu0 %v10298
    %v10300 = vand.u32 %v26, 4294901760
    %v10301 = vsub.f32 %v26, %v10300
    %v10302 = vand.u32 %v10301, 4294901760
    %10303 = vmatpush.msra.mxu0 %v10302
    %v10304 = vand.u32 %v22, 4294901760
    %v10305 = vsub.f32 %v22, %v10304
    %v10306 = vand.u32 %v10305, 4294901760
    %10307 = vmatpush.msra.mxu0 %v10306
    %v10308 = vand.u32 %v5913, 4294901760
    %10309 = vmatmul.f32.gmra.mxu0 %v10308
    %v10310 = vpop.f32.mrf.mxu0
    %v10311 = vadd.f32 %v10242, %v10310
    %10312 = vdwg.mxu0
    %v10313 = vand.u32 %v82, 4294901760
    %10314 = vmatpush.msra.mxu0 %v10313
    %v10315 = vand.u32 %v78, 4294901760
    %10316 = vmatpush.msra.mxu0 %v10315
    %v10317 = vand.u32 %v74, 4294901760
    %10318 = vmatpush.msra.mxu0 %v10317
    %v10319 = vand.u32 %v70, 4294901760
    %10320 = vmatpush.msra.mxu0 %v10319
    %v10321 = vand.u32 %v66, 4294901760
    %10322 = vmatpush.msra.mxu0 %v10321
    %v10323 = vand.u32 %v62, 4294901760
    %10324 = vmatpush.msra.mxu0 %v10323
    %v10325 = vand.u32 %v58, 4294901760
    %10326 = vmatpush.msra.mxu0 %v10325
    %v10327 = vand.u32 %v54, 4294901760
    %10328 = vmatpush.msra.mxu0 %v10327
    %v10329 = vand.u32 %v50, 4294901760
    %10330 = vmatpush.msra.mxu0 %v10329
    %v10331 = vand.u32 %v46, 4294901760
    %10332 = vmatpush.msra.mxu0 %v10331
    %v10333 = vand.u32 %v42, 4294901760
    %10334 = vmatpush.msra.mxu0 %v10333
    %v10335 = vand.u32 %v38, 4294901760
    %10336 = vmatpush.msra.mxu0 %v10335
    %v10337 = vand.u32 %v34, 4294901760
    %10338 = vmatpush.msra.mxu0 %v10337
    %v10339 = vand.u32 %v30, 4294901760
    %10340 = vmatpush.msra.mxu0 %v10339
    %v10341 = vand.u32 %v26, 4294901760
    %10342 = vmatpush.msra.mxu0 %v10341
    %v10343 = vand.u32 %v22, 4294901760
    %10344 = vmatpush.msra.mxu0 %v10343
    %v10345 = vand.u32 %v5913, 4294901760
    %10346 = vmatmul.f32.gmra.mxu0 %v10345
    %v10347 = vpop.f32.mrf.mxu0
    %v10348 = vadd.f32 %v10311, %v10347
    %10349 = vdwg.mxu0
    %v10350 = vand.u32 %v146, 4294901760
    %10351 = vmatpush.msra.mxu0 %v10350
    %v10352 = vand.u32 %v142, 4294901760
    %10353 = vmatpush.msra.mxu0 %v10352
    %v10354 = vand.u32 %v138, 4294901760
    %10355 = vmatpush.msra.mxu0 %v10354
    %v10356 = vand.u32 %v134, 4294901760
    %10357 = vmatpush.msra.mxu0 %v10356
    %v10358 = vand.u32 %v130, 4294901760
    %10359 = vmatpush.msra.mxu0 %v10358
    %v10360 = vand.u32 %v126, 4294901760
    %10361 = vmatpush.msra.mxu0 %v10360
    %v10362 = vand.u32 %v122, 4294901760
    %10363 = vmatpush.msra.mxu0 %v10362
    %v10364 = vand.u32 %v118, 4294901760
    %10365 = vmatpush.msra.mxu0 %v10364
    %v10366 = vand.u32 %v114, 4294901760
    %10367 = vmatpush.msra.mxu0 %v10366
    %v10368 = vand.u32 %v110, 4294901760
    %10369 = vmatpush.msra.mxu0 %v10368
    %v10370 = vand.u32 %v106, 4294901760
    %10371 = vmatpush.msra.mxu0 %v10370
    %v10372 = vand.u32 %v102, 4294901760
    %10373 = vmatpush.msra.mxu0 %v10372
    %v10374 = vand.u32 %v98, 4294901760
    %10375 = vmatpush.msra.mxu0 %v10374
    %v10376 = vand.u32 %v94, 4294901760
    %10377 = vmatpush.msra.mxu0 %v10376
    %v10378 = vand.u32 %v90, 4294901760
    %10379 = vmatpush.msra.mxu0 %v10378
    %v10380 = vand.u32 %v86, 4294901760
    %10381 = vmatpush.msra.mxu0 %v10380
    %v10382 = vand.u32 %v5914, 4294901760
    %v10383 = vsub.f32 %v5914, %v10382
    %v10384 = vand.u32 %v10383, 4294901760
    %v10385 = vsub.f32 %v10383, %v10384
    %v10386 = vand.u32 %v10385, 4294901760
    %10387 = vmatmul.f32.gmra.mxu0 %v10386
    %v10388 = vpop.f32.mrf.mxu0
    %v10389 = vadd.f32 %v10348, %v10388
    %10390 = vdwg.mxu0
    %v10391 = vand.u32 %v146, 4294901760
    %v10392 = vsub.f32 %v146, %v10391
    %v10393 = vand.u32 %v10392, 4294901760
    %v10394 = vsub.f32 %v10392, %v10393
    %v10395 = vand.u32 %v10394, 4294901760
    %10396 = vmatpush.msra.mxu0 %v10395
    %v10397 = vand.u32 %v142, 4294901760
    %v10398 = vsub.f32 %v142, %v10397
    %v10399 = vand.u32 %v10398, 4294901760
    %v10400 = vsub.f32 %v10398, %v10399
    %v10401 = vand.u32 %v10400, 4294901760
    %10402 = vmatpush.msra.mxu0 %v10401
    %v10403 = vand.u32 %v138, 4294901760
    %v10404 = vsub.f32 %v138, %v10403
    %v10405 = vand.u32 %v10404, 4294901760
    %v10406 = vsub.f32 %v10404, %v10405
    %v10407 = vand.u32 %v10406, 4294901760
    %10408 = vmatpush.msra.mxu0 %v10407
    %v10409 = vand.u32 %v134, 4294901760
    %v10410 = vsub.f32 %v134, %v10409
    %v10411 = vand.u32 %v10410, 4294901760
    %v10412 = vsub.f32 %v10410, %v10411
    %v10413 = vand.u32 %v10412, 4294901760
    %10414 = vmatpush.msra.mxu0 %v10413
    %v10415 = vand.u32 %v130, 4294901760
    %v10416 = vsub.f32 %v130, %v10415
    %v10417 = vand.u32 %v10416, 4294901760
    %v10418 = vsub.f32 %v10416, %v10417
    %v10419 = vand.u32 %v10418, 4294901760
    %10420 = vmatpush.msra.mxu0 %v10419
    %v10421 = vand.u32 %v126, 4294901760
    %v10422 = vsub.f32 %v126, %v10421
    %v10423 = vand.u32 %v10422, 4294901760
    %v10424 = vsub.f32 %v10422, %v10423
    %v10425 = vand.u32 %v10424, 4294901760
    %10426 = vmatpush.msra.mxu0 %v10425
    %v10427 = vand.u32 %v122, 4294901760
    %v10428 = vsub.f32 %v122, %v10427
    %v10429 = vand.u32 %v10428, 4294901760
    %v10430 = vsub.f32 %v10428, %v10429
    %v10431 = vand.u32 %v10430, 4294901760
    %10432 = vmatpush.msra.mxu0 %v10431
    %v10433 = vand.u32 %v118, 4294901760
    %v10434 = vsub.f32 %v118, %v10433
    %v10435 = vand.u32 %v10434, 4294901760
    %v10436 = vsub.f32 %v10434, %v10435
    %v10437 = vand.u32 %v10436, 4294901760
    %10438 = vmatpush.msra.mxu0 %v10437
    %v10439 = vand.u32 %v114, 4294901760
    %v10440 = vsub.f32 %v114, %v10439
    %v10441 = vand.u32 %v10440, 4294901760
    %v10442 = vsub.f32 %v10440, %v10441
    %v10443 = vand.u32 %v10442, 4294901760
    %10444 = vmatpush.msra.mxu0 %v10443
    %v10445 = vand.u32 %v110, 4294901760
    %v10446 = vsub.f32 %v110, %v10445
    %v10447 = vand.u32 %v10446, 4294901760
    %v10448 = vsub.f32 %v10446, %v10447
    %v10449 = vand.u32 %v10448, 4294901760
    %10450 = vmatpush.msra.mxu0 %v10449
    %v10451 = vand.u32 %v106, 4294901760
    %v10452 = vsub.f32 %v106, %v10451
    %v10453 = vand.u32 %v10452, 4294901760
    %v10454 = vsub.f32 %v10452, %v10453
    %v10455 = vand.u32 %v10454, 4294901760
    %10456 = vmatpush.msra.mxu0 %v10455
    %v10457 = vand.u32 %v102, 4294901760
    %v10458 = vsub.f32 %v102, %v10457
    %v10459 = vand.u32 %v10458, 4294901760
    %v10460 = vsub.f32 %v10458, %v10459
    %v10461 = vand.u32 %v10460, 4294901760
    %10462 = vmatpush.msra.mxu0 %v10461
    %v10463 = vand.u32 %v98, 4294901760
    %v10464 = vsub.f32 %v98, %v10463
    %v10465 = vand.u32 %v10464, 4294901760
    %v10466 = vsub.f32 %v10464, %v10465
    %v10467 = vand.u32 %v10466, 4294901760
    %10468 = vmatpush.msra.mxu0 %v10467
    %v10469 = vand.u32 %v94, 4294901760
    %v10470 = vsub.f32 %v94, %v10469
    %v10471 = vand.u32 %v10470, 4294901760
    %v10472 = vsub.f32 %v10470, %v10471
    %v10473 = vand.u32 %v10472, 4294901760
    %10474 = vmatpush.msra.mxu0 %v10473
    %v10475 = vand.u32 %v90, 4294901760
    %v10476 = vsub.f32 %v90, %v10475
    %v10477 = vand.u32 %v10476, 4294901760
    %v10478 = vsub.f32 %v10476, %v10477
    %v10479 = vand.u32 %v10478, 4294901760
    %10480 = vmatpush.msra.mxu0 %v10479
    %v10481 = vand.u32 %v86, 4294901760
    %v10482 = vsub.f32 %v86, %v10481
    %v10483 = vand.u32 %v10482, 4294901760
    %v10484 = vsub.f32 %v10482, %v10483
    %v10485 = vand.u32 %v10484, 4294901760
    %10486 = vmatpush.msra.mxu0 %v10485
    %v10487 = vand.u32 %v5914, 4294901760
    %10488 = vmatmul.f32.gmra.mxu0 %v10487
    %v10489 = vpop.f32.mrf.mxu0
    %v10490 = vadd.f32 %v10389, %v10489
    %10491 = vdwg.mxu0
    %v10492 = vand.u32 %v146, 4294901760
    %v10493 = vsub.f32 %v146, %v10492
    %10494 = vmatpush.msra.mxu0 %v10493
    %v10495 = vand.u32 %v142, 4294901760
    %v10496 = vsub.f32 %v142, %v10495
    %10497 = vmatpush.msra.mxu0 %v10496
    %v10498 = vand.u32 %v138, 4294901760
    %v10499 = vsub.f32 %v138, %v10498
    %10500 = vmatpush.msra.mxu0 %v10499
    %v10501 = vand.u32 %v134, 4294901760
    %v10502 = vsub.f32 %v134, %v10501
    %10503 = vmatpush.msra.mxu0 %v10502
    %v10504 = vand.u32 %v130, 4294901760
    %v10505 = vsub.f32 %v130, %v10504
    %10506 = vmatpush.msra.mxu0 %v10505
    %v10507 = vand.u32 %v126, 4294901760
    %v10508 = vsub.f32 %v126, %v10507
    %10509 = vmatpush.msra.mxu0 %v10508
    %v10510 = vand.u32 %v122, 4294901760
    %v10511 = vsub.f32 %v122, %v10510
    %10512 = vmatpush.msra.mxu0 %v10511
    %v10513 = vand.u32 %v118, 4294901760
    %v10514 = vsub.f32 %v118, %v10513
    %10515 = vmatpush.msra.mxu0 %v10514
    %v10516 = vand.u32 %v114, 4294901760
    %v10517 = vsub.f32 %v114, %v10516
    %10518 = vmatpush.msra.mxu0 %v10517
    %v10519 = vand.u32 %v110, 4294901760
    %v10520 = vsub.f32 %v110, %v10519
    %10521 = vmatpush.msra.mxu0 %v10520
    %v10522 = vand.u32 %v106, 4294901760
    %v10523 = vsub.f32 %v106, %v10522
    %10524 = vmatpush.msra.mxu0 %v10523
    %v10525 = vand.u32 %v102, 4294901760
    %v10526 = vsub.f32 %v102, %v10525
    %10527 = vmatpush.msra.mxu0 %v10526
    %v10528 = vand.u32 %v98, 4294901760
    %v10529 = vsub.f32 %v98, %v10528
    %10530 = vmatpush.msra.mxu0 %v10529
    %v10531 = vand.u32 %v94, 4294901760
    %v10532 = vsub.f32 %v94, %v10531
    %10533 = vmatpush.msra.mxu0 %v10532
    %v10534 = vand.u32 %v90, 4294901760
    %v10535 = vsub.f32 %v90, %v10534
    %10536 = vmatpush.msra.mxu0 %v10535
    %v10537 = vand.u32 %v86, 4294901760
    %v10538 = vsub.f32 %v86, %v10537
    %10539 = vmatpush.msra.mxu0 %v10538
    %v10540 = vand.u32 %v5914, 4294901760
    %v10541 = vsub.f32 %v5914, %v10540
    %10542 = vmatmul.f32.gmra.mxu0 %v10541
    %v10543 = vpop.f32.mrf.mxu0
    %v10544 = vadd.f32 %v10490, %v10543
    %10545 = vdwg.mxu0
    %v10546 = vand.u32 %v146, 4294901760
    %10547 = vmatpush.msra.mxu0 %v10546
    %v10548 = vand.u32 %v142, 4294901760
    %10549 = vmatpush.msra.mxu0 %v10548
    %v10550 = vand.u32 %v138, 4294901760
    %10551 = vmatpush.msra.mxu0 %v10550
    %v10552 = vand.u32 %v134, 4294901760
    %10553 = vmatpush.msra.mxu0 %v10552
    %v10554 = vand.u32 %v130, 4294901760
    %10555 = vmatpush.msra.mxu0 %v10554
    %v10556 = vand.u32 %v126, 4294901760
    %10557 = vmatpush.msra.mxu0 %v10556
    %v10558 = vand.u32 %v122, 4294901760
    %10559 = vmatpush.msra.mxu0 %v10558
    %v10560 = vand.u32 %v118, 4294901760
    %10561 = vmatpush.msra.mxu0 %v10560
    %v10562 = vand.u32 %v114, 4294901760
    %10563 = vmatpush.msra.mxu0 %v10562
    %v10564 = vand.u32 %v110, 4294901760
    %10565 = vmatpush.msra.mxu0 %v10564
    %v10566 = vand.u32 %v106, 4294901760
    %10567 = vmatpush.msra.mxu0 %v10566
    %v10568 = vand.u32 %v102, 4294901760
    %10569 = vmatpush.msra.mxu0 %v10568
    %v10570 = vand.u32 %v98, 4294901760
    %10571 = vmatpush.msra.mxu0 %v10570
    %v10572 = vand.u32 %v94, 4294901760
    %10573 = vmatpush.msra.mxu0 %v10572
    %v10574 = vand.u32 %v90, 4294901760
    %10575 = vmatpush.msra.mxu0 %v10574
    %v10576 = vand.u32 %v86, 4294901760
    %10577 = vmatpush.msra.mxu0 %v10576
    %v10578 = vand.u32 %v5914, 4294901760
    %v10579 = vsub.f32 %v5914, %v10578
    %v10580 = vand.u32 %v10579, 4294901760
    %10581 = vmatmul.f32.gmra.mxu0 %v10580
    %v10582 = vpop.f32.mrf.mxu0
    %v10583 = vadd.f32 %v10544, %v10582
    %10584 = vdwg.mxu0
    %v10585 = vand.u32 %v146, 4294901760
    %v10586 = vsub.f32 %v146, %v10585
    %v10587 = vand.u32 %v10586, 4294901760
    %10588 = vmatpush.msra.mxu0 %v10587
    %v10589 = vand.u32 %v142, 4294901760
    %v10590 = vsub.f32 %v142, %v10589
    %v10591 = vand.u32 %v10590, 4294901760
    %10592 = vmatpush.msra.mxu0 %v10591
    %v10593 = vand.u32 %v138, 4294901760
    %v10594 = vsub.f32 %v138, %v10593
    %v10595 = vand.u32 %v10594, 4294901760
    %10596 = vmatpush.msra.mxu0 %v10595
    %v10597 = vand.u32 %v134, 4294901760
    %v10598 = vsub.f32 %v134, %v10597
    %v10599 = vand.u32 %v10598, 4294901760
    %10600 = vmatpush.msra.mxu0 %v10599
    %v10601 = vand.u32 %v130, 4294901760
    %v10602 = vsub.f32 %v130, %v10601
    %v10603 = vand.u32 %v10602, 4294901760
    %10604 = vmatpush.msra.mxu0 %v10603
    %v10605 = vand.u32 %v126, 4294901760
    %v10606 = vsub.f32 %v126, %v10605
    %v10607 = vand.u32 %v10606, 4294901760
    %10608 = vmatpush.msra.mxu0 %v10607
    %v10609 = vand.u32 %v122, 4294901760
    %v10610 = vsub.f32 %v122, %v10609
    %v10611 = vand.u32 %v10610, 4294901760
    %10612 = vmatpush.msra.mxu0 %v10611
    %v10613 = vand.u32 %v118, 4294901760
    %v10614 = vsub.f32 %v118, %v10613
    %v10615 = vand.u32 %v10614, 4294901760
    %10616 = vmatpush.msra.mxu0 %v10615
    %v10617 = vand.u32 %v114, 4294901760
    %v10618 = vsub.f32 %v114, %v10617
    %v10619 = vand.u32 %v10618, 4294901760
    %10620 = vmatpush.msra.mxu0 %v10619
    %v10621 = vand.u32 %v110, 4294901760
    %v10622 = vsub.f32 %v110, %v10621
    %v10623 = vand.u32 %v10622, 4294901760
    %10624 = vmatpush.msra.mxu0 %v10623
    %v10625 = vand.u32 %v106, 4294901760
    %v10626 = vsub.f32 %v106, %v10625
    %v10627 = vand.u32 %v10626, 4294901760
    %10628 = vmatpush.msra.mxu0 %v10627
    %v10629 = vand.u32 %v102, 4294901760
    %v10630 = vsub.f32 %v102, %v10629
    %v10631 = vand.u32 %v10630, 4294901760
    %10632 = vmatpush.msra.mxu0 %v10631
    %v10633 = vand.u32 %v98, 4294901760
    %v10634 = vsub.f32 %v98, %v10633
    %v10635 = vand.u32 %v10634, 4294901760
    %10636 = vmatpush.msra.mxu0 %v10635
    %v10637 = vand.u32 %v94, 4294901760
    %v10638 = vsub.f32 %v94, %v10637
    %v10639 = vand.u32 %v10638, 4294901760
    %10640 = vmatpush.msra.mxu0 %v10639
    %v10641 = vand.u32 %v90, 4294901760
    %v10642 = vsub.f32 %v90, %v10641
    %v10643 = vand.u32 %v10642, 4294901760
    %10644 = vmatpush.msra.mxu0 %v10643
    %v10645 = vand.u32 %v86, 4294901760
    %v10646 = vsub.f32 %v86, %v10645
    %v10647 = vand.u32 %v10646, 4294901760
    %10648 = vmatpush.msra.mxu0 %v10647
    %v10649 = vand.u32 %v5914, 4294901760
    %10650 = vmatmul.f32.gmra.mxu0 %v10649
    %v10651 = vpop.f32.mrf.mxu0
    %v10652 = vadd.f32 %v10583, %v10651
    %10653 = vdwg.mxu0
    %v10654 = vand.u32 %v146, 4294901760
    %10655 = vmatpush.msra.mxu0 %v10654
    %v10656 = vand.u32 %v142, 4294901760
    %10657 = vmatpush.msra.mxu0 %v10656
    %v10658 = vand.u32 %v138, 4294901760
    %10659 = vmatpush.msra.mxu0 %v10658
    %v10660 = vand.u32 %v134, 4294901760
    %10661 = vmatpush.msra.mxu0 %v10660
    %v10662 = vand.u32 %v130, 4294901760
    %10663 = vmatpush.msra.mxu0 %v10662
    %v10664 = vand.u32 %v126, 4294901760
    %10665 = vmatpush.msra.mxu0 %v10664
    %v10666 = vand.u32 %v122, 4294901760
    %10667 = vmatpush.msra.mxu0 %v10666
    %v10668 = vand.u32 %v118, 4294901760
    %10669 = vmatpush.msra.mxu0 %v10668
    %v10670 = vand.u32 %v114, 4294901760
    %10671 = vmatpush.msra.mxu0 %v10670
    %v10672 = vand.u32 %v110, 4294901760
    %10673 = vmatpush.msra.mxu0 %v10672
    %v10674 = vand.u32 %v106, 4294901760
    %10675 = vmatpush.msra.mxu0 %v10674
    %v10676 = vand.u32 %v102, 4294901760
    %10677 = vmatpush.msra.mxu0 %v10676
    %v10678 = vand.u32 %v98, 4294901760
    %10679 = vmatpush.msra.mxu0 %v10678
    %v10680 = vand.u32 %v94, 4294901760
    %10681 = vmatpush.msra.mxu0 %v10680
    %v10682 = vand.u32 %v90, 4294901760
    %10683 = vmatpush.msra.mxu0 %v10682
    %v10684 = vand.u32 %v86, 4294901760
    %10685 = vmatpush.msra.mxu0 %v10684
    %v10686 = vand.u32 %v5914, 4294901760
    %10687 = vmatmul.f32.gmra.mxu0 %v10686
    %v10688 = vpop.f32.mrf.mxu0
    %v10689 = vadd.f32 %v10652, %v10688
    %10690 = vdwg.mxu0
    %v10691 = vand.u32 %v210, 4294901760
    %10692 = vmatpush.msra.mxu0 %v10691
    %v10693 = vand.u32 %v206, 4294901760
    %10694 = vmatpush.msra.mxu0 %v10693
    %v10695 = vand.u32 %v202, 4294901760
    %10696 = vmatpush.msra.mxu0 %v10695
    %v10697 = vand.u32 %v198, 4294901760
    %10698 = vmatpush.msra.mxu0 %v10697
    %v10699 = vand.u32 %v194, 4294901760
    %10700 = vmatpush.msra.mxu0 %v10699
    %v10701 = vand.u32 %v190, 4294901760
    %10702 = vmatpush.msra.mxu0 %v10701
    %v10703 = vand.u32 %v186, 4294901760
    %10704 = vmatpush.msra.mxu0 %v10703
    %v10705 = vand.u32 %v182, 4294901760
    %10706 = vmatpush.msra.mxu0 %v10705
    %v10707 = vand.u32 %v178, 4294901760
    %10708 = vmatpush.msra.mxu0 %v10707
    %v10709 = vand.u32 %v174, 4294901760
    %10710 = vmatpush.msra.mxu0 %v10709
    %v10711 = vand.u32 %v170, 4294901760
    %10712 = vmatpush.msra.mxu0 %v10711
    %v10713 = vand.u32 %v166, 4294901760
    %10714 = vmatpush.msra.mxu0 %v10713
    %v10715 = vand.u32 %v162, 4294901760
    %10716 = vmatpush.msra.mxu0 %v10715
    %v10717 = vand.u32 %v158, 4294901760
    %10718 = vmatpush.msra.mxu0 %v10717
    %v10719 = vand.u32 %v154, 4294901760
    %10720 = vmatpush.msra.mxu0 %v10719
    %v10721 = vand.u32 %v150, 4294901760
    %10722 = vmatpush.msra.mxu0 %v10721
    %v10723 = vand.u32 %v5915, 4294901760
    %v10724 = vsub.f32 %v5915, %v10723
    %v10725 = vand.u32 %v10724, 4294901760
    %v10726 = vsub.f32 %v10724, %v10725
    %v10727 = vand.u32 %v10726, 4294901760
    %10728 = vmatmul.f32.gmra.mxu0 %v10727
    %v10729 = vpop.f32.mrf.mxu0
    %v10730 = vadd.f32 %v10689, %v10729
    %10731 = vdwg.mxu0
    %v10732 = vand.u32 %v210, 4294901760
    %v10733 = vsub.f32 %v210, %v10732
    %v10734 = vand.u32 %v10733, 4294901760
    %v10735 = vsub.f32 %v10733, %v10734
    %v10736 = vand.u32 %v10735, 4294901760
    %10737 = vmatpush.msra.mxu0 %v10736
    %v10738 = vand.u32 %v206, 4294901760
    %v10739 = vsub.f32 %v206, %v10738
    %v10740 = vand.u32 %v10739, 4294901760
    %v10741 = vsub.f32 %v10739, %v10740
    %v10742 = vand.u32 %v10741, 4294901760
    %10743 = vmatpush.msra.mxu0 %v10742
    %v10744 = vand.u32 %v202, 4294901760
    %v10745 = vsub.f32 %v202, %v10744
    %v10746 = vand.u32 %v10745, 4294901760
    %v10747 = vsub.f32 %v10745, %v10746
    %v10748 = vand.u32 %v10747, 4294901760
    %10749 = vmatpush.msra.mxu0 %v10748
    %v10750 = vand.u32 %v198, 4294901760
    %v10751 = vsub.f32 %v198, %v10750
    %v10752 = vand.u32 %v10751, 4294901760
    %v10753 = vsub.f32 %v10751, %v10752
    %v10754 = vand.u32 %v10753, 4294901760
    %10755 = vmatpush.msra.mxu0 %v10754
    %v10756 = vand.u32 %v194, 4294901760
    %v10757 = vsub.f32 %v194, %v10756
    %v10758 = vand.u32 %v10757, 4294901760
    %v10759 = vsub.f32 %v10757, %v10758
    %v10760 = vand.u32 %v10759, 4294901760
    %10761 = vmatpush.msra.mxu0 %v10760
    %v10762 = vand.u32 %v190, 4294901760
    %v10763 = vsub.f32 %v190, %v10762
    %v10764 = vand.u32 %v10763, 4294901760
    %v10765 = vsub.f32 %v10763, %v10764
    %v10766 = vand.u32 %v10765, 4294901760
    %10767 = vmatpush.msra.mxu0 %v10766
    %v10768 = vand.u32 %v186, 4294901760
    %v10769 = vsub.f32 %v186, %v10768
    %v10770 = vand.u32 %v10769, 4294901760
    %v10771 = vsub.f32 %v10769, %v10770
    %v10772 = vand.u32 %v10771, 4294901760
    %10773 = vmatpush.msra.mxu0 %v10772
    %v10774 = vand.u32 %v182, 4294901760
    %v10775 = vsub.f32 %v182, %v10774
    %v10776 = vand.u32 %v10775, 4294901760
    %v10777 = vsub.f32 %v10775, %v10776
    %v10778 = vand.u32 %v10777, 4294901760
    %10779 = vmatpush.msra.mxu0 %v10778
    %v10780 = vand.u32 %v178, 4294901760
    %v10781 = vsub.f32 %v178, %v10780
    %v10782 = vand.u32 %v10781, 4294901760
    %v10783 = vsub.f32 %v10781, %v10782
    %v10784 = vand.u32 %v10783, 4294901760
    %10785 = vmatpush.msra.mxu0 %v10784
    %v10786 = vand.u32 %v174, 4294901760
    %v10787 = vsub.f32 %v174, %v10786
    %v10788 = vand.u32 %v10787, 4294901760
    %v10789 = vsub.f32 %v10787, %v10788
    %v10790 = vand.u32 %v10789, 4294901760
    %10791 = vmatpush.msra.mxu0 %v10790
    %v10792 = vand.u32 %v170, 4294901760
    %v10793 = vsub.f32 %v170, %v10792
    %v10794 = vand.u32 %v10793, 4294901760
    %v10795 = vsub.f32 %v10793, %v10794
    %v10796 = vand.u32 %v10795, 4294901760
    %10797 = vmatpush.msra.mxu0 %v10796
    %v10798 = vand.u32 %v166, 4294901760
    %v10799 = vsub.f32 %v166, %v10798
    %v10800 = vand.u32 %v10799, 4294901760
    %v10801 = vsub.f32 %v10799, %v10800
    %v10802 = vand.u32 %v10801, 4294901760
    %10803 = vmatpush.msra.mxu0 %v10802
    %v10804 = vand.u32 %v162, 4294901760
    %v10805 = vsub.f32 %v162, %v10804
    %v10806 = vand.u32 %v10805, 4294901760
    %v10807 = vsub.f32 %v10805, %v10806
    %v10808 = vand.u32 %v10807, 4294901760
    %10809 = vmatpush.msra.mxu0 %v10808
    %v10810 = vand.u32 %v158, 4294901760
    %v10811 = vsub.f32 %v158, %v10810
    %v10812 = vand.u32 %v10811, 4294901760
    %v10813 = vsub.f32 %v10811, %v10812
    %v10814 = vand.u32 %v10813, 4294901760
    %10815 = vmatpush.msra.mxu0 %v10814
    %v10816 = vand.u32 %v154, 4294901760
    %v10817 = vsub.f32 %v154, %v10816
    %v10818 = vand.u32 %v10817, 4294901760
    %v10819 = vsub.f32 %v10817, %v10818
    %v10820 = vand.u32 %v10819, 4294901760
    %10821 = vmatpush.msra.mxu0 %v10820
    %v10822 = vand.u32 %v150, 4294901760
    %v10823 = vsub.f32 %v150, %v10822
    %v10824 = vand.u32 %v10823, 4294901760
    %v10825 = vsub.f32 %v10823, %v10824
    %v10826 = vand.u32 %v10825, 4294901760
    %10827 = vmatpush.msra.mxu0 %v10826
    %v10828 = vand.u32 %v5915, 4294901760
    %10829 = vmatmul.f32.gmra.mxu0 %v10828
    %v10830 = vpop.f32.mrf.mxu0
    %v10831 = vadd.f32 %v10730, %v10830
    %10832 = vdwg.mxu0
    %v10833 = vand.u32 %v210, 4294901760
    %v10834 = vsub.f32 %v210, %v10833
    %10835 = vmatpush.msra.mxu0 %v10834
    %v10836 = vand.u32 %v206, 4294901760
    %v10837 = vsub.f32 %v206, %v10836
    %10838 = vmatpush.msra.mxu0 %v10837
    %v10839 = vand.u32 %v202, 4294901760
    %v10840 = vsub.f32 %v202, %v10839
    %10841 = vmatpush.msra.mxu0 %v10840
    %v10842 = vand.u32 %v198, 4294901760
    %v10843 = vsub.f32 %v198, %v10842
    %10844 = vmatpush.msra.mxu0 %v10843
    %v10845 = vand.u32 %v194, 4294901760
    %v10846 = vsub.f32 %v194, %v10845
    %10847 = vmatpush.msra.mxu0 %v10846
    %v10848 = vand.u32 %v190, 4294901760
    %v10849 = vsub.f32 %v190, %v10848
    %10850 = vmatpush.msra.mxu0 %v10849
    %v10851 = vand.u32 %v186, 4294901760
    %v10852 = vsub.f32 %v186, %v10851
    %10853 = vmatpush.msra.mxu0 %v10852
    %v10854 = vand.u32 %v182, 4294901760
    %v10855 = vsub.f32 %v182, %v10854
    %10856 = vmatpush.msra.mxu0 %v10855
    %v10857 = vand.u32 %v178, 4294901760
    %v10858 = vsub.f32 %v178, %v10857
    %10859 = vmatpush.msra.mxu0 %v10858
    %v10860 = vand.u32 %v174, 4294901760
    %v10861 = vsub.f32 %v174, %v10860
    %10862 = vmatpush.msra.mxu0 %v10861
    %v10863 = vand.u32 %v170, 4294901760
    %v10864 = vsub.f32 %v170, %v10863
    %10865 = vmatpush.msra.mxu0 %v10864
    %v10866 = vand.u32 %v166, 4294901760
    %v10867 = vsub.f32 %v166, %v10866
    %10868 = vmatpush.msra.mxu0 %v10867
    %v10869 = vand.u32 %v162, 4294901760
    %v10870 = vsub.f32 %v162, %v10869
    %10871 = vmatpush.msra.mxu0 %v10870
    %v10872 = vand.u32 %v158, 4294901760
    %v10873 = vsub.f32 %v158, %v10872
    %10874 = vmatpush.msra.mxu0 %v10873
    %v10875 = vand.u32 %v154, 4294901760
    %v10876 = vsub.f32 %v154, %v10875
    %10877 = vmatpush.msra.mxu0 %v10876
    %v10878 = vand.u32 %v150, 4294901760
    %v10879 = vsub.f32 %v150, %v10878
    %10880 = vmatpush.msra.mxu0 %v10879
    %v10881 = vand.u32 %v5915, 4294901760
    %v10882 = vsub.f32 %v5915, %v10881
    %10883 = vmatmul.f32.gmra.mxu0 %v10882
    %v10884 = vpop.f32.mrf.mxu0
    %v10885 = vadd.f32 %v10831, %v10884
    %10886 = vdwg.mxu0
    %v10887 = vand.u32 %v210, 4294901760
    %10888 = vmatpush.msra.mxu0 %v10887
    %v10889 = vand.u32 %v206, 4294901760
    %10890 = vmatpush.msra.mxu0 %v10889
    %v10891 = vand.u32 %v202, 4294901760
    %10892 = vmatpush.msra.mxu0 %v10891
    %v10893 = vand.u32 %v198, 4294901760
    %10894 = vmatpush.msra.mxu0 %v10893
    %v10895 = vand.u32 %v194, 4294901760
    %10896 = vmatpush.msra.mxu0 %v10895
    %v10897 = vand.u32 %v190, 4294901760
    %10898 = vmatpush.msra.mxu0 %v10897
    %v10899 = vand.u32 %v186, 4294901760
    %10900 = vmatpush.msra.mxu0 %v10899
    %v10901 = vand.u32 %v182, 4294901760
    %10902 = vmatpush.msra.mxu0 %v10901
    %v10903 = vand.u32 %v178, 4294901760
    %10904 = vmatpush.msra.mxu0 %v10903
    %v10905 = vand.u32 %v174, 4294901760
    %10906 = vmatpush.msra.mxu0 %v10905
    %v10907 = vand.u32 %v170, 4294901760
    %10908 = vmatpush.msra.mxu0 %v10907
    %v10909 = vand.u32 %v166, 4294901760
    %10910 = vmatpush.msra.mxu0 %v10909
    %v10911 = vand.u32 %v162, 4294901760
    %10912 = vmatpush.msra.mxu0 %v10911
    %v10913 = vand.u32 %v158, 4294901760
    %10914 = vmatpush.msra.mxu0 %v10913
    %v10915 = vand.u32 %v154, 4294901760
    %10916 = vmatpush.msra.mxu0 %v10915
    %v10917 = vand.u32 %v150, 4294901760
    %10918 = vmatpush.msra.mxu0 %v10917
    %v10919 = vand.u32 %v5915, 4294901760
    %v10920 = vsub.f32 %v5915, %v10919
    %v10921 = vand.u32 %v10920, 4294901760
    %10922 = vmatmul.f32.gmra.mxu0 %v10921
    %v10923 = vpop.f32.mrf.mxu0
    %v10924 = vadd.f32 %v10885, %v10923
    %10925 = vdwg.mxu0
    %v10926 = vand.u32 %v210, 4294901760
    %v10927 = vsub.f32 %v210, %v10926
    %v10928 = vand.u32 %v10927, 4294901760
    %10929 = vmatpush.msra.mxu0 %v10928
    %v10930 = vand.u32 %v206, 4294901760
    %v10931 = vsub.f32 %v206, %v10930
    %v10932 = vand.u32 %v10931, 4294901760
    %10933 = vmatpush.msra.mxu0 %v10932
    %v10934 = vand.u32 %v202, 4294901760
    %v10935 = vsub.f32 %v202, %v10934
    %v10936 = vand.u32 %v10935, 4294901760
    %10937 = vmatpush.msra.mxu0 %v10936
    %v10938 = vand.u32 %v198, 4294901760
    %v10939 = vsub.f32 %v198, %v10938
    %v10940 = vand.u32 %v10939, 4294901760
    %10941 = vmatpush.msra.mxu0 %v10940
    %v10942 = vand.u32 %v194, 4294901760
    %v10943 = vsub.f32 %v194, %v10942
    %v10944 = vand.u32 %v10943, 4294901760
    %10945 = vmatpush.msra.mxu0 %v10944
    %v10946 = vand.u32 %v190, 4294901760
    %v10947 = vsub.f32 %v190, %v10946
    %v10948 = vand.u32 %v10947, 4294901760
    %10949 = vmatpush.msra.mxu0 %v10948
    %v10950 = vand.u32 %v186, 4294901760
    %v10951 = vsub.f32 %v186, %v10950
    %v10952 = vand.u32 %v10951, 4294901760
    %10953 = vmatpush.msra.mxu0 %v10952
    %v10954 = vand.u32 %v182, 4294901760
    %v10955 = vsub.f32 %v182, %v10954
    %v10956 = vand.u32 %v10955, 4294901760
    %10957 = vmatpush.msra.mxu0 %v10956
    %v10958 = vand.u32 %v178, 4294901760
    %v10959 = vsub.f32 %v178, %v10958
    %v10960 = vand.u32 %v10959, 4294901760
    %10961 = vmatpush.msra.mxu0 %v10960
    %v10962 = vand.u32 %v174, 4294901760
    %v10963 = vsub.f32 %v174, %v10962
    %v10964 = vand.u32 %v10963, 4294901760
    %10965 = vmatpush.msra.mxu0 %v10964
    %v10966 = vand.u32 %v170, 4294901760
    %v10967 = vsub.f32 %v170, %v10966
    %v10968 = vand.u32 %v10967, 4294901760
    %10969 = vmatpush.msra.mxu0 %v10968
    %v10970 = vand.u32 %v166, 4294901760
    %v10971 = vsub.f32 %v166, %v10970
    %v10972 = vand.u32 %v10971, 4294901760
    %10973 = vmatpush.msra.mxu0 %v10972
    %v10974 = vand.u32 %v162, 4294901760
    %v10975 = vsub.f32 %v162, %v10974
    %v10976 = vand.u32 %v10975, 4294901760
    %10977 = vmatpush.msra.mxu0 %v10976
    %v10978 = vand.u32 %v158, 4294901760
    %v10979 = vsub.f32 %v158, %v10978
    %v10980 = vand.u32 %v10979, 4294901760
    %10981 = vmatpush.msra.mxu0 %v10980
    %v10982 = vand.u32 %v154, 4294901760
    %v10983 = vsub.f32 %v154, %v10982
    %v10984 = vand.u32 %v10983, 4294901760
    %10985 = vmatpush.msra.mxu0 %v10984
    %v10986 = vand.u32 %v150, 4294901760
    %v10987 = vsub.f32 %v150, %v10986
    %v10988 = vand.u32 %v10987, 4294901760
    %10989 = vmatpush.msra.mxu0 %v10988
    %v10990 = vand.u32 %v5915, 4294901760
    %10991 = vmatmul.f32.gmra.mxu0 %v10990
    %v10992 = vpop.f32.mrf.mxu0
    %v10993 = vadd.f32 %v10924, %v10992
    %10994 = vdwg.mxu0
    %v10995 = vand.u32 %v210, 4294901760
    %10996 = vmatpush.msra.mxu0 %v10995
    %v10997 = vand.u32 %v206, 4294901760
    %10998 = vmatpush.msra.mxu0 %v10997
    %v10999 = vand.u32 %v202, 4294901760
    %11000 = vmatpush.msra.mxu0 %v10999
    %v11001 = vand.u32 %v198, 4294901760
    %11002 = vmatpush.msra.mxu0 %v11001
    %v11003 = vand.u32 %v194, 4294901760
    %11004 = vmatpush.msra.mxu0 %v11003
    %v11005 = vand.u32 %v190, 4294901760
    %11006 = vmatpush.msra.mxu0 %v11005
    %v11007 = vand.u32 %v186, 4294901760
    %11008 = vmatpush.msra.mxu0 %v11007
    %v11009 = vand.u32 %v182, 4294901760
    %11010 = vmatpush.msra.mxu0 %v11009
    %v11011 = vand.u32 %v178, 4294901760
    %11012 = vmatpush.msra.mxu0 %v11011
    %v11013 = vand.u32 %v174, 4294901760
    %11014 = vmatpush.msra.mxu0 %v11013
    %v11015 = vand.u32 %v170, 4294901760
    %11016 = vmatpush.msra.mxu0 %v11015
    %v11017 = vand.u32 %v166, 4294901760
    %11018 = vmatpush.msra.mxu0 %v11017
    %v11019 = vand.u32 %v162, 4294901760
    %11020 = vmatpush.msra.mxu0 %v11019
    %v11021 = vand.u32 %v158, 4294901760
    %11022 = vmatpush.msra.mxu0 %v11021
    %v11023 = vand.u32 %v154, 4294901760
    %11024 = vmatpush.msra.mxu0 %v11023
    %v11025 = vand.u32 %v150, 4294901760
    %11026 = vmatpush.msra.mxu0 %v11025
    %v11027 = vand.u32 %v5915, 4294901760
    %11028 = vmatmul.f32.gmra.mxu0 %v11027
    %v11029 = vpop.f32.mrf.mxu0
    %v11030 = vadd.f32 %v10993, %v11029
    %11031 = vdwg.mxu0
    %v11032 = vand.u32 %v274, 4294901760
    %11033 = vmatpush.msra.mxu0 %v11032
    %v11034 = vand.u32 %v270, 4294901760
    %11035 = vmatpush.msra.mxu0 %v11034
    %v11036 = vand.u32 %v266, 4294901760
    %11037 = vmatpush.msra.mxu0 %v11036
    %v11038 = vand.u32 %v262, 4294901760
    %11039 = vmatpush.msra.mxu0 %v11038
    %v11040 = vand.u32 %v258, 4294901760
    %11041 = vmatpush.msra.mxu0 %v11040
    %v11042 = vand.u32 %v254, 4294901760
    %11043 = vmatpush.msra.mxu0 %v11042
    %v11044 = vand.u32 %v250, 4294901760
    %11045 = vmatpush.msra.mxu0 %v11044
    %v11046 = vand.u32 %v246, 4294901760
    %11047 = vmatpush.msra.mxu0 %v11046
    %v11048 = vand.u32 %v242, 4294901760
    %11049 = vmatpush.msra.mxu0 %v11048
    %v11050 = vand.u32 %v238, 4294901760
    %11051 = vmatpush.msra.mxu0 %v11050
    %v11052 = vand.u32 %v234, 4294901760
    %11053 = vmatpush.msra.mxu0 %v11052
    %v11054 = vand.u32 %v230, 4294901760
    %11055 = vmatpush.msra.mxu0 %v11054
    %v11056 = vand.u32 %v226, 4294901760
    %11057 = vmatpush.msra.mxu0 %v11056
    %v11058 = vand.u32 %v222, 4294901760
    %11059 = vmatpush.msra.mxu0 %v11058
    %v11060 = vand.u32 %v218, 4294901760
    %11061 = vmatpush.msra.mxu0 %v11060
    %v11062 = vand.u32 %v214, 4294901760
    %11063 = vmatpush.msra.mxu0 %v11062
    %v11064 = vand.u32 %v5916, 4294901760
    %v11065 = vsub.f32 %v5916, %v11064
    %v11066 = vand.u32 %v11065, 4294901760
    %v11067 = vsub.f32 %v11065, %v11066
    %v11068 = vand.u32 %v11067, 4294901760
    %11069 = vmatmul.f32.gmra.mxu0 %v11068
    %v11070 = vpop.f32.mrf.mxu0
    %v11071 = vadd.f32 %v11030, %v11070
    %11072 = vdwg.mxu0
    %v11073 = vand.u32 %v274, 4294901760
    %v11074 = vsub.f32 %v274, %v11073
    %v11075 = vand.u32 %v11074, 4294901760
    %v11076 = vsub.f32 %v11074, %v11075
    %v11077 = vand.u32 %v11076, 4294901760
    %11078 = vmatpush.msra.mxu0 %v11077
    %v11079 = vand.u32 %v270, 4294901760
    %v11080 = vsub.f32 %v270, %v11079
    %v11081 = vand.u32 %v11080, 4294901760
    %v11082 = vsub.f32 %v11080, %v11081
    %v11083 = vand.u32 %v11082, 4294901760
    %11084 = vmatpush.msra.mxu0 %v11083
    %v11085 = vand.u32 %v266, 4294901760
    %v11086 = vsub.f32 %v266, %v11085
    %v11087 = vand.u32 %v11086, 4294901760
    %v11088 = vsub.f32 %v11086, %v11087
    %v11089 = vand.u32 %v11088, 4294901760
    %11090 = vmatpush.msra.mxu0 %v11089
    %v11091 = vand.u32 %v262, 4294901760
    %v11092 = vsub.f32 %v262, %v11091
    %v11093 = vand.u32 %v11092, 4294901760
    %v11094 = vsub.f32 %v11092, %v11093
    %v11095 = vand.u32 %v11094, 4294901760
    %11096 = vmatpush.msra.mxu0 %v11095
    %v11097 = vand.u32 %v258, 4294901760
    %v11098 = vsub.f32 %v258, %v11097
    %v11099 = vand.u32 %v11098, 4294901760
    %v11100 = vsub.f32 %v11098, %v11099
    %v11101 = vand.u32 %v11100, 4294901760
    %11102 = vmatpush.msra.mxu0 %v11101
    %v11103 = vand.u32 %v254, 4294901760
    %v11104 = vsub.f32 %v254, %v11103
    %v11105 = vand.u32 %v11104, 4294901760
    %v11106 = vsub.f32 %v11104, %v11105
    %v11107 = vand.u32 %v11106, 4294901760
    %11108 = vmatpush.msra.mxu0 %v11107
    %v11109 = vand.u32 %v250, 4294901760
    %v11110 = vsub.f32 %v250, %v11109
    %v11111 = vand.u32 %v11110, 4294901760
    %v11112 = vsub.f32 %v11110, %v11111
    %v11113 = vand.u32 %v11112, 4294901760
    %11114 = vmatpush.msra.mxu0 %v11113
    %v11115 = vand.u32 %v246, 4294901760
    %v11116 = vsub.f32 %v246, %v11115
    %v11117 = vand.u32 %v11116, 4294901760
    %v11118 = vsub.f32 %v11116, %v11117
    %v11119 = vand.u32 %v11118, 4294901760
    %11120 = vmatpush.msra.mxu0 %v11119
    %v11121 = vand.u32 %v242, 4294901760
    %v11122 = vsub.f32 %v242, %v11121
    %v11123 = vand.u32 %v11122, 4294901760
    %v11124 = vsub.f32 %v11122, %v11123
    %v11125 = vand.u32 %v11124, 4294901760
    %11126 = vmatpush.msra.mxu0 %v11125
    %v11127 = vand.u32 %v238, 4294901760
    %v11128 = vsub.f32 %v238, %v11127
    %v11129 = vand.u32 %v11128, 4294901760
    %v11130 = vsub.f32 %v11128, %v11129
    %v11131 = vand.u32 %v11130, 4294901760
    %11132 = vmatpush.msra.mxu0 %v11131
    %v11133 = vand.u32 %v234, 4294901760
    %v11134 = vsub.f32 %v234, %v11133
    %v11135 = vand.u32 %v11134, 4294901760
    %v11136 = vsub.f32 %v11134, %v11135
    %v11137 = vand.u32 %v11136, 4294901760
    %11138 = vmatpush.msra.mxu0 %v11137
    %v11139 = vand.u32 %v230, 4294901760
    %v11140 = vsub.f32 %v230, %v11139
    %v11141 = vand.u32 %v11140, 4294901760
    %v11142 = vsub.f32 %v11140, %v11141
    %v11143 = vand.u32 %v11142, 4294901760
    %11144 = vmatpush.msra.mxu0 %v11143
    %v11145 = vand.u32 %v226, 4294901760
    %v11146 = vsub.f32 %v226, %v11145
    %v11147 = vand.u32 %v11146, 4294901760
    %v11148 = vsub.f32 %v11146, %v11147
    %v11149 = vand.u32 %v11148, 4294901760
    %11150 = vmatpush.msra.mxu0 %v11149
    %v11151 = vand.u32 %v222, 4294901760
    %v11152 = vsub.f32 %v222, %v11151
    %v11153 = vand.u32 %v11152, 4294901760
    %v11154 = vsub.f32 %v11152, %v11153
    %v11155 = vand.u32 %v11154, 4294901760
    %11156 = vmatpush.msra.mxu0 %v11155
    %v11157 = vand.u32 %v218, 4294901760
    %v11158 = vsub.f32 %v218, %v11157
    %v11159 = vand.u32 %v11158, 4294901760
    %v11160 = vsub.f32 %v11158, %v11159
    %v11161 = vand.u32 %v11160, 4294901760
    %11162 = vmatpush.msra.mxu0 %v11161
    %v11163 = vand.u32 %v214, 4294901760
    %v11164 = vsub.f32 %v214, %v11163
    %v11165 = vand.u32 %v11164, 4294901760
    %v11166 = vsub.f32 %v11164, %v11165
    %v11167 = vand.u32 %v11166, 4294901760
    %11168 = vmatpush.msra.mxu0 %v11167
    %v11169 = vand.u32 %v5916, 4294901760
    %11170 = vmatmul.f32.gmra.mxu0 %v11169
    %v11171 = vpop.f32.mrf.mxu0
    %v11172 = vadd.f32 %v11071, %v11171
    %11173 = vdwg.mxu0
    %v11174 = vand.u32 %v274, 4294901760
    %v11175 = vsub.f32 %v274, %v11174
    %11176 = vmatpush.msra.mxu0 %v11175
    %v11177 = vand.u32 %v270, 4294901760
    %v11178 = vsub.f32 %v270, %v11177
    %11179 = vmatpush.msra.mxu0 %v11178
    %v11180 = vand.u32 %v266, 4294901760
    %v11181 = vsub.f32 %v266, %v11180
    %11182 = vmatpush.msra.mxu0 %v11181
    %v11183 = vand.u32 %v262, 4294901760
    %v11184 = vsub.f32 %v262, %v11183
    %11185 = vmatpush.msra.mxu0 %v11184
    %v11186 = vand.u32 %v258, 4294901760
    %v11187 = vsub.f32 %v258, %v11186
    %11188 = vmatpush.msra.mxu0 %v11187
    %v11189 = vand.u32 %v254, 4294901760
    %v11190 = vsub.f32 %v254, %v11189
    %11191 = vmatpush.msra.mxu0 %v11190
    %v11192 = vand.u32 %v250, 4294901760
    %v11193 = vsub.f32 %v250, %v11192
    %11194 = vmatpush.msra.mxu0 %v11193
    %v11195 = vand.u32 %v246, 4294901760
    %v11196 = vsub.f32 %v246, %v11195
    %11197 = vmatpush.msra.mxu0 %v11196
    %v11198 = vand.u32 %v242, 4294901760
    %v11199 = vsub.f32 %v242, %v11198
    %11200 = vmatpush.msra.mxu0 %v11199
    %v11201 = vand.u32 %v238, 4294901760
    %v11202 = vsub.f32 %v238, %v11201
    %11203 = vmatpush.msra.mxu0 %v11202
    %v11204 = vand.u32 %v234, 4294901760
    %v11205 = vsub.f32 %v234, %v11204
    %11206 = vmatpush.msra.mxu0 %v11205
    %v11207 = vand.u32 %v230, 4294901760
    %v11208 = vsub.f32 %v230, %v11207
    %11209 = vmatpush.msra.mxu0 %v11208
    %v11210 = vand.u32 %v226, 4294901760
    %v11211 = vsub.f32 %v226, %v11210
    %11212 = vmatpush.msra.mxu0 %v11211
    %v11213 = vand.u32 %v222, 4294901760
    %v11214 = vsub.f32 %v222, %v11213
    %11215 = vmatpush.msra.mxu0 %v11214
    %v11216 = vand.u32 %v218, 4294901760
    %v11217 = vsub.f32 %v218, %v11216
    %11218 = vmatpush.msra.mxu0 %v11217
    %v11219 = vand.u32 %v214, 4294901760
    %v11220 = vsub.f32 %v214, %v11219
    %11221 = vmatpush.msra.mxu0 %v11220
    %v11222 = vand.u32 %v5916, 4294901760
    %v11223 = vsub.f32 %v5916, %v11222
    %11224 = vmatmul.f32.gmra.mxu0 %v11223
    %v11225 = vpop.f32.mrf.mxu0
    %v11226 = vadd.f32 %v11172, %v11225
    %11227 = vdwg.mxu0
    %v11228 = vand.u32 %v274, 4294901760
    %11229 = vmatpush.msra.mxu0 %v11228
    %v11230 = vand.u32 %v270, 4294901760
    %11231 = vmatpush.msra.mxu0 %v11230
    %v11232 = vand.u32 %v266, 4294901760
    %11233 = vmatpush.msra.mxu0 %v11232
    %v11234 = vand.u32 %v262, 4294901760
    %11235 = vmatpush.msra.mxu0 %v11234
    %v11236 = vand.u32 %v258, 4294901760
    %11237 = vmatpush.msra.mxu0 %v11236
    %v11238 = vand.u32 %v254, 4294901760
    %11239 = vmatpush.msra.mxu0 %v11238
    %v11240 = vand.u32 %v250, 4294901760
    %11241 = vmatpush.msra.mxu0 %v11240
    %v11242 = vand.u32 %v246, 4294901760
    %11243 = vmatpush.msra.mxu0 %v11242
    %v11244 = vand.u32 %v242, 4294901760
    %11245 = vmatpush.msra.mxu0 %v11244
    %v11246 = vand.u32 %v238, 4294901760
    %11247 = vmatpush.msra.mxu0 %v11246
    %v11248 = vand.u32 %v234, 4294901760
    %11249 = vmatpush.msra.mxu0 %v11248
    %v11250 = vand.u32 %v230, 4294901760
    %11251 = vmatpush.msra.mxu0 %v11250
    %v11252 = vand.u32 %v226, 4294901760
    %11253 = vmatpush.msra.mxu0 %v11252
    %v11254 = vand.u32 %v222, 4294901760
    %11255 = vmatpush.msra.mxu0 %v11254
    %v11256 = vand.u32 %v218, 4294901760
    %11257 = vmatpush.msra.mxu0 %v11256
    %v11258 = vand.u32 %v214, 4294901760
    %11259 = vmatpush.msra.mxu0 %v11258
    %v11260 = vand.u32 %v5916, 4294901760
    %v11261 = vsub.f32 %v5916, %v11260
    %v11262 = vand.u32 %v11261, 4294901760
    %11263 = vmatmul.f32.gmra.mxu0 %v11262
    %v11264 = vpop.f32.mrf.mxu0
    %v11265 = vadd.f32 %v11226, %v11264
    %11266 = vdwg.mxu0
    %v11267 = vand.u32 %v274, 4294901760
    %v11268 = vsub.f32 %v274, %v11267
    %v11269 = vand.u32 %v11268, 4294901760
    %11270 = vmatpush.msra.mxu0 %v11269
    %v11271 = vand.u32 %v270, 4294901760
    %v11272 = vsub.f32 %v270, %v11271
    %v11273 = vand.u32 %v11272, 4294901760
    %11274 = vmatpush.msra.mxu0 %v11273
    %v11275 = vand.u32 %v266, 4294901760
    %v11276 = vsub.f32 %v266, %v11275
    %v11277 = vand.u32 %v11276, 4294901760
    %11278 = vmatpush.msra.mxu0 %v11277
    %v11279 = vand.u32 %v262, 4294901760
    %v11280 = vsub.f32 %v262, %v11279
    %v11281 = vand.u32 %v11280, 4294901760
    %11282 = vmatpush.msra.mxu0 %v11281
    %v11283 = vand.u32 %v258, 4294901760
    %v11284 = vsub.f32 %v258, %v11283
    %v11285 = vand.u32 %v11284, 4294901760
    %11286 = vmatpush.msra.mxu0 %v11285
    %v11287 = vand.u32 %v254, 4294901760
    %v11288 = vsub.f32 %v254, %v11287
    %v11289 = vand.u32 %v11288, 4294901760
    %11290 = vmatpush.msra.mxu0 %v11289
    %v11291 = vand.u32 %v250, 4294901760
    %v11292 = vsub.f32 %v250, %v11291
    %v11293 = vand.u32 %v11292, 4294901760
    %11294 = vmatpush.msra.mxu0 %v11293
    %v11295 = vand.u32 %v246, 4294901760
    %v11296 = vsub.f32 %v246, %v11295
    %v11297 = vand.u32 %v11296, 4294901760
    %11298 = vmatpush.msra.mxu0 %v11297
    %v11299 = vand.u32 %v242, 4294901760
    %v11300 = vsub.f32 %v242, %v11299
    %v11301 = vand.u32 %v11300, 4294901760
    %11302 = vmatpush.msra.mxu0 %v11301
    %v11303 = vand.u32 %v238, 4294901760
    %v11304 = vsub.f32 %v238, %v11303
    %v11305 = vand.u32 %v11304, 4294901760
    %11306 = vmatpush.msra.mxu0 %v11305
    %v11307 = vand.u32 %v234, 4294901760
    %v11308 = vsub.f32 %v234, %v11307
    %v11309 = vand.u32 %v11308, 4294901760
    %11310 = vmatpush.msra.mxu0 %v11309
    %v11311 = vand.u32 %v230, 4294901760
    %v11312 = vsub.f32 %v230, %v11311
    %v11313 = vand.u32 %v11312, 4294901760
    %11314 = vmatpush.msra.mxu0 %v11313
    %v11315 = vand.u32 %v226, 4294901760
    %v11316 = vsub.f32 %v226, %v11315
    %v11317 = vand.u32 %v11316, 4294901760
    %11318 = vmatpush.msra.mxu0 %v11317
    %v11319 = vand.u32 %v222, 4294901760
    %v11320 = vsub.f32 %v222, %v11319
    %v11321 = vand.u32 %v11320, 4294901760
    %11322 = vmatpush.msra.mxu0 %v11321
    %v11323 = vand.u32 %v218, 4294901760
    %v11324 = vsub.f32 %v218, %v11323
    %v11325 = vand.u32 %v11324, 4294901760
    %11326 = vmatpush.msra.mxu0 %v11325
    %v11327 = vand.u32 %v214, 4294901760
    %v11328 = vsub.f32 %v214, %v11327
    %v11329 = vand.u32 %v11328, 4294901760
    %11330 = vmatpush.msra.mxu0 %v11329
    %v11331 = vand.u32 %v5916, 4294901760
    %11332 = vmatmul.f32.gmra.mxu0 %v11331
    %v11333 = vpop.f32.mrf.mxu0
    %v11334 = vadd.f32 %v11265, %v11333
    %11335 = vdwg.mxu0
    %v11336 = vand.u32 %v274, 4294901760
    %11337 = vmatpush.msra.mxu0 %v11336
    %v11338 = vand.u32 %v270, 4294901760
    %11339 = vmatpush.msra.mxu0 %v11338
    %v11340 = vand.u32 %v266, 4294901760
    %11341 = vmatpush.msra.mxu0 %v11340
    %v11342 = vand.u32 %v262, 4294901760
    %11343 = vmatpush.msra.mxu0 %v11342
    %v11344 = vand.u32 %v258, 4294901760
    %11345 = vmatpush.msra.mxu0 %v11344
    %v11346 = vand.u32 %v254, 4294901760
    %11347 = vmatpush.msra.mxu0 %v11346
    %v11348 = vand.u32 %v250, 4294901760
    %11349 = vmatpush.msra.mxu0 %v11348
    %v11350 = vand.u32 %v246, 4294901760
    %11351 = vmatpush.msra.mxu0 %v11350
    %v11352 = vand.u32 %v242, 4294901760
    %11353 = vmatpush.msra.mxu0 %v11352
    %v11354 = vand.u32 %v238, 4294901760
    %11355 = vmatpush.msra.mxu0 %v11354
    %v11356 = vand.u32 %v234, 4294901760
    %11357 = vmatpush.msra.mxu0 %v11356
    %v11358 = vand.u32 %v230, 4294901760
    %11359 = vmatpush.msra.mxu0 %v11358
    %v11360 = vand.u32 %v226, 4294901760
    %11361 = vmatpush.msra.mxu0 %v11360
    %v11362 = vand.u32 %v222, 4294901760
    %11363 = vmatpush.msra.mxu0 %v11362
    %v11364 = vand.u32 %v218, 4294901760
    %11365 = vmatpush.msra.mxu0 %v11364
    %v11366 = vand.u32 %v214, 4294901760
    %11367 = vmatpush.msra.mxu0 %v11366
    %v11368 = vand.u32 %v5916, 4294901760
    %11369 = vmatmul.f32.gmra.mxu0 %v11368
    %v11370 = vpop.f32.mrf.mxu0
    %v11371 = vadd.f32 %v11334, %v11370
    %11372 = vdwg.mxu0
    %v11373 = vmul.f32 %v7279, 0.5
    %v11374 = vmul.f32 %v8643, 0.5
    %v11375 = vmul.f32 %v10007, 0.5
    %v11376 = vmul.f32 %v11371, 0.5
    %v11377 = vmul.f32 %v7279, 0.70710677
    %v11378 = vmul.f32 %v8643, 0.70710677
    %v11379 = vmul.f32 %v10007, 0.70710677
    %v11380 = vmul.f32 %v11371, 0.70710677
    %v11381 = vmul.f32 %v11377, %v11377
    %v11382 = vmin.f32 16.0, %v11381
    %v11383 = vmul.f32 %v11382, 2.1237322e-06
    %v11384 = vadd.f32 %v11383, 0.00028619796
    %v11385 = vmul.f32 %v11382, %v11384
    %v11386 = vadd.f32 %v11385, 0.0036580483
    %v11387 = vmul.f32 %v11382, %v11386
    %v11388 = vadd.f32 %v11387, 0.05243302
    %v11389 = vmul.f32 %v11382, %v11388
    %v11390 = vadd.f32 %v11389, 0.18741608
    %v11391 = vmul.f32 %v11382, %v11390
    %v11392 = vadd.f32 %v11391, 1.1283791
    %v11393 = vmul.f32 %v11377, %v11392
    %v11394 = vmul.f32 %v11382, 3.8918573e-05
    %v11395 = vadd.f32 %v11394, 0.001143296
    %v11396 = vmul.f32 %v11382, %v11395
    %v11397 = vadd.f32 %v11396, 0.014752088
    %v11398 = vmul.f32 %v11382, %v11397
    %v11399 = vadd.f32 %v11398, 0.112945676
    %v11400 = vmul.f32 %v11382, %v11399
    %v11401 = vadd.f32 %v11400, 0.4994258
    %v11402 = vmul.f32 %v11382, %v11401
    %v11403 = vadd.f32 %v11402, 1.0
    %v11404 = vrcp.pop %v11403
    %v11405 = vmul.f32 %v11403, %v11404
    %v11406 = vsub.f32 1.0, %v11405
    %v11407 = vmul.f32 %v11404, %v11406
    %v11408 = vadd.f32 %v11404, %v11407
    %vm11409 = vweird.f32 %v11403
    %vm11410 = vweird.f32 %v11404
    %vm11411 = vmor %vm11409, %vm11410
    %v11412 = vsel %vm11411, %v11404, %v11408
    %v11413 = vand.u32 2147483647, %v11403
    %vm11414 = vcmp.eq.f32.partialorder %v11413, 8.507059e+37
    %v11415 = vand.u32 %v11403, 2147483648
    %v11416 = vor.u32 1.1754944e-38, %v11415
    %v11417 = vsel %vm11414, %v11416, %v11412
    %v11418 = vmul.f32 %v11393, %v11417
    %v11419 = vmin.f32 %v11418, 1.0
    %v11420 = vmax.f32 %v11419, -1.0
    %v11421 = vmul.f32 %v11378, %v11378
    %v11422 = vmin.f32 16.0, %v11421
    %v11423 = vmul.f32 %v11422, 2.1237322e-06
    %v11424 = vadd.f32 %v11423, 0.00028619796
    %v11425 = vmul.f32 %v11422, %v11424
    %v11426 = vadd.f32 %v11425, 0.0036580483
    %v11427 = vmul.f32 %v11422, %v11426
    %v11428 = vadd.f32 %v11427, 0.05243302
    %v11429 = vmul.f32 %v11422, %v11428
    %v11430 = vadd.f32 %v11429, 0.18741608
    %v11431 = vmul.f32 %v11422, %v11430
    %v11432 = vadd.f32 %v11431, 1.1283791
    %v11433 = vmul.f32 %v11378, %v11432
    %v11434 = vmul.f32 %v11422, 3.8918573e-05
    %v11435 = vadd.f32 %v11434, 0.001143296
    %v11436 = vmul.f32 %v11422, %v11435
    %v11437 = vadd.f32 %v11436, 0.014752088
    %v11438 = vmul.f32 %v11422, %v11437
    %v11439 = vadd.f32 %v11438, 0.112945676
    %v11440 = vmul.f32 %v11422, %v11439
    %v11441 = vadd.f32 %v11440, 0.4994258
    %v11442 = vmul.f32 %v11422, %v11441
    %v11443 = vadd.f32 %v11442, 1.0
    %v11444 = vrcp.pop %v11443
    %v11445 = vmul.f32 %v11443, %v11444
    %v11446 = vsub.f32 1.0, %v11445
    %v11447 = vmul.f32 %v11444, %v11446
    %v11448 = vadd.f32 %v11444, %v11447
    %vm11449 = vweird.f32 %v11443
    %vm11450 = vweird.f32 %v11444
    %vm11451 = vmor %vm11449, %vm11450
    %v11452 = vsel %vm11451, %v11444, %v11448
    %v11453 = vand.u32 2147483647, %v11443
    %vm11454 = vcmp.eq.f32.partialorder %v11453, 8.507059e+37
    %v11455 = vand.u32 %v11443, 2147483648
    %v11456 = vor.u32 1.1754944e-38, %v11455
    %v11457 = vsel %vm11454, %v11456, %v11452
    %v11458 = vmul.f32 %v11433, %v11457
    %v11459 = vmin.f32 %v11458, 1.0
    %v11460 = vmax.f32 %v11459, -1.0
    %v11461 = vmul.f32 %v11379, %v11379
    %v11462 = vmin.f32 16.0, %v11461
    %v11463 = vmul.f32 %v11462, 2.1237322e-06
    %v11464 = vadd.f32 %v11463, 0.00028619796
    %v11465 = vmul.f32 %v11462, %v11464
    %v11466 = vadd.f32 %v11465, 0.0036580483
    %v11467 = vmul.f32 %v11462, %v11466
    %v11468 = vadd.f32 %v11467, 0.05243302
    %v11469 = vmul.f32 %v11462, %v11468
    %v11470 = vadd.f32 %v11469, 0.18741608
    %v11471 = vmul.f32 %v11462, %v11470
    %v11472 = vadd.f32 %v11471, 1.1283791
    %v11473 = vmul.f32 %v11379, %v11472
    %v11474 = vmul.f32 %v11462, 3.8918573e-05
    %v11475 = vadd.f32 %v11474, 0.001143296
    %v11476 = vmul.f32 %v11462, %v11475
    %v11477 = vadd.f32 %v11476, 0.014752088
    %v11478 = vmul.f32 %v11462, %v11477
    %v11479 = vadd.f32 %v11478, 0.112945676
    %v11480 = vmul.f32 %v11462, %v11479
    %v11481 = vadd.f32 %v11480, 0.4994258
    %v11482 = vmul.f32 %v11462, %v11481
    %v11483 = vadd.f32 %v11482, 1.0
    %v11484 = vrcp.pop %v11483
    %v11485 = vmul.f32 %v11483, %v11484
    %v11486 = vsub.f32 1.0, %v11485
    %v11487 = vmul.f32 %v11484, %v11486
    %v11488 = vadd.f32 %v11484, %v11487
    %vm11489 = vweird.f32 %v11483
    %vm11490 = vweird.f32 %v11484
    %vm11491 = vmor %vm11489, %vm11490
    %v11492 = vsel %vm11491, %v11484, %v11488
    %v11493 = vand.u32 2147483647, %v11483
    %vm11494 = vcmp.eq.f32.partialorder %v11493, 8.507059e+37
    %v11495 = vand.u32 %v11483, 2147483648
    %v11496 = vor.u32 1.1754944e-38, %v11495
    %v11497 = vsel %vm11494, %v11496, %v11492
    %v11498 = vmul.f32 %v11473, %v11497
    %v11499 = vmin.f32 %v11498, 1.0
    %v11500 = vmax.f32 %v11499, -1.0
    %v11501 = vmul.f32 %v11380, %v11380
    %v11502 = vmin.f32 16.0, %v11501
    %v11503 = vmul.f32 %v11502, 2.1237322e-06
    %v11504 = vadd.f32 %v11503, 0.00028619796
    %v11505 = vmul.f32 %v11502, %v11504
    %v11506 = vadd.f32 %v11505, 0.0036580483
    %v11507 = vmul.f32 %v11502, %v11506
    %v11508 = vadd.f32 %v11507, 0.05243302
    %v11509 = vmul.f32 %v11502, %v11508
    %v11510 = vadd.f32 %v11509, 0.18741608
    %v11511 = vmul.f32 %v11502, %v11510
    %v11512 = vadd.f32 %v11511, 1.1283791
    %v11513 = vmul.f32 %v11380, %v11512
    %v11514 = vmul.f32 %v11502, 3.8918573e-05
    %v11515 = vadd.f32 %v11514, 0.001143296
    %v11516 = vmul.f32 %v11502, %v11515
    %v11517 = vadd.f32 %v11516, 0.014752088
    %v11518 = vmul.f32 %v11502, %v11517
    %v11519 = vadd.f32 %v11518, 0.112945676
    %v11520 = vmul.f32 %v11502, %v11519
    %v11521 = vadd.f32 %v11520, 0.4994258
    %v11522 = vmul.f32 %v11502, %v11521
    %v11523 = vadd.f32 %v11522, 1.0
    %v11524 = vrcp.pop %v11523
    %v11525 = vmul.f32 %v11523, %v11524
    %v11526 = vsub.f32 1.0, %v11525
    %v11527 = vmul.f32 %v11524, %v11526
    %v11528 = vadd.f32 %v11524, %v11527
    %vm11529 = vweird.f32 %v11523
    %vm11530 = vweird.f32 %v11524
    %vm11531 = vmor %vm11529, %vm11530
    %v11532 = vsel %vm11531, %v11524, %v11528
    %v11533 = vand.u32 2147483647, %v11523
    %vm11534 = vcmp.eq.f32.partialorder %v11533, 8.507059e+37
    %v11535 = vand.u32 %v11523, 2147483648
    %v11536 = vor.u32 1.1754944e-38, %v11535
    %v11537 = vsel %vm11534, %v11536, %v11532
    %v11538 = vmul.f32 %v11513, %v11537
    %v11539 = vmin.f32 %v11538, 1.0
    %v11540 = vmax.f32 %v11539, -1.0
    %v11541 = vadd.f32 %v11420, 1.0
    %v11542 = vadd.f32 %v11460, 1.0
    %v11543 = vadd.f32 %v11500, 1.0
    %v11544 = vadd.f32 %v11540, 1.0
    %v11545 = vmul.f32 %v11373, %v11541
    %v11546 = vmul.f32 %v11374, %v11542
    %v11547 = vmul.f32 %v11375, %v11543
    %v11548 = vmul.f32 %v11376, %v11544
    %v11549 = vmul.f32 %v11545, %v11545
    %v11550 = vmul.f32 %v11546, %v11546
    %v11551 = vmul.f32 %v11547, %v11547
    %v11552 = vmul.f32 %v11548, %v11548
    %v11553 = vadd.f32 %v11549, %v11550
    %v11554 = vadd.f32 %v11553, %v11551
    %v11555 = vadd.f32 %v11554, %v11552
    %11556 = vadd.xlane.f32.xlu0 %v11555
    %v11557 = vpop.xlane.xlu0 %11556
    %v11558 = vmax.f32 %v11557, 1e-24
    %v11559 = vrsqrt.pop %v11558
    %v11560 = vmul.f32 %v11559, %v11558
    %v11561 = vmul.f32 %v11560, %v11559
    %v11562 = vmul.f32 0.5, %v11561
    %v11563 = vsub.f32 1.5, %v11562
    %v11564 = vmul.f32 %v11559, %v11563
    %vm11565 = vweird.f32 %v11558
    %vm11566 = vweird.f32 %v11559
    %vm11567 = vmor %vm11565, %vm11566
    %v11568 = vsel %vm11567, %v11559, %v11564
    %v11569 = vmul.f32 %v11545, %v11568
    %v11570 = vmul.f32 %v11546, %v11568
    %v11571 = vmul.f32 %v11547, %v11568
    %v11572 = vmul.f32 %v11548, %v11568
    %11573 = vst [vmem:[#allocation2] sm:$0xff] %v11569
    %11574 = vst [vmem:[#allocation2 + $0x8] sm:$0xff] %v11570
    %11575 = vst [vmem:[#allocation2 + $0x10] sm:$0xff] %v11571
    %11576 = vst [vmem:[#allocation2 + $0x18] sm:$0xff] %v11572
    // Predicated region
    $region14: #{image_encoder2.1} parent=1 // pred_check
      _
    $region15: #{image_encoder2.1} parent=1 // pred_check_branch
      %11578 = sbr.rel (0) target = $region17
    $region16: #{image_encoder2.1} parent=1 // pred_region
      %11580 = vsyncadd [#allocation3], 0
      %s11582 = sshll.u32 [#allocation2], 4
      %s11583 = int_to_ptr.vmem [resolvable:$true] %s11582
      %s11584 = sshll.u32 %s3, 4
      %s11585 = int_to_ptr.hbm [resolvable:$true] %s11584
      %11587 = dma.vmem_to_hbm [thread:$0]  %s11583, 512, %s11585, [#allocation3]
    $region17: #{image_encoder2.1} parent=1 // pred_fallthru
      _
    // Predicated region
    $region18: #{image_encoder2.1} parent=1 // pred_check
      _
    $region19: #{image_encoder2.1} parent=1 // pred_check_branch
      %11589 = sbr.rel (0) target = $region21
    $region20: #{image_encoder2.1} parent=1 // pred_region
      %11591 = dma.done [#allocation3], 512
    $region21: #{image_encoder2.1} parent=1 // pred_fallthru
      _
    %11592 = vsyncpa [#allocation3], 1

</llo_original>
